<compile_context>
chip_gen: v7x
topology: tpu7x:2x2x1
jax: 0.10.0
libtpu: 0.0.40
codegen_flags: <defaults>
</compile_context>

<pallas_src>
import jax
import jax.numpy as jnp
from jax import lax
from jax.experimental import pallas as pl
from jax.experimental.pallas import tpu as pltpu

NEG_SLOPE = 0.2  # MIMO-VRN -> LeakyReLU(0.2)


def _conv3x3_accum(pad_ref, w_ref, b_ref, R, W, C):
    """3x3 SAME conv on a zero-padded (R+2, W+2, C) bf16 VMEM scratch as nine
    accumulated tap matmuls (R*W, C) @ (C, C), f32 accumulation + bias."""
    acc = None
    for kh in range(3):
        for kw in range(3):
            lhs = pad_ref[kh:kh + R, kw:kw + W, :].reshape(R * W, C)
            part = jnp.dot(lhs, w_ref[kh * 3 + kw],
                           preferred_element_type=jnp.float32)
            acc = part if acc is None else acc + part
    return acc + b_ref[...]                       # (R*W, C) f32


def _pick_tile_h(H):
    """Largest even row tile <= 64 that divides H (VMEM-safe on v7x at
    production widths); bigger tiles on v6e/v5e amortize per-step overhead."""
    target = min(H, 64)
    for th in range(target - (target % 2), 1, -2):
        if H % th == 0:
            return th
    return H


def residual_block_nobn_nhwc(x_nhwc, w1_hwio, b1, w2_hwio, b2, tile_h=None):
    """Fused ResidualBlockNoBN forward in NHWC. Weights HWIO (3,3,C,C)."""
    B, H, W, C = x_nhwc.shape
    TH = _pick_tile_h(H) if tile_h is None else tile_h
    assert H % 2 == 0, "H must be even (2-row halo blocks)"
    assert TH % 2 == 0 and 2 <= TH <= H and H % TH == 0, "bad row tile"
    nrt = H // TH          # number of row tiles
    TH2 = TH + 2           # conv1 is computed on TH+2 rows (conv2's halo)

    # Per-tap weight layout (9, C, C): k = kh*3 + kw, [c_in, c_out]. bf16 MXU.
    w1_r = w1_hwio.reshape(9, C, C).astype(jnp.bfloat16)
    w2_r = w2_hwio.reshape(9, C, C).astype(jnp.bfloat16)
    b1_r = b1.reshape(1, C).astype(jnp.float32)
    b2_r = b2.reshape(1, C).astype(jnp.float32)

    def kernel(xm_ref, xt_ref, xb_ref, w1_ref, b1_ref, w2_ref, b2_ref,
               out_ref, xpad_ref, midpad_ref):
        i = pl.program_id(1)   # row-tile index

        # ---- build the zero-halo'd input tile in VMEM (bf16) --------------
        # Ring-only zeroing (left/right columns); every step -> megacore-safe.
        xpad_ref[:, 0:1, :] = jnp.zeros((TH + 4, 1, C), jnp.bfloat16)
        xpad_ref[:, W + 1:W + 2, :] = jnp.zeros((TH + 4, 1, C), jnp.bfloat16)
        # interior TH rows
        xpad_ref[2:TH + 2, 1:W + 1, :] = xm_ref[0].astype(jnp.bfloat16)
        # 2-row halos: real neighbour rows, or zeros at the image boundary
        top = xt_ref[0].astype(jnp.bfloat16)
        top = jnp.where(i > 0, top, jnp.zeros_like(top))
        xpad_ref[0:2, 1:W + 1, :] = top
        bot = xb_ref[0].astype(jnp.bfloat16)
        bot = jnp.where(i < nrt - 1, bot, jnp.zeros_like(bot))
        xpad_ref[TH + 2:TH + 4, 1:W + 1, :] = bot

        # ---- conv1 on TH+2 rows + bias + LeakyReLU -------------------------
        act = _conv3x3_accum(xpad_ref, w1_ref, b1_ref, TH2, W, C)
        act = jnp.maximum(act, NEG_SLOPE * act)          # LeakyReLU(0.2), f32
        act = act.reshape(TH2, W, C)
        # rows outside the image become conv2's zero padding
        r = lax.broadcasted_iota(jnp.int32, (TH2, 1, 1), 0)
        g = i * TH - 1 + r
        act = jnp.where(jnp.logical_and(g >= 0, g < H), act, 0.0)

        # ---- conv2: intermediate stays in VMEM ------------------------------
        midpad_ref[:, 0:1, :] = jnp.zeros((TH2, 1, C), jnp.bfloat16)
        midpad_ref[:, W + 1:W + 2, :] = jnp.zeros((TH2, 1, C), jnp.bfloat16)
        midpad_ref[:, 1:W + 1, :] = act.astype(jnp.bfloat16)
        out2 = _conv3x3_accum(midpad_ref, w2_ref, b2_ref, TH, W, C)

        # ---- residual add in f32 (x tile already resident in VMEM) ---------
        res = xm_ref[0].reshape(TH * W, C).astype(jnp.float32) + out2
        out_ref[0] = res.reshape(TH, W, C).astype(out_ref.dtype)

    flops = 2 * (2 * B * H * W * 9 * C * C)              # two 3x3 convs
    bytes_accessed = (B * H * W * C * 4                  # x main tiles
                      + B * nrt * 4 * W * C * 4          # halo row re-reads
                      + B * H * W * C * 4                # output
                      + 2 * 9 * C * C * 2 + 2 * C * 4)   # weights + biases

    return pl.pallas_call(
        kernel,
        out_shape=jax.ShapeDtypeStruct((B, H, W, C), x_nhwc.dtype),
        grid=(B, nrt),
        in_specs=[
            # main x tile (TH rows)
            pl.BlockSpec((1, TH, W, C), lambda b, i: (b, i, 0, 0)),
            # 2-row top halo (block index clamped; masked to zero when i == 0)
            pl.BlockSpec((1, 2, W, C),
                         lambda b, i: (b, jnp.maximum(i * (TH // 2) - 1, 0),
                                       0, 0)),
            # 2-row bottom halo (clamped; masked to zero on the last tile)
            pl.BlockSpec((1, 2, W, C),
                         lambda b, i: (b, jnp.minimum((i + 1) * (TH // 2),
                                                      H // 2 - 1), 0, 0)),
            pl.BlockSpec((9, C, C), lambda b, i: (0, 0, 0)),   # w1 taps
            pl.BlockSpec((1, C), lambda b, i: (0, 0)),         # b1
            pl.BlockSpec((9, C, C), lambda b, i: (0, 0, 0)),   # w2 taps
            pl.BlockSpec((1, C), lambda b, i: (0, 0)),         # b2
        ],
        out_specs=pl.BlockSpec((1, TH, W, C), lambda b, i: (b, i, 0, 0)),
        scratch_shapes=[
            pltpu.VMEM((TH + 4, W + 2, C), jnp.bfloat16),  # padded x tile
            pltpu.VMEM((TH + 2, W + 2, C), jnp.bfloat16),  # padded conv1 act
        ],
        compiler_params=pltpu.CompilerParams(
            dimension_semantics=("parallel", "parallel"),
            vmem_limit_bytes=48 * 1024 * 1024),
        cost_estimate=pl.CostEstimate(
            flops=flops, transcendentals=0, bytes_accessed=bytes_accessed),
    )(x_nhwc, x_nhwc, x_nhwc, w1_r, b1_r, w2_r, b2_r)


def residual_block_nobn(x_nchw, w1_hwio, b1, w2_hwio, b2, tile_h=None):
    """PyTorch-layout entry point (NCHW in/out). In a stacked trunk, hoist
    these transposes out and call residual_block_nobn_nhwc directly."""
    x_nhwc = jnp.transpose(x_nchw, (0, 2, 3, 1))
    out = residual_block_nobn_nhwc(x_nhwc, w1_hwio, b1, w2_hwio, b2, tile_h)
    return jnp.transpose(out, (0, 3, 1, 2))


def _reference_forward(x_nhwc, w1, b1, w2, b2):
    """Pure-JAX f32 reference (NHWC, HWIO weights) for verification."""
    def conv(x, w, b):
        y = lax.conv_general_dilated(
            x, w, window_strides=(1, 1), padding="SAME",
            dimension_numbers=("NHWC", "HWIO", "NHWC"))
        return y + b.reshape(1, 1, 1, -1)

    out = conv(x_nhwc, w1, b1)
    out = jnp.where(out >= 0, out, NEG_SLOPE * out)
    out = conv(out, w2, b2)
    return x_nhwc + out


if __name__ == "__main__":
    key = jax.random.PRNGKey(0)
    B, C, H, W = 2, 32, 16, 16  # small nf / spatial consistent with the module

    k_x, k_w1, k_w2, k_b1, k_b2 = jax.random.split(key, 5)
    x = jax.random.normal(k_x, (B, C, H, W), jnp.float32)  # NCHW like PyTorch

    # Xavier-normal * 0.1 (initialize_weights_xavier). Module zero-inits the
    # biases, but use small non-zero biases here so the conv2 zero-padding
    # semantics at tile/image boundaries are actually exercised by the test.
    fan_in = fan_out = C * 3 * 3
    std = 0.1 * (2.0 / (fan_in + fan_out)) ** 0.5
    w1 = std * jax.random.normal(k_w1, (3, 3, C, C), jnp.float32)  # HWIO
    w2 = std * jax.random.normal(k_w2, (3, 3, C, C), jnp.float32)
    b1 = 0.05 * jax.random.normal(k_b1, (C,), jnp.float32)
    b2 = 0.05 * jax.random.normal(k_b2, (C,), jnp.float32)

    # Reference (f32) in PyTorch layout.
    x_nhwc = jnp.transpose(x, (0, 2, 3, 1))
    ref = jnp.transpose(_reference_forward(x_nhwc, w1, b1, w2, b2),
                        (0, 3, 1, 2))

    # Multi-tile path: 2 row tiles per image -> exercises the 2-row halo
    # exchange and the image-boundary zero padding.
    out = jax.block_until_ready(
        residual_block_nobn(x, w1, b1, w2, b2, tile_h=8))
    assert out.shape == (B, C, H, W)
    assert jnp.allclose(out, ref, atol=2e-3, rtol=2e-3), "mismatch (tile_h=8)"

    # Single-tile path (TH == H) as well.
    out1 = jax.block_until_ready(
        residual_block_nobn(x, w1, b1, w2, b2, tile_h=16))
    assert jnp.allclose(out1, ref, atol=2e-3, rtol=2e-3), "mismatch (tile_h=16)"

    print("KERNEL_OK")
</pallas_src>

<mosaic_0001>
module attributes {stable_mosaic.version = 11 : i64} {
  func.func @kernel(%arg0: i32, %arg1: i32, %arg2: memref<1x8x16x32xf32, #tpu.memory_space<vmem>>, %arg3: memref<1x2x16x32xf32, #tpu.memory_space<vmem>>, %arg4: memref<1x2x16x32xf32, #tpu.memory_space<vmem>>, %arg5: memref<9x32x32xbf16, #tpu.memory_space<vmem>>, %arg6: memref<1x32xf32, #tpu.memory_space<vmem>>, %arg7: memref<9x32x32xbf16, #tpu.memory_space<vmem>>, %arg8: memref<1x32xf32, #tpu.memory_space<vmem>>, %arg9: memref<1x8x16x32xf32, #tpu.memory_space<vmem>>, %arg10: memref<12x18x32xbf16, #tpu.memory_space<vmem>>, %arg11: memref<10x18x32xbf16, #tpu.memory_space<vmem>>) attributes {dimension_semantics = [#tpu.dimension_semantics<parallel>, #tpu.dimension_semantics<parallel>], iteration_bounds = array<i64: 2, 2>, scalar_prefetch = 0 : i64, scratch_operands = 2 : i64, tpu.core_type = #tpu.core_type<tc>, window_params = [{transform_indices = @transform_0, window_bounds = array<i64: 1, 8, 16, 32>}, {transform_indices = @transform_1, window_bounds = array<i64: 1, 2, 16, 32>}, {transform_indices = @transform_2, window_bounds = array<i64: 1, 2, 16, 32>}, {pipeline_mode = #tpu.pipeline_mode<synchronous>, transform_indices = @transform_3, window_bounds = array<i64: 9, 32, 32>}, {pipeline_mode = #tpu.pipeline_mode<synchronous>, transform_indices = @transform_4, window_bounds = array<i64: 1, 32>}, {pipeline_mode = #tpu.pipeline_mode<synchronous>, transform_indices = @transform_5, window_bounds = array<i64: 9, 32, 32>}, {pipeline_mode = #tpu.pipeline_mode<synchronous>, transform_indices = @transform_6, window_bounds = array<i64: 1, 32>}, {transform_indices = @transform_7, window_bounds = array<i64: 1, 8, 16, 32>}]} {
    %cst = arith.constant 0.000000e+00 : bf16
    %0 = vector.broadcast %cst : bf16 to vector<12x1x32xbf16>
    %c0 = arith.constant 0 : index
    %c0_0 = arith.constant 0 : index
    %c0_1 = arith.constant 0 : index
    %1 = vector.load %arg10[%c0, %c0_0, %c0_1] : memref<12x18x32xbf16, #tpu.memory_space<vmem>>, vector<12x1x32xbf16>
    tpu.vector_store %arg10[%c0, %c0_0, %c0_1], %0 {strides = array<i32>} : memref<12x18x32xbf16, #tpu.memory_space<vmem>>, vector<12x1x32xbf16>,
    %cst_2 = arith.constant 0.000000e+00 : bf16
    %2 = vector.broadcast %cst_2 : bf16 to vector<12x1x32xbf16>
    %c0_3 = arith.constant 0 : index
    %c17 = arith.constant 17 : index
    %c0_4 = arith.constant 0 : index
    %3 = vector.load %arg10[%c0_3, %c17, %c0_4] : memref<12x18x32xbf16, #tpu.memory_space<vmem>>, vector<12x1x32xbf16>
    tpu.vector_store %arg10[%c0_3, %c17, %c0_4], %2 {strides = array<i32>} : memref<12x18x32xbf16, #tpu.memory_space<vmem>>, vector<12x1x32xbf16>,
    %c0_5 = arith.constant 0 : index
    %c0_6 = arith.constant 0 : index
    %c0_7 = arith.constant 0 : index
    %c0_8 = arith.constant 0 : index
    %4 = vector.load %arg2[%c0_5, %c0_6, %c0_7, %c0_8] : memref<1x8x16x32xf32, #tpu.memory_space<vmem>>, vector<1x8x16x32xf32>
    %5 = vector.shape_cast %4 : vector<1x8x16x32xf32> to vector<8x16x32xf32>
    %6 = arith.truncf %5 : vector<8x16x32xf32> to vector<8x16x32xbf16>
    %c2 = arith.constant 2 : index
    %c1 = arith.constant 1 : index
    %c0_9 = arith.constant 0 : index
    %7 = vector.load %arg10[%c2, %c1, %c0_9] : memref<12x18x32xbf16, #tpu.memory_space<vmem>>, vector<8x16x32xbf16>
    tpu.vector_store %arg10[%c2, %c1, %c0_9], %6 {strides = array<i32>} : memref<12x18x32xbf16, #tpu.memory_space<vmem>>, vector<8x16x32xbf16>,
    %c0_10 = arith.constant 0 : index
    %c0_11 = arith.constant 0 : index
    %c0_12 = arith.constant 0 : index
    %c0_13 = arith.constant 0 : index
    %8 = vector.load %arg3[%c0_10, %c0_11, %c0_12, %c0_13] : memref<1x2x16x32xf32, #tpu.memory_space<vmem>>, vector<1x2x16x32xf32>
    %9 = vector.shape_cast %8 : vector<1x2x16x32xf32> to vector<2x16x32xf32>
    %10 = arith.truncf %9 : vector<2x16x32xf32> to vector<2x16x32xbf16>
    %c0_i32 = arith.constant 0 : i32
    %11 = arith.cmpi sgt, %arg1, %c0_i32 : i32
    %cst_14 = arith.constant 0.000000e+00 : bf16
    %12 = vector.broadcast %cst_14 : bf16 to vector<2x16x32xbf16>
    %13 = arith.select %11, %10, %12 : vector<2x16x32xbf16>
    %c0_15 = arith.constant 0 : index
    %c1_16 = arith.constant 1 : index
    %c0_17 = arith.constant 0 : index
    %14 = vector.load %arg10[%c0_15, %c1_16, %c0_17] : memref<12x18x32xbf16, #tpu.memory_space<vmem>>, vector<2x16x32xbf16>
    tpu.vector_store %arg10[%c0_15, %c1_16, %c0_17], %13 {strides = array<i32>} : memref<12x18x32xbf16, #tpu.memory_space<vmem>>, vector<2x16x32xbf16>,
    %c0_18 = arith.constant 0 : index
    %c0_19 = arith.constant 0 : index
    %c0_20 = arith.constant 0 : index
    %c0_21 = arith.constant 0 : index
    %15 = vector.load %arg4[%c0_18, %c0_19, %c0_20, %c0_21] : memref<1x2x16x32xf32, #tpu.memory_space<vmem>>, vector<1x2x16x32xf32>
    %16 = vector.shape_cast %15 : vector<1x2x16x32xf32> to vector<2x16x32xf32>
    %17 = arith.truncf %16 : vector<2x16x32xf32> to vector<2x16x32xbf16>
    %c1_i32 = arith.constant 1 : i32
    %18 = arith.cmpi slt, %arg1, %c1_i32 : i32
    %cst_22 = arith.constant 0.000000e+00 : bf16
    %19 = vector.broadcast %cst_22 : bf16 to vector<2x16x32xbf16>
    %20 = arith.select %18, %17, %19 : vector<2x16x32xbf16>
    %c10 = arith.constant 10 : index
    %c1_23 = arith.constant 1 : index
    %c0_24 = arith.constant 0 : index
    %21 = vector.load %arg10[%c10, %c1_23, %c0_24] : memref<12x18x32xbf16, #tpu.memory_space<vmem>>, vector<2x16x32xbf16>
    tpu.vector_store %arg10[%c10, %c1_23, %c0_24], %20 {strides = array<i32>} : memref<12x18x32xbf16, #tpu.memory_space<vmem>>, vector<2x16x32xbf16>,
    %c0_25 = arith.constant 0 : index
    %c0_26 = arith.constant 0 : index
    %c0_27 = arith.constant 0 : index
    %22 = vector.load %arg10[%c0_25, %c0_26, %c0_27] : memref<12x18x32xbf16, #tpu.memory_space<vmem>>, vector<10x16x32xbf16>
    %23 = vector.shape_cast %22 : vector<10x16x32xbf16> to vector<160x32xbf16>
    %c0_28 = arith.constant 0 : index
    %c0_29 = arith.constant 0 : index
    %c0_30 = arith.constant 0 : index
    %24 = vector.load %arg5[%c0_28, %c0_29, %c0_30] : memref<9x32x32xbf16, #tpu.memory_space<vmem>>, vector<1x32x32xbf16>
    %25 = vector.shape_cast %24 : vector<1x32x32xbf16> to vector<32x32xbf16>
    %cst_31 = arith.constant dense<0.000000e+00> : vector<160x32xf32>
    %26 = tpu.matmul %23, %25, %cst_31 {dimension_numbers = #tpu.dot_dimension_numbers<[1], [0], [0], [1], [0, 0, 1, 1], [], []>} : vector<160x32xbf16>, vector<32x32xbf16>, vector<160x32xf32> -> vector<160x32xf32>
    %c0_32 = arith.constant 0 : index
    %c1_33 = arith.constant 1 : index
    %c0_34 = arith.constant 0 : index
    %27 = vector.load %arg10[%c0_32, %c1_33, %c0_34] : memref<12x18x32xbf16, #tpu.memory_space<vmem>>, vector<10x16x32xbf16>
    %28 = vector.shape_cast %27 : vector<10x16x32xbf16> to vector<160x32xbf16>
    %c1_35 = arith.constant 1 : index
    %c0_36 = arith.constant 0 : index
    %c0_37 = arith.constant 0 : index
    %29 = vector.load %arg5[%c1_35, %c0_36, %c0_37] : memref<9x32x32xbf16, #tpu.memory_space<vmem>>, vector<1x32x32xbf16>
    %30 = vector.shape_cast %29 : vector<1x32x32xbf16> to vector<32x32xbf16>
    %cst_38 = arith.constant dense<0.000000e+00> : vector<160x32xf32>
    %31 = tpu.matmul %28, %30, %cst_38 {dimension_numbers = #tpu.dot_dimension_numbers<[1], [0], [0], [1], [0, 0, 1, 1], [], []>} : vector<160x32xbf16>, vector<32x32xbf16>, vector<160x32xf32> -> vector<160x32xf32>
    %32 = arith.addf %26, %31 : vector<160x32xf32>
    %c0_39 = arith.constant 0 : index
    %c2_40 = arith.constant 2 : index
    %c0_41 = arith.constant 0 : index
    %33 = vector.load %arg10[%c0_39, %c2_40, %c0_41] : memref<12x18x32xbf16, #tpu.memory_space<vmem>>, vector<10x16x32xbf16>
    %34 = vector.shape_cast %33 : vector<10x16x32xbf16> to vector<160x32xbf16>
    %c2_42 = arith.constant 2 : index
    %c0_43 = arith.constant 0 : index
    %c0_44 = arith.constant 0 : index
    %35 = vector.load %arg5[%c2_42, %c0_43, %c0_44] : memref<9x32x32xbf16, #tpu.memory_space<vmem>>, vector<1x32x32xbf16>
    %36 = vector.shape_cast %35 : vector<1x32x32xbf16> to vector<32x32xbf16>
    %cst_45 = arith.constant dense<0.000000e+00> : vector<160x32xf32>
    %37 = tpu.matmul %34, %36, %cst_45 {dimension_numbers = #tpu.dot_dimension_numbers<[1], [0], [0], [1], [0, 0, 1, 1], [], []>} : vector<160x32xbf16>, vector<32x32xbf16>, vector<160x32xf32> -> vector<160x32xf32>
    %38 = arith.addf %32, %37 : vector<160x32xf32>
    %c1_46 = arith.constant 1 : index
    %c0_47 = arith.constant 0 : index
    %c0_48 = arith.constant 0 : index
    %39 = vector.load %arg10[%c1_46, %c0_47, %c0_48] : memref<12x18x32xbf16, #tpu.memory_space<vmem>>, vector<10x16x32xbf16>
    %40 = vector.shape_cast %39 : vector<10x16x32xbf16> to vector<160x32xbf16>
    %c3 = arith.constant 3 : index
    %c0_49 = arith.constant 0 : index
    %c0_50 = arith.constant 0 : index
    %41 = vector.load %arg5[%c3, %c0_49, %c0_50] : memref<9x32x32xbf16, #tpu.memory_space<vmem>>, vector<1x32x32xbf16>
    %42 = vector.shape_cast %41 : vector<1x32x32xbf16> to vector<32x32xbf16>
    %cst_51 = arith.constant dense<0.000000e+00> : vector<160x32xf32>
    %43 = tpu.matmul %40, %42, %cst_51 {dimension_numbers = #tpu.dot_dimension_numbers<[1], [0], [0], [1], [0, 0, 1, 1], [], []>} : vector<160x32xbf16>, vector<32x32xbf16>, vector<160x32xf32> -> vector<160x32xf32>
    %44 = arith.addf %38, %43 : vector<160x32xf32>
    %c1_52 = arith.constant 1 : index
    %c1_53 = arith.constant 1 : index
    %c0_54 = arith.constant 0 : index
    %45 = vector.load %arg10[%c1_52, %c1_53, %c0_54] : memref<12x18x32xbf16, #tpu.memory_space<vmem>>, vector<10x16x32xbf16>
    %46 = vector.shape_cast %45 : vector<10x16x32xbf16> to vector<160x32xbf16>
    %c4 = arith.constant 4 : index
    %c0_55 = arith.constant 0 : index
    %c0_56 = arith.constant 0 : index
    %47 = vector.load %arg5[%c4, %c0_55, %c0_56] : memref<9x32x32xbf16, #tpu.memory_space<vmem>>, vector<1x32x32xbf16>
    %48 = vector.shape_cast %47 : vector<1x32x32xbf16> to vector<32x32xbf16>
    %cst_57 = arith.constant dense<0.000000e+00> : vector<160x32xf32>
    %49 = tpu.matmul %46, %48, %cst_57 {dimension_numbers = #tpu.dot_dimension_numbers<[1], [0], [0], [1], [0, 0, 1, 1], [], []>} : vector<160x32xbf16>, vector<32x32xbf16>, vector<160x32xf32> -> vector<160x32xf32>
    %50 = arith.addf %44, %49 : vector<160x32xf32>
    %c1_58 = arith.constant 1 : index
    %c2_59 = arith.constant 2 : index
    %c0_60 = arith.constant 0 : index
    %51 = vector.load %arg10[%c1_58, %c2_59, %c0_60] : memref<12x18x32xbf16, #tpu.memory_space<vmem>>, vector<10x16x32xbf16>
    %52 = vector.shape_cast %51 : vector<10x16x32xbf16> to vector<160x32xbf16>
    %c5 = arith.constant 5 : index
    %c0_61 = arith.constant 0 : index
    %c0_62 = arith.constant 0 : index
    %53 = vector.load %arg5[%c5, %c0_61, %c0_62] : memref<9x32x32xbf16, #tpu.memory_space<vmem>>, vector<1x32x32xbf16>
    %54 = vector.shape_cast %53 : vector<1x32x32xbf16> to vector<32x32xbf16>
    %cst_63 = arith.constant dense<0.000000e+00> : vector<160x32xf32>
    %55 = tpu.matmul %52, %54, %cst_63 {dimension_numbers = #tpu.dot_dimension_numbers<[1], [0], [0], [1], [0, 0, 1, 1], [], []>} : vector<160x32xbf16>, vector<32x32xbf16>, vector<160x32xf32> -> vector<160x32xf32>
    %56 = arith.addf %50, %55 : vector<160x32xf32>
    %c2_64 = arith.constant 2 : index
    %c0_65 = arith.constant 0 : index
    %c0_66 = arith.constant 0 : index
    %57 = vector.load %arg10[%c2_64, %c0_65, %c0_66] : memref<12x18x32xbf16, #tpu.memory_space<vmem>>, vector<10x16x32xbf16>
    %58 = vector.shape_cast %57 : vector<10x16x32xbf16> to vector<160x32xbf16>
    %c6 = arith.constant 6 : index
    %c0_67 = arith.constant 0 : index
    %c0_68 = arith.constant 0 : index
    %59 = vector.load %arg5[%c6, %c0_67, %c0_68] : memref<9x32x32xbf16, #tpu.memory_space<vmem>>, vector<1x32x32xbf16>
    %60 = vector.shape_cast %59 : vector<1x32x32xbf16> to vector<32x32xbf16>
    %cst_69 = arith.constant dense<0.000000e+00> : vector<160x32xf32>
    %61 = tpu.matmul %58, %60, %cst_69 {dimension_numbers = #tpu.dot_dimension_numbers<[1], [0], [0], [1], [0, 0, 1, 1], [], []>} : vector<160x32xbf16>, vector<32x32xbf16>, vector<160x32xf32> -> vector<160x32xf32>
    %62 = arith.addf %56, %61 : vector<160x32xf32>
    %c2_70 = arith.constant 2 : index
    %c1_71 = arith.constant 1 : index
    %c0_72 = arith.constant 0 : index
    %63 = vector.load %arg10[%c2_70, %c1_71, %c0_72] : memref<12x18x32xbf16, #tpu.memory_space<vmem>>, vector<10x16x32xbf16>
    %64 = vector.shape_cast %63 : vector<10x16x32xbf16> to vector<160x32xbf16>
    %c7 = arith.constant 7 : index
    %c0_73 = arith.constant 0 : index
    %c0_74 = arith.constant 0 : index
    %65 = vector.load %arg5[%c7, %c0_73, %c0_74] : memref<9x32x32xbf16, #tpu.memory_space<vmem>>, vector<1x32x32xbf16>
    %66 = vector.shape_cast %65 : vector<1x32x32xbf16> to vector<32x32xbf16>
    %cst_75 = arith.constant dense<0.000000e+00> : vector<160x32xf32>
    %67 = tpu.matmul %64, %66, %cst_75 {dimension_numbers = #tpu.dot_dimension_numbers<[1], [0], [0], [1], [0, 0, 1, 1], [], []>} : vector<160x32xbf16>, vector<32x32xbf16>, vector<160x32xf32> -> vector<160x32xf32>
    %68 = arith.addf %62, %67 : vector<160x32xf32>
    %c2_76 = arith.constant 2 : index
    %c2_77 = arith.constant 2 : index
    %c0_78 = arith.constant 0 : index
    %69 = vector.load %arg10[%c2_76, %c2_77, %c0_78] : memref<12x18x32xbf16, #tpu.memory_space<vmem>>, vector<10x16x32xbf16>
    %70 = vector.shape_cast %69 : vector<10x16x32xbf16> to vector<160x32xbf16>
    %c8 = arith.constant 8 : index
    %c0_79 = arith.constant 0 : index
    %c0_80 = arith.constant 0 : index
    %71 = vector.load %arg5[%c8, %c0_79, %c0_80] : memref<9x32x32xbf16, #tpu.memory_space<vmem>>, vector<1x32x32xbf16>
    %72 = vector.shape_cast %71 : vector<1x32x32xbf16> to vector<32x32xbf16>
    %cst_81 = arith.constant dense<0.000000e+00> : vector<160x32xf32>
    %73 = tpu.matmul %70, %72, %cst_81 {dimension_numbers = #tpu.dot_dimension_numbers<[1], [0], [0], [1], [0, 0, 1, 1], [], []>} : vector<160x32xbf16>, vector<32x32xbf16>, vector<160x32xf32> -> vector<160x32xf32>
    %74 = arith.addf %68, %73 : vector<160x32xf32>
    %c0_82 = arith.constant 0 : index
    %c0_83 = arith.constant 0 : index
    %75 = vector.load %arg6[%c0_82, %c0_83] : memref<1x32xf32, #tpu.memory_space<vmem>>, vector<1x32xf32>
    %76 = vector.broadcast %75 : vector<1x32xf32> to vector<160x32xf32>
    %77 = arith.addf %74, %76 : vector<160x32xf32>
    %cst_84 = arith.constant 2.000000e-01 : f32
    %78 = vector.broadcast %cst_84 : f32 to vector<160x32xf32>
    %79 = arith.mulf %78, %77 : vector<160x32xf32>
    %80 = arith.maximumf %77, %79 : vector<160x32xf32>
    %81 = vector.shape_cast %80 : vector<160x32xf32> to vector<10x16x32xf32>
    %82 = tpu.iota {dimensions = array<i32: 0>} : vector<10x1x1xi32>
    %c8_i32 = arith.constant 8 : i32
    %83 = arith.muli %arg1, %c8_i32 : i32
    %c1_i32_85 = arith.constant 1 : i32
    %84 = arith.subi %83, %c1_i32_85 : i32
    %85 = vector.broadcast %84 : i32 to vector<10x1x1xi32>
    %86 = arith.addi %85, %82 : vector<10x1x1xi32>
    %c0_i32_86 = arith.constant 0 : i32
    %87 = vector.broadcast %c0_i32_86 : i32 to vector<10x1x1xi32>
    %88 = arith.cmpi sge, %86, %87 : vector<10x1x1xi32>
    %c16_i32 = arith.constant 16 : i32
    %89 = vector.broadcast %c16_i32 : i32 to vector<10x1x1xi32>
    %90 = arith.cmpi slt, %86, %89 : vector<10x1x1xi32>
    %91 = arith.andi %88, %90 : vector<10x1x1xi1>
    %cst_87 = arith.constant 0.000000e+00 : f32
    %92 = vector.shape_cast %91 : vector<10x1x1xi1> to vector<10x1x1xi1>
    %93 = vector.broadcast %92 : vector<10x1x1xi1> to vector<10x16x32xi1>
    %94 = vector.broadcast %cst_87 : f32 to vector<10x16x32xf32>
    %95 = arith.select %93, %81, %94 : vector<10x16x32xi1>, vector<10x16x32xf32>
    %cst_88 = arith.constant 0.000000e+00 : bf16
    %96 = vector.broadcast %cst_88 : bf16 to vector<10x1x32xbf16>
    %c0_89 = arith.constant 0 : index
    %c0_90 = arith.constant 0 : index
    %c0_91 = arith.constant 0 : index
    %97 = vector.load %arg11[%c0_89, %c0_90, %c0_91] : memref<10x18x32xbf16, #tpu.memory_space<vmem>>, vector<10x1x32xbf16>
    tpu.vector_store %arg11[%c0_89, %c0_90, %c0_91], %96 {strides = array<i32>} : memref<10x18x32xbf16, #tpu.memory_space<vmem>>, vector<10x1x32xbf16>,
    %cst_92 = arith.constant 0.000000e+00 : bf16
    %98 = vector.broadcast %cst_92 : bf16 to vector<10x1x32xbf16>
    %c0_93 = arith.constant 0 : index
    %c17_94 = arith.constant 17 : index
    %c0_95 = arith.constant 0 : index
    %99 = vector.load %arg11[%c0_93, %c17_94, %c0_95] : memref<10x18x32xbf16, #tpu.memory_space<vmem>>, vector<10x1x32xbf16>
    tpu.vector_store %arg11[%c0_93, %c17_94, %c0_95], %98 {strides = array<i32>} : memref<10x18x32xbf16, #tpu.memory_space<vmem>>, vector<10x1x32xbf16>,
    %100 = arith.truncf %95 : vector<10x16x32xf32> to vector<10x16x32xbf16>
    %c0_96 = arith.constant 0 : index
    %c1_97 = arith.constant 1 : index
    %c0_98 = arith.constant 0 : index
    %101 = vector.load %arg11[%c0_96, %c1_97, %c0_98] : memref<10x18x32xbf16, #tpu.memory_space<vmem>>, vector<10x16x32xbf16>
    tpu.vector_store %arg11[%c0_96, %c1_97, %c0_98], %100 {strides = array<i32>} : memref<10x18x32xbf16, #tpu.memory_space<vmem>>, vector<10x16x32xbf16>,
    %c0_99 = arith.constant 0 : index
    %c0_100 = arith.constant 0 : index
    %c0_101 = arith.constant 0 : index
    %102 = vector.load %arg11[%c0_99, %c0_100, %c0_101] : memref<10x18x32xbf16, #tpu.memory_space<vmem>>, vector<8x16x32xbf16>
    %103 = vector.shape_cast %102 : vector<8x16x32xbf16> to vector<128x32xbf16>
    %c0_102 = arith.constant 0 : index
    %c0_103 = arith.constant 0 : index
    %c0_104 = arith.constant 0 : index
    %104 = vector.load %arg7[%c0_102, %c0_103, %c0_104] : memref<9x32x32xbf16, #tpu.memory_space<vmem>>, vector<1x32x32xbf16>
    %105 = vector.shape_cast %104 : vector<1x32x32xbf16> to vector<32x32xbf16>
    %cst_105 = arith.constant dense<0.000000e+00> : vector<128x32xf32>
    %106 = tpu.matmul %103, %105, %cst_105 {dimension_numbers = #tpu.dot_dimension_numbers<[1], [0], [0], [1], [0, 0, 1, 1], [], []>} : vector<128x32xbf16>, vector<32x32xbf16>, vector<128x32xf32> -> vector<128x32xf32>
    %c0_106 = arith.constant 0 : index
    %c1_107 = arith.constant 1 : index
    %c0_108 = arith.constant 0 : index
    %107 = vector.load %arg11[%c0_106, %c1_107, %c0_108] : memref<10x18x32xbf16, #tpu.memory_space<vmem>>, vector<8x16x32xbf16>
    %108 = vector.shape_cast %107 : vector<8x16x32xbf16> to vector<128x32xbf16>
    %c1_109 = arith.constant 1 : index
    %c0_110 = arith.constant 0 : index
    %c0_111 = arith.constant 0 : index
    %109 = vector.load %arg7[%c1_109, %c0_110, %c0_111] : memref<9x32x32xbf16, #tpu.memory_space<vmem>>, vector<1x32x32xbf16>
    %110 = vector.shape_cast %109 : vector<1x32x32xbf16> to vector<32x32xbf16>
    %cst_112 = arith.constant dense<0.000000e+00> : vector<128x32xf32>
    %111 = tpu.matmul %108, %110, %cst_112 {dimension_numbers = #tpu.dot_dimension_numbers<[1], [0], [0], [1], [0, 0, 1, 1], [], []>} : vector<128x32xbf16>, vector<32x32xbf16>, vector<128x32xf32> -> vector<128x32xf32>
    %112 = arith.addf %106, %111 : vector<128x32xf32>
    %c0_113 = arith.constant 0 : index
    %c2_114 = arith.constant 2 : index
    %c0_115 = arith.constant 0 : index
    %113 = vector.load %arg11[%c0_113, %c2_114, %c0_115] : memref<10x18x32xbf16, #tpu.memory_space<vmem>>, vector<8x16x32xbf16>
    %114 = vector.shape_cast %113 : vector<8x16x32xbf16> to vector<128x32xbf16>
    %c2_116 = arith.constant 2 : index
    %c0_117 = arith.constant 0 : index
    %c0_118 = arith.constant 0 : index
    %115 = vector.load %arg7[%c2_116, %c0_117, %c0_118] : memref<9x32x32xbf16, #tpu.memory_space<vmem>>, vector<1x32x32xbf16>
    %116 = vector.shape_cast %115 : vector<1x32x32xbf16> to vector<32x32xbf16>
    %cst_119 = arith.constant dense<0.000000e+00> : vector<128x32xf32>
    %117 = tpu.matmul %114, %116, %cst_119 {dimension_numbers = #tpu.dot_dimension_numbers<[1], [0], [0], [1], [0, 0, 1, 1], [], []>} : vector<128x32xbf16>, vector<32x32xbf16>, vector<128x32xf32> -> vector<128x32xf32>
    %118 = arith.addf %112, %117 : vector<128x32xf32>
    %c1_120 = arith.constant 1 : index
    %c0_121 = arith.constant 0 : index
    %c0_122 = arith.constant 0 : index
    %119 = vector.load %arg11[%c1_120, %c0_121, %c0_122] : memref<10x18x32xbf16, #tpu.memory_space<vmem>>, vector<8x16x32xbf16>
    %120 = vector.shape_cast %119 : vector<8x16x32xbf16> to vector<128x32xbf16>
    %c3_123 = arith.constant 3 : index
    %c0_124 = arith.constant 0 : index
    %c0_125 = arith.constant 0 : index
    %121 = vector.load %arg7[%c3_123, %c0_124, %c0_125] : memref<9x32x32xbf16, #tpu.memory_space<vmem>>, vector<1x32x32xbf16>
    %122 = vector.shape_cast %121 : vector<1x32x32xbf16> to vector<32x32xbf16>
    %cst_126 = arith.constant dense<0.000000e+00> : vector<128x32xf32>
    %123 = tpu.matmul %120, %122, %cst_126 {dimension_numbers = #tpu.dot_dimension_numbers<[1], [0], [0], [1], [0, 0, 1, 1], [], []>} : vector<128x32xbf16>, vector<32x32xbf16>, vector<128x32xf32> -> vector<128x32xf32>
    %124 = arith.addf %118, %123 : vector<128x32xf32>
    %c1_127 = arith.constant 1 : index
    %c1_128 = arith.constant 1 : index
    %c0_129 = arith.constant 0 : index
    %125 = vector.load %arg11[%c1_127, %c1_128, %c0_129] : memref<10x18x32xbf16, #tpu.memory_space<vmem>>, vector<8x16x32xbf16>
    %126 = vector.shape_cast %125 : vector<8x16x32xbf16> to vector<128x32xbf16>
    %c4_130 = arith.constant 4 : index
    %c0_131 = arith.constant 0 : index
    %c0_132 = arith.constant 0 : index
    %127 = vector.load %arg7[%c4_130, %c0_131, %c0_132] : memref<9x32x32xbf16, #tpu.memory_space<vmem>>, vector<1x32x32xbf16>
    %128 = vector.shape_cast %127 : vector<1x32x32xbf16> to vector<32x32xbf16>
    %cst_133 = arith.constant dense<0.000000e+00> : vector<128x32xf32>
    %129 = tpu.matmul %126, %128, %cst_133 {dimension_numbers = #tpu.dot_dimension_numbers<[1], [0], [0], [1], [0, 0, 1, 1], [], []>} : vector<128x32xbf16>, vector<32x32xbf16>, vector<128x32xf32> -> vector<128x32xf32>
    %130 = arith.addf %124, %129 : vector<128x32xf32>
    %c1_134 = arith.constant 1 : index
    %c2_135 = arith.constant 2 : index
    %c0_136 = arith.constant 0 : index
    %131 = vector.load %arg11[%c1_134, %c2_135, %c0_136] : memref<10x18x32xbf16, #tpu.memory_space<vmem>>, vector<8x16x32xbf16>
    %132 = vector.shape_cast %131 : vector<8x16x32xbf16> to vector<128x32xbf16>
    %c5_137 = arith.constant 5 : index
    %c0_138 = arith.constant 0 : index
    %c0_139 = arith.constant 0 : index
    %133 = vector.load %arg7[%c5_137, %c0_138, %c0_139] : memref<9x32x32xbf16, #tpu.memory_space<vmem>>, vector<1x32x32xbf16>
    %134 = vector.shape_cast %133 : vector<1x32x32xbf16> to vector<32x32xbf16>
    %cst_140 = arith.constant dense<0.000000e+00> : vector<128x32xf32>
    %135 = tpu.matmul %132, %134, %cst_140 {dimension_numbers = #tpu.dot_dimension_numbers<[1], [0], [0], [1], [0, 0, 1, 1], [], []>} : vector<128x32xbf16>, vector<32x32xbf16>, vector<128x32xf32> -> vector<128x32xf32>
    %136 = arith.addf %130, %135 : vector<128x32xf32>
    %c2_141 = arith.constant 2 : index
    %c0_142 = arith.constant 0 : index
    %c0_143 = arith.constant 0 : index
    %137 = vector.load %arg11[%c2_141, %c0_142, %c0_143] : memref<10x18x32xbf16, #tpu.memory_space<vmem>>, vector<8x16x32xbf16>
    %138 = vector.shape_cast %137 : vector<8x16x32xbf16> to vector<128x32xbf16>
    %c6_144 = arith.constant 6 : index
    %c0_145 = arith.constant 0 : index
    %c0_146 = arith.constant 0 : index
    %139 = vector.load %arg7[%c6_144, %c0_145, %c0_146] : memref<9x32x32xbf16, #tpu.memory_space<vmem>>, vector<1x32x32xbf16>
    %140 = vector.shape_cast %139 : vector<1x32x32xbf16> to vector<32x32xbf16>
    %cst_147 = arith.constant dense<0.000000e+00> : vector<128x32xf32>
    %141 = tpu.matmul %138, %140, %cst_147 {dimension_numbers = #tpu.dot_dimension_numbers<[1], [0], [0], [1], [0, 0, 1, 1], [], []>} : vector<128x32xbf16>, vector<32x32xbf16>, vector<128x32xf32> -> vector<128x32xf32>
    %142 = arith.addf %136, %141 : vector<128x32xf32>
    %c2_148 = arith.constant 2 : index
    %c1_149 = arith.constant 1 : index
    %c0_150 = arith.constant 0 : index
    %143 = vector.load %arg11[%c2_148, %c1_149, %c0_150] : memref<10x18x32xbf16, #tpu.memory_space<vmem>>, vector<8x16x32xbf16>
    %144 = vector.shape_cast %143 : vector<8x16x32xbf16> to vector<128x32xbf16>
    %c7_151 = arith.constant 7 : index
    %c0_152 = arith.constant 0 : index
    %c0_153 = arith.constant 0 : index
    %145 = vector.load %arg7[%c7_151, %c0_152, %c0_153] : memref<9x32x32xbf16, #tpu.memory_space<vmem>>, vector<1x32x32xbf16>
    %146 = vector.shape_cast %145 : vector<1x32x32xbf16> to vector<32x32xbf16>
    %cst_154 = arith.constant dense<0.000000e+00> : vector<128x32xf32>
    %147 = tpu.matmul %144, %146, %cst_154 {dimension_numbers = #tpu.dot_dimension_numbers<[1], [0], [0], [1], [0, 0, 1, 1], [], []>} : vector<128x32xbf16>, vector<32x32xbf16>, vector<128x32xf32> -> vector<128x32xf32>
    %148 = arith.addf %142, %147 : vector<128x32xf32>
    %c2_155 = arith.constant 2 : index
    %c2_156 = arith.constant 2 : index
    %c0_157 = arith.constant 0 : index
    %149 = vector.load %arg11[%c2_155, %c2_156, %c0_157] : memref<10x18x32xbf16, #tpu.memory_space<vmem>>, vector<8x16x32xbf16>
    %150 = vector.shape_cast %149 : vector<8x16x32xbf16> to vector<128x32xbf16>
    %c8_158 = arith.constant 8 : index
    %c0_159 = arith.constant 0 : index
    %c0_160 = arith.constant 0 : index
    %151 = vector.load %arg7[%c8_158, %c0_159, %c0_160] : memref<9x32x32xbf16, #tpu.memory_space<vmem>>, vector<1x32x32xbf16>
    %152 = vector.shape_cast %151 : vector<1x32x32xbf16> to vector<32x32xbf16>
    %cst_161 = arith.constant dense<0.000000e+00> : vector<128x32xf32>
    %153 = tpu.matmul %150, %152, %cst_161 {dimension_numbers = #tpu.dot_dimension_numbers<[1], [0], [0], [1], [0, 0, 1, 1], [], []>} : vector<128x32xbf16>, vector<32x32xbf16>, vector<128x32xf32> -> vector<128x32xf32>
    %154 = arith.addf %148, %153 : vector<128x32xf32>
    %c0_162 = arith.constant 0 : index
    %c0_163 = arith.constant 0 : index
    %155 = vector.load %arg8[%c0_162, %c0_163] : memref<1x32xf32, #tpu.memory_space<vmem>>, vector<1x32xf32>
    %156 = vector.broadcast %155 : vector<1x32xf32> to vector<128x32xf32>
    %157 = arith.addf %154, %156 : vector<128x32xf32>
    %c0_164 = arith.constant 0 : index
    %c0_165 = arith.constant 0 : index
    %c0_166 = arith.constant 0 : index
    %c0_167 = arith.constant 0 : index
    %158 = vector.load %arg2[%c0_164, %c0_165, %c0_166, %c0_167] : memref<1x8x16x32xf32, #tpu.memory_space<vmem>>, vector<1x8x16x32xf32>
    %159 = vector.shape_cast %158 : vector<1x8x16x32xf32> to vector<8x16x32xf32>
    %160 = vector.shape_cast %159 : vector<8x16x32xf32> to vector<128x32xf32>
    %161 = arith.addf %160, %157 : vector<128x32xf32>
    %162 = vector.shape_cast %161 : vector<128x32xf32> to vector<8x16x32xf32>
    %c0_168 = arith.constant 0 : index
    %c0_169 = arith.constant 0 : index
    %c0_170 = arith.constant 0 : index
    %c0_171 = arith.constant 0 : index
    %163 = vector.load %arg9[%c0_168, %c0_169, %c0_170, %c0_171] : memref<1x8x16x32xf32, #tpu.memory_space<vmem>>, vector<1x8x16x32xf32>
    %164 = vector.shape_cast %163 : vector<1x8x16x32xf32> to vector<8x16x32xf32>
    %165 = vector.shape_cast %162 : vector<8x16x32xf32> to vector<1x8x16x32xf32>
    tpu.vector_store %arg9[%c0_168, %c0_169, %c0_170, %c0_171], %165 {strides = array<i32>} : memref<1x8x16x32xf32, #tpu.memory_space<vmem>>, vector<1x8x16x32xf32>,
    return
  }
  func.func @transform_0(%arg0: i32, %arg1: i32) -> (i32, i32, i32, i32) {
    %c0_i32 = arith.constant 0 : i32
    %c0_i32_0 = arith.constant 0 : i32
    %c0_i32_1 = arith.constant 0 : i32
    return %arg0, %arg1, %c0_i32, %c0_i32_0 : i32, i32, i32, i32
  }
  func.func @transform_1(%arg0: i32, %arg1: i32) -> (i32, i32, i32, i32) {
    %c4_i32 = arith.constant 4 : i32
    %0 = arith.muli %arg1, %c4_i32 : i32
    %c1_i32 = arith.constant 1 : i32
    %1 = arith.subi %0, %c1_i32 : i32
    %c0_i32 = arith.constant 0 : i32
    %2 = arith.maxsi %1, %c0_i32 : i32
    %c0_i32_0 = arith.constant 0 : i32
    %c0_i32_1 = arith.constant 0 : i32
    %c0_i32_2 = arith.constant 0 : i32
    return %arg0, %2, %c0_i32_0, %c0_i32_1 : i32, i32, i32, i32
  }
  func.func @transform_2(%arg0: i32, %arg1: i32) -> (i32, i32, i32, i32) {
    %c1_i32 = arith.constant 1 : i32
    %0 = arith.addi %arg1, %c1_i32 : i32
    %c4_i32 = arith.constant 4 : i32
    %1 = arith.muli %0, %c4_i32 : i32
    %c7_i32 = arith.constant 7 : i32
    %2 = arith.minsi %1, %c7_i32 : i32
    %c0_i32 = arith.constant 0 : i32
    %c0_i32_0 = arith.constant 0 : i32
    %c0_i32_1 = arith.constant 0 : i32
    return %arg0, %2, %c0_i32, %c0_i32_0 : i32, i32, i32, i32
  }
  func.func @transform_3(%arg0: i32, %arg1: i32) -> (i32, i32, i32) {
    %c0_i32 = arith.constant 0 : i32
    %c0_i32_0 = arith.constant 0 : i32
    %c0_i32_1 = arith.constant 0 : i32
    %c0_i32_2 = arith.constant 0 : i32
    return %c0_i32, %c0_i32_0, %c0_i32_1 : i32, i32, i32
  }
  func.func @transform_4(%arg0: i32, %arg1: i32) -> (i32, i32) {
    %c0_i32 = arith.constant 0 : i32
    %c0_i32_0 = arith.constant 0 : i32
    %c0_i32_1 = arith.constant 0 : i32
    return %c0_i32, %c0_i32_0 : i32, i32
  }
  func.func @transform_5(%arg0: i32, %arg1: i32) -> (i32, i32, i32) {
    %c0_i32 = arith.constant 0 : i32
    %c0_i32_0 = arith.constant 0 : i32
    %c0_i32_1 = arith.constant 0 : i32
    %c0_i32_2 = arith.constant 0 : i32
    return %c0_i32, %c0_i32_0, %c0_i32_1 : i32, i32, i32
  }
  func.func @transform_6(%arg0: i32, %arg1: i32) -> (i32, i32) {
    %c0_i32 = arith.constant 0 : i32
    %c0_i32_0 = arith.constant 0 : i32
    %c0_i32_1 = arith.constant 0 : i32
    return %c0_i32, %c0_i32_0 : i32, i32
  }
  func.func @transform_7(%arg0: i32, %arg1: i32) -> (i32, i32, i32, i32) {
    %c0_i32 = arith.constant 0 : i32
    %c0_i32_0 = arith.constant 0 : i32
    %c0_i32_1 = arith.constant 0 : i32
    return %arg0, %arg1, %c0_i32, %c0_i32_0 : i32, i32, i32, i32
  }
}

</mosaic_0001>

<llo_original>
// kernel: tpu_custom_call.1
$region0: #{tpu_custom_call.1}
  #allocation0 [shape = 'u32[]', space=smem, size = 0x4, offset = 0x4, fixed_abs, tag = 'smem constant byte address 0x4 - core index']
  #allocation1 [shape = 'u32[144,128]{1,0:T(1,128)}', space=vmem, size = 0x12000, scoped, tag = 'internal scratch']
  #allocation2 [shape = 'bf16[12,18,32]{2,1,0:T(8,128)(2,1)}', space=vmem, size = 0x12000, scoped, tag = 'scratch operand']
  #allocation3 [shape = 'bf16[10,18,32]{2,1,0:T(8,128)(2,1)}', space=vmem, size = 0xf000, scoped, tag = 'scratch operand']
  %s0 = inlined_call_operand.hbm [shape: f32[2,16,16,32], index: 0, kind: input, shape index: {}]
  %s1 = inlined_call_operand.hbm [shape: f32[2,16,16,32], index: 1, kind: input, shape index: {}]
  %s2 = inlined_call_operand.hbm [shape: f32[2,16,16,32], index: 2, kind: input, shape index: {}]
  %s3 = inlined_call_operand.hbm [shape: bf16[9,32,32], index: 3, kind: input, shape index: {}]
  %s4 = inlined_call_operand.vmem [shape: f32[1,32], index: 4, kind: input, shape index: {}]
  %s5 = inlined_call_operand.hbm [shape: bf16[9,32,32], index: 5, kind: input, shape index: {}]
  %s6 = inlined_call_operand.vmem [shape: f32[1,32], index: 6, kind: input, shape index: {}]
  %s7 = inlined_call_operand.hbm [shape: f32[2,16,16,32], index: 7, kind: output, shape index: {}]
  %s8 = sld [smem:[#allocation0]]
  $region81: #{tpu_custom_call.1} parent=0
    _
  %s10 = ssub.s32 1, %s8
  %s11 = scalar_select 0, %s10, %s8
  $region1: #{tpu_custom_call.1} parent=0
    #allocation4 [shape = 'u8[131072]{0}', space=vmem, size = 0x20000, scoped, tag = 'input window, operand 0']
    #allocation5 [shape = 's32[2]{0}', space=sflag, size = 0x8, scoped, tag = 'scoped memory for tpu_custom_call.1']
    #allocation6 [shape = 's32[2]{0}', space=sflag, size = 0x8, scoped, tag = 'scoped memory for tpu_custom_call.1']
    #allocation7 [shape = 'u8[32768]{0}', space=vmem, size = 0x8000, scoped, tag = 'input window, operand 1']
    #allocation8 [shape = 's32[2]{0}', space=sflag, size = 0x8, scoped, tag = 'scoped memory for tpu_custom_call.1']
    #allocation9 [shape = 'u8[32768]{0}', space=vmem, size = 0x8000, scoped, tag = 'input window, operand 2']
    #allocation10 [shape = 'u8[73728]{0}', space=vmem, size = 0x12000, scoped, tag = 'input window, operand 3, single buffered']
    #allocation11 [shape = 's32[1]{0}', space=sflag, size = 0x4, scoped, tag = 'scoped memory for tpu_custom_call.1']
    #allocation12 [shape = 'u8[73728]{0}', space=vmem, size = 0x12000, scoped, tag = 'input window, operand 5, single buffered']
    #allocation13 [shape = 'u8[131072]{0}', space=vmem, size = 0x20000, scoped, tag = 'output window, operand 0']
    %12 = vsyncpa [#allocation5], 0
    %s13 = scalar_lea.sflag [#allocation5], 1
    %14 = vsyncpa %s13, 0
    %15 = vsyncpa [#allocation8], 0
    %s16 = scalar_lea.sflag [#allocation8], 1
    %17 = vsyncpa %s16, 0
    %18 = vsyncpa [#allocation11], 0
    %19 = vsyncpa [#allocation6], 0
    %s20 = scalar_lea.sflag [#allocation6], 1
    %21 = vsyncpa %s20, 0
    loop: start=0, step=1, limit=6
    $region2: #{tpu_custom_call.1} parent=1 // loop_pre_header
      _
    $region3: #{tpu_custom_call.1} parent=1 // loop_header
      %s23 = sphi 0, %s27
      %p24 = scmp.ge.s32.totalorder %s23, 6
      %s30 = sphi 0, %s42
      %s31 = sphi 0, %s38
      %s32 = sphi 0, %s30
      %s33 = sphi 0, %s31
      %s34 = sphi 0, %s32
      %s35 = sphi 0, %s33
      %s47 = sphi 0, %s49
      %s50 = sphi 0, %s47
      %s51 = sphi 0, %s50
      %s67 = sphi 0, %s51
      %s83 = sphi 0, %s85
      %s86 = sphi 0, %s83
      %s87 = sphi 0, %s86
      %s103 = sphi 0, %s87
      %s119 = sphi 0, %s121
      %s122 = sphi 0, %s119
      %s123 = sphi 0, %s122
      %s139 = sphi 0, %s123
      %s143 = sphi 0, %s143
      %s145 = sphi 0, %s143
      %s146 = sphi 0, %s145
      %s160 = sphi 0, %s146
      %s164 = sphi 0, %s164
      %s166 = sphi 0, %s164
      %s167 = sphi 0, %s166
      %s181 = sphi 0, %s167
      %s185 = sphi 0, %s185
      %s187 = sphi 0, %s185
      %s188 = sphi 0, %s187
      %s202 = sphi 0, %s188
      %s206 = sphi 0, %s206
      %s208 = sphi 0, %s206
      %s209 = sphi 0, %s208
      %s223 = sphi 0, %s209
      %s231 = sphi 0, %s233
      %s234 = sphi 0, %s231
      %s235 = sphi 0, %s234
      %s251 = sphi 0, %s235
    $region4: #{tpu_custom_call.1} parent=1 // loop_header_branch
      %26 = sbr.rel (%p24) target = $region8
    $region5: #{tpu_custom_call.1} parent=1 // loop_body
      %s28 = ssub.s32 %s23, 1
      %s29 = ssub.s32 %s23, 2
      %s36 = sadd.s32 1, %s31
      %p37 = scmp.ge.s32.totalorder %s36, 2
      %s38 = scalar_select %p37, 0, %s36
      %s39 = sadd.s32 1, %s30
      %s40 = scalar_select %p37, %s39, %s30
      %p41 = scmp.ge.s32.totalorder %s40, 2
      %s42 = scalar_select %p41, 0, %s40
      %s43 = ssub.s32 %s30, %s42
      %s44 = ssub.s32 %s31, %s38
      %s45 = sor.u32 %s43, %s44
      %p46 = scmp.eq.s32.totalorder %s45, 0
      %s48 = sadd.s32 %s47, 1
      %s49 = scalar_select %p46, %s47, %s48
      %p52 = pneg %p46
      %p53 = scmp.eq.s32.totalorder %s23, 3
      %p54 = por %p52, %p53
      %p55 = scmp.ne.s32.totalorder %s47, %s50
      %p56 = scmp.eq.s32.totalorder %s23, 0
      %p57 = por %p55, %p56
      %p58 = scmp.ne.s32.totalorder %s47, %s50
      %p59 = scmp.eq.s32.totalorder %s28, 3
      %p60 = por %p58, %p59
      %p61 = scmp.ne.s32.totalorder %s50, %s51
      %p62 = scmp.eq.s32.totalorder %s28, 0
      %p63 = por %p61, %p62
      %p64 = scmp.ne.s32.totalorder %s50, %s51
      %p65 = scmp.eq.s32.totalorder %s29, 3
      %p66 = por %p64, %p65
      %p68 = scmp.ne.s32.totalorder %s51, %s67
      %p69 = scmp.eq.s32.totalorder %s29, 0
      %p70 = por %p68, %p69
      %s71 = smul.u32 %s31, 4
      %s72 = ssub.s32 %s71, 1
      %p73 = scmp.gt.s32.totalorder %s72, 0
      %s74 = scalar_select %p73, %s72, 0
      %s75 = smul.u32 %s38, 4
      %s76 = ssub.s32 %s75, 1
      %p77 = scmp.gt.s32.totalorder %s76, 0
      %s78 = scalar_select %p77, %s76, 0
      %s79 = ssub.s32 %s30, %s42
      %s80 = ssub.s32 %s74, %s78
      %s81 = sor.u32 %s79, %s80
      %p82 = scmp.eq.s32.totalorder %s81, 0
      %s84 = sadd.s32 %s83, 1
      %s85 = scalar_select %p82, %s83, %s84
      %p88 = pneg %p82
      %p89 = scmp.eq.s32.totalorder %s23, 3
      %p90 = por %p88, %p89
      %p91 = scmp.ne.s32.totalorder %s83, %s86
      %p92 = scmp.eq.s32.totalorder %s23, 0
      %p93 = por %p91, %p92
      %p94 = scmp.ne.s32.totalorder %s83, %s86
      %p95 = scmp.eq.s32.totalorder %s28, 3
      %p96 = por %p94, %p95
      %p97 = scmp.ne.s32.totalorder %s86, %s87
      %p98 = scmp.eq.s32.totalorder %s28, 0
      %p99 = por %p97, %p98
      %p100 = scmp.ne.s32.totalorder %s86, %s87
      %p101 = scmp.eq.s32.totalorder %s29, 3
      %p102 = por %p100, %p101
      %p104 = scmp.ne.s32.totalorder %s87, %s103
      %p105 = scmp.eq.s32.totalorder %s29, 0
      %p106 = por %p104, %p105
      %s107 = sadd.s32 %s31, 1
      %s108 = smul.u32 %s107, 4
      %p109 = scmp.lt.s32.totalorder %s108, 7
      %s110 = scalar_select %p109, %s108, 7
      %s111 = sadd.s32 %s38, 1
      %s112 = smul.u32 %s111, 4
      %p113 = scmp.lt.s32.totalorder %s112, 7
      %s114 = scalar_select %p113, %s112, 7
      %s115 = ssub.s32 %s30, %s42
      %s116 = ssub.s32 %s110, %s114
      %s117 = sor.u32 %s115, %s116
      %p118 = scmp.eq.s32.totalorder %s117, 0
      %s120 = sadd.s32 %s119, 1
      %s121 = scalar_select %p118, %s119, %s120
      %p124 = pneg %p118
      %p125 = scmp.eq.s32.totalorder %s23, 3
      %p126 = por %p124, %p125
      %p127 = scmp.ne.s32.totalorder %s119, %s122
      %p128 = scmp.eq.s32.totalorder %s23, 0
      %p129 = por %p127, %p128
      %p130 = scmp.ne.s32.totalorder %s119, %s122
      %p131 = scmp.eq.s32.totalorder %s28, 3
      %p132 = por %p130, %p131
      %p133 = scmp.ne.s32.totalorder %s122, %s123
      %p134 = scmp.eq.s32.totalorder %s28, 0
      %p135 = por %p133, %p134
      %p136 = scmp.ne.s32.totalorder %s122, %s123
      %p137 = scmp.eq.s32.totalorder %s29, 3
      %p138 = por %p136, %p137
      %p140 = scmp.ne.s32.totalorder %s123, %s139
      %p141 = scmp.eq.s32.totalorder %s29, 0
      %p142 = por %p140, %p141
      %s144 = sadd.s32 %s143, 1
      %p147 = scmp.eq.s32.totalorder %s23, 3
      %p148 = scmp.ne.s32.totalorder %s143, %s145
      %p149 = scmp.eq.s32.totalorder %s23, 0
      %p150 = por %p148, %p149
      %p151 = scmp.ne.s32.totalorder %s143, %s145
      %p152 = scmp.eq.s32.totalorder %s28, 3
      %p153 = por %p151, %p152
      %p154 = scmp.ne.s32.totalorder %s145, %s146
      %p155 = scmp.eq.s32.totalorder %s28, 0
      %p156 = por %p154, %p155
      %p157 = scmp.ne.s32.totalorder %s145, %s146
      %p158 = scmp.eq.s32.totalorder %s29, 3
      %p159 = por %p157, %p158
      %p161 = scmp.ne.s32.totalorder %s146, %s160
      %p162 = scmp.eq.s32.totalorder %s29, 0
      %p163 = por %p161, %p162
      %s165 = sadd.s32 %s164, 1
      %p168 = scmp.eq.s32.totalorder %s23, 3
      %p169 = scmp.ne.s32.totalorder %s164, %s166
      %p170 = scmp.eq.s32.totalorder %s23, 0
      %p171 = por %p169, %p170
      %p172 = scmp.ne.s32.totalorder %s164, %s166
      %p173 = scmp.eq.s32.totalorder %s28, 3
      %p174 = por %p172, %p173
      %p175 = scmp.ne.s32.totalorder %s166, %s167
      %p176 = scmp.eq.s32.totalorder %s28, 0
      %p177 = por %p175, %p176
      %p178 = scmp.ne.s32.totalorder %s166, %s167
      %p179 = scmp.eq.s32.totalorder %s29, 3
      %p180 = por %p178, %p179
      %p182 = scmp.ne.s32.totalorder %s167, %s181
      %p183 = scmp.eq.s32.totalorder %s29, 0
      %p184 = por %p182, %p183
      %s186 = sadd.s32 %s185, 1
      %p189 = scmp.eq.s32.totalorder %s23, 3
      %p190 = scmp.ne.s32.totalorder %s185, %s187
      %p191 = scmp.eq.s32.totalorder %s23, 0
      %p192 = por %p190, %p191
      %p193 = scmp.ne.s32.totalorder %s185, %s187
      %p194 = scmp.eq.s32.totalorder %s28, 3
      %p195 = por %p193, %p194
      %p196 = scmp.ne.s32.totalorder %s187, %s188
      %p197 = scmp.eq.s32.totalorder %s28, 0
      %p198 = por %p196, %p197
      %p199 = scmp.ne.s32.totalorder %s187, %s188
      %p200 = scmp.eq.s32.totalorder %s29, 3
      %p201 = por %p199, %p200
      %p203 = scmp.ne.s32.totalorder %s188, %s202
      %p204 = scmp.eq.s32.totalorder %s29, 0
      %p205 = por %p203, %p204
      %s207 = sadd.s32 %s206, 1
      %p210 = scmp.eq.s32.totalorder %s23, 3
      %p211 = scmp.ne.s32.totalorder %s206, %s208
      %p212 = scmp.eq.s32.totalorder %s23, 0
      %p213 = por %p211, %p212
      %p214 = scmp.ne.s32.totalorder %s206, %s208
      %p215 = scmp.eq.s32.totalorder %s28, 3
      %p216 = por %p214, %p215
      %p217 = scmp.ne.s32.totalorder %s208, %s209
      %p218 = scmp.eq.s32.totalorder %s28, 0
      %p219 = por %p217, %p218
      %p220 = scmp.ne.s32.totalorder %s208, %s209
      %p221 = scmp.eq.s32.totalorder %s29, 3
      %p222 = por %p220, %p221
      %p224 = scmp.ne.s32.totalorder %s209, %s223
      %p225 = scmp.eq.s32.totalorder %s29, 0
      %p226 = por %p224, %p225
      %s227 = ssub.s32 %s30, %s42
      %s228 = ssub.s32 %s31, %s38
      %s229 = sor.u32 %s227, %s228
      %p230 = scmp.eq.s32.totalorder %s229, 0
      %s232 = sadd.s32 %s231, 1
      %s233 = scalar_select %p230, %s231, %s232
      %p236 = pneg %p230
      %p237 = scmp.eq.s32.totalorder %s23, 3
      %p238 = por %p236, %p237
      %p239 = scmp.ne.s32.totalorder %s231, %s234
      %p240 = scmp.eq.s32.totalorder %s23, 0
      %p241 = por %p239, %p240
      %p242 = scmp.ne.s32.totalorder %s231, %s234
      %p243 = scmp.eq.s32.totalorder %s28, 3
      %p244 = por %p242, %p243
      %p245 = scmp.ne.s32.totalorder %s234, %s235
      %p246 = scmp.eq.s32.totalorder %s28, 0
      %p247 = por %p245, %p246
      %p248 = scmp.ne.s32.totalorder %s234, %s235
      %p249 = scmp.eq.s32.totalorder %s29, 3
      %p250 = por %p248, %p249
      %p252 = scmp.ne.s32.totalorder %s235, %s251
      %p253 = scmp.eq.s32.totalorder %s29, 0
      %p254 = por %p252, %p253
      %p255 = scmp.le.s32.totalorder 1, %s23
      %p256 = scmp.lt.s32.totalorder %s23, 5
      %p257 = pnand %p255, %p256
      %p258 = pneg %p257
      // Predicated region
      $region9: #{tpu_custom_call.1} parent=5 // pred_check
        _
      $region10: #{tpu_custom_call.1} parent=5 // pred_check_branch
        %260 = sbr.rel (%p257) target = $region12
      $region11: #{tpu_custom_call.1} parent=5 // pred_region
        %s261 = ssub.s32 %s23, 1
        // Predicated region
        $region13: #{tpu_custom_call.1} parent=11 // pred_check
          %p262 = pneg %p156
        $region14: #{tpu_custom_call.1} parent=11 // pred_check_branch
          %264 = sbr.rel (%p262) target = $region16
        $region15: #{tpu_custom_call.1} parent=11 // pred_region
          %s266 = ssub.s32 2304, 2304
          %267 = vsyncadd [#allocation11], %s266
          %s268 = sshll.u32 [#allocation10], 4
          %s269 = int_to_ptr.vmem [resolvable:$true] %s268
          %274 = dma.hbm_to_vmem [thread:$0]  %s3, 2304, %s269, [#allocation11], 64, 64, 4
        $region16: #{tpu_custom_call.1} parent=11 // pred_fallthru
          _
        // Predicated region
        $region17: #{tpu_custom_call.1} parent=11 // pred_check
          %p275 = pneg %p177
        $region18: #{tpu_custom_call.1} parent=11 // pred_check_branch
          %277 = sbr.rel (%p275) target = $region20
        $region19: #{tpu_custom_call.1} parent=11 // pred_region
          _
        $region20: #{tpu_custom_call.1} parent=11 // pred_fallthru
          _
        // Predicated region
        $region21: #{tpu_custom_call.1} parent=11 // pred_check
          %p278 = pneg %p198
        $region22: #{tpu_custom_call.1} parent=11 // pred_check_branch
          %280 = sbr.rel (%p278) target = $region24
        $region23: #{tpu_custom_call.1} parent=11 // pred_region
          %s282 = ssub.s32 2304, 2304
          %283 = vsyncadd [#allocation11], %s282
          %s284 = sshll.u32 [#allocation12], 4
          %s285 = int_to_ptr.vmem [resolvable:$true] %s284
          %290 = dma.hbm_to_vmem [thread:$0]  %s5, 2304, %s285, [#allocation11], 64, 64, 4
        $region24: #{tpu_custom_call.1} parent=11 // pred_fallthru
          _
        // Predicated region
        $region25: #{tpu_custom_call.1} parent=11 // pred_check
          %p291 = pneg %p219
        $region26: #{tpu_custom_call.1} parent=11 // pred_check_branch
          %293 = sbr.rel (%p291) target = $region28
        $region27: #{tpu_custom_call.1} parent=11 // pred_region
          _
        $region28: #{tpu_custom_call.1} parent=11 // pred_fallthru
          _
      $region12: #{tpu_custom_call.1} parent=5 // pred_fallthru
        _
      %p294 = scmp.lt.s32.totalorder %s23, 4
      // Predicated region
      $region29: #{tpu_custom_call.1} parent=5 // pred_check
        %p295 = pneg %p294
      $region30: #{tpu_custom_call.1} parent=5 // pred_check_branch
        %297 = sbr.rel (%p295) target = $region32
      $region31: #{tpu_custom_call.1} parent=5 // pred_region
        // Predicated region
        $region33: #{tpu_custom_call.1} parent=31 // pred_check
          %p298 = pneg %p57
        $region34: #{tpu_custom_call.1} parent=31 // pred_check_branch
          %300 = sbr.rel (%p298) target = $region36
        $region35: #{tpu_custom_call.1} parent=31 // pred_region
          %s301 = sand.u32 %s47, 1
          %s302 = scalar_lea.sflag [#allocation5], %s301
          %s303 = sand.u32 %s47, 1
          %s304 = smul.addr %s303, 128
          %s305 = scalar_lea.vmem [#allocation4], %s304
          %s306 = smul.u32 8, %s31
          %s308 = ssub.s32 2048, 2048
          %309 = vsyncadd %s302, %s308
          %s310 = smul.addr %s306, 2
          %s311 = smul.addr %s30, 32
          %s312 = sadd.s32 %s310, %s311
          %s313 = smul.addr %s312, 128
          %s314 = scalar_lea.hbm %s0, %s313
          %s315 = sshll.u32 %s305, 4
          %s316 = int_to_ptr.vmem [resolvable:$true] %s315
          %321 = dma.hbm_to_vmem [thread:$0]  %s314, 2048, %s316, %s302, 128, 128, 8
        $region36: #{tpu_custom_call.1} parent=31 // pred_fallthru
          _
        // Predicated region
        $region37: #{tpu_custom_call.1} parent=31 // pred_check
          %p322 = pneg %p93
        $region38: #{tpu_custom_call.1} parent=31 // pred_check_branch
          %324 = sbr.rel (%p322) target = $region40
        $region39: #{tpu_custom_call.1} parent=31 // pred_region
          %s325 = sand.u32 %s23, 1
          %s326 = scalar_lea.sflag [#allocation8], %s325
          %s327 = sand.u32 %s83, 1
          %s328 = smul.addr %s327, 32
          %s329 = scalar_lea.vmem [#allocation7], %s328
          %s330 = smul.u32 %s31, 4
          %s331 = ssub.s32 %s330, 1
          %p332 = scmp.gt.s32.totalorder %s331, 0
          %s333 = scalar_select %p332, %s331, 0
          %s334 = smul.u32 2, %s333
          %s336 = ssub.s32 512, 512
          %337 = vsyncadd %s326, %s336
          %s338 = smul.addr %s334, 2
          %s339 = smul.addr %s30, 32
          %s340 = sadd.s32 %s338, %s339
          %s341 = smul.addr %s340, 128
          %s342 = scalar_lea.hbm %s1, %s341
          %s343 = sshll.u32 %s329, 4
          %s344 = int_to_ptr.vmem [resolvable:$true] %s343
          %349 = dma.hbm_to_vmem [thread:$0]  %s342, 512, %s344, %s326, 128, 128, 8
        $region40: #{tpu_custom_call.1} parent=31 // pred_fallthru
          _
        // Predicated region
        $region41: #{tpu_custom_call.1} parent=31 // pred_check
          %p350 = pneg %p129
        $region42: #{tpu_custom_call.1} parent=31 // pred_check_branch
          %352 = sbr.rel (%p350) target = $region44
        $region43: #{tpu_custom_call.1} parent=31 // pred_region
          %s353 = sand.u32 %s23, 1
          %s354 = scalar_lea.sflag [#allocation8], %s353
          %s355 = sand.u32 %s119, 1
          %s356 = smul.addr %s355, 32
          %s357 = scalar_lea.vmem [#allocation9], %s356
          %s358 = sadd.s32 %s31, 1
          %s359 = smul.u32 %s358, 4
          %p360 = scmp.lt.s32.totalorder %s359, 7
          %s361 = scalar_select %p360, %s359, 7
          %s362 = smul.u32 2, %s361
          %s364 = ssub.s32 512, 512
          %365 = vsyncadd %s354, %s364
          %s366 = smul.addr %s362, 2
          %s367 = smul.addr %s30, 32
          %s368 = sadd.s32 %s366, %s367
          %s369 = smul.addr %s368, 128
          %s370 = scalar_lea.hbm %s2, %s369
          %s371 = sshll.u32 %s357, 4
          %s372 = int_to_ptr.vmem [resolvable:$true] %s371
          %377 = dma.hbm_to_vmem [thread:$0]  %s370, 512, %s372, %s354, 128, 128, 8
        $region44: #{tpu_custom_call.1} parent=31 // pred_fallthru
          _
      $region32: #{tpu_custom_call.1} parent=5 // pred_fallthru
        _
      %p378 = scmp.le.s32.totalorder 1, %s23
      %p379 = scmp.lt.s32.totalorder %s23, 5
      %p380 = pnand %p378, %p379
      %p381 = pneg %p380
      // Predicated region
      $region45: #{tpu_custom_call.1} parent=5 // pred_check
        _
      $region46: #{tpu_custom_call.1} parent=5 // pred_check_branch
        %383 = sbr.rel (%p380) target = $region48
      $region47: #{tpu_custom_call.1} parent=5 // pred_region
        %s384 = ssub.s32 %s23, 1
        %s385 = sand.u32 %s50, 1
        %s386 = scalar_lea.sflag [#allocation5], %s385
        %s387 = sand.u32 %s50, 1
        %s388 = smul.addr %s387, 128
        %s389 = scalar_lea.vmem [#allocation4], %s388
        // Predicated region
        $region49: #{tpu_custom_call.1} parent=47 // pred_check
          %p390 = pneg %p63
        $region50: #{tpu_custom_call.1} parent=47 // pred_check_branch
          %392 = sbr.rel (%p390) target = $region52
        $region51: #{tpu_custom_call.1} parent=47 // pred_region
          %393 = dma.done %s386, 2048
        $region52: #{tpu_custom_call.1} parent=47 // pred_fallthru
          _
        %s394 = sand.u32 %s28, 1
        %s395 = scalar_lea.sflag [#allocation8], %s394
        %s396 = sand.u32 %s86, 1
        %s397 = smul.addr %s396, 32
        %s398 = scalar_lea.vmem [#allocation7], %s397
        // Predicated region
        $region53: #{tpu_custom_call.1} parent=47 // pred_check
          %p399 = pneg %p99
        $region54: #{tpu_custom_call.1} parent=47 // pred_check_branch
          %401 = sbr.rel (%p399) target = $region56
        $region55: #{tpu_custom_call.1} parent=47 // pred_region
          %402 = dma.done %s395, 512
        $region56: #{tpu_custom_call.1} parent=47 // pred_fallthru
          _
        %s403 = sand.u32 %s28, 1
        %s404 = scalar_lea.sflag [#allocation8], %s403
        %s405 = sand.u32 %s122, 1
        %s406 = smul.addr %s405, 32
        %s407 = scalar_lea.vmem [#allocation9], %s406
        // Predicated region
        $region57: #{tpu_custom_call.1} parent=47 // pred_check
          %p408 = pneg %p135
        $region58: #{tpu_custom_call.1} parent=47 // pred_check_branch
          %410 = sbr.rel (%p408) target = $region60
        $region59: #{tpu_custom_call.1} parent=47 // pred_region
          %411 = dma.done %s404, 512
        $region60: #{tpu_custom_call.1} parent=47 // pred_fallthru
          _
        // Predicated region
        $region61: #{tpu_custom_call.1} parent=47 // pred_check
          %p412 = pneg %p156
        $region62: #{tpu_custom_call.1} parent=47 // pred_check_branch
          %414 = sbr.rel (%p412) target = $region64
        $region63: #{tpu_custom_call.1} parent=47 // pred_region
          %415 = dma.done [#allocation11], 2304
        $region64: #{tpu_custom_call.1} parent=47 // pred_fallthru
          _
        // Predicated region
        $region65: #{tpu_custom_call.1} parent=47 // pred_check
          %p416 = pneg %p198
        $region66: #{tpu_custom_call.1} parent=47 // pred_check_branch
          %418 = sbr.rel (%p416) target = $region68
        $region67: #{tpu_custom_call.1} parent=47 // pred_region
          %419 = dma.done [#allocation11], 2304
        $region68: #{tpu_custom_call.1} parent=47 // pred_fallthru
          _
        %s420 = sand.u32 %s50, 1
        %s421 = scalar_lea.sflag [#allocation5], %s420
        %s422 = sand.u32 %s50, 1
        %s423 = smul.addr %s422, 128
        %s424 = scalar_lea.vmem [#allocation4], %s423
        %p425 = pneg %p63
        %p426 = pneg %p60
        %s427 = sand.u32 %s28, 1
        %s428 = scalar_lea.sflag [#allocation8], %s427
        %s429 = sand.u32 %s86, 1
        %s430 = smul.addr %s429, 32
        %s431 = scalar_lea.vmem [#allocation7], %s430
        %p432 = pneg %p99
        %p433 = pneg %p96
        %s434 = sand.u32 %s28, 1
        %s435 = scalar_lea.sflag [#allocation8], %s434
        %s436 = sand.u32 %s122, 1
        %s437 = smul.addr %s436, 32
        %s438 = scalar_lea.vmem [#allocation9], %s437
        %p439 = pneg %p135
        %p440 = pneg %p132
        %p441 = pneg %p156
        %p442 = pneg %p153
        %p443 = pneg %p177
        %p444 = pneg %p174
        %p445 = pneg %p198
        %p446 = pneg %p195
        %p447 = pneg %p219
        %p448 = pneg %p216
        %p449 = pneg %p247
        %p450 = pneg %p244
        %s451 = sand.u32 %s234, 1
        %s452 = scalar_lea.sflag [#allocation6], %s451
        %s453 = sand.u32 %s234, 1
        %s454 = smul.addr %s453, 128
        %s455 = scalar_lea.vmem [#allocation13], %s454
        %s456 = smul.u32 8, %s33
        %s457 = smul.u32 %s33, 4
        %s458 = ssub.s32 %s457, 1
        %p459 = scmp.gt.s32.totalorder %s458, 0
        %s460 = scalar_select %p459, %s458, 0
        %s461 = smul.u32 2, %s460
        %s462 = sadd.s32 %s33, 1
        %s463 = smul.u32 %s462, 4
        %p464 = scmp.lt.s32.totalorder %s463, 7
        %s465 = scalar_select %p464, %s463, 7
        %s466 = smul.u32 2, %s465
        %s467 = smul.u32 8, %s33
        %vm469 = vcmask 253952
        %vm470 = vsmask.f32 256
        %vm471 = vmand %vm469, %vm470
        %v472 = vld [vmem:[#allocation2] sm:$0x1]
        %v473 = vsel %vm471, 0, %v472
        %474 = vst [vmem:[#allocation2] sm:$0x1] %v473
        %v475 = vld [vmem:[#allocation2 + $0xc] sm:$0x1]
        %v476 = vsel %vm471, 0, %v475
        %477 = vst [vmem:[#allocation2 + $0xc] sm:$0x1] %v476
        %v478 = vld [vmem:[#allocation2 + $0x18] sm:$0x1]
        %v479 = vsel %vm471, 0, %v478
        %480 = vst [vmem:[#allocation2 + $0x18] sm:$0x1] %v479
        %v481 = vld [vmem:[#allocation2 + $0x24] sm:$0x1]
        %v482 = vsel %vm471, 0, %v481
        %483 = vst [vmem:[#allocation2 + $0x24] sm:$0x1] %v482
        %v484 = vld [vmem:[#allocation2 + $0x30] sm:$0x1]
        %v485 = vsel %vm471, 0, %v484
        %486 = vst [vmem:[#allocation2 + $0x30] sm:$0x1] %v485
        %v487 = vld [vmem:[#allocation2 + $0x3c] sm:$0x1]
        %v488 = vsel %vm471, 0, %v487
        %489 = vst [vmem:[#allocation2 + $0x3c] sm:$0x1] %v488
        %v490 = vld [vmem:[#allocation2 + $0x48] sm:$0x1]
        %v491 = vsel %vm471, 0, %v490
        %492 = vst [vmem:[#allocation2 + $0x48] sm:$0x1] %v491
        %v493 = vld [vmem:[#allocation2 + $0x54] sm:$0x1]
        %v494 = vsel %vm471, 0, %v493
        %495 = vst [vmem:[#allocation2 + $0x54] sm:$0x1] %v494
        %v496 = vld [vmem:[#allocation2 + $0x60] sm:$0x1]
        %v497 = vsel %vm471, 0, %v496
        %498 = vst [vmem:[#allocation2 + $0x60] sm:$0x1] %v497
        %v499 = vld [vmem:[#allocation2 + $0x6c] sm:$0x1]
        %v500 = vsel %vm471, 0, %v499
        %501 = vst [vmem:[#allocation2 + $0x6c] sm:$0x1] %v500
        %v502 = vld [vmem:[#allocation2 + $0x78] sm:$0x1]
        %v503 = vsel %vm471, 0, %v502
        %504 = vst [vmem:[#allocation2 + $0x78] sm:$0x1] %v503
        %v505 = vld [vmem:[#allocation2 + $0x84] sm:$0x1]
        %v506 = vsel %vm471, 0, %v505
        %507 = vst [vmem:[#allocation2 + $0x84] sm:$0x1] %v506
        %vm508 = vsmask.f32 7938
        %vm509 = vmand %vm469, %vm508
        %v510 = vld [vmem:[#allocation2 + $0x8] sm:$0x1]
        %v511 = vsel %vm509, 0, %v510
        %512 = vst [vmem:[#allocation2 + $0x8] sm:$0x1] %v511
        %v513 = vld [vmem:[#allocation2 + $0x14] sm:$0x1]
        %v514 = vsel %vm509, 0, %v513
        %515 = vst [vmem:[#allocation2 + $0x14] sm:$0x1] %v514
        %v516 = vld [vmem:[#allocation2 + $0x20] sm:$0x1]
        %v517 = vsel %vm509, 0, %v516
        %518 = vst [vmem:[#allocation2 + $0x20] sm:$0x1] %v517
        %v519 = vld [vmem:[#allocation2 + $0x2c] sm:$0x1]
        %v520 = vsel %vm509, 0, %v519
        %521 = vst [vmem:[#allocation2 + $0x2c] sm:$0x1] %v520
        %v522 = vld [vmem:[#allocation2 + $0x38] sm:$0x1]
        %v523 = vsel %vm509, 0, %v522
        %524 = vst [vmem:[#allocation2 + $0x38] sm:$0x1] %v523
        %v525 = vld [vmem:[#allocation2 + $0x44] sm:$0x1]
        %v526 = vsel %vm509, 0, %v525
        %527 = vst [vmem:[#allocation2 + $0x44] sm:$0x1] %v526
        %v528 = vld [vmem:[#allocation2 + $0x50] sm:$0x1]
        %v529 = vsel %vm509, 0, %v528
        %530 = vst [vmem:[#allocation2 + $0x50] sm:$0x1] %v529
        %v531 = vld [vmem:[#allocation2 + $0x5c] sm:$0x1]
        %v532 = vsel %vm509, 0, %v531
        %533 = vst [vmem:[#allocation2 + $0x5c] sm:$0x1] %v532
        %v534 = vld [vmem:[#allocation2 + $0x68] sm:$0x1]
        %v535 = vsel %vm509, 0, %v534
        %536 = vst [vmem:[#allocation2 + $0x68] sm:$0x1] %v535
        %v537 = vld [vmem:[#allocation2 + $0x74] sm:$0x1]
        %v538 = vsel %vm509, 0, %v537
        %539 = vst [vmem:[#allocation2 + $0x74] sm:$0x1] %v538
        %v540 = vld [vmem:[#allocation2 + $0x80] sm:$0x1]
        %v541 = vsel %vm509, 0, %v540
        %542 = vst [vmem:[#allocation2 + $0x80] sm:$0x1] %v541
        %v543 = vld [vmem:[#allocation2 + $0x8c] sm:$0x1]
        %v544 = vsel %vm509, 0, %v543
        %545 = vst [vmem:[#allocation2 + $0x8c] sm:$0x1] %v544
        %v546 = vld [vmem:[%s389] sm:$0xff]
        %v547 = vld [vmem:[%s389 + $0x8] sm:$0xff]
        %v548 = vld [vmem:[%s389 + $0x10] sm:$0xff]
        %v549 = vld [vmem:[%s389 + $0x18] sm:$0xff]
        %v550 = vld [vmem:[%s389 + $0x20] sm:$0xff]
        %v551 = vld [vmem:[%s389 + $0x28] sm:$0xff]
        %v552 = vld [vmem:[%s389 + $0x30] sm:$0xff]
        %v553 = vld [vmem:[%s389 + $0x38] sm:$0xff]
        %v554 = vld [vmem:[%s389 + $0x40] sm:$0xff]
        %v555 = vld [vmem:[%s389 + $0x48] sm:$0xff]
        %v556 = vld [vmem:[%s389 + $0x50] sm:$0xff]
        %v557 = vld [vmem:[%s389 + $0x58] sm:$0xff]
        %v558 = vld [vmem:[%s389 + $0x60] sm:$0xff]
        %v559 = vld [vmem:[%s389 + $0x68] sm:$0xff]
        %v560 = vld [vmem:[%s389 + $0x70] sm:$0xff]
        %v561 = vld [vmem:[%s389 + $0x78] sm:$0xff]
        %v562 = vpack.c.bf16 %v547, %v546
        %v563 = vpack.c.bf16 %v549, %v548
        %v564 = vpack.c.bf16 %v551, %v550
        %v565 = vpack.c.bf16 %v553, %v552
        %v566 = vpack.c.bf16 %v555, %v554
        %v567 = vpack.c.bf16 %v557, %v556
        %v568 = vpack.c.bf16 %v559, %v558
        %v569 = vpack.c.bf16 %v561, %v560
        %v578 = vunpack.c.l.b16 %v562
        %v579 = vunpack.c.h.b16 %v562
        %v580 = vunpack.c.l.b16 %v563
        %v581 = vunpack.c.h.b16 %v563
        %v582 = vunpack.c.l.b16 %v564
        %v583 = vunpack.c.h.b16 %v564
        %v584 = vunpack.c.l.b16 %v565
        %v585 = vunpack.c.h.b16 %v565
        %v586 = vunpack.c.l.b16 %v566
        %v587 = vunpack.c.h.b16 %v566
        %v588 = vunpack.c.l.b16 %v567
        %v589 = vunpack.c.h.b16 %v567
        %v590 = vunpack.c.l.b16 %v568
        %v591 = vunpack.c.h.b16 %v568
        %v592 = vunpack.c.l.b16 %v569
        %v593 = vunpack.c.h.b16 %v569
        %v594 = vpack.c.b16 %v578, %v578
        %v595 = vpack.c.b16 %v579, %v579
        %v596 = vpack.c.b16 %v580, %v580
        %v597 = vpack.c.b16 %v581, %v581
        %v598 = vpack.c.b16 %v582, %v582
        %v599 = vpack.c.b16 %v583, %v583
        %v600 = vpack.c.b16 %v584, %v584
        %v601 = vpack.c.b16 %v585, %v585
        %v602 = vpack.c.b16 %v586, %v586
        %v603 = vpack.c.b16 %v587, %v587
        %v604 = vpack.c.b16 %v588, %v588
        %v605 = vpack.c.b16 %v589, %v589
        %v606 = vpack.c.b16 %v590, %v590
        %v607 = vpack.c.b16 %v591, %v591
        %v608 = vpack.c.b16 %v592, %v592
        %v609 = vpack.c.b16 %v593, %v593
        %vm610 = vsmask.f32 4368
        %vm611 = vmor %vm470, %vm610
        %v613 = vshrl.u32 %v594, 16
        %v615 = vrot.slane %v613, 7
        %v616 = vshll.u32 %v594, 16
        %v618 = vor.u32 %v615, %v616
        %v619 = vrot.slane %v615, 4
        %v621 = vshrl.u32 %v595, 16
        %v623 = vrot.slane %v621, 7
        %v624 = vshll.u32 %v595, 16
        %v626 = vor.u32 %v623, %v624
        %v627 = vsel %vm611, %v619, %v626
        %v628 = vrot.slane %v623, 4
        %v630 = vshrl.u32 %v596, 16
        %v632 = vrot.slane %v630, 7
        %v633 = vshll.u32 %v596, 16
        %v635 = vor.u32 %v632, %v633
        %v636 = vrot.slane %v632, 4
        %v638 = vshrl.u32 %v597, 16
        %v640 = vrot.slane %v638, 7
        %v641 = vshll.u32 %v597, 16
        %v643 = vor.u32 %v640, %v641
        %v644 = vsel %vm611, %v636, %v643
        %v645 = vrot.slane %v640, 4
        %v647 = vshrl.u32 %v598, 16
        %v649 = vrot.slane %v647, 7
        %v650 = vshll.u32 %v598, 16
        %v652 = vor.u32 %v649, %v650
        %v653 = vrot.slane %v649, 4
        %v655 = vshrl.u32 %v599, 16
        %v657 = vrot.slane %v655, 7
        %v658 = vshll.u32 %v599, 16
        %v660 = vor.u32 %v657, %v658
        %v661 = vsel %vm611, %v653, %v660
        %v662 = vrot.slane %v657, 4
        %v664 = vshrl.u32 %v600, 16
        %v666 = vrot.slane %v664, 7
        %v667 = vshll.u32 %v600, 16
        %v669 = vor.u32 %v666, %v667
        %v670 = vrot.slane %v666, 4
        %v672 = vshrl.u32 %v601, 16
        %v674 = vrot.slane %v672, 7
        %v675 = vshll.u32 %v601, 16
        %v677 = vor.u32 %v674, %v675
        %v678 = vsel %vm611, %v670, %v677
        %v679 = vrot.slane %v674, 4
        %v681 = vshrl.u32 %v602, 16
        %v683 = vrot.slane %v681, 7
        %v684 = vshll.u32 %v602, 16
        %v686 = vor.u32 %v683, %v684
        %v687 = vrot.slane %v683, 4
        %v689 = vshrl.u32 %v603, 16
        %v691 = vrot.slane %v689, 7
        %v692 = vshll.u32 %v603, 16
        %v694 = vor.u32 %v691, %v692
        %v695 = vsel %vm611, %v687, %v694
        %v696 = vrot.slane %v691, 4
        %v698 = vshrl.u32 %v604, 16
        %v700 = vrot.slane %v698, 7
        %v701 = vshll.u32 %v604, 16
        %v703 = vor.u32 %v700, %v701
        %v704 = vrot.slane %v700, 4
        %v706 = vshrl.u32 %v605, 16
        %v708 = vrot.slane %v706, 7
        %v709 = vshll.u32 %v605, 16
        %v711 = vor.u32 %v708, %v709
        %v712 = vsel %vm611, %v704, %v711
        %v713 = vrot.slane %v708, 4
        %v715 = vshrl.u32 %v606, 16
        %v717 = vrot.slane %v715, 7
        %v718 = vshll.u32 %v606, 16
        %v720 = vor.u32 %v717, %v718
        %v721 = vrot.slane %v717, 4
        %v723 = vshrl.u32 %v607, 16
        %v725 = vrot.slane %v723, 7
        %v726 = vshll.u32 %v607, 16
        %v728 = vor.u32 %v725, %v726
        %v729 = vsel %vm611, %v721, %v728
        %v730 = vrot.slane %v725, 4
        %v732 = vshrl.u32 %v608, 16
        %v734 = vrot.slane %v732, 7
        %v735 = vshll.u32 %v608, 16
        %v737 = vor.u32 %v734, %v735
        %v738 = vrot.slane %v734, 4
        %v740 = vshrl.u32 %v609, 16
        %v742 = vrot.slane %v740, 7
        %v743 = vshll.u32 %v609, 16
        %v745 = vor.u32 %v742, %v743
        %v746 = vsel %vm611, %v738, %v745
        %v747 = vrot.slane %v742, 4
        %s772 = scalar_lea.vmem [#allocation2], 24
        %vm773 = vcmask 257024
        %vm774 = vmand %vm773, %vm508
        %v775 = vld [vmem:[%s772] sm:$0xf]
        %v776 = vsel %vm774, %v618, %v775
        %777 = vst [vmem:[%s772] sm:$0xf] %v776
        %vm778 = vcmask 257024
        %779 = vst.msk [vmem:[%s772 + $0x4] sm:$0xf] %vm778, %v627
        %v780 = vld [vmem:[%s772 + $0x8] sm:$0x1]
        %v781 = vsel %vm471, %v628, %v780
        %782 = vst [vmem:[%s772 + $0x8] sm:$0x1] %v781
        %v783 = vld [vmem:[%s772 + $0xc] sm:$0xf]
        %v784 = vsel %vm774, %v635, %v783
        %785 = vst [vmem:[%s772 + $0xc] sm:$0xf] %v784
        %786 = vst.msk [vmem:[%s772 + $0x10] sm:$0xf] %vm778, %v644
        %v787 = vld [vmem:[%s772 + $0x14] sm:$0x1]
        %v788 = vsel %vm471, %v645, %v787
        %789 = vst [vmem:[%s772 + $0x14] sm:$0x1] %v788
        %v790 = vld [vmem:[%s772 + $0x18] sm:$0xf]
        %v791 = vsel %vm774, %v652, %v790
        %792 = vst [vmem:[%s772 + $0x18] sm:$0xf] %v791
        %793 = vst.msk [vmem:[%s772 + $0x1c] sm:$0xf] %vm778, %v661
        %v794 = vld [vmem:[%s772 + $0x20] sm:$0x1]
        %v795 = vsel %vm471, %v662, %v794
        %796 = vst [vmem:[%s772 + $0x20] sm:$0x1] %v795
        %v797 = vld [vmem:[%s772 + $0x24] sm:$0xf]
        %v798 = vsel %vm774, %v669, %v797
        %799 = vst [vmem:[%s772 + $0x24] sm:$0xf] %v798
        %800 = vst.msk [vmem:[%s772 + $0x28] sm:$0xf] %vm778, %v678
        %v801 = vld [vmem:[%s772 + $0x2c] sm:$0x1]
        %v802 = vsel %vm471, %v679, %v801
        %803 = vst [vmem:[%s772 + $0x2c] sm:$0x1] %v802
        %v804 = vld [vmem:[%s772 + $0x30] sm:$0xf]
        %v805 = vsel %vm774, %v686, %v804
        %806 = vst [vmem:[%s772 + $0x30] sm:$0xf] %v805
        %807 = vst.msk [vmem:[%s772 + $0x34] sm:$0xf] %vm778, %v695
        %v808 = vld [vmem:[%s772 + $0x38] sm:$0x1]
        %v809 = vsel %vm471, %v696, %v808
        %810 = vst [vmem:[%s772 + $0x38] sm:$0x1] %v809
        %v811 = vld [vmem:[%s772 + $0x3c] sm:$0xf]
        %v812 = vsel %vm774, %v703, %v811
        %813 = vst [vmem:[%s772 + $0x3c] sm:$0xf] %v812
        %814 = vst.msk [vmem:[%s772 + $0x40] sm:$0xf] %vm778, %v712
        %v815 = vld [vmem:[%s772 + $0x44] sm:$0x1]
        %v816 = vsel %vm471, %v713, %v815
        %817 = vst [vmem:[%s772 + $0x44] sm:$0x1] %v816
        %v818 = vld [vmem:[%s772 + $0x48] sm:$0xf]
        %v819 = vsel %vm774, %v720, %v818
        %820 = vst [vmem:[%s772 + $0x48] sm:$0xf] %v819
        %821 = vst.msk [vmem:[%s772 + $0x4c] sm:$0xf] %vm778, %v729
        %v822 = vld [vmem:[%s772 + $0x50] sm:$0x1]
        %v823 = vsel %vm471, %v730, %v822
        %824 = vst [vmem:[%s772 + $0x50] sm:$0x1] %v823
        %v825 = vld [vmem:[%s772 + $0x54] sm:$0xf]
        %v826 = vsel %vm774, %v737, %v825
        %827 = vst [vmem:[%s772 + $0x54] sm:$0xf] %v826
        %828 = vst.msk [vmem:[%s772 + $0x58] sm:$0xf] %vm778, %v746
        %v829 = vld [vmem:[%s772 + $0x5c] sm:$0x1]
        %v830 = vsel %vm471, %v747, %v829
        %831 = vst [vmem:[%s772 + $0x5c] sm:$0x1] %v830
        %v832 = vld [vmem:[%s398] sm:$0xff]
        %v833 = vld [vmem:[%s398 + $0x8] sm:$0xff]
        %v834 = vld [vmem:[%s398 + $0x10] sm:$0xff]
        %v835 = vld [vmem:[%s398 + $0x18] sm:$0xff]
        %v836 = vpack.c.bf16 %v833, %v832
        %v837 = vpack.c.bf16 %v835, %v834
        %p838 = scmp.gt.s32.totalorder %s33, 0
        %s839 = scalar_select %p838, 1, 0
        %v840 = vstv %s839
        %vm841 = vcmp.eq.s32.totalorder %v840, 1
        %v842 = vsel %vm841, %v836, 0
        %v843 = vsel %vm841, %v837, 0
        %v846 = vunpack.c.l.b16 %v842
        %v847 = vunpack.c.h.b16 %v842
        %v848 = vunpack.c.l.b16 %v843
        %v849 = vunpack.c.h.b16 %v843
        %v850 = vpack.c.b16 %v846, %v846
        %v851 = vpack.c.b16 %v847, %v847
        %v852 = vpack.c.b16 %v848, %v848
        %v853 = vpack.c.b16 %v849, %v849
        %v855 = vshrl.u32 %v850, 16
        %v857 = vrot.slane %v855, 7
        %v858 = vshll.u32 %v850, 16
        %v860 = vor.u32 %v857, %v858
        %v861 = vrot.slane %v857, 4
        %v863 = vshrl.u32 %v851, 16
        %v865 = vrot.slane %v863, 7
        %v866 = vshll.u32 %v851, 16
        %v868 = vor.u32 %v865, %v866
        %v869 = vsel %vm611, %v861, %v868
        %v870 = vrot.slane %v865, 4
        %v872 = vshrl.u32 %v852, 16
        %v874 = vrot.slane %v872, 7
        %v875 = vshll.u32 %v852, 16
        %v877 = vor.u32 %v874, %v875
        %v878 = vrot.slane %v874, 4
        %v880 = vshrl.u32 %v853, 16
        %v882 = vrot.slane %v880, 7
        %v883 = vshll.u32 %v853, 16
        %v885 = vor.u32 %v882, %v883
        %v886 = vsel %vm611, %v878, %v885
        %v887 = vrot.slane %v882, 4
        %v894 = vld [vmem:[#allocation2] sm:$0xf]
        %v895 = vsel %vm774, %v860, %v894
        %896 = vst [vmem:[#allocation2] sm:$0xf] %v895
        %897 = vst.msk [vmem:[#allocation2 + $0x4] sm:$0xf] %vm778, %v869
        %v898 = vld [vmem:[#allocation2 + $0x8] sm:$0x1]
        %v899 = vsel %vm471, %v870, %v898
        %900 = vst [vmem:[#allocation2 + $0x8] sm:$0x1] %v899
        %v901 = vld [vmem:[#allocation2 + $0xc] sm:$0xf]
        %v902 = vsel %vm774, %v877, %v901
        %903 = vst [vmem:[#allocation2 + $0xc] sm:$0xf] %v902
        %904 = vst.msk [vmem:[#allocation2 + $0x10] sm:$0xf] %vm778, %v886
        %v905 = vld [vmem:[#allocation2 + $0x14] sm:$0x1]
        %v906 = vsel %vm471, %v887, %v905
        %907 = vst [vmem:[#allocation2 + $0x14] sm:$0x1] %v906
        %v908 = vld [vmem:[%s407] sm:$0xff]
        %v909 = vld [vmem:[%s407 + $0x8] sm:$0xff]
        %v910 = vld [vmem:[%s407 + $0x10] sm:$0xff]
        %v911 = vld [vmem:[%s407 + $0x18] sm:$0xff]
        %v912 = vpack.c.bf16 %v909, %v908
        %v913 = vpack.c.bf16 %v911, %v910
        %p914 = scmp.lt.s32.totalorder %s33, 1
        %s915 = scalar_select %p914, 1, 0
        %v916 = vstv %s915
        %vm917 = vcmp.eq.s32.totalorder %v916, 1
        %v918 = vsel %vm917, %v912, 0
        %v919 = vsel %vm917, %v913, 0
        %v922 = vunpack.c.l.b16 %v918
        %v923 = vunpack.c.h.b16 %v918
        %v924 = vunpack.c.l.b16 %v919
        %v925 = vunpack.c.h.b16 %v919
        %v926 = vpack.c.b16 %v922, %v922
        %v927 = vpack.c.b16 %v923, %v923
        %v928 = vpack.c.b16 %v924, %v924
        %v929 = vpack.c.b16 %v925, %v925
        %v931 = vshrl.u32 %v926, 16
        %v933 = vrot.slane %v931, 7
        %v934 = vshll.u32 %v926, 16
        %v936 = vor.u32 %v933, %v934
        %v937 = vrot.slane %v933, 4
        %v939 = vshrl.u32 %v927, 16
        %v941 = vrot.slane %v939, 7
        %v942 = vshll.u32 %v927, 16
        %v944 = vor.u32 %v941, %v942
        %v945 = vsel %vm611, %v937, %v944
        %v946 = vrot.slane %v941, 4
        %v948 = vshrl.u32 %v928, 16
        %v950 = vrot.slane %v948, 7
        %v951 = vshll.u32 %v928, 16
        %v953 = vor.u32 %v950, %v951
        %v954 = vrot.slane %v950, 4
        %v956 = vshrl.u32 %v929, 16
        %v958 = vrot.slane %v956, 7
        %v959 = vshll.u32 %v929, 16
        %v961 = vor.u32 %v958, %v959
        %v962 = vsel %vm611, %v954, %v961
        %v963 = vrot.slane %v958, 4
        %s970 = scalar_lea.vmem [#allocation2], 120
        %v971 = vld [vmem:[%s970] sm:$0xf]
        %v972 = vsel %vm774, %v936, %v971
        %973 = vst [vmem:[%s970] sm:$0xf] %v972
        %974 = vst.msk [vmem:[%s970 + $0x4] sm:$0xf] %vm778, %v945
        %v975 = vld [vmem:[%s970 + $0x8] sm:$0x1]
        %v976 = vsel %vm471, %v946, %v975
        %977 = vst [vmem:[%s970 + $0x8] sm:$0x1] %v976
        %v978 = vld [vmem:[%s970 + $0xc] sm:$0xf]
        %v979 = vsel %vm774, %v953, %v978
        %980 = vst [vmem:[%s970 + $0xc] sm:$0xf] %v979
        %981 = vst.msk [vmem:[%s970 + $0x10] sm:$0xf] %vm778, %v962
        %v982 = vld [vmem:[%s970 + $0x14] sm:$0x1]
        %v983 = vsel %vm471, %v963, %v982
        %984 = vst [vmem:[%s970 + $0x14] sm:$0x1] %v983
        %v985 = vld [vmem:[#allocation2] sm:$0xf]
        %v986 = vld [vmem:[#allocation2 + $0x4] sm:$0xf]
        %v987 = vld [vmem:[#allocation2 + $0xc] sm:$0xf]
        %v988 = vld [vmem:[#allocation2 + $0x10] sm:$0xf]
        %v989 = vld [vmem:[#allocation2 + $0x18] sm:$0xf]
        %v990 = vld [vmem:[#allocation2 + $0x1c] sm:$0xf]
        %v991 = vld [vmem:[#allocation2 + $0x24] sm:$0xf]
        %v992 = vld [vmem:[#allocation2 + $0x28] sm:$0xf]
        %v993 = vld [vmem:[#allocation2 + $0x30] sm:$0xf]
        %v994 = vld [vmem:[#allocation2 + $0x34] sm:$0xf]
        %v995 = vld [vmem:[#allocation2 + $0x3c] sm:$0xf]
        %v996 = vld [vmem:[#allocation2 + $0x40] sm:$0xf]
        %v997 = vld [vmem:[#allocation2 + $0x48] sm:$0xf]
        %v998 = vld [vmem:[#allocation2 + $0x4c] sm:$0xf]
        %v999 = vld [vmem:[#allocation2 + $0x54] sm:$0xf]
        %v1000 = vld [vmem:[#allocation2 + $0x58] sm:$0xf]
        %v1001 = vld [vmem:[#allocation2 + $0x60] sm:$0xf]
        %v1002 = vld [vmem:[#allocation2 + $0x64] sm:$0xf]
        %v1003 = vld [vmem:[#allocation2 + $0x6c] sm:$0xf]
        %v1004 = vld [vmem:[#allocation2 + $0x70] sm:$0xf]
        %v1005 = vld [vmem:[#allocation10] sm:$0xf]
        %v1006 = vld [vmem:[#allocation10 + $0x4] sm:$0xf]
        %v1007 = vld [vmem:[#allocation10 + $0x8] sm:$0xf]
        %v1008 = vld [vmem:[#allocation10 + $0xc] sm:$0xf]
        %v1009 = vld [vmem:[#allocation2 + $0x8] sm:$0x1]
        %v1010 = vld [vmem:[#allocation2 + $0x14] sm:$0x1]
        %v1011 = vld [vmem:[#allocation2 + $0x20] sm:$0x1]
        %v1012 = vld [vmem:[#allocation2 + $0x2c] sm:$0x1]
        %v1013 = vld [vmem:[#allocation2 + $0x38] sm:$0x1]
        %v1014 = vld [vmem:[#allocation2 + $0x44] sm:$0x1]
        %v1015 = vld [vmem:[#allocation2 + $0x50] sm:$0x1]
        %v1016 = vld [vmem:[#allocation2 + $0x5c] sm:$0x1]
        %v1017 = vld [vmem:[#allocation2 + $0x68] sm:$0x1]
        %v1018 = vld [vmem:[#allocation2 + $0x74] sm:$0x1]
        %vm1019 = vsmask.f32 3328
        %vm1020 = vsmask.f32 7440
        %vm1021 = vmor %vm1019, %vm1020
        %v1023 = vshrl.u32 %v985, 16
        %v1025 = vrot.slane %v1023, 4
        %v1026 = vshll.u32 %v985, 16
        %v1028 = vrot.slane %v1026, 5
        %v1029 = vor.u32 %v1025, %v1028
        %v1030 = vrot.slane %v1029, 4
        %v1032 = vshll.u32 %v986, 16
        %v1034 = vrot.slane %v1032, 5
        %v1035 = vsel %vm1021, %v1030, %v1034
        %v1036 = vshrl.u32 %v986, 16
        %v1038 = vrot.slane %v1036, 4
        %v1039 = vor.u32 %v1038, %v1034
        %v1040 = vrot.slane %v1039, 4
        %v1042 = vshll.u32 %v1009, 16
        %v1044 = vrot.slane %v1042, 5
        %v1045 = vsel %vm1021, %v1040, %v1044
        %v1047 = vshrl.u32 %v987, 16
        %v1049 = vrot.slane %v1047, 4
        %v1050 = vshll.u32 %v987, 16
        %v1052 = vrot.slane %v1050, 5
        %v1053 = vor.u32 %v1049, %v1052
        %v1054 = vrot.slane %v1053, 4
        %v1056 = vshll.u32 %v988, 16
        %v1058 = vrot.slane %v1056, 5
        %v1059 = vsel %vm1021, %v1054, %v1058
        %v1060 = vshrl.u32 %v988, 16
        %v1062 = vrot.slane %v1060, 4
        %v1063 = vor.u32 %v1062, %v1058
        %v1064 = vrot.slane %v1063, 4
        %v1066 = vshll.u32 %v1010, 16
        %v1068 = vrot.slane %v1066, 5
        %v1069 = vsel %vm1021, %v1064, %v1068
        %v1071 = vshrl.u32 %v989, 16
        %v1073 = vrot.slane %v1071, 4
        %v1074 = vshll.u32 %v989, 16
        %v1076 = vrot.slane %v1074, 5
        %v1077 = vor.u32 %v1073, %v1076
        %v1078 = vrot.slane %v1077, 4
        %v1080 = vshll.u32 %v990, 16
        %v1082 = vrot.slane %v1080, 5
        %v1083 = vsel %vm1021, %v1078, %v1082
        %v1084 = vshrl.u32 %v990, 16
        %v1086 = vrot.slane %v1084, 4
        %v1087 = vor.u32 %v1086, %v1082
        %v1088 = vrot.slane %v1087, 4
        %v1090 = vshll.u32 %v1011, 16
        %v1092 = vrot.slane %v1090, 5
        %v1093 = vsel %vm1021, %v1088, %v1092
        %v1095 = vshrl.u32 %v991, 16
        %v1097 = vrot.slane %v1095, 4
        %v1098 = vshll.u32 %v991, 16
        %v1100 = vrot.slane %v1098, 5
        %v1101 = vor.u32 %v1097, %v1100
        %v1102 = vrot.slane %v1101, 4
        %v1104 = vshll.u32 %v992, 16
        %v1106 = vrot.slane %v1104, 5
        %v1107 = vsel %vm1021, %v1102, %v1106
        %v1108 = vshrl.u32 %v992, 16
        %v1110 = vrot.slane %v1108, 4
        %v1111 = vor.u32 %v1110, %v1106
        %v1112 = vrot.slane %v1111, 4
        %v1114 = vshll.u32 %v1012, 16
        %v1116 = vrot.slane %v1114, 5
        %v1117 = vsel %vm1021, %v1112, %v1116
        %v1119 = vshrl.u32 %v993, 16
        %v1121 = vrot.slane %v1119, 4
        %v1122 = vshll.u32 %v993, 16
        %v1124 = vrot.slane %v1122, 5
        %v1125 = vor.u32 %v1121, %v1124
        %v1126 = vrot.slane %v1125, 4
        %v1128 = vshll.u32 %v994, 16
        %v1130 = vrot.slane %v1128, 5
        %v1131 = vsel %vm1021, %v1126, %v1130
        %v1132 = vshrl.u32 %v994, 16
        %v1134 = vrot.slane %v1132, 4
        %v1135 = vor.u32 %v1134, %v1130
        %v1136 = vrot.slane %v1135, 4
        %v1138 = vshll.u32 %v1013, 16
        %v1140 = vrot.slane %v1138, 5
        %v1141 = vsel %vm1021, %v1136, %v1140
        %v1143 = vshrl.u32 %v995, 16
        %v1145 = vrot.slane %v1143, 4
        %v1146 = vshll.u32 %v995, 16
        %v1148 = vrot.slane %v1146, 5
        %v1149 = vor.u32 %v1145, %v1148
        %v1150 = vrot.slane %v1149, 4
        %v1152 = vshll.u32 %v996, 16
        %v1154 = vrot.slane %v1152, 5
        %v1155 = vsel %vm1021, %v1150, %v1154
        %v1156 = vshrl.u32 %v996, 16
        %v1158 = vrot.slane %v1156, 4
        %v1159 = vor.u32 %v1158, %v1154
        %v1160 = vrot.slane %v1159, 4
        %v1162 = vshll.u32 %v1014, 16
        %v1164 = vrot.slane %v1162, 5
        %v1165 = vsel %vm1021, %v1160, %v1164
        %v1167 = vshrl.u32 %v997, 16
        %v1169 = vrot.slane %v1167, 4
        %v1170 = vshll.u32 %v997, 16
        %v1172 = vrot.slane %v1170, 5
        %v1173 = vor.u32 %v1169, %v1172
        %v1174 = vrot.slane %v1173, 4
        %v1176 = vshll.u32 %v998, 16
        %v1178 = vrot.slane %v1176, 5
        %v1179 = vsel %vm1021, %v1174, %v1178
        %v1180 = vshrl.u32 %v998, 16
        %v1182 = vrot.slane %v1180, 4
        %v1183 = vor.u32 %v1182, %v1178
        %v1184 = vrot.slane %v1183, 4
        %v1186 = vshll.u32 %v1015, 16
        %v1188 = vrot.slane %v1186, 5
        %v1189 = vsel %vm1021, %v1184, %v1188
        %v1191 = vshrl.u32 %v999, 16
        %v1193 = vrot.slane %v1191, 4
        %v1194 = vshll.u32 %v999, 16
        %v1196 = vrot.slane %v1194, 5
        %v1197 = vor.u32 %v1193, %v1196
        %v1198 = vrot.slane %v1197, 4
        %v1200 = vshll.u32 %v1000, 16
        %v1202 = vrot.slane %v1200, 5
        %v1203 = vsel %vm1021, %v1198, %v1202
        %v1204 = vshrl.u32 %v1000, 16
        %v1206 = vrot.slane %v1204, 4
        %v1207 = vor.u32 %v1206, %v1202
        %v1208 = vrot.slane %v1207, 4
        %v1210 = vshll.u32 %v1016, 16
        %v1212 = vrot.slane %v1210, 5
        %v1213 = vsel %vm1021, %v1208, %v1212
        %v1215 = vshrl.u32 %v1001, 16
        %v1217 = vrot.slane %v1215, 4
        %v1218 = vshll.u32 %v1001, 16
        %v1220 = vrot.slane %v1218, 5
        %v1221 = vor.u32 %v1217, %v1220
        %v1222 = vrot.slane %v1221, 4
        %v1224 = vshll.u32 %v1002, 16
        %v1226 = vrot.slane %v1224, 5
        %v1227 = vsel %vm1021, %v1222, %v1226
        %v1228 = vshrl.u32 %v1002, 16
        %v1230 = vrot.slane %v1228, 4
        %v1231 = vor.u32 %v1230, %v1226
        %v1232 = vrot.slane %v1231, 4
        %v1234 = vshll.u32 %v1017, 16
        %v1236 = vrot.slane %v1234, 5
        %v1237 = vsel %vm1021, %v1232, %v1236
        %v1239 = vshrl.u32 %v1003, 16
        %v1241 = vrot.slane %v1239, 4
        %v1242 = vshll.u32 %v1003, 16
        %v1244 = vrot.slane %v1242, 5
        %v1245 = vor.u32 %v1241, %v1244
        %v1246 = vrot.slane %v1245, 4
        %v1248 = vshll.u32 %v1004, 16
        %v1250 = vrot.slane %v1248, 5
        %v1251 = vsel %vm1021, %v1246, %v1250
        %v1252 = vshrl.u32 %v1004, 16
        %v1254 = vrot.slane %v1252, 4
        %v1255 = vor.u32 %v1254, %v1250
        %v1256 = vrot.slane %v1255, 4
        %v1258 = vshll.u32 %v1018, 16
        %v1260 = vrot.slane %v1258, 5
        %v1261 = vsel %vm1021, %v1256, %v1260
        %s1262 = scalar_lea.vmem [#allocation10], 16
        %v1263 = vld [vmem:[%s1262] sm:$0xf]
        %v1264 = vld [vmem:[%s1262 + $0x4] sm:$0xf]
        %v1265 = vld [vmem:[%s1262 + $0x8] sm:$0xf]
        %v1266 = vld [vmem:[%s1262 + $0xc] sm:$0xf]
        %v1267 = vunpack.c.l.b16 %v1035
        %v1268 = vunpack.c.l.b16 %v1045
        %v1269 = vunpack.c.l.b16 %v1059
        %v1270 = vunpack.c.l.b16 %v1069
        %v1271 = vunpack.c.l.b16 %v1083
        %v1272 = vunpack.c.l.b16 %v1093
        %v1273 = vunpack.c.l.b16 %v1107
        %v1274 = vunpack.c.l.b16 %v1117
        %v1275 = vunpack.c.l.b16 %v1131
        %v1276 = vunpack.c.l.b16 %v1141
        %v1277 = vunpack.c.l.b16 %v1155
        %v1278 = vunpack.c.l.b16 %v1165
        %v1279 = vunpack.c.l.b16 %v1179
        %v1280 = vunpack.c.l.b16 %v1189
        %v1281 = vunpack.c.l.b16 %v1203
        %v1282 = vunpack.c.l.b16 %v1213
        %v1283 = vunpack.c.l.b16 %v1227
        %v1284 = vunpack.c.l.b16 %v1237
        %v1285 = vunpack.c.l.b16 %v1251
        %v1286 = vunpack.c.l.b16 %v1261
        %v1287 = vpack.c.b16 %v1268, %v1267
        %v1288 = vpack.c.b16 %v1270, %v1269
        %v1289 = vpack.c.b16 %v1272, %v1271
        %v1290 = vpack.c.b16 %v1274, %v1273
        %v1291 = vpack.c.b16 %v1276, %v1275
        %v1292 = vpack.c.b16 %v1278, %v1277
        %v1293 = vpack.c.b16 %v1280, %v1279
        %v1294 = vpack.c.b16 %v1282, %v1281
        %v1295 = vpack.c.b16 %v1284, %v1283
        %v1296 = vpack.c.b16 %v1286, %v1285
        %v1301 = vunpack.c.l.b16 %v1263
        %v1302 = vunpack.c.l.b16 %v1264
        %v1303 = vunpack.c.l.b16 %v1265
        %v1304 = vunpack.c.l.b16 %v1266
        %v1305 = vpack.c.b16 %v1302, %v1301
        %v1306 = vpack.c.b16 %v1304, %v1303
        %vm1309 = vcmask 261120
        %v1311 = vsel %vm1309, %v1287, 0
        %v1314 = vsel %vm1309, %v1288, 0
        %v1317 = vsel %vm1309, %v1289, 0
        %v1320 = vsel %vm1309, %v1290, 0
        %v1323 = vsel %vm1309, %v1291, 0
        %v1326 = vsel %vm1309, %v1292, 0
        %v1329 = vsel %vm1309, %v1293, 0
        %v1332 = vsel %vm1309, %v1294, 0
        %v1335 = vsel %vm1309, %v1295, 0
        %v1338 = vsel %vm1309, %v1296, 0
        %1340 = vmatprep.subr.bf16.mxu0 0
        %1341 = vmatpush1.bf16.msra.mxu0 %v1305
        %1342 = vmatprep.subr.bf16.mxu0 0
        %1343 = vmatpush1.bf16.msra.mxu0 %v1306
        %1344 = vmatprep.subr.bf16.mxu0 0
        %1345 = vmatpush1.bf16.msra.mxu0 0
        %1346 = vmatprep.subr.bf16.mxu0 0
        %1347 = vmatpush1.bf16.msra.mxu0 0
        %1348 = vmatprep.subr.bf16.mxu0 0
        %1349 = vmatpush1.bf16.msra.mxu0 0
        %1350 = vmatprep.subr.bf16.mxu0 0
        %1351 = vmatpush1.bf16.msra.mxu0 0
        %1352 = vmatprep.subr.bf16.mxu0 0
        %1353 = vmatpush1.bf16.msra.mxu0 0
        %1354 = vmatprep.subr.bf16.mxu0 0
        %1355 = vmatpush1.bf16.msra.mxu0 0
        %1356 = vmatprep.subr.bf16.mxu0 0
        %1357 = vmatpush1.bf16.msra.mxu0 0
        %1358 = vmatprep.subr.bf16.mxu0 0
        %1359 = vmatpush1.bf16.msra.mxu0 0
        %1360 = vmatprep.subr.bf16.mxu0 0
        %1361 = vmatpush1.bf16.msra.mxu0 0
        %1362 = vmatprep.subr.bf16.mxu0 0
        %1363 = vmatpush1.bf16.msra.mxu0 0
        %1364 = vmatprep.subr.bf16.mxu0 0
        %1365 = vmatpush1.bf16.msra.mxu0 0
        %1366 = vmatprep.subr.bf16.mxu0 0
        %1367 = vmatpush1.bf16.msra.mxu0 0
        %1368 = vmatprep.subr.bf16.mxu0 0
        %1369 = vmatpush1.bf16.msra.mxu0 0
        %1370 = vmatprep.subr.bf16.mxu0 0
        %1371 = vmatpush1.bf16.msra.mxu0 0
        %1372 = vmatprep.mubr.bf16.mxu0 0
        %1373 = vmatmul.mubr.bf16.gmra.mrb[0].mxu0 %v1311
        %v1374 = vpop.f32.mrb[0].mxu0
        %v1375 = vadd.f32 0.0, %v1374
        %v1376 = vpop.f32.mrb[0].mxu0
        %v1377 = vpop.f32.mrb[0].mxu0
        %v1378 = vadd.f32 0.0, %v1377
        %v1379 = vpop.f32.mrb[0].mxu0
        %1380 = vmatprep.mubr.bf16.mxu0 0
        %1381 = vmatmul.mubr.bf16.gmra.mrb[0].mxu0 %v1314
        %v1382 = vpop.f32.mrb[0].mxu0
        %v1383 = vadd.f32 0.0, %v1382
        %v1384 = vpop.f32.mrb[0].mxu0
        %v1385 = vpop.f32.mrb[0].mxu0
        %v1386 = vadd.f32 0.0, %v1385
        %v1387 = vpop.f32.mrb[0].mxu0
        %1388 = vmatprep.mubr.bf16.mxu0 0
        %1389 = vmatmul.mubr.bf16.gmra.mrb[0].mxu0 %v1317
        %v1390 = vpop.f32.mrb[0].mxu0
        %v1391 = vadd.f32 0.0, %v1390
        %v1392 = vpop.f32.mrb[0].mxu0
        %v1393 = vpop.f32.mrb[0].mxu0
        %v1394 = vadd.f32 0.0, %v1393
        %v1395 = vpop.f32.mrb[0].mxu0
        %1396 = vmatprep.mubr.bf16.mxu0 0
        %1397 = vmatmul.mubr.bf16.gmra.mrb[0].mxu0 %v1320
        %v1398 = vpop.f32.mrb[0].mxu0
        %v1399 = vadd.f32 0.0, %v1398
        %v1400 = vpop.f32.mrb[0].mxu0
        %v1401 = vpop.f32.mrb[0].mxu0
        %v1402 = vadd.f32 0.0, %v1401
        %v1403 = vpop.f32.mrb[0].mxu0
        %1404 = vmatprep.mubr.bf16.mxu0 0
        %1405 = vmatmul.mubr.bf16.gmra.mrb[0].mxu0 %v1323
        %v1406 = vpop.f32.mrb[0].mxu0
        %v1407 = vadd.f32 0.0, %v1406
        %v1408 = vpop.f32.mrb[0].mxu0
        %v1409 = vpop.f32.mrb[0].mxu0
        %v1410 = vadd.f32 0.0, %v1409
        %v1411 = vpop.f32.mrb[0].mxu0
        %1412 = vmatprep.mubr.bf16.mxu0 0
        %1413 = vmatmul.mubr.bf16.gmra.mrb[0].mxu0 %v1326
        %v1414 = vpop.f32.mrb[0].mxu0
        %v1415 = vadd.f32 0.0, %v1414
        %v1416 = vpop.f32.mrb[0].mxu0
        %v1417 = vpop.f32.mrb[0].mxu0
        %v1418 = vadd.f32 0.0, %v1417
        %v1419 = vpop.f32.mrb[0].mxu0
        %1420 = vmatprep.mubr.bf16.mxu0 0
        %1421 = vmatmul.mubr.bf16.gmra.mrb[0].mxu0 %v1329
        %v1422 = vpop.f32.mrb[0].mxu0
        %v1423 = vadd.f32 0.0, %v1422
        %v1424 = vpop.f32.mrb[0].mxu0
        %v1425 = vpop.f32.mrb[0].mxu0
        %v1426 = vadd.f32 0.0, %v1425
        %v1427 = vpop.f32.mrb[0].mxu0
        %1428 = vmatprep.mubr.bf16.mxu0 0
        %1429 = vmatmul.mubr.bf16.gmra.mrb[0].mxu0 %v1332
        %v1430 = vpop.f32.mrb[0].mxu0
        %v1431 = vadd.f32 0.0, %v1430
        %v1432 = vpop.f32.mrb[0].mxu0
        %v1433 = vpop.f32.mrb[0].mxu0
        %v1434 = vadd.f32 0.0, %v1433
        %v1435 = vpop.f32.mrb[0].mxu0
        %1436 = vmatprep.mubr.bf16.mxu0 0
        %1437 = vmatmul.mubr.bf16.gmra.mrb[0].mxu0 %v1335
        %v1438 = vpop.f32.mrb[0].mxu0
        %v1439 = vadd.f32 0.0, %v1438
        %v1440 = vpop.f32.mrb[0].mxu0
        %v1441 = vpop.f32.mrb[0].mxu0
        %v1442 = vadd.f32 0.0, %v1441
        %v1443 = vpop.f32.mrb[0].mxu0
        %1444 = vmatprep.mubr.bf16.mxu0 0
        %1445 = vmatmul.mubr.bf16.gmra.mrb[0].mxu0 %v1338
        %v1446 = vpop.f32.mrb[0].mxu0
        %v1447 = vadd.f32 0.0, %v1446
        %v1448 = vpop.f32.mrb[0].mxu0
        %v1449 = vpop.f32.mrb[0].mxu0
        %v1450 = vadd.f32 0.0, %v1449
        %v1451 = vpop.f32.mrb[0].mxu0
        %1452 = vdwg.mxu0
        %v1473 = vunpack.c.l.b16 %v985
        %v1474 = vunpack.c.l.b16 %v986
        %v1475 = vunpack.c.l.b16 %v987
        %v1476 = vunpack.c.l.b16 %v988
        %v1477 = vunpack.c.l.b16 %v989
        %v1478 = vunpack.c.l.b16 %v990
        %v1479 = vunpack.c.l.b16 %v991
        %v1480 = vunpack.c.l.b16 %v992
        %v1481 = vunpack.c.l.b16 %v993
        %v1482 = vunpack.c.l.b16 %v994
        %v1483 = vunpack.c.l.b16 %v995
        %v1484 = vunpack.c.l.b16 %v996
        %v1485 = vunpack.c.l.b16 %v997
        %v1486 = vunpack.c.l.b16 %v998
        %v1487 = vunpack.c.l.b16 %v999
        %v1488 = vunpack.c.l.b16 %v1000
        %v1489 = vunpack.c.l.b16 %v1001
        %v1490 = vunpack.c.l.b16 %v1002
        %v1491 = vunpack.c.l.b16 %v1003
        %v1492 = vunpack.c.l.b16 %v1004
        %v1493 = vpack.c.b16 %v1474, %v1473
        %v1494 = vpack.c.b16 %v1476, %v1475
        %v1495 = vpack.c.b16 %v1478, %v1477
        %v1496 = vpack.c.b16 %v1480, %v1479
        %v1497 = vpack.c.b16 %v1482, %v1481
        %v1498 = vpack.c.b16 %v1484, %v1483
        %v1499 = vpack.c.b16 %v1486, %v1485
        %v1500 = vpack.c.b16 %v1488, %v1487
        %v1501 = vpack.c.b16 %v1490, %v1489
        %v1502 = vpack.c.b16 %v1492, %v1491
        %v1507 = vunpack.c.l.b16 %v1005
        %v1508 = vunpack.c.l.b16 %v1006
        %v1509 = vunpack.c.l.b16 %v1007
        %v1510 = vunpack.c.l.b16 %v1008
        %v1511 = vpack.c.b16 %v1508, %v1507
        %v1512 = vpack.c.b16 %v1510, %v1509
        %v1516 = vsel %vm1309, %v1493, 0
        %v1519 = vsel %vm1309, %v1494, 0
        %v1522 = vsel %vm1309, %v1495, 0
        %v1525 = vsel %vm1309, %v1496, 0
        %v1528 = vsel %vm1309, %v1497, 0
        %v1531 = vsel %vm1309, %v1498, 0
        %v1534 = vsel %vm1309, %v1499, 0
        %v1537 = vsel %vm1309, %v1500, 0
        %v1540 = vsel %vm1309, %v1501, 0
        %v1543 = vsel %vm1309, %v1502, 0
        %1545 = vmatprep.subr.bf16.mxu0 0
        %1546 = vmatpush1.bf16.msra.mxu0 %v1511
        %1547 = vmatprep.subr.bf16.mxu0 0
        %1548 = vmatpush1.bf16.msra.mxu0 %v1512
        %1549 = vmatprep.subr.bf16.mxu0 0
        %1550 = vmatpush1.bf16.msra.mxu0 0
        %1551 = vmatprep.subr.bf16.mxu0 0
        %1552 = vmatpush1.bf16.msra.mxu0 0
        %1553 = vmatprep.subr.bf16.mxu0 0
        %1554 = vmatpush1.bf16.msra.mxu0 0
        %1555 = vmatprep.subr.bf16.mxu0 0
        %1556 = vmatpush1.bf16.msra.mxu0 0
        %1557 = vmatprep.subr.bf16.mxu0 0
        %1558 = vmatpush1.bf16.msra.mxu0 0
        %1559 = vmatprep.subr.bf16.mxu0 0
        %1560 = vmatpush1.bf16.msra.mxu0 0
        %1561 = vmatprep.subr.bf16.mxu0 0
        %1562 = vmatpush1.bf16.msra.mxu0 0
        %1563 = vmatprep.subr.bf16.mxu0 0
        %1564 = vmatpush1.bf16.msra.mxu0 0
        %1565 = vmatprep.subr.bf16.mxu0 0
        %1566 = vmatpush1.bf16.msra.mxu0 0
        %1567 = vmatprep.subr.bf16.mxu0 0
        %1568 = vmatpush1.bf16.msra.mxu0 0
        %1569 = vmatprep.subr.bf16.mxu0 0
        %1570 = vmatpush1.bf16.msra.mxu0 0
        %1571 = vmatprep.subr.bf16.mxu0 0
        %1572 = vmatpush1.bf16.msra.mxu0 0
        %1573 = vmatprep.subr.bf16.mxu0 0
        %1574 = vmatpush1.bf16.msra.mxu0 0
        %1575 = vmatprep.subr.bf16.mxu0 0
        %1576 = vmatpush1.bf16.msra.mxu0 0
        %1577 = vmatprep.mubr.bf16.mxu0 0
        %1578 = vmatmul.mubr.bf16.gmra.mrb[0].mxu0 %v1516
        %v1579 = vpop.f32.mrb[0].mxu0
        %v1580 = vadd.f32 %v1375, %v1579
        %v1581 = vpop.f32.mrb[0].mxu0
        %v1582 = vpop.f32.mrb[0].mxu0
        %v1583 = vadd.f32 %v1378, %v1582
        %v1584 = vpop.f32.mrb[0].mxu0
        %1585 = vmatprep.mubr.bf16.mxu0 0
        %1586 = vmatmul.mubr.bf16.gmra.mrb[0].mxu0 %v1519
        %v1587 = vpop.f32.mrb[0].mxu0
        %v1588 = vadd.f32 %v1383, %v1587
        %v1589 = vpop.f32.mrb[0].mxu0
        %v1590 = vpop.f32.mrb[0].mxu0
        %v1591 = vadd.f32 %v1386, %v1590
        %v1592 = vpop.f32.mrb[0].mxu0
        %1593 = vmatprep.mubr.bf16.mxu0 0
        %1594 = vmatmul.mubr.bf16.gmra.mrb[0].mxu0 %v1522
        %v1595 = vpop.f32.mrb[0].mxu0
        %v1596 = vadd.f32 %v1391, %v1595
        %v1597 = vpop.f32.mrb[0].mxu0
        %v1598 = vpop.f32.mrb[0].mxu0
        %v1599 = vadd.f32 %v1394, %v1598
        %v1600 = vpop.f32.mrb[0].mxu0
        %1601 = vmatprep.mubr.bf16.mxu0 0
        %1602 = vmatmul.mubr.bf16.gmra.mrb[0].mxu0 %v1525
        %v1603 = vpop.f32.mrb[0].mxu0
        %v1604 = vadd.f32 %v1399, %v1603
        %v1605 = vpop.f32.mrb[0].mxu0
        %v1606 = vpop.f32.mrb[0].mxu0
        %v1607 = vadd.f32 %v1402, %v1606
        %v1608 = vpop.f32.mrb[0].mxu0
        %1609 = vmatprep.mubr.bf16.mxu0 0
        %1610 = vmatmul.mubr.bf16.gmra.mrb[0].mxu0 %v1528
        %v1611 = vpop.f32.mrb[0].mxu0
        %v1612 = vadd.f32 %v1407, %v1611
        %v1613 = vpop.f32.mrb[0].mxu0
        %v1614 = vpop.f32.mrb[0].mxu0
        %v1615 = vadd.f32 %v1410, %v1614
        %v1616 = vpop.f32.mrb[0].mxu0
        %1617 = vmatprep.mubr.bf16.mxu0 0
        %1618 = vmatmul.mubr.bf16.gmra.mrb[0].mxu0 %v1531
        %v1619 = vpop.f32.mrb[0].mxu0
        %v1620 = vadd.f32 %v1415, %v1619
        %v1621 = vpop.f32.mrb[0].mxu0
        %v1622 = vpop.f32.mrb[0].mxu0
        %v1623 = vadd.f32 %v1418, %v1622
        %v1624 = vpop.f32.mrb[0].mxu0
        %1625 = vmatprep.mubr.bf16.mxu0 0
        %1626 = vmatmul.mubr.bf16.gmra.mrb[0].mxu0 %v1534
        %v1627 = vpop.f32.mrb[0].mxu0
        %v1628 = vadd.f32 %v1423, %v1627
        %v1629 = vpop.f32.mrb[0].mxu0
        %v1630 = vpop.f32.mrb[0].mxu0
        %v1631 = vadd.f32 %v1426, %v1630
        %v1632 = vpop.f32.mrb[0].mxu0
        %1633 = vmatprep.mubr.bf16.mxu0 0
        %1634 = vmatmul.mubr.bf16.gmra.mrb[0].mxu0 %v1537
        %v1635 = vpop.f32.mrb[0].mxu0
        %v1636 = vadd.f32 %v1431, %v1635
        %v1637 = vpop.f32.mrb[0].mxu0
        %v1638 = vpop.f32.mrb[0].mxu0
        %v1639 = vadd.f32 %v1434, %v1638
        %v1640 = vpop.f32.mrb[0].mxu0
        %1641 = vmatprep.mubr.bf16.mxu0 0
        %1642 = vmatmul.mubr.bf16.gmra.mrb[0].mxu0 %v1540
        %v1643 = vpop.f32.mrb[0].mxu0
        %v1644 = vadd.f32 %v1439, %v1643
        %v1645 = vpop.f32.mrb[0].mxu0
        %v1646 = vpop.f32.mrb[0].mxu0
        %v1647 = vadd.f32 %v1442, %v1646
        %v1648 = vpop.f32.mrb[0].mxu0
        %1649 = vmatprep.mubr.bf16.mxu0 0
        %1650 = vmatmul.mubr.bf16.gmra.mrb[0].mxu0 %v1543
        %v1651 = vpop.f32.mrb[0].mxu0
        %v1652 = vadd.f32 %v1447, %v1651
        %v1653 = vpop.f32.mrb[0].mxu0
        %v1654 = vpop.f32.mrb[0].mxu0
        %v1655 = vadd.f32 %v1450, %v1654
        %v1656 = vpop.f32.mrb[0].mxu0
        %1657 = vdwg.mxu0
        %v1658 = vld [vmem:[#allocation2] sm:$0xe]
        %v1659 = vld [vmem:[#allocation2 + $0xc] sm:$0xe]
        %v1660 = vld [vmem:[#allocation2 + $0x18] sm:$0xe]
        %v1661 = vld [vmem:[#allocation2 + $0x24] sm:$0xe]
        %v1662 = vld [vmem:[#allocation2 + $0x30] sm:$0xe]
        %v1663 = vld [vmem:[#allocation2 + $0x3c] sm:$0xe]
        %v1664 = vld [vmem:[#allocation2 + $0x48] sm:$0xe]
        %v1665 = vld [vmem:[#allocation2 + $0x54] sm:$0xe]
        %v1666 = vld [vmem:[#allocation2 + $0x60] sm:$0xe]
        %v1667 = vld [vmem:[#allocation2 + $0x6c] sm:$0xe]
        %vm1688 = vcmask 1042432
        %vm1689 = vcmask 1046532
        %vm1690 = vmor %vm1688, %vm1689
        %v1691 = vrot.slane %v1658, 5
        %v1692 = vrot.slane %v1691, 4
        %v1693 = vrot.slane %v986, 5
        %v1694 = vsel %vm1690, %v1692, %v1693
        %v1695 = vrot.slane %v1693, 4
        %v1696 = vrot.slane %v1009, 5
        %v1697 = vsel %vm1690, %v1695, %v1696
        %v1698 = vrot.slane %v1659, 5
        %v1699 = vrot.slane %v1698, 4
        %v1700 = vrot.slane %v988, 5
        %v1701 = vsel %vm1690, %v1699, %v1700
        %v1702 = vrot.slane %v1700, 4
        %v1703 = vrot.slane %v1010, 5
        %v1704 = vsel %vm1690, %v1702, %v1703
        %v1705 = vrot.slane %v1660, 5
        %v1706 = vrot.slane %v1705, 4
        %v1707 = vrot.slane %v990, 5
        %v1708 = vsel %vm1690, %v1706, %v1707
        %v1709 = vrot.slane %v1707, 4
        %v1710 = vrot.slane %v1011, 5
        %v1711 = vsel %vm1690, %v1709, %v1710
        %v1712 = vrot.slane %v1661, 5
        %v1713 = vrot.slane %v1712, 4
        %v1714 = vrot.slane %v992, 5
        %v1715 = vsel %vm1690, %v1713, %v1714
        %v1716 = vrot.slane %v1714, 4
        %v1717 = vrot.slane %v1012, 5
        %v1718 = vsel %vm1690, %v1716, %v1717
        %v1719 = vrot.slane %v1662, 5
        %v1720 = vrot.slane %v1719, 4
        %v1721 = vrot.slane %v994, 5
        %v1722 = vsel %vm1690, %v1720, %v1721
        %v1723 = vrot.slane %v1721, 4
        %v1724 = vrot.slane %v1013, 5
        %v1725 = vsel %vm1690, %v1723, %v1724
        %v1726 = vrot.slane %v1663, 5
        %v1727 = vrot.slane %v1726, 4
        %v1728 = vrot.slane %v996, 5
        %v1729 = vsel %vm1690, %v1727, %v1728
        %v1730 = vrot.slane %v1728, 4
        %v1731 = vrot.slane %v1014, 5
        %v1732 = vsel %vm1690, %v1730, %v1731
        %v1733 = vrot.slane %v1664, 5
        %v1734 = vrot.slane %v1733, 4
        %v1735 = vrot.slane %v998, 5
        %v1736 = vsel %vm1690, %v1734, %v1735
        %v1737 = vrot.slane %v1735, 4
        %v1738 = vrot.slane %v1015, 5
        %v1739 = vsel %vm1690, %v1737, %v1738
        %v1740 = vrot.slane %v1665, 5
        %v1741 = vrot.slane %v1740, 4
        %v1742 = vrot.slane %v1000, 5
        %v1743 = vsel %vm1690, %v1741, %v1742
        %v1744 = vrot.slane %v1742, 4
        %v1745 = vrot.slane %v1016, 5
        %v1746 = vsel %vm1690, %v1744, %v1745
        %v1747 = vrot.slane %v1666, 5
        %v1748 = vrot.slane %v1747, 4
        %v1749 = vrot.slane %v1002, 5
        %v1750 = vsel %vm1690, %v1748, %v1749
        %v1751 = vrot.slane %v1749, 4
        %v1752 = vrot.slane %v1017, 5
        %v1753 = vsel %vm1690, %v1751, %v1752
        %v1754 = vrot.slane %v1667, 5
        %v1755 = vrot.slane %v1754, 4
        %v1756 = vrot.slane %v1004, 5
        %v1757 = vsel %vm1690, %v1755, %v1756
        %v1758 = vrot.slane %v1756, 4
        %v1759 = vrot.slane %v1018, 5
        %v1760 = vsel %vm1690, %v1758, %v1759
        %s1761 = scalar_lea.vmem [#allocation10], 32
        %v1762 = vld [vmem:[%s1761] sm:$0xf]
        %v1763 = vld [vmem:[%s1761 + $0x4] sm:$0xf]
        %v1764 = vld [vmem:[%s1761 + $0x8] sm:$0xf]
        %v1765 = vld [vmem:[%s1761 + $0xc] sm:$0xf]
        %v1766 = vunpack.c.l.b16 %v1694
        %v1767 = vunpack.c.l.b16 %v1697
        %v1768 = vunpack.c.l.b16 %v1701
        %v1769 = vunpack.c.l.b16 %v1704
        %v1770 = vunpack.c.l.b16 %v1708
        %v1771 = vunpack.c.l.b16 %v1711
        %v1772 = vunpack.c.l.b16 %v1715
        %v1773 = vunpack.c.l.b16 %v1718
        %v1774 = vunpack.c.l.b16 %v1722
        %v1775 = vunpack.c.l.b16 %v1725
        %v1776 = vunpack.c.l.b16 %v1729
        %v1777 = vunpack.c.l.b16 %v1732
        %v1778 = vunpack.c.l.b16 %v1736
        %v1779 = vunpack.c.l.b16 %v1739
        %v1780 = vunpack.c.l.b16 %v1743
        %v1781 = vunpack.c.l.b16 %v1746
        %v1782 = vunpack.c.l.b16 %v1750
        %v1783 = vunpack.c.l.b16 %v1753
        %v1784 = vunpack.c.l.b16 %v1757
        %v1785 = vunpack.c.l.b16 %v1760
        %v1786 = vpack.c.b16 %v1767, %v1766
        %v1787 = vpack.c.b16 %v1769, %v1768
        %v1788 = vpack.c.b16 %v1771, %v1770
        %v1789 = vpack.c.b16 %v1773, %v1772
        %v1790 = vpack.c.b16 %v1775, %v1774
        %v1791 = vpack.c.b16 %v1777, %v1776
        %v1792 = vpack.c.b16 %v1779, %v1778
        %v1793 = vpack.c.b16 %v1781, %v1780
        %v1794 = vpack.c.b16 %v1783, %v1782
        %v1795 = vpack.c.b16 %v1785, %v1784
        %v1800 = vunpack.c.l.b16 %v1762
        %v1801 = vunpack.c.l.b16 %v1763
        %v1802 = vunpack.c.l.b16 %v1764
        %v1803 = vunpack.c.l.b16 %v1765
        %v1804 = vpack.c.b16 %v1801, %v1800
        %v1805 = vpack.c.b16 %v1803, %v1802
        %v1809 = vsel %vm1309, %v1786, 0
        %v1812 = vsel %vm1309, %v1787, 0
        %v1815 = vsel %vm1309, %v1788, 0
        %v1818 = vsel %vm1309, %v1789, 0
        %v1821 = vsel %vm1309, %v1790, 0
        %v1824 = vsel %vm1309, %v1791, 0
        %v1827 = vsel %vm1309, %v1792, 0
        %v1830 = vsel %vm1309, %v1793, 0
        %v1833 = vsel %vm1309, %v1794, 0
        %v1836 = vsel %vm1309, %v1795, 0
        %1838 = vmatprep.subr.bf16.mxu0 0
        %1839 = vmatpush1.bf16.msra.mxu0 %v1804
        %1840 = vmatprep.subr.bf16.mxu0 0
        %1841 = vmatpush1.bf16.msra.mxu0 %v1805
        %1842 = vmatprep.subr.bf16.mxu0 0
        %1843 = vmatpush1.bf16.msra.mxu0 0
        %1844 = vmatprep.subr.bf16.mxu0 0
        %1845 = vmatpush1.bf16.msra.mxu0 0
        %1846 = vmatprep.subr.bf16.mxu0 0
        %1847 = vmatpush1.bf16.msra.mxu0 0
        %1848 = vmatprep.subr.bf16.mxu0 0
        %1849 = vmatpush1.bf16.msra.mxu0 0
        %1850 = vmatprep.subr.bf16.mxu0 0
        %1851 = vmatpush1.bf16.msra.mxu0 0
        %1852 = vmatprep.subr.bf16.mxu0 0
        %1853 = vmatpush1.bf16.msra.mxu0 0
        %1854 = vmatprep.subr.bf16.mxu0 0
        %1855 = vmatpush1.bf16.msra.mxu0 0
        %1856 = vmatprep.subr.bf16.mxu0 0
        %1857 = vmatpush1.bf16.msra.mxu0 0
        %1858 = vmatprep.subr.bf16.mxu0 0
        %1859 = vmatpush1.bf16.msra.mxu0 0
        %1860 = vmatprep.subr.bf16.mxu0 0
        %1861 = vmatpush1.bf16.msra.mxu0 0
        %1862 = vmatprep.subr.bf16.mxu0 0
        %1863 = vmatpush1.bf16.msra.mxu0 0
        %1864 = vmatprep.subr.bf16.mxu0 0
        %1865 = vmatpush1.bf16.msra.mxu0 0
        %1866 = vmatprep.subr.bf16.mxu0 0
        %1867 = vmatpush1.bf16.msra.mxu0 0
        %1868 = vmatprep.subr.bf16.mxu0 0
        %1869 = vmatpush1.bf16.msra.mxu0 0
        %1870 = vmatprep.mubr.bf16.mxu0 0
        %1871 = vmatmul.mubr.bf16.gmra.mrb[0].mxu0 %v1809
        %v1872 = vpop.f32.mrb[0].mxu0
        %v1873 = vadd.f32 0.0, %v1872
        %v1874 = vpop.f32.mrb[0].mxu0
        %v1875 = vpop.f32.mrb[0].mxu0
        %v1876 = vadd.f32 0.0, %v1875
        %v1877 = vpop.f32.mrb[0].mxu0
        %1878 = vmatprep.mubr.bf16.mxu0 0
        %1879 = vmatmul.mubr.bf16.gmra.mrb[0].mxu0 %v1812
        %v1880 = vpop.f32.mrb[0].mxu0
        %v1881 = vadd.f32 0.0, %v1880
        %v1882 = vpop.f32.mrb[0].mxu0
        %v1883 = vpop.f32.mrb[0].mxu0
        %v1884 = vadd.f32 0.0, %v1883
        %v1885 = vpop.f32.mrb[0].mxu0
        %1886 = vmatprep.mubr.bf16.mxu0 0
        %1887 = vmatmul.mubr.bf16.gmra.mrb[0].mxu0 %v1815
        %v1888 = vpop.f32.mrb[0].mxu0
        %v1889 = vadd.f32 0.0, %v1888
        %v1890 = vpop.f32.mrb[0].mxu0
        %v1891 = vpop.f32.mrb[0].mxu0
        %v1892 = vadd.f32 0.0, %v1891
        %v1893 = vpop.f32.mrb[0].mxu0
        %1894 = vmatprep.mubr.bf16.mxu0 0
        %1895 = vmatmul.mubr.bf16.gmra.mrb[0].mxu0 %v1818
        %v1896 = vpop.f32.mrb[0].mxu0
        %v1897 = vadd.f32 0.0, %v1896
        %v1898 = vpop.f32.mrb[0].mxu0
        %v1899 = vpop.f32.mrb[0].mxu0
        %v1900 = vadd.f32 0.0, %v1899
        %v1901 = vpop.f32.mrb[0].mxu0
        %1902 = vmatprep.mubr.bf16.mxu0 0
        %1903 = vmatmul.mubr.bf16.gmra.mrb[0].mxu0 %v1821
        %v1904 = vpop.f32.mrb[0].mxu0
        %v1905 = vadd.f32 0.0, %v1904
        %v1906 = vpop.f32.mrb[0].mxu0
        %v1907 = vpop.f32.mrb[0].mxu0
        %v1908 = vadd.f32 0.0, %v1907
        %v1909 = vpop.f32.mrb[0].mxu0
        %1910 = vmatprep.mubr.bf16.mxu0 0
        %1911 = vmatmul.mubr.bf16.gmra.mrb[0].mxu0 %v1824
        %v1912 = vpop.f32.mrb[0].mxu0
        %v1913 = vadd.f32 0.0, %v1912
        %v1914 = vpop.f32.mrb[0].mxu0
        %v1915 = vpop.f32.mrb[0].mxu0
        %v1916 = vadd.f32 0.0, %v1915
        %v1917 = vpop.f32.mrb[0].mxu0
        %1918 = vmatprep.mubr.bf16.mxu0 0
        %1919 = vmatmul.mubr.bf16.gmra.mrb[0].mxu0 %v1827
        %v1920 = vpop.f32.mrb[0].mxu0
        %v1921 = vadd.f32 0.0, %v1920
        %v1922 = vpop.f32.mrb[0].mxu0
        %v1923 = vpop.f32.mrb[0].mxu0
        %v1924 = vadd.f32 0.0, %v1923
        %v1925 = vpop.f32.mrb[0].mxu0
        %1926 = vmatprep.mubr.bf16.mxu0 0
        %1927 = vmatmul.mubr.bf16.gmra.mrb[0].mxu0 %v1830
        %v1928 = vpop.f32.mrb[0].mxu0
        %v1929 = vadd.f32 0.0, %v1928
        %v1930 = vpop.f32.mrb[0].mxu0
        %v1931 = vpop.f32.mrb[0].mxu0
        %v1932 = vadd.f32 0.0, %v1931
        %v1933 = vpop.f32.mrb[0].mxu0
        %1934 = vmatprep.mubr.bf16.mxu0 0
        %1935 = vmatmul.mubr.bf16.gmra.mrb[0].mxu0 %v1833
        %v1936 = vpop.f32.mrb[0].mxu0
        %v1937 = vadd.f32 0.0, %v1936
        %v1938 = vpop.f32.mrb[0].mxu0
        %v1939 = vpop.f32.mrb[0].mxu0
        %v1940 = vadd.f32 0.0, %v1939
        %v1941 = vpop.f32.mrb[0].mxu0
        %1942 = vmatprep.mubr.bf16.mxu0 0
        %1943 = vmatmul.mubr.bf16.gmra.mrb[0].mxu0 %v1836
        %v1944 = vpop.f32.mrb[0].mxu0
        %v1945 = vadd.f32 0.0, %v1944
        %v1946 = vpop.f32.mrb[0].mxu0
        %v1947 = vpop.f32.mrb[0].mxu0
        %v1948 = vadd.f32 0.0, %v1947
        %v1949 = vpop.f32.mrb[0].mxu0
        %1950 = vdwg.mxu0
        %v1951 = vadd.f32 %v1580, %v1873
        %v1952 = vadd.f32 %v1583, %v1876
        %v1953 = vadd.f32 %v1588, %v1881
        %v1954 = vadd.f32 %v1591, %v1884
        %v1955 = vadd.f32 %v1596, %v1889
        %v1956 = vadd.f32 %v1599, %v1892
        %v1957 = vadd.f32 %v1604, %v1897
        %v1958 = vadd.f32 %v1607, %v1900
        %v1959 = vadd.f32 %v1612, %v1905
        %v1960 = vadd.f32 %v1615, %v1908
        %v1961 = vadd.f32 %v1620, %v1913
        %v1962 = vadd.f32 %v1623, %v1916
        %v1963 = vadd.f32 %v1628, %v1921
        %v1964 = vadd.f32 %v1631, %v1924
        %v1965 = vadd.f32 %v1636, %v1929
        %v1966 = vadd.f32 %v1639, %v1932
        %v1967 = vadd.f32 %v1644, %v1937
        %v1968 = vadd.f32 %v1647, %v1940
        %v1969 = vadd.f32 %v1652, %v1945
        %v1970 = vadd.f32 %v1655, %v1948
        %s1971 = scalar_lea.vmem [#allocation2], 12
        %v1972 = vld [vmem:[%s1971] sm:$0xf]
        %v1973 = vld [vmem:[%s1971 + $0x4] sm:$0xf]
        %v1974 = vld [vmem:[%s1971 + $0xc] sm:$0xf]
        %v1975 = vld [vmem:[%s1971 + $0x10] sm:$0xf]
        %v1976 = vld [vmem:[%s1971 + $0x18] sm:$0xf]
        %v1977 = vld [vmem:[%s1971 + $0x1c] sm:$0xf]
        %v1978 = vld [vmem:[%s1971 + $0x24] sm:$0xf]
        %v1979 = vld [vmem:[%s1971 + $0x28] sm:$0xf]
        %v1980 = vld [vmem:[%s1971 + $0x30] sm:$0xf]
        %v1981 = vld [vmem:[%s1971 + $0x34] sm:$0xf]
        %v1982 = vld [vmem:[%s1971 + $0x3c] sm:$0xf]
        %v1983 = vld [vmem:[%s1971 + $0x40] sm:$0xf]
        %v1984 = vld [vmem:[%s1971 + $0x48] sm:$0xf]
        %v1985 = vld [vmem:[%s1971 + $0x4c] sm:$0xf]
        %v1986 = vld [vmem:[%s1971 + $0x54] sm:$0xf]
        %v1987 = vld [vmem:[%s1971 + $0x58] sm:$0xf]
        %v1988 = vld [vmem:[%s1971 + $0x60] sm:$0xf]
        %v1989 = vld [vmem:[%s1971 + $0x64] sm:$0xf]
        %v1990 = vld [vmem:[%s1971 + $0x6c] sm:$0xf]
        %v1991 = vld [vmem:[%s1971 + $0x70] sm:$0xf]
        %s1992 = scalar_lea.vmem [#allocation10], 48
        %v1993 = vld [vmem:[%s1992] sm:$0xf]
        %v1994 = vld [vmem:[%s1992 + $0x4] sm:$0xf]
        %v1995 = vld [vmem:[%s1992 + $0x8] sm:$0xf]
        %v1996 = vld [vmem:[%s1992 + $0xc] sm:$0xf]
        %v2017 = vunpack.c.l.b16 %v1972
        %v2018 = vunpack.c.l.b16 %v1973
        %v2019 = vunpack.c.l.b16 %v1974
        %v2020 = vunpack.c.l.b16 %v1975
        %v2021 = vunpack.c.l.b16 %v1976
        %v2022 = vunpack.c.l.b16 %v1977
        %v2023 = vunpack.c.l.b16 %v1978
        %v2024 = vunpack.c.l.b16 %v1979
        %v2025 = vunpack.c.l.b16 %v1980
        %v2026 = vunpack.c.l.b16 %v1981
        %v2027 = vunpack.c.l.b16 %v1982
        %v2028 = vunpack.c.l.b16 %v1983
        %v2029 = vunpack.c.l.b16 %v1984
        %v2030 = vunpack.c.l.b16 %v1985
        %v2031 = vunpack.c.l.b16 %v1986
        %v2032 = vunpack.c.l.b16 %v1987
        %v2033 = vunpack.c.l.b16 %v1988
        %v2034 = vunpack.c.l.b16 %v1989
        %v2035 = vunpack.c.l.b16 %v1990
        %v2036 = vunpack.c.l.b16 %v1991
        %v2037 = vpack.c.b16 %v2018, %v2017
        %v2038 = vpack.c.b16 %v2020, %v2019
        %v2039 = vpack.c.b16 %v2022, %v2021
        %v2040 = vpack.c.b16 %v2024, %v2023
        %v2041 = vpack.c.b16 %v2026, %v2025
        %v2042 = vpack.c.b16 %v2028, %v2027
        %v2043 = vpack.c.b16 %v2030, %v2029
        %v2044 = vpack.c.b16 %v2032, %v2031
        %v2045 = vpack.c.b16 %v2034, %v2033
        %v2046 = vpack.c.b16 %v2036, %v2035
        %v2051 = vunpack.c.l.b16 %v1993
        %v2052 = vunpack.c.l.b16 %v1994
        %v2053 = vunpack.c.l.b16 %v1995
        %v2054 = vunpack.c.l.b16 %v1996
        %v2055 = vpack.c.b16 %v2052, %v2051
        %v2056 = vpack.c.b16 %v2054, %v2053
        %v2060 = vsel %vm1309, %v2037, 0
        %v2063 = vsel %vm1309, %v2038, 0
        %v2066 = vsel %vm1309, %v2039, 0
        %v2069 = vsel %vm1309, %v2040, 0
        %v2072 = vsel %vm1309, %v2041, 0
        %v2075 = vsel %vm1309, %v2042, 0
        %v2078 = vsel %vm1309, %v2043, 0
        %v2081 = vsel %vm1309, %v2044, 0
        %v2084 = vsel %vm1309, %v2045, 0
        %v2087 = vsel %vm1309, %v2046, 0
        %2089 = vmatprep.subr.bf16.mxu0 0
        %2090 = vmatpush1.bf16.msra.mxu0 %v2055
        %2091 = vmatprep.subr.bf16.mxu0 0
        %2092 = vmatpush1.bf16.msra.mxu0 %v2056
        %2093 = vmatprep.subr.bf16.mxu0 0
        %2094 = vmatpush1.bf16.msra.mxu0 0
        %2095 = vmatprep.subr.bf16.mxu0 0
        %2096 = vmatpush1.bf16.msra.mxu0 0
        %2097 = vmatprep.subr.bf16.mxu0 0
        %2098 = vmatpush1.bf16.msra.mxu0 0
        %2099 = vmatprep.subr.bf16.mxu0 0
        %2100 = vmatpush1.bf16.msra.mxu0 0
        %2101 = vmatprep.subr.bf16.mxu0 0
        %2102 = vmatpush1.bf16.msra.mxu0 0
        %2103 = vmatprep.subr.bf16.mxu0 0
        %2104 = vmatpush1.bf16.msra.mxu0 0
        %2105 = vmatprep.subr.bf16.mxu0 0
        %2106 = vmatpush1.bf16.msra.mxu0 0
        %2107 = vmatprep.subr.bf16.mxu0 0
        %2108 = vmatpush1.bf16.msra.mxu0 0
        %2109 = vmatprep.subr.bf16.mxu0 0
        %2110 = vmatpush1.bf16.msra.mxu0 0
        %2111 = vmatprep.subr.bf16.mxu0 0
        %2112 = vmatpush1.bf16.msra.mxu0 0
        %2113 = vmatprep.subr.bf16.mxu0 0
        %2114 = vmatpush1.bf16.msra.mxu0 0
        %2115 = vmatprep.subr.bf16.mxu0 0
        %2116 = vmatpush1.bf16.msra.mxu0 0
        %2117 = vmatprep.subr.bf16.mxu0 0
        %2118 = vmatpush1.bf16.msra.mxu0 0
        %2119 = vmatprep.subr.bf16.mxu0 0
        %2120 = vmatpush1.bf16.msra.mxu0 0
        %2121 = vmatprep.mubr.bf16.mxu0 0
        %2122 = vmatmul.mubr.bf16.gmra.mrb[0].mxu0 %v2060
        %v2123 = vpop.f32.mrb[0].mxu0
        %v2124 = vadd.f32 0.0, %v2123
        %v2125 = vpop.f32.mrb[0].mxu0
        %v2126 = vpop.f32.mrb[0].mxu0
        %v2127 = vadd.f32 0.0, %v2126
        %v2128 = vpop.f32.mrb[0].mxu0
        %2129 = vmatprep.mubr.bf16.mxu0 0
        %2130 = vmatmul.mubr.bf16.gmra.mrb[0].mxu0 %v2063
        %v2131 = vpop.f32.mrb[0].mxu0
        %v2132 = vadd.f32 0.0, %v2131
        %v2133 = vpop.f32.mrb[0].mxu0
        %v2134 = vpop.f32.mrb[0].mxu0
        %v2135 = vadd.f32 0.0, %v2134
        %v2136 = vpop.f32.mrb[0].mxu0
        %2137 = vmatprep.mubr.bf16.mxu0 0
        %2138 = vmatmul.mubr.bf16.gmra.mrb[0].mxu0 %v2066
        %v2139 = vpop.f32.mrb[0].mxu0
        %v2140 = vadd.f32 0.0, %v2139
        %v2141 = vpop.f32.mrb[0].mxu0
        %v2142 = vpop.f32.mrb[0].mxu0
        %v2143 = vadd.f32 0.0, %v2142
        %v2144 = vpop.f32.mrb[0].mxu0
        %2145 = vmatprep.mubr.bf16.mxu0 0
        %2146 = vmatmul.mubr.bf16.gmra.mrb[0].mxu0 %v2069
        %v2147 = vpop.f32.mrb[0].mxu0
        %v2148 = vadd.f32 0.0, %v2147
        %v2149 = vpop.f32.mrb[0].mxu0
        %v2150 = vpop.f32.mrb[0].mxu0
        %v2151 = vadd.f32 0.0, %v2150
        %v2152 = vpop.f32.mrb[0].mxu0
        %2153 = vmatprep.mubr.bf16.mxu0 0
        %2154 = vmatmul.mubr.bf16.gmra.mrb[0].mxu0 %v2072
        %v2155 = vpop.f32.mrb[0].mxu0
        %v2156 = vadd.f32 0.0, %v2155
        %v2157 = vpop.f32.mrb[0].mxu0
        %v2158 = vpop.f32.mrb[0].mxu0
        %v2159 = vadd.f32 0.0, %v2158
        %v2160 = vpop.f32.mrb[0].mxu0
        %2161 = vmatprep.mubr.bf16.mxu0 0
        %2162 = vmatmul.mubr.bf16.gmra.mrb[0].mxu0 %v2075
        %v2163 = vpop.f32.mrb[0].mxu0
        %v2164 = vadd.f32 0.0, %v2163
        %v2165 = vpop.f32.mrb[0].mxu0
        %v2166 = vpop.f32.mrb[0].mxu0
        %v2167 = vadd.f32 0.0, %v2166
        %v2168 = vpop.f32.mrb[0].mxu0
        %2169 = vmatprep.mubr.bf16.mxu0 0
        %2170 = vmatmul.mubr.bf16.gmra.mrb[0].mxu0 %v2078
        %v2171 = vpop.f32.mrb[0].mxu0
        %v2172 = vadd.f32 0.0, %v2171
        %v2173 = vpop.f32.mrb[0].mxu0
        %v2174 = vpop.f32.mrb[0].mxu0
        %v2175 = vadd.f32 0.0, %v2174
        %v2176 = vpop.f32.mrb[0].mxu0
        %2177 = vmatprep.mubr.bf16.mxu0 0
        %2178 = vmatmul.mubr.bf16.gmra.mrb[0].mxu0 %v2081
        %v2179 = vpop.f32.mrb[0].mxu0
        %v2180 = vadd.f32 0.0, %v2179
        %v2181 = vpop.f32.mrb[0].mxu0
        %v2182 = vpop.f32.mrb[0].mxu0
        %v2183 = vadd.f32 0.0, %v2182
        %v2184 = vpop.f32.mrb[0].mxu0
        %2185 = vmatprep.mubr.bf16.mxu0 0
        %2186 = vmatmul.mubr.bf16.gmra.mrb[0].mxu0 %v2084
        %v2187 = vpop.f32.mrb[0].mxu0
        %v2188 = vadd.f32 0.0, %v2187
        %v2189 = vpop.f32.mrb[0].mxu0
        %v2190 = vpop.f32.mrb[0].mxu0
        %v2191 = vadd.f32 0.0, %v2190
        %v2192 = vpop.f32.mrb[0].mxu0
        %2193 = vmatprep.mubr.bf16.mxu0 0
        %2194 = vmatmul.mubr.bf16.gmra.mrb[0].mxu0 %v2087
        %v2195 = vpop.f32.mrb[0].mxu0
        %v2196 = vadd.f32 0.0, %v2195
        %v2197 = vpop.f32.mrb[0].mxu0
        %v2198 = vpop.f32.mrb[0].mxu0
        %v2199 = vadd.f32 0.0, %v2198
        %v2200 = vpop.f32.mrb[0].mxu0
        %2201 = vdwg.mxu0
        %v2202 = vadd.f32 %v1951, %v2124
        %v2203 = vadd.f32 %v1952, %v2127
        %v2204 = vadd.f32 %v1953, %v2132
        %v2205 = vadd.f32 %v1954, %v2135
        %v2206 = vadd.f32 %v1955, %v2140
        %v2207 = vadd.f32 %v1956, %v2143
        %v2208 = vadd.f32 %v1957, %v2148
        %v2209 = vadd.f32 %v1958, %v2151
        %v2210 = vadd.f32 %v1959, %v2156
        %v2211 = vadd.f32 %v1960, %v2159
        %v2212 = vadd.f32 %v1961, %v2164
        %v2213 = vadd.f32 %v1962, %v2167
        %v2214 = vadd.f32 %v1963, %v2172
        %v2215 = vadd.f32 %v1964, %v2175
        %v2216 = vadd.f32 %v1965, %v2180
        %v2217 = vadd.f32 %v1966, %v2183
        %v2218 = vadd.f32 %v1967, %v2188
        %v2219 = vadd.f32 %v1968, %v2191
        %v2220 = vadd.f32 %v1969, %v2196
        %v2221 = vadd.f32 %v1970, %v2199
        %v2222 = vld [vmem:[%s1971] sm:$0xf]
        %v2223 = vld [vmem:[%s1971 + $0x4] sm:$0xf]
        %v2224 = vld [vmem:[%s1971 + $0x8] sm:$0x1]
        %v2225 = vld [vmem:[%s1971 + $0xc] sm:$0xf]
        %v2226 = vld [vmem:[%s1971 + $0x10] sm:$0xf]
        %v2227 = vld [vmem:[%s1971 + $0x14] sm:$0x1]
        %v2228 = vld [vmem:[%s1971 + $0x18] sm:$0xf]
        %v2229 = vld [vmem:[%s1971 + $0x1c] sm:$0xf]
        %v2230 = vld [vmem:[%s1971 + $0x20] sm:$0x1]
        %v2231 = vld [vmem:[%s1971 + $0x24] sm:$0xf]
        %v2232 = vld [vmem:[%s1971 + $0x28] sm:$0xf]
        %v2233 = vld [vmem:[%s1971 + $0x2c] sm:$0x1]
        %v2234 = vld [vmem:[%s1971 + $0x30] sm:$0xf]
        %v2235 = vld [vmem:[%s1971 + $0x34] sm:$0xf]
        %v2236 = vld [vmem:[%s1971 + $0x38] sm:$0x1]
        %v2237 = vld [vmem:[%s1971 + $0x3c] sm:$0xf]
        %v2238 = vld [vmem:[%s1971 + $0x40] sm:$0xf]
        %v2239 = vld [vmem:[%s1971 + $0x44] sm:$0x1]
        %v2240 = vld [vmem:[%s1971 + $0x48] sm:$0xf]
        %v2241 = vld [vmem:[%s1971 + $0x4c] sm:$0xf]
        %v2242 = vld [vmem:[%s1971 + $0x50] sm:$0x1]
        %v2243 = vld [vmem:[%s1971 + $0x54] sm:$0xf]
        %v2244 = vld [vmem:[%s1971 + $0x58] sm:$0xf]
        %v2245 = vld [vmem:[%s1971 + $0x5c] sm:$0x1]
        %v2246 = vld [vmem:[%s1971 + $0x60] sm:$0xf]
        %v2247 = vld [vmem:[%s1971 + $0x64] sm:$0xf]
        %v2248 = vld [vmem:[%s1971 + $0x68] sm:$0x1]
        %v2249 = vld [vmem:[%s1971 + $0x6c] sm:$0xf]
        %v2250 = vld [vmem:[%s1971 + $0x70] sm:$0xf]
        %v2251 = vld [vmem:[%s1971 + $0x74] sm:$0x1]
        %v2253 = vshrl.u32 %v2222, 16
        %v2255 = vrot.slane %v2253, 4
        %v2256 = vshll.u32 %v2222, 16
        %v2258 = vrot.slane %v2256, 5
        %v2259 = vor.u32 %v2255, %v2258
        %v2260 = vrot.slane %v2259, 4
        %v2262 = vshll.u32 %v2223, 16
        %v2264 = vrot.slane %v2262, 5
        %v2265 = vsel %vm1021, %v2260, %v2264
        %v2266 = vshrl.u32 %v2223, 16
        %v2268 = vrot.slane %v2266, 4
        %v2269 = vor.u32 %v2268, %v2264
        %v2270 = vrot.slane %v2269, 4
        %v2272 = vshll.u32 %v2224, 16
        %v2274 = vrot.slane %v2272, 5
        %v2275 = vsel %vm1021, %v2270, %v2274
        %v2277 = vshrl.u32 %v2225, 16
        %v2279 = vrot.slane %v2277, 4
        %v2280 = vshll.u32 %v2225, 16
        %v2282 = vrot.slane %v2280, 5
        %v2283 = vor.u32 %v2279, %v2282
        %v2284 = vrot.slane %v2283, 4
        %v2286 = vshll.u32 %v2226, 16
        %v2288 = vrot.slane %v2286, 5
        %v2289 = vsel %vm1021, %v2284, %v2288
        %v2290 = vshrl.u32 %v2226, 16
        %v2292 = vrot.slane %v2290, 4
        %v2293 = vor.u32 %v2292, %v2288
        %v2294 = vrot.slane %v2293, 4
        %v2296 = vshll.u32 %v2227, 16
        %v2298 = vrot.slane %v2296, 5
        %v2299 = vsel %vm1021, %v2294, %v2298
        %v2301 = vshrl.u32 %v2228, 16
        %v2303 = vrot.slane %v2301, 4
        %v2304 = vshll.u32 %v2228, 16
        %v2306 = vrot.slane %v2304, 5
        %v2307 = vor.u32 %v2303, %v2306
        %v2308 = vrot.slane %v2307, 4
        %v2310 = vshll.u32 %v2229, 16
        %v2312 = vrot.slane %v2310, 5
        %v2313 = vsel %vm1021, %v2308, %v2312
        %v2314 = vshrl.u32 %v2229, 16
        %v2316 = vrot.slane %v2314, 4
        %v2317 = vor.u32 %v2316, %v2312
        %v2318 = vrot.slane %v2317, 4
        %v2320 = vshll.u32 %v2230, 16
        %v2322 = vrot.slane %v2320, 5
        %v2323 = vsel %vm1021, %v2318, %v2322
        %v2325 = vshrl.u32 %v2231, 16
        %v2327 = vrot.slane %v2325, 4
        %v2328 = vshll.u32 %v2231, 16
        %v2330 = vrot.slane %v2328, 5
        %v2331 = vor.u32 %v2327, %v2330
        %v2332 = vrot.slane %v2331, 4
        %v2334 = vshll.u32 %v2232, 16
        %v2336 = vrot.slane %v2334, 5
        %v2337 = vsel %vm1021, %v2332, %v2336
        %v2338 = vshrl.u32 %v2232, 16
        %v2340 = vrot.slane %v2338, 4
        %v2341 = vor.u32 %v2340, %v2336
        %v2342 = vrot.slane %v2341, 4
        %v2344 = vshll.u32 %v2233, 16
        %v2346 = vrot.slane %v2344, 5
        %v2347 = vsel %vm1021, %v2342, %v2346
        %v2349 = vshrl.u32 %v2234, 16
        %v2351 = vrot.slane %v2349, 4
        %v2352 = vshll.u32 %v2234, 16
        %v2354 = vrot.slane %v2352, 5
        %v2355 = vor.u32 %v2351, %v2354
        %v2356 = vrot.slane %v2355, 4
        %v2358 = vshll.u32 %v2235, 16
        %v2360 = vrot.slane %v2358, 5
        %v2361 = vsel %vm1021, %v2356, %v2360
        %v2362 = vshrl.u32 %v2235, 16
        %v2364 = vrot.slane %v2362, 4
        %v2365 = vor.u32 %v2364, %v2360
        %v2366 = vrot.slane %v2365, 4
        %v2368 = vshll.u32 %v2236, 16
        %v2370 = vrot.slane %v2368, 5
        %v2371 = vsel %vm1021, %v2366, %v2370
        %v2373 = vshrl.u32 %v2237, 16
        %v2375 = vrot.slane %v2373, 4
        %v2376 = vshll.u32 %v2237, 16
        %v2378 = vrot.slane %v2376, 5
        %v2379 = vor.u32 %v2375, %v2378
        %v2380 = vrot.slane %v2379, 4
        %v2382 = vshll.u32 %v2238, 16
        %v2384 = vrot.slane %v2382, 5
        %v2385 = vsel %vm1021, %v2380, %v2384
        %v2386 = vshrl.u32 %v2238, 16
        %v2388 = vrot.slane %v2386, 4
        %v2389 = vor.u32 %v2388, %v2384
        %v2390 = vrot.slane %v2389, 4
        %v2392 = vshll.u32 %v2239, 16
        %v2394 = vrot.slane %v2392, 5
        %v2395 = vsel %vm1021, %v2390, %v2394
        %v2397 = vshrl.u32 %v2240, 16
        %v2399 = vrot.slane %v2397, 4
        %v2400 = vshll.u32 %v2240, 16
        %v2402 = vrot.slane %v2400, 5
        %v2403 = vor.u32 %v2399, %v2402
        %v2404 = vrot.slane %v2403, 4
        %v2406 = vshll.u32 %v2241, 16
        %v2408 = vrot.slane %v2406, 5
        %v2409 = vsel %vm1021, %v2404, %v2408
        %v2410 = vshrl.u32 %v2241, 16
        %v2412 = vrot.slane %v2410, 4
        %v2413 = vor.u32 %v2412, %v2408
        %v2414 = vrot.slane %v2413, 4
        %v2416 = vshll.u32 %v2242, 16
        %v2418 = vrot.slane %v2416, 5
        %v2419 = vsel %vm1021, %v2414, %v2418
        %v2421 = vshrl.u32 %v2243, 16
        %v2423 = vrot.slane %v2421, 4
        %v2424 = vshll.u32 %v2243, 16
        %v2426 = vrot.slane %v2424, 5
        %v2427 = vor.u32 %v2423, %v2426
        %v2428 = vrot.slane %v2427, 4
        %v2430 = vshll.u32 %v2244, 16
        %v2432 = vrot.slane %v2430, 5
        %v2433 = vsel %vm1021, %v2428, %v2432
        %v2434 = vshrl.u32 %v2244, 16
        %v2436 = vrot.slane %v2434, 4
        %v2437 = vor.u32 %v2436, %v2432
        %v2438 = vrot.slane %v2437, 4
        %v2440 = vshll.u32 %v2245, 16
        %v2442 = vrot.slane %v2440, 5
        %v2443 = vsel %vm1021, %v2438, %v2442
        %v2445 = vshrl.u32 %v2246, 16
        %v2447 = vrot.slane %v2445, 4
        %v2448 = vshll.u32 %v2246, 16
        %v2450 = vrot.slane %v2448, 5
        %v2451 = vor.u32 %v2447, %v2450
        %v2452 = vrot.slane %v2451, 4
        %v2454 = vshll.u32 %v2247, 16
        %v2456 = vrot.slane %v2454, 5
        %v2457 = vsel %vm1021, %v2452, %v2456
        %v2458 = vshrl.u32 %v2247, 16
        %v2460 = vrot.slane %v2458, 4
        %v2461 = vor.u32 %v2460, %v2456
        %v2462 = vrot.slane %v2461, 4
        %v2464 = vshll.u32 %v2248, 16
        %v2466 = vrot.slane %v2464, 5
        %v2467 = vsel %vm1021, %v2462, %v2466
        %v2469 = vshrl.u32 %v2249, 16
        %v2471 = vrot.slane %v2469, 4
        %v2472 = vshll.u32 %v2249, 16
        %v2474 = vrot.slane %v2472, 5
        %v2475 = vor.u32 %v2471, %v2474
        %v2476 = vrot.slane %v2475, 4
        %v2478 = vshll.u32 %v2250, 16
        %v2480 = vrot.slane %v2478, 5
        %v2481 = vsel %vm1021, %v2476, %v2480
        %v2482 = vshrl.u32 %v2250, 16
        %v2484 = vrot.slane %v2482, 4
        %v2485 = vor.u32 %v2484, %v2480
        %v2486 = vrot.slane %v2485, 4
        %v2488 = vshll.u32 %v2251, 16
        %v2490 = vrot.slane %v2488, 5
        %v2491 = vsel %vm1021, %v2486, %v2490
        %s2492 = scalar_lea.vmem [#allocation10], 64
        %v2493 = vld [vmem:[%s2492] sm:$0xf]
        %v2494 = vld [vmem:[%s2492 + $0x4] sm:$0xf]
        %v2495 = vld [vmem:[%s2492 + $0x8] sm:$0xf]
        %v2496 = vld [vmem:[%s2492 + $0xc] sm:$0xf]
        %v2497 = vunpack.c.l.b16 %v2265
        %v2498 = vunpack.c.l.b16 %v2275
        %v2499 = vunpack.c.l.b16 %v2289
        %v2500 = vunpack.c.l.b16 %v2299
        %v2501 = vunpack.c.l.b16 %v2313
        %v2502 = vunpack.c.l.b16 %v2323
        %v2503 = vunpack.c.l.b16 %v2337
        %v2504 = vunpack.c.l.b16 %v2347
        %v2505 = vunpack.c.l.b16 %v2361
        %v2506 = vunpack.c.l.b16 %v2371
        %v2507 = vunpack.c.l.b16 %v2385
        %v2508 = vunpack.c.l.b16 %v2395
        %v2509 = vunpack.c.l.b16 %v2409
        %v2510 = vunpack.c.l.b16 %v2419
        %v2511 = vunpack.c.l.b16 %v2433
        %v2512 = vunpack.c.l.b16 %v2443
        %v2513 = vunpack.c.l.b16 %v2457
        %v2514 = vunpack.c.l.b16 %v2467
        %v2515 = vunpack.c.l.b16 %v2481
        %v2516 = vunpack.c.l.b16 %v2491
        %v2517 = vpack.c.b16 %v2498, %v2497
        %v2518 = vpack.c.b16 %v2500, %v2499
        %v2519 = vpack.c.b16 %v2502, %v2501
        %v2520 = vpack.c.b16 %v2504, %v2503
        %v2521 = vpack.c.b16 %v2506, %v2505
        %v2522 = vpack.c.b16 %v2508, %v2507
        %v2523 = vpack.c.b16 %v2510, %v2509
        %v2524 = vpack.c.b16 %v2512, %v2511
        %v2525 = vpack.c.b16 %v2514, %v2513
        %v2526 = vpack.c.b16 %v2516, %v2515
        %v2531 = vunpack.c.l.b16 %v2493
        %v2532 = vunpack.c.l.b16 %v2494
        %v2533 = vunpack.c.l.b16 %v2495
        %v2534 = vunpack.c.l.b16 %v2496
        %v2535 = vpack.c.b16 %v2532, %v2531
        %v2536 = vpack.c.b16 %v2534, %v2533
        %v2540 = vsel %vm1309, %v2517, 0
        %v2543 = vsel %vm1309, %v2518, 0
        %v2546 = vsel %vm1309, %v2519, 0
        %v2549 = vsel %vm1309, %v2520, 0
        %v2552 = vsel %vm1309, %v2521, 0
        %v2555 = vsel %vm1309, %v2522, 0
        %v2558 = vsel %vm1309, %v2523, 0
        %v2561 = vsel %vm1309, %v2524, 0
        %v2564 = vsel %vm1309, %v2525, 0
        %v2567 = vsel %vm1309, %v2526, 0
        %2569 = vmatprep.subr.bf16.mxu0 0
        %2570 = vmatpush1.bf16.msra.mxu0 %v2535
        %2571 = vmatprep.subr.bf16.mxu0 0
        %2572 = vmatpush1.bf16.msra.mxu0 %v2536
        %2573 = vmatprep.subr.bf16.mxu0 0
        %2574 = vmatpush1.bf16.msra.mxu0 0
        %2575 = vmatprep.subr.bf16.mxu0 0
        %2576 = vmatpush1.bf16.msra.mxu0 0
        %2577 = vmatprep.subr.bf16.mxu0 0
        %2578 = vmatpush1.bf16.msra.mxu0 0
        %2579 = vmatprep.subr.bf16.mxu0 0
        %2580 = vmatpush1.bf16.msra.mxu0 0
        %2581 = vmatprep.subr.bf16.mxu0 0
        %2582 = vmatpush1.bf16.msra.mxu0 0
        %2583 = vmatprep.subr.bf16.mxu0 0
        %2584 = vmatpush1.bf16.msra.mxu0 0
        %2585 = vmatprep.subr.bf16.mxu0 0
        %2586 = vmatpush1.bf16.msra.mxu0 0
        %2587 = vmatprep.subr.bf16.mxu0 0
        %2588 = vmatpush1.bf16.msra.mxu0 0
        %2589 = vmatprep.subr.bf16.mxu0 0
        %2590 = vmatpush1.bf16.msra.mxu0 0
        %2591 = vmatprep.subr.bf16.mxu0 0
        %2592 = vmatpush1.bf16.msra.mxu0 0
        %2593 = vmatprep.subr.bf16.mxu0 0
        %2594 = vmatpush1.bf16.msra.mxu0 0
        %2595 = vmatprep.subr.bf16.mxu0 0
        %2596 = vmatpush1.bf16.msra.mxu0 0
        %2597 = vmatprep.subr.bf16.mxu0 0
        %2598 = vmatpush1.bf16.msra.mxu0 0
        %2599 = vmatprep.subr.bf16.mxu0 0
        %2600 = vmatpush1.bf16.msra.mxu0 0
        %2601 = vmatprep.mubr.bf16.mxu0 0
        %2602 = vmatmul.mubr.bf16.gmra.mrb[0].mxu0 %v2540
        %v2603 = vpop.f32.mrb[0].mxu0
        %v2604 = vadd.f32 0.0, %v2603
        %v2605 = vpop.f32.mrb[0].mxu0
        %v2606 = vpop.f32.mrb[0].mxu0
        %v2607 = vadd.f32 0.0, %v2606
        %v2608 = vpop.f32.mrb[0].mxu0
        %2609 = vmatprep.mubr.bf16.mxu0 0
        %2610 = vmatmul.mubr.bf16.gmra.mrb[0].mxu0 %v2543
        %v2611 = vpop.f32.mrb[0].mxu0
        %v2612 = vadd.f32 0.0, %v2611
        %v2613 = vpop.f32.mrb[0].mxu0
        %v2614 = vpop.f32.mrb[0].mxu0
        %v2615 = vadd.f32 0.0, %v2614
        %v2616 = vpop.f32.mrb[0].mxu0
        %2617 = vmatprep.mubr.bf16.mxu0 0
        %2618 = vmatmul.mubr.bf16.gmra.mrb[0].mxu0 %v2546
        %v2619 = vpop.f32.mrb[0].mxu0
        %v2620 = vadd.f32 0.0, %v2619
        %v2621 = vpop.f32.mrb[0].mxu0
        %v2622 = vpop.f32.mrb[0].mxu0
        %v2623 = vadd.f32 0.0, %v2622
        %v2624 = vpop.f32.mrb[0].mxu0
        %2625 = vmatprep.mubr.bf16.mxu0 0
        %2626 = vmatmul.mubr.bf16.gmra.mrb[0].mxu0 %v2549
        %v2627 = vpop.f32.mrb[0].mxu0
        %v2628 = vadd.f32 0.0, %v2627
        %v2629 = vpop.f32.mrb[0].mxu0
        %v2630 = vpop.f32.mrb[0].mxu0
        %v2631 = vadd.f32 0.0, %v2630
        %v2632 = vpop.f32.mrb[0].mxu0
        %2633 = vmatprep.mubr.bf16.mxu0 0
        %2634 = vmatmul.mubr.bf16.gmra.mrb[0].mxu0 %v2552
        %v2635 = vpop.f32.mrb[0].mxu0
        %v2636 = vadd.f32 0.0, %v2635
        %v2637 = vpop.f32.mrb[0].mxu0
        %v2638 = vpop.f32.mrb[0].mxu0
        %v2639 = vadd.f32 0.0, %v2638
        %v2640 = vpop.f32.mrb[0].mxu0
        %2641 = vmatprep.mubr.bf16.mxu0 0
        %2642 = vmatmul.mubr.bf16.gmra.mrb[0].mxu0 %v2555
        %v2643 = vpop.f32.mrb[0].mxu0
        %v2644 = vadd.f32 0.0, %v2643
        %v2645 = vpop.f32.mrb[0].mxu0
        %v2646 = vpop.f32.mrb[0].mxu0
        %v2647 = vadd.f32 0.0, %v2646
        %v2648 = vpop.f32.mrb[0].mxu0
        %2649 = vmatprep.mubr.bf16.mxu0 0
        %2650 = vmatmul.mubr.bf16.gmra.mrb[0].mxu0 %v2558
        %v2651 = vpop.f32.mrb[0].mxu0
        %v2652 = vadd.f32 0.0, %v2651
        %v2653 = vpop.f32.mrb[0].mxu0
        %v2654 = vpop.f32.mrb[0].mxu0
        %v2655 = vadd.f32 0.0, %v2654
        %v2656 = vpop.f32.mrb[0].mxu0
        %2657 = vmatprep.mubr.bf16.mxu0 0
        %2658 = vmatmul.mubr.bf16.gmra.mrb[0].mxu0 %v2561
        %v2659 = vpop.f32.mrb[0].mxu0
        %v2660 = vadd.f32 0.0, %v2659
        %v2661 = vpop.f32.mrb[0].mxu0
        %v2662 = vpop.f32.mrb[0].mxu0
        %v2663 = vadd.f32 0.0, %v2662
        %v2664 = vpop.f32.mrb[0].mxu0
        %2665 = vmatprep.mubr.bf16.mxu0 0
        %2666 = vmatmul.mubr.bf16.gmra.mrb[0].mxu0 %v2564
        %v2667 = vpop.f32.mrb[0].mxu0
        %v2668 = vadd.f32 0.0, %v2667
        %v2669 = vpop.f32.mrb[0].mxu0
        %v2670 = vpop.f32.mrb[0].mxu0
        %v2671 = vadd.f32 0.0, %v2670
        %v2672 = vpop.f32.mrb[0].mxu0
        %2673 = vmatprep.mubr.bf16.mxu0 0
        %2674 = vmatmul.mubr.bf16.gmra.mrb[0].mxu0 %v2567
        %v2675 = vpop.f32.mrb[0].mxu0
        %v2676 = vadd.f32 0.0, %v2675
        %v2677 = vpop.f32.mrb[0].mxu0
        %v2678 = vpop.f32.mrb[0].mxu0
        %v2679 = vadd.f32 0.0, %v2678
        %v2680 = vpop.f32.mrb[0].mxu0
        %2681 = vdwg.mxu0
        %v2682 = vadd.f32 %v2202, %v2604
        %v2683 = vadd.f32 %v2203, %v2607
        %v2684 = vadd.f32 %v2204, %v2612
        %v2685 = vadd.f32 %v2205, %v2615
        %v2686 = vadd.f32 %v2206, %v2620
        %v2687 = vadd.f32 %v2207, %v2623
        %v2688 = vadd.f32 %v2208, %v2628
        %v2689 = vadd.f32 %v2209, %v2631
        %v2690 = vadd.f32 %v2210, %v2636
        %v2691 = vadd.f32 %v2211, %v2639
        %v2692 = vadd.f32 %v2212, %v2644
        %v2693 = vadd.f32 %v2213, %v2647
        %v2694 = vadd.f32 %v2214, %v2652
        %v2695 = vadd.f32 %v2215, %v2655
        %v2696 = vadd.f32 %v2216, %v2660
        %v2697 = vadd.f32 %v2217, %v2663
        %v2698 = vadd.f32 %v2218, %v2668
        %v2699 = vadd.f32 %v2219, %v2671
        %v2700 = vadd.f32 %v2220, %v2676
        %v2701 = vadd.f32 %v2221, %v2679
        %v2702 = vld [vmem:[%s1971] sm:$0xe]
        %v2703 = vld [vmem:[%s1971 + $0xc] sm:$0xe]
        %v2704 = vld [vmem:[%s1971 + $0x18] sm:$0xe]
        %v2705 = vld [vmem:[%s1971 + $0x24] sm:$0xe]
        %v2706 = vld [vmem:[%s1971 + $0x30] sm:$0xe]
        %v2707 = vld [vmem:[%s1971 + $0x3c] sm:$0xe]
        %v2708 = vld [vmem:[%s1971 + $0x48] sm:$0xe]
        %v2709 = vld [vmem:[%s1971 + $0x54] sm:$0xe]
        %v2710 = vld [vmem:[%s1971 + $0x60] sm:$0xe]
        %v2711 = vld [vmem:[%s1971 + $0x6c] sm:$0xe]
        %v2742 = vrot.slane %v2702, 5
        %v2743 = vrot.slane %v2742, 4
        %v2744 = vrot.slane %v2223, 5
        %v2745 = vsel %vm1690, %v2743, %v2744
        %v2746 = vrot.slane %v2744, 4
        %v2747 = vrot.slane %v2224, 5
        %v2748 = vsel %vm1690, %v2746, %v2747
        %v2749 = vrot.slane %v2703, 5
        %v2750 = vrot.slane %v2749, 4
        %v2751 = vrot.slane %v2226, 5
        %v2752 = vsel %vm1690, %v2750, %v2751
        %v2753 = vrot.slane %v2751, 4
        %v2754 = vrot.slane %v2227, 5
        %v2755 = vsel %vm1690, %v2753, %v2754
        %v2756 = vrot.slane %v2704, 5
        %v2757 = vrot.slane %v2756, 4
        %v2758 = vrot.slane %v2229, 5
        %v2759 = vsel %vm1690, %v2757, %v2758
        %v2760 = vrot.slane %v2758, 4
        %v2761 = vrot.slane %v2230, 5
        %v2762 = vsel %vm1690, %v2760, %v2761
        %v2763 = vrot.slane %v2705, 5
        %v2764 = vrot.slane %v2763, 4
        %v2765 = vrot.slane %v2232, 5
        %v2766 = vsel %vm1690, %v2764, %v2765
        %v2767 = vrot.slane %v2765, 4
        %v2768 = vrot.slane %v2233, 5
        %v2769 = vsel %vm1690, %v2767, %v2768
        %v2770 = vrot.slane %v2706, 5
        %v2771 = vrot.slane %v2770, 4
        %v2772 = vrot.slane %v2235, 5
        %v2773 = vsel %vm1690, %v2771, %v2772
        %v2774 = vrot.slane %v2772, 4
        %v2775 = vrot.slane %v2236, 5
        %v2776 = vsel %vm1690, %v2774, %v2775
        %v2777 = vrot.slane %v2707, 5
        %v2778 = vrot.slane %v2777, 4
        %v2779 = vrot.slane %v2238, 5
        %v2780 = vsel %vm1690, %v2778, %v2779
        %v2781 = vrot.slane %v2779, 4
        %v2782 = vrot.slane %v2239, 5
        %v2783 = vsel %vm1690, %v2781, %v2782
        %v2784 = vrot.slane %v2708, 5
        %v2785 = vrot.slane %v2784, 4
        %v2786 = vrot.slane %v2241, 5
        %v2787 = vsel %vm1690, %v2785, %v2786
        %v2788 = vrot.slane %v2786, 4
        %v2789 = vrot.slane %v2242, 5
        %v2790 = vsel %vm1690, %v2788, %v2789
        %v2791 = vrot.slane %v2709, 5
        %v2792 = vrot.slane %v2791, 4
        %v2793 = vrot.slane %v2244, 5
        %v2794 = vsel %vm1690, %v2792, %v2793
        %v2795 = vrot.slane %v2793, 4
        %v2796 = vrot.slane %v2245, 5
        %v2797 = vsel %vm1690, %v2795, %v2796
        %v2798 = vrot.slane %v2710, 5
        %v2799 = vrot.slane %v2798, 4
        %v2800 = vrot.slane %v2247, 5
        %v2801 = vsel %vm1690, %v2799, %v2800
        %v2802 = vrot.slane %v2800, 4
        %v2803 = vrot.slane %v2248, 5
        %v2804 = vsel %vm1690, %v2802, %v2803
        %v2805 = vrot.slane %v2711, 5
        %v2806 = vrot.slane %v2805, 4
        %v2807 = vrot.slane %v2250, 5
        %v2808 = vsel %vm1690, %v2806, %v2807
        %v2809 = vrot.slane %v2807, 4
        %v2810 = vrot.slane %v2251, 5
        %v2811 = vsel %vm1690, %v2809, %v2810
        %s2812 = scalar_lea.vmem [#allocation10], 80
        %v2813 = vld [vmem:[%s2812] sm:$0xf]
        %v2814 = vld [vmem:[%s2812 + $0x4] sm:$0xf]
        %v2815 = vld [vmem:[%s2812 + $0x8] sm:$0xf]
        %v2816 = vld [vmem:[%s2812 + $0xc] sm:$0xf]
        %v2817 = vunpack.c.l.b16 %v2745
        %v2818 = vunpack.c.l.b16 %v2748
        %v2819 = vunpack.c.l.b16 %v2752
        %v2820 = vunpack.c.l.b16 %v2755
        %v2821 = vunpack.c.l.b16 %v2759
        %v2822 = vunpack.c.l.b16 %v2762
        %v2823 = vunpack.c.l.b16 %v2766
        %v2824 = vunpack.c.l.b16 %v2769
        %v2825 = vunpack.c.l.b16 %v2773
        %v2826 = vunpack.c.l.b16 %v2776
        %v2827 = vunpack.c.l.b16 %v2780
        %v2828 = vunpack.c.l.b16 %v2783
        %v2829 = vunpack.c.l.b16 %v2787
        %v2830 = vunpack.c.l.b16 %v2790
        %v2831 = vunpack.c.l.b16 %v2794
        %v2832 = vunpack.c.l.b16 %v2797
        %v2833 = vunpack.c.l.b16 %v2801
        %v2834 = vunpack.c.l.b16 %v2804
        %v2835 = vunpack.c.l.b16 %v2808
        %v2836 = vunpack.c.l.b16 %v2811
        %v2837 = vpack.c.b16 %v2818, %v2817
        %v2838 = vpack.c.b16 %v2820, %v2819
        %v2839 = vpack.c.b16 %v2822, %v2821
        %v2840 = vpack.c.b16 %v2824, %v2823
        %v2841 = vpack.c.b16 %v2826, %v2825
        %v2842 = vpack.c.b16 %v2828, %v2827
        %v2843 = vpack.c.b16 %v2830, %v2829
        %v2844 = vpack.c.b16 %v2832, %v2831
        %v2845 = vpack.c.b16 %v2834, %v2833
        %v2846 = vpack.c.b16 %v2836, %v2835
        %v2851 = vunpack.c.l.b16 %v2813
        %v2852 = vunpack.c.l.b16 %v2814
        %v2853 = vunpack.c.l.b16 %v2815
        %v2854 = vunpack.c.l.b16 %v2816
        %v2855 = vpack.c.b16 %v2852, %v2851
        %v2856 = vpack.c.b16 %v2854, %v2853
        %v2860 = vsel %vm1309, %v2837, 0
        %v2863 = vsel %vm1309, %v2838, 0
        %v2866 = vsel %vm1309, %v2839, 0
        %v2869 = vsel %vm1309, %v2840, 0
        %v2872 = vsel %vm1309, %v2841, 0
        %v2875 = vsel %vm1309, %v2842, 0
        %v2878 = vsel %vm1309, %v2843, 0
        %v2881 = vsel %vm1309, %v2844, 0
        %v2884 = vsel %vm1309, %v2845, 0
        %v2887 = vsel %vm1309, %v2846, 0
        %2889 = vmatprep.subr.bf16.mxu0 0
        %2890 = vmatpush1.bf16.msra.mxu0 %v2855
        %2891 = vmatprep.subr.bf16.mxu0 0
        %2892 = vmatpush1.bf16.msra.mxu0 %v2856
        %2893 = vmatprep.subr.bf16.mxu0 0
        %2894 = vmatpush1.bf16.msra.mxu0 0
        %2895 = vmatprep.subr.bf16.mxu0 0
        %2896 = vmatpush1.bf16.msra.mxu0 0
        %2897 = vmatprep.subr.bf16.mxu0 0
        %2898 = vmatpush1.bf16.msra.mxu0 0
        %2899 = vmatprep.subr.bf16.mxu0 0
        %2900 = vmatpush1.bf16.msra.mxu0 0
        %2901 = vmatprep.subr.bf16.mxu0 0
        %2902 = vmatpush1.bf16.msra.mxu0 0
        %2903 = vmatprep.subr.bf16.mxu0 0
        %2904 = vmatpush1.bf16.msra.mxu0 0
        %2905 = vmatprep.subr.bf16.mxu0 0
        %2906 = vmatpush1.bf16.msra.mxu0 0
        %2907 = vmatprep.subr.bf16.mxu0 0
        %2908 = vmatpush1.bf16.msra.mxu0 0
        %2909 = vmatprep.subr.bf16.mxu0 0
        %2910 = vmatpush1.bf16.msra.mxu0 0
        %2911 = vmatprep.subr.bf16.mxu0 0
        %2912 = vmatpush1.bf16.msra.mxu0 0
        %2913 = vmatprep.subr.bf16.mxu0 0
        %2914 = vmatpush1.bf16.msra.mxu0 0
        %2915 = vmatprep.subr.bf16.mxu0 0
        %2916 = vmatpush1.bf16.msra.mxu0 0
        %2917 = vmatprep.subr.bf16.mxu0 0
        %2918 = vmatpush1.bf16.msra.mxu0 0
        %2919 = vmatprep.subr.bf16.mxu0 0
        %2920 = vmatpush1.bf16.msra.mxu0 0
        %2921 = vmatprep.mubr.bf16.mxu0 0
        %2922 = vmatmul.mubr.bf16.gmra.mrb[0].mxu0 %v2860
        %v2923 = vpop.f32.mrb[0].mxu0
        %v2924 = vadd.f32 0.0, %v2923
        %v2925 = vpop.f32.mrb[0].mxu0
        %v2926 = vpop.f32.mrb[0].mxu0
        %v2927 = vadd.f32 0.0, %v2926
        %v2928 = vpop.f32.mrb[0].mxu0
        %2929 = vmatprep.mubr.bf16.mxu0 0
        %2930 = vmatmul.mubr.bf16.gmra.mrb[0].mxu0 %v2863
        %v2931 = vpop.f32.mrb[0].mxu0
        %v2932 = vadd.f32 0.0, %v2931
        %v2933 = vpop.f32.mrb[0].mxu0
        %v2934 = vpop.f32.mrb[0].mxu0
        %v2935 = vadd.f32 0.0, %v2934
        %v2936 = vpop.f32.mrb[0].mxu0
        %2937 = vmatprep.mubr.bf16.mxu0 0
        %2938 = vmatmul.mubr.bf16.gmra.mrb[0].mxu0 %v2866
        %v2939 = vpop.f32.mrb[0].mxu0
        %v2940 = vadd.f32 0.0, %v2939
        %v2941 = vpop.f32.mrb[0].mxu0
        %v2942 = vpop.f32.mrb[0].mxu0
        %v2943 = vadd.f32 0.0, %v2942
        %v2944 = vpop.f32.mrb[0].mxu0
        %2945 = vmatprep.mubr.bf16.mxu0 0
        %2946 = vmatmul.mubr.bf16.gmra.mrb[0].mxu0 %v2869
        %v2947 = vpop.f32.mrb[0].mxu0
        %v2948 = vadd.f32 0.0, %v2947
        %v2949 = vpop.f32.mrb[0].mxu0
        %v2950 = vpop.f32.mrb[0].mxu0
        %v2951 = vadd.f32 0.0, %v2950
        %v2952 = vpop.f32.mrb[0].mxu0
        %2953 = vmatprep.mubr.bf16.mxu0 0
        %2954 = vmatmul.mubr.bf16.gmra.mrb[0].mxu0 %v2872
        %v2955 = vpop.f32.mrb[0].mxu0
        %v2956 = vadd.f32 0.0, %v2955
        %v2957 = vpop.f32.mrb[0].mxu0
        %v2958 = vpop.f32.mrb[0].mxu0
        %v2959 = vadd.f32 0.0, %v2958
        %v2960 = vpop.f32.mrb[0].mxu0
        %2961 = vmatprep.mubr.bf16.mxu0 0
        %2962 = vmatmul.mubr.bf16.gmra.mrb[0].mxu0 %v2875
        %v2963 = vpop.f32.mrb[0].mxu0
        %v2964 = vadd.f32 0.0, %v2963
        %v2965 = vpop.f32.mrb[0].mxu0
        %v2966 = vpop.f32.mrb[0].mxu0
        %v2967 = vadd.f32 0.0, %v2966
        %v2968 = vpop.f32.mrb[0].mxu0
        %2969 = vmatprep.mubr.bf16.mxu0 0
        %2970 = vmatmul.mubr.bf16.gmra.mrb[0].mxu0 %v2878
        %v2971 = vpop.f32.mrb[0].mxu0
        %v2972 = vadd.f32 0.0, %v2971
        %v2973 = vpop.f32.mrb[0].mxu0
        %v2974 = vpop.f32.mrb[0].mxu0
        %v2975 = vadd.f32 0.0, %v2974
        %v2976 = vpop.f32.mrb[0].mxu0
        %2977 = vmatprep.mubr.bf16.mxu0 0
        %2978 = vmatmul.mubr.bf16.gmra.mrb[0].mxu0 %v2881
        %v2979 = vpop.f32.mrb[0].mxu0
        %v2980 = vadd.f32 0.0, %v2979
        %v2981 = vpop.f32.mrb[0].mxu0
        %v2982 = vpop.f32.mrb[0].mxu0
        %v2983 = vadd.f32 0.0, %v2982
        %v2984 = vpop.f32.mrb[0].mxu0
        %2985 = vmatprep.mubr.bf16.mxu0 0
        %2986 = vmatmul.mubr.bf16.gmra.mrb[0].mxu0 %v2884
        %v2987 = vpop.f32.mrb[0].mxu0
        %v2988 = vadd.f32 0.0, %v2987
        %v2989 = vpop.f32.mrb[0].mxu0
        %v2990 = vpop.f32.mrb[0].mxu0
        %v2991 = vadd.f32 0.0, %v2990
        %v2992 = vpop.f32.mrb[0].mxu0
        %2993 = vmatprep.mubr.bf16.mxu0 0
        %2994 = vmatmul.mubr.bf16.gmra.mrb[0].mxu0 %v2887
        %v2995 = vpop.f32.mrb[0].mxu0
        %v2996 = vadd.f32 0.0, %v2995
        %v2997 = vpop.f32.mrb[0].mxu0
        %v2998 = vpop.f32.mrb[0].mxu0
        %v2999 = vadd.f32 0.0, %v2998
        %v3000 = vpop.f32.mrb[0].mxu0
        %3001 = vdwg.mxu0
        %v3002 = vadd.f32 %v2682, %v2924
        %v3003 = vadd.f32 %v2683, %v2927
        %v3004 = vadd.f32 %v2684, %v2932
        %v3005 = vadd.f32 %v2685, %v2935
        %v3006 = vadd.f32 %v2686, %v2940
        %v3007 = vadd.f32 %v2687, %v2943
        %v3008 = vadd.f32 %v2688, %v2948
        %v3009 = vadd.f32 %v2689, %v2951
        %v3010 = vadd.f32 %v2690, %v2956
        %v3011 = vadd.f32 %v2691, %v2959
        %v3012 = vadd.f32 %v2692, %v2964
        %v3013 = vadd.f32 %v2693, %v2967
        %v3014 = vadd.f32 %v2694, %v2972
        %v3015 = vadd.f32 %v2695, %v2975
        %v3016 = vadd.f32 %v2696, %v2980
        %v3017 = vadd.f32 %v2697, %v2983
        %v3018 = vadd.f32 %v2698, %v2988
        %v3019 = vadd.f32 %v2699, %v2991
        %v3020 = vadd.f32 %v2700, %v2996
        %v3021 = vadd.f32 %v2701, %v2999
        %v3022 = vld [vmem:[%s772] sm:$0xf]
        %v3023 = vld [vmem:[%s772 + $0x4] sm:$0xf]
        %v3024 = vld [vmem:[%s772 + $0xc] sm:$0xf]
        %v3025 = vld [vmem:[%s772 + $0x10] sm:$0xf]
        %v3026 = vld [vmem:[%s772 + $0x18] sm:$0xf]
        %v3027 = vld [vmem:[%s772 + $0x1c] sm:$0xf]
        %v3028 = vld [vmem:[%s772 + $0x24] sm:$0xf]
        %v3029 = vld [vmem:[%s772 + $0x28] sm:$0xf]
        %v3030 = vld [vmem:[%s772 + $0x30] sm:$0xf]
        %v3031 = vld [vmem:[%s772 + $0x34] sm:$0xf]
        %v3032 = vld [vmem:[%s772 + $0x3c] sm:$0xf]
        %v3033 = vld [vmem:[%s772 + $0x40] sm:$0xf]
        %v3034 = vld [vmem:[%s772 + $0x48] sm:$0xf]
        %v3035 = vld [vmem:[%s772 + $0x4c] sm:$0xf]
        %v3036 = vld [vmem:[%s772 + $0x54] sm:$0xf]
        %v3037 = vld [vmem:[%s772 + $0x58] sm:$0xf]
        %v3038 = vld [vmem:[%s772 + $0x60] sm:$0xf]
        %v3039 = vld [vmem:[%s772 + $0x64] sm:$0xf]
        %v3040 = vld [vmem:[%s772 + $0x6c] sm:$0xf]
        %v3041 = vld [vmem:[%s772 + $0x70] sm:$0xf]
        %s3042 = scalar_lea.vmem [#allocation10], 96
        %v3043 = vld [vmem:[%s3042] sm:$0xf]
        %v3044 = vld [vmem:[%s3042 + $0x4] sm:$0xf]
        %v3045 = vld [vmem:[%s3042 + $0x8] sm:$0xf]
        %v3046 = vld [vmem:[%s3042 + $0xc] sm:$0xf]
        %v3067 = vunpack.c.l.b16 %v3022
        %v3068 = vunpack.c.l.b16 %v3023
        %v3069 = vunpack.c.l.b16 %v3024
        %v3070 = vunpack.c.l.b16 %v3025
        %v3071 = vunpack.c.l.b16 %v3026
        %v3072 = vunpack.c.l.b16 %v3027
        %v3073 = vunpack.c.l.b16 %v3028
        %v3074 = vunpack.c.l.b16 %v3029
        %v3075 = vunpack.c.l.b16 %v3030
        %v3076 = vunpack.c.l.b16 %v3031
        %v3077 = vunpack.c.l.b16 %v3032
        %v3078 = vunpack.c.l.b16 %v3033
        %v3079 = vunpack.c.l.b16 %v3034
        %v3080 = vunpack.c.l.b16 %v3035
        %v3081 = vunpack.c.l.b16 %v3036
        %v3082 = vunpack.c.l.b16 %v3037
        %v3083 = vunpack.c.l.b16 %v3038
        %v3084 = vunpack.c.l.b16 %v3039
        %v3085 = vunpack.c.l.b16 %v3040
        %v3086 = vunpack.c.l.b16 %v3041
        %v3087 = vpack.c.b16 %v3068, %v3067
        %v3088 = vpack.c.b16 %v3070, %v3069
        %v3089 = vpack.c.b16 %v3072, %v3071
        %v3090 = vpack.c.b16 %v3074, %v3073
        %v3091 = vpack.c.b16 %v3076, %v3075
        %v3092 = vpack.c.b16 %v3078, %v3077
        %v3093 = vpack.c.b16 %v3080, %v3079
        %v3094 = vpack.c.b16 %v3082, %v3081
        %v3095 = vpack.c.b16 %v3084, %v3083
        %v3096 = vpack.c.b16 %v3086, %v3085
        %v3101 = vunpack.c.l.b16 %v3043
        %v3102 = vunpack.c.l.b16 %v3044
        %v3103 = vunpack.c.l.b16 %v3045
        %v3104 = vunpack.c.l.b16 %v3046
        %v3105 = vpack.c.b16 %v3102, %v3101
        %v3106 = vpack.c.b16 %v3104, %v3103
        %v3110 = vsel %vm1309, %v3087, 0
        %v3113 = vsel %vm1309, %v3088, 0
        %v3116 = vsel %vm1309, %v3089, 0
        %v3119 = vsel %vm1309, %v3090, 0
        %v3122 = vsel %vm1309, %v3091, 0
        %v3125 = vsel %vm1309, %v3092, 0
        %v3128 = vsel %vm1309, %v3093, 0
        %v3131 = vsel %vm1309, %v3094, 0
        %v3134 = vsel %vm1309, %v3095, 0
        %v3137 = vsel %vm1309, %v3096, 0
        %3139 = vmatprep.subr.bf16.mxu0 0
        %3140 = vmatpush1.bf16.msra.mxu0 %v3105
        %3141 = vmatprep.subr.bf16.mxu0 0
        %3142 = vmatpush1.bf16.msra.mxu0 %v3106
        %3143 = vmatprep.subr.bf16.mxu0 0
        %3144 = vmatpush1.bf16.msra.mxu0 0
        %3145 = vmatprep.subr.bf16.mxu0 0
        %3146 = vmatpush1.bf16.msra.mxu0 0
        %3147 = vmatprep.subr.bf16.mxu0 0
        %3148 = vmatpush1.bf16.msra.mxu0 0
        %3149 = vmatprep.subr.bf16.mxu0 0
        %3150 = vmatpush1.bf16.msra.mxu0 0
        %3151 = vmatprep.subr.bf16.mxu0 0
        %3152 = vmatpush1.bf16.msra.mxu0 0
        %3153 = vmatprep.subr.bf16.mxu0 0
        %3154 = vmatpush1.bf16.msra.mxu0 0
        %3155 = vmatprep.subr.bf16.mxu0 0
        %3156 = vmatpush1.bf16.msra.mxu0 0
        %3157 = vmatprep.subr.bf16.mxu0 0
        %3158 = vmatpush1.bf16.msra.mxu0 0
        %3159 = vmatprep.subr.bf16.mxu0 0
        %3160 = vmatpush1.bf16.msra.mxu0 0
        %3161 = vmatprep.subr.bf16.mxu0 0
        %3162 = vmatpush1.bf16.msra.mxu0 0
        %3163 = vmatprep.subr.bf16.mxu0 0
        %3164 = vmatpush1.bf16.msra.mxu0 0
        %3165 = vmatprep.subr.bf16.mxu0 0
        %3166 = vmatpush1.bf16.msra.mxu0 0
        %3167 = vmatprep.subr.bf16.mxu0 0
        %3168 = vmatpush1.bf16.msra.mxu0 0
        %3169 = vmatprep.subr.bf16.mxu0 0
        %3170 = vmatpush1.bf16.msra.mxu0 0
        %3171 = vmatprep.mubr.bf16.mxu0 0
        %3172 = vmatmul.mubr.bf16.gmra.mrb[0].mxu0 %v3110
        %v3173 = vpop.f32.mrb[0].mxu0
        %v3174 = vadd.f32 0.0, %v3173
        %v3175 = vpop.f32.mrb[0].mxu0
        %v3176 = vpop.f32.mrb[0].mxu0
        %v3177 = vadd.f32 0.0, %v3176
        %v3178 = vpop.f32.mrb[0].mxu0
        %3179 = vmatprep.mubr.bf16.mxu0 0
        %3180 = vmatmul.mubr.bf16.gmra.mrb[0].mxu0 %v3113
        %v3181 = vpop.f32.mrb[0].mxu0
        %v3182 = vadd.f32 0.0, %v3181
        %v3183 = vpop.f32.mrb[0].mxu0
        %v3184 = vpop.f32.mrb[0].mxu0
        %v3185 = vadd.f32 0.0, %v3184
        %v3186 = vpop.f32.mrb[0].mxu0
        %3187 = vmatprep.mubr.bf16.mxu0 0
        %3188 = vmatmul.mubr.bf16.gmra.mrb[0].mxu0 %v3116
        %v3189 = vpop.f32.mrb[0].mxu0
        %v3190 = vadd.f32 0.0, %v3189
        %v3191 = vpop.f32.mrb[0].mxu0
        %v3192 = vpop.f32.mrb[0].mxu0
        %v3193 = vadd.f32 0.0, %v3192
        %v3194 = vpop.f32.mrb[0].mxu0
        %3195 = vmatprep.mubr.bf16.mxu0 0
        %3196 = vmatmul.mubr.bf16.gmra.mrb[0].mxu0 %v3119
        %v3197 = vpop.f32.mrb[0].mxu0
        %v3198 = vadd.f32 0.0, %v3197
        %v3199 = vpop.f32.mrb[0].mxu0
        %v3200 = vpop.f32.mrb[0].mxu0
        %v3201 = vadd.f32 0.0, %v3200
        %v3202 = vpop.f32.mrb[0].mxu0
        %3203 = vmatprep.mubr.bf16.mxu0 0
        %3204 = vmatmul.mubr.bf16.gmra.mrb[0].mxu0 %v3122
        %v3205 = vpop.f32.mrb[0].mxu0
        %v3206 = vadd.f32 0.0, %v3205
        %v3207 = vpop.f32.mrb[0].mxu0
        %v3208 = vpop.f32.mrb[0].mxu0
        %v3209 = vadd.f32 0.0, %v3208
        %v3210 = vpop.f32.mrb[0].mxu0
        %3211 = vmatprep.mubr.bf16.mxu0 0
        %3212 = vmatmul.mubr.bf16.gmra.mrb[0].mxu0 %v3125
        %v3213 = vpop.f32.mrb[0].mxu0
        %v3214 = vadd.f32 0.0, %v3213
        %v3215 = vpop.f32.mrb[0].mxu0
        %v3216 = vpop.f32.mrb[0].mxu0
        %v3217 = vadd.f32 0.0, %v3216
        %v3218 = vpop.f32.mrb[0].mxu0
        %3219 = vmatprep.mubr.bf16.mxu0 0
        %3220 = vmatmul.mubr.bf16.gmra.mrb[0].mxu0 %v3128
        %v3221 = vpop.f32.mrb[0].mxu0
        %v3222 = vadd.f32 0.0, %v3221
        %v3223 = vpop.f32.mrb[0].mxu0
        %v3224 = vpop.f32.mrb[0].mxu0
        %v3225 = vadd.f32 0.0, %v3224
        %v3226 = vpop.f32.mrb[0].mxu0
        %3227 = vmatprep.mubr.bf16.mxu0 0
        %3228 = vmatmul.mubr.bf16.gmra.mrb[0].mxu0 %v3131
        %v3229 = vpop.f32.mrb[0].mxu0
        %v3230 = vadd.f32 0.0, %v3229
        %v3231 = vpop.f32.mrb[0].mxu0
        %v3232 = vpop.f32.mrb[0].mxu0
        %v3233 = vadd.f32 0.0, %v3232
        %v3234 = vpop.f32.mrb[0].mxu0
        %3235 = vmatprep.mubr.bf16.mxu0 0
        %3236 = vmatmul.mubr.bf16.gmra.mrb[0].mxu0 %v3134
        %v3237 = vpop.f32.mrb[0].mxu0
        %v3238 = vadd.f32 0.0, %v3237
        %v3239 = vpop.f32.mrb[0].mxu0
        %v3240 = vpop.f32.mrb[0].mxu0
        %v3241 = vadd.f32 0.0, %v3240
        %v3242 = vpop.f32.mrb[0].mxu0
        %3243 = vmatprep.mubr.bf16.mxu0 0
        %3244 = vmatmul.mubr.bf16.gmra.mrb[0].mxu0 %v3137
        %v3245 = vpop.f32.mrb[0].mxu0
        %v3246 = vadd.f32 0.0, %v3245
        %v3247 = vpop.f32.mrb[0].mxu0
        %v3248 = vpop.f32.mrb[0].mxu0
        %v3249 = vadd.f32 0.0, %v3248
        %v3250 = vpop.f32.mrb[0].mxu0
        %3251 = vdwg.mxu0
        %v3252 = vadd.f32 %v3002, %v3174
        %v3253 = vadd.f32 %v3003, %v3177
        %v3254 = vadd.f32 %v3004, %v3182
        %v3255 = vadd.f32 %v3005, %v3185
        %v3256 = vadd.f32 %v3006, %v3190
        %v3257 = vadd.f32 %v3007, %v3193
        %v3258 = vadd.f32 %v3008, %v3198
        %v3259 = vadd.f32 %v3009, %v3201
        %v3260 = vadd.f32 %v3010, %v3206
        %v3261 = vadd.f32 %v3011, %v3209
        %v3262 = vadd.f32 %v3012, %v3214
        %v3263 = vadd.f32 %v3013, %v3217
        %v3264 = vadd.f32 %v3014, %v3222
        %v3265 = vadd.f32 %v3015, %v3225
        %v3266 = vadd.f32 %v3016, %v3230
        %v3267 = vadd.f32 %v3017, %v3233
        %v3268 = vadd.f32 %v3018, %v3238
        %v3269 = vadd.f32 %v3019, %v3241
        %v3270 = vadd.f32 %v3020, %v3246
        %v3271 = vadd.f32 %v3021, %v3249
        %v3272 = vld [vmem:[%s772] sm:$0xf]
        %v3273 = vld [vmem:[%s772 + $0x4] sm:$0xf]
        %v3274 = vld [vmem:[%s772 + $0x8] sm:$0x1]
        %v3275 = vld [vmem:[%s772 + $0xc] sm:$0xf]
        %v3276 = vld [vmem:[%s772 + $0x10] sm:$0xf]
        %v3277 = vld [vmem:[%s772 + $0x14] sm:$0x1]
        %v3278 = vld [vmem:[%s772 + $0x18] sm:$0xf]
        %v3279 = vld [vmem:[%s772 + $0x1c] sm:$0xf]
        %v3280 = vld [vmem:[%s772 + $0x20] sm:$0x1]
        %v3281 = vld [vmem:[%s772 + $0x24] sm:$0xf]
        %v3282 = vld [vmem:[%s772 + $0x28] sm:$0xf]
        %v3283 = vld [vmem:[%s772 + $0x2c] sm:$0x1]
        %v3284 = vld [vmem:[%s772 + $0x30] sm:$0xf]
        %v3285 = vld [vmem:[%s772 + $0x34] sm:$0xf]
        %v3286 = vld [vmem:[%s772 + $0x38] sm:$0x1]
        %v3287 = vld [vmem:[%s772 + $0x3c] sm:$0xf]
        %v3288 = vld [vmem:[%s772 + $0x40] sm:$0xf]
        %v3289 = vld [vmem:[%s772 + $0x44] sm:$0x1]
        %v3290 = vld [vmem:[%s772 + $0x48] sm:$0xf]
        %v3291 = vld [vmem:[%s772 + $0x4c] sm:$0xf]
        %v3292 = vld [vmem:[%s772 + $0x50] sm:$0x1]
        %v3293 = vld [vmem:[%s772 + $0x54] sm:$0xf]
        %v3294 = vld [vmem:[%s772 + $0x58] sm:$0xf]
        %v3295 = vld [vmem:[%s772 + $0x5c] sm:$0x1]
        %v3296 = vld [vmem:[%s772 + $0x60] sm:$0xf]
        %v3297 = vld [vmem:[%s772 + $0x64] sm:$0xf]
        %v3298 = vld [vmem:[%s772 + $0x68] sm:$0x1]
        %v3299 = vld [vmem:[%s772 + $0x6c] sm:$0xf]
        %v3300 = vld [vmem:[%s772 + $0x70] sm:$0xf]
        %v3301 = vld [vmem:[%s772 + $0x74] sm:$0x1]
        %v3303 = vshrl.u32 %v3272, 16
        %v3305 = vrot.slane %v3303, 4
        %v3306 = vshll.u32 %v3272, 16
        %v3308 = vrot.slane %v3306, 5
        %v3309 = vor.u32 %v3305, %v3308
        %v3310 = vrot.slane %v3309, 4
        %v3312 = vshll.u32 %v3273, 16
        %v3314 = vrot.slane %v3312, 5
        %v3315 = vsel %vm1021, %v3310, %v3314
        %v3316 = vshrl.u32 %v3273, 16
        %v3318 = vrot.slane %v3316, 4
        %v3319 = vor.u32 %v3318, %v3314
        %v3320 = vrot.slane %v3319, 4
        %v3322 = vshll.u32 %v3274, 16
        %v3324 = vrot.slane %v3322, 5
        %v3325 = vsel %vm1021, %v3320, %v3324
        %v3327 = vshrl.u32 %v3275, 16
        %v3329 = vrot.slane %v3327, 4
        %v3330 = vshll.u32 %v3275, 16
        %v3332 = vrot.slane %v3330, 5
        %v3333 = vor.u32 %v3329, %v3332
        %v3334 = vrot.slane %v3333, 4
        %v3336 = vshll.u32 %v3276, 16
        %v3338 = vrot.slane %v3336, 5
        %v3339 = vsel %vm1021, %v3334, %v3338
        %v3340 = vshrl.u32 %v3276, 16
        %v3342 = vrot.slane %v3340, 4
        %v3343 = vor.u32 %v3342, %v3338
        %v3344 = vrot.slane %v3343, 4
        %v3346 = vshll.u32 %v3277, 16
        %v3348 = vrot.slane %v3346, 5
        %v3349 = vsel %vm1021, %v3344, %v3348
        %v3351 = vshrl.u32 %v3278, 16
        %v3353 = vrot.slane %v3351, 4
        %v3354 = vshll.u32 %v3278, 16
        %v3356 = vrot.slane %v3354, 5
        %v3357 = vor.u32 %v3353, %v3356
        %v3358 = vrot.slane %v3357, 4
        %v3360 = vshll.u32 %v3279, 16
        %v3362 = vrot.slane %v3360, 5
        %v3363 = vsel %vm1021, %v3358, %v3362
        %v3364 = vshrl.u32 %v3279, 16
        %v3366 = vrot.slane %v3364, 4
        %v3367 = vor.u32 %v3366, %v3362
        %v3368 = vrot.slane %v3367, 4
        %v3370 = vshll.u32 %v3280, 16
        %v3372 = vrot.slane %v3370, 5
        %v3373 = vsel %vm1021, %v3368, %v3372
        %v3375 = vshrl.u32 %v3281, 16
        %v3377 = vrot.slane %v3375, 4
        %v3378 = vshll.u32 %v3281, 16
        %v3380 = vrot.slane %v3378, 5
        %v3381 = vor.u32 %v3377, %v3380
        %v3382 = vrot.slane %v3381, 4
        %v3384 = vshll.u32 %v3282, 16
        %v3386 = vrot.slane %v3384, 5
        %v3387 = vsel %vm1021, %v3382, %v3386
        %v3388 = vshrl.u32 %v3282, 16
        %v3390 = vrot.slane %v3388, 4
        %v3391 = vor.u32 %v3390, %v3386
        %v3392 = vrot.slane %v3391, 4
        %v3394 = vshll.u32 %v3283, 16
        %v3396 = vrot.slane %v3394, 5
        %v3397 = vsel %vm1021, %v3392, %v3396
        %v3399 = vshrl.u32 %v3284, 16
        %v3401 = vrot.slane %v3399, 4
        %v3402 = vshll.u32 %v3284, 16
        %v3404 = vrot.slane %v3402, 5
        %v3405 = vor.u32 %v3401, %v3404
        %v3406 = vrot.slane %v3405, 4
        %v3408 = vshll.u32 %v3285, 16
        %v3410 = vrot.slane %v3408, 5
        %v3411 = vsel %vm1021, %v3406, %v3410
        %v3412 = vshrl.u32 %v3285, 16
        %v3414 = vrot.slane %v3412, 4
        %v3415 = vor.u32 %v3414, %v3410
        %v3416 = vrot.slane %v3415, 4
        %v3418 = vshll.u32 %v3286, 16
        %v3420 = vrot.slane %v3418, 5
        %v3421 = vsel %vm1021, %v3416, %v3420
        %v3423 = vshrl.u32 %v3287, 16
        %v3425 = vrot.slane %v3423, 4
        %v3426 = vshll.u32 %v3287, 16
        %v3428 = vrot.slane %v3426, 5
        %v3429 = vor.u32 %v3425, %v3428
        %v3430 = vrot.slane %v3429, 4
        %v3432 = vshll.u32 %v3288, 16
        %v3434 = vrot.slane %v3432, 5
        %v3435 = vsel %vm1021, %v3430, %v3434
        %v3436 = vshrl.u32 %v3288, 16
        %v3438 = vrot.slane %v3436, 4
        %v3439 = vor.u32 %v3438, %v3434
        %v3440 = vrot.slane %v3439, 4
        %v3442 = vshll.u32 %v3289, 16
        %v3444 = vrot.slane %v3442, 5
        %v3445 = vsel %vm1021, %v3440, %v3444
        %v3447 = vshrl.u32 %v3290, 16
        %v3449 = vrot.slane %v3447, 4
        %v3450 = vshll.u32 %v3290, 16
        %v3452 = vrot.slane %v3450, 5
        %v3453 = vor.u32 %v3449, %v3452
        %v3454 = vrot.slane %v3453, 4
        %v3456 = vshll.u32 %v3291, 16
        %v3458 = vrot.slane %v3456, 5
        %v3459 = vsel %vm1021, %v3454, %v3458
        %v3460 = vshrl.u32 %v3291, 16
        %v3462 = vrot.slane %v3460, 4
        %v3463 = vor.u32 %v3462, %v3458
        %v3464 = vrot.slane %v3463, 4
        %v3466 = vshll.u32 %v3292, 16
        %v3468 = vrot.slane %v3466, 5
        %v3469 = vsel %vm1021, %v3464, %v3468
        %v3471 = vshrl.u32 %v3293, 16
        %v3473 = vrot.slane %v3471, 4
        %v3474 = vshll.u32 %v3293, 16
        %v3476 = vrot.slane %v3474, 5
        %v3477 = vor.u32 %v3473, %v3476
        %v3478 = vrot.slane %v3477, 4
        %v3480 = vshll.u32 %v3294, 16
        %v3482 = vrot.slane %v3480, 5
        %v3483 = vsel %vm1021, %v3478, %v3482
        %v3484 = vshrl.u32 %v3294, 16
        %v3486 = vrot.slane %v3484, 4
        %v3487 = vor.u32 %v3486, %v3482
        %v3488 = vrot.slane %v3487, 4
        %v3490 = vshll.u32 %v3295, 16
        %v3492 = vrot.slane %v3490, 5
        %v3493 = vsel %vm1021, %v3488, %v3492
        %v3495 = vshrl.u32 %v3296, 16
        %v3497 = vrot.slane %v3495, 4
        %v3498 = vshll.u32 %v3296, 16
        %v3500 = vrot.slane %v3498, 5
        %v3501 = vor.u32 %v3497, %v3500
        %v3502 = vrot.slane %v3501, 4
        %v3504 = vshll.u32 %v3297, 16
        %v3506 = vrot.slane %v3504, 5
        %v3507 = vsel %vm1021, %v3502, %v3506
        %v3508 = vshrl.u32 %v3297, 16
        %v3510 = vrot.slane %v3508, 4
        %v3511 = vor.u32 %v3510, %v3506
        %v3512 = vrot.slane %v3511, 4
        %v3514 = vshll.u32 %v3298, 16
        %v3516 = vrot.slane %v3514, 5
        %v3517 = vsel %vm1021, %v3512, %v3516
        %v3519 = vshrl.u32 %v3299, 16
        %v3521 = vrot.slane %v3519, 4
        %v3522 = vshll.u32 %v3299, 16
        %v3524 = vrot.slane %v3522, 5
        %v3525 = vor.u32 %v3521, %v3524
        %v3526 = vrot.slane %v3525, 4
        %v3528 = vshll.u32 %v3300, 16
        %v3530 = vrot.slane %v3528, 5
        %v3531 = vsel %vm1021, %v3526, %v3530
        %v3532 = vshrl.u32 %v3300, 16
        %v3534 = vrot.slane %v3532, 4
        %v3535 = vor.u32 %v3534, %v3530
        %v3536 = vrot.slane %v3535, 4
        %v3538 = vshll.u32 %v3301, 16
        %v3540 = vrot.slane %v3538, 5
        %v3541 = vsel %vm1021, %v3536, %v3540
        %s3542 = scalar_lea.vmem [#allocation10], 112
        %v3543 = vld [vmem:[%s3542] sm:$0xf]
        %v3544 = vld [vmem:[%s3542 + $0x4] sm:$0xf]
        %v3545 = vld [vmem:[%s3542 + $0x8] sm:$0xf]
        %v3546 = vld [vmem:[%s3542 + $0xc] sm:$0xf]
        %v3547 = vunpack.c.l.b16 %v3315
        %v3548 = vunpack.c.l.b16 %v3325
        %v3549 = vunpack.c.l.b16 %v3339
        %v3550 = vunpack.c.l.b16 %v3349
        %v3551 = vunpack.c.l.b16 %v3363
        %v3552 = vunpack.c.l.b16 %v3373
        %v3553 = vunpack.c.l.b16 %v3387
        %v3554 = vunpack.c.l.b16 %v3397
        %v3555 = vunpack.c.l.b16 %v3411
        %v3556 = vunpack.c.l.b16 %v3421
        %v3557 = vunpack.c.l.b16 %v3435
        %v3558 = vunpack.c.l.b16 %v3445
        %v3559 = vunpack.c.l.b16 %v3459
        %v3560 = vunpack.c.l.b16 %v3469
        %v3561 = vunpack.c.l.b16 %v3483
        %v3562 = vunpack.c.l.b16 %v3493
        %v3563 = vunpack.c.l.b16 %v3507
        %v3564 = vunpack.c.l.b16 %v3517
        %v3565 = vunpack.c.l.b16 %v3531
        %v3566 = vunpack.c.l.b16 %v3541
        %v3567 = vpack.c.b16 %v3548, %v3547
        %v3568 = vpack.c.b16 %v3550, %v3549
        %v3569 = vpack.c.b16 %v3552, %v3551
        %v3570 = vpack.c.b16 %v3554, %v3553
        %v3571 = vpack.c.b16 %v3556, %v3555
        %v3572 = vpack.c.b16 %v3558, %v3557
        %v3573 = vpack.c.b16 %v3560, %v3559
        %v3574 = vpack.c.b16 %v3562, %v3561
        %v3575 = vpack.c.b16 %v3564, %v3563
        %v3576 = vpack.c.b16 %v3566, %v3565
        %v3581 = vunpack.c.l.b16 %v3543
        %v3582 = vunpack.c.l.b16 %v3544
        %v3583 = vunpack.c.l.b16 %v3545
        %v3584 = vunpack.c.l.b16 %v3546
        %v3585 = vpack.c.b16 %v3582, %v3581
        %v3586 = vpack.c.b16 %v3584, %v3583
        %v3590 = vsel %vm1309, %v3567, 0
        %v3593 = vsel %vm1309, %v3568, 0
        %v3596 = vsel %vm1309, %v3569, 0
        %v3599 = vsel %vm1309, %v3570, 0
        %v3602 = vsel %vm1309, %v3571, 0
        %v3605 = vsel %vm1309, %v3572, 0
        %v3608 = vsel %vm1309, %v3573, 0
        %v3611 = vsel %vm1309, %v3574, 0
        %v3614 = vsel %vm1309, %v3575, 0
        %v3617 = vsel %vm1309, %v3576, 0
        %3619 = vmatprep.subr.bf16.mxu0 0
        %3620 = vmatpush1.bf16.msra.mxu0 %v3585
        %3621 = vmatprep.subr.bf16.mxu0 0
        %3622 = vmatpush1.bf16.msra.mxu0 %v3586
        %3623 = vmatprep.subr.bf16.mxu0 0
        %3624 = vmatpush1.bf16.msra.mxu0 0
        %3625 = vmatprep.subr.bf16.mxu0 0
        %3626 = vmatpush1.bf16.msra.mxu0 0
        %3627 = vmatprep.subr.bf16.mxu0 0
        %3628 = vmatpush1.bf16.msra.mxu0 0
        %3629 = vmatprep.subr.bf16.mxu0 0
        %3630 = vmatpush1.bf16.msra.mxu0 0
        %3631 = vmatprep.subr.bf16.mxu0 0
        %3632 = vmatpush1.bf16.msra.mxu0 0
        %3633 = vmatprep.subr.bf16.mxu0 0
        %3634 = vmatpush1.bf16.msra.mxu0 0
        %3635 = vmatprep.subr.bf16.mxu0 0
        %3636 = vmatpush1.bf16.msra.mxu0 0
        %3637 = vmatprep.subr.bf16.mxu0 0
        %3638 = vmatpush1.bf16.msra.mxu0 0
        %3639 = vmatprep.subr.bf16.mxu0 0
        %3640 = vmatpush1.bf16.msra.mxu0 0
        %3641 = vmatprep.subr.bf16.mxu0 0
        %3642 = vmatpush1.bf16.msra.mxu0 0
        %3643 = vmatprep.subr.bf16.mxu0 0
        %3644 = vmatpush1.bf16.msra.mxu0 0
        %3645 = vmatprep.subr.bf16.mxu0 0
        %3646 = vmatpush1.bf16.msra.mxu0 0
        %3647 = vmatprep.subr.bf16.mxu0 0
        %3648 = vmatpush1.bf16.msra.mxu0 0
        %3649 = vmatprep.subr.bf16.mxu0 0
        %3650 = vmatpush1.bf16.msra.mxu0 0
        %3651 = vmatprep.mubr.bf16.mxu0 0
        %3652 = vmatmul.mubr.bf16.gmra.mrb[0].mxu0 %v3590
        %v3653 = vpop.f32.mrb[0].mxu0
        %v3654 = vadd.f32 0.0, %v3653
        %v3655 = vpop.f32.mrb[0].mxu0
        %v3656 = vpop.f32.mrb[0].mxu0
        %v3657 = vadd.f32 0.0, %v3656
        %v3658 = vpop.f32.mrb[0].mxu0
        %3659 = vmatprep.mubr.bf16.mxu0 0
        %3660 = vmatmul.mubr.bf16.gmra.mrb[0].mxu0 %v3593
        %v3661 = vpop.f32.mrb[0].mxu0
        %v3662 = vadd.f32 0.0, %v3661
        %v3663 = vpop.f32.mrb[0].mxu0
        %v3664 = vpop.f32.mrb[0].mxu0
        %v3665 = vadd.f32 0.0, %v3664
        %v3666 = vpop.f32.mrb[0].mxu0
        %3667 = vmatprep.mubr.bf16.mxu0 0
        %3668 = vmatmul.mubr.bf16.gmra.mrb[0].mxu0 %v3596
        %v3669 = vpop.f32.mrb[0].mxu0
        %v3670 = vadd.f32 0.0, %v3669
        %v3671 = vpop.f32.mrb[0].mxu0
        %v3672 = vpop.f32.mrb[0].mxu0
        %v3673 = vadd.f32 0.0, %v3672
        %v3674 = vpop.f32.mrb[0].mxu0
        %3675 = vmatprep.mubr.bf16.mxu0 0
        %3676 = vmatmul.mubr.bf16.gmra.mrb[0].mxu0 %v3599
        %v3677 = vpop.f32.mrb[0].mxu0
        %v3678 = vadd.f32 0.0, %v3677
        %v3679 = vpop.f32.mrb[0].mxu0
        %v3680 = vpop.f32.mrb[0].mxu0
        %v3681 = vadd.f32 0.0, %v3680
        %v3682 = vpop.f32.mrb[0].mxu0
        %3683 = vmatprep.mubr.bf16.mxu0 0
        %3684 = vmatmul.mubr.bf16.gmra.mrb[0].mxu0 %v3602
        %v3685 = vpop.f32.mrb[0].mxu0
        %v3686 = vadd.f32 0.0, %v3685
        %v3687 = vpop.f32.mrb[0].mxu0
        %v3688 = vpop.f32.mrb[0].mxu0
        %v3689 = vadd.f32 0.0, %v3688
        %v3690 = vpop.f32.mrb[0].mxu0
        %3691 = vmatprep.mubr.bf16.mxu0 0
        %3692 = vmatmul.mubr.bf16.gmra.mrb[0].mxu0 %v3605
        %v3693 = vpop.f32.mrb[0].mxu0
        %v3694 = vadd.f32 0.0, %v3693
        %v3695 = vpop.f32.mrb[0].mxu0
        %v3696 = vpop.f32.mrb[0].mxu0
        %v3697 = vadd.f32 0.0, %v3696
        %v3698 = vpop.f32.mrb[0].mxu0
        %3699 = vmatprep.mubr.bf16.mxu0 0
        %3700 = vmatmul.mubr.bf16.gmra.mrb[0].mxu0 %v3608
        %v3701 = vpop.f32.mrb[0].mxu0
        %v3702 = vadd.f32 0.0, %v3701
        %v3703 = vpop.f32.mrb[0].mxu0
        %v3704 = vpop.f32.mrb[0].mxu0
        %v3705 = vadd.f32 0.0, %v3704
        %v3706 = vpop.f32.mrb[0].mxu0
        %3707 = vmatprep.mubr.bf16.mxu0 0
        %3708 = vmatmul.mubr.bf16.gmra.mrb[0].mxu0 %v3611
        %v3709 = vpop.f32.mrb[0].mxu0
        %v3710 = vadd.f32 0.0, %v3709
        %v3711 = vpop.f32.mrb[0].mxu0
        %v3712 = vpop.f32.mrb[0].mxu0
        %v3713 = vadd.f32 0.0, %v3712
        %v3714 = vpop.f32.mrb[0].mxu0
        %3715 = vmatprep.mubr.bf16.mxu0 0
        %3716 = vmatmul.mubr.bf16.gmra.mrb[0].mxu0 %v3614
        %v3717 = vpop.f32.mrb[0].mxu0
        %v3718 = vadd.f32 0.0, %v3717
        %v3719 = vpop.f32.mrb[0].mxu0
        %v3720 = vpop.f32.mrb[0].mxu0
        %v3721 = vadd.f32 0.0, %v3720
        %v3722 = vpop.f32.mrb[0].mxu0
        %3723 = vmatprep.mubr.bf16.mxu0 0
        %3724 = vmatmul.mubr.bf16.gmra.mrb[0].mxu0 %v3617
        %v3725 = vpop.f32.mrb[0].mxu0
        %v3726 = vadd.f32 0.0, %v3725
        %v3727 = vpop.f32.mrb[0].mxu0
        %v3728 = vpop.f32.mrb[0].mxu0
        %v3729 = vadd.f32 0.0, %v3728
        %v3730 = vpop.f32.mrb[0].mxu0
        %3731 = vdwg.mxu0
        %v3732 = vadd.f32 %v3252, %v3654
        %v3733 = vadd.f32 %v3253, %v3657
        %v3734 = vadd.f32 %v3254, %v3662
        %v3735 = vadd.f32 %v3255, %v3665
        %v3736 = vadd.f32 %v3256, %v3670
        %v3737 = vadd.f32 %v3257, %v3673
        %v3738 = vadd.f32 %v3258, %v3678
        %v3739 = vadd.f32 %v3259, %v3681
        %v3740 = vadd.f32 %v3260, %v3686
        %v3741 = vadd.f32 %v3261, %v3689
        %v3742 = vadd.f32 %v3262, %v3694
        %v3743 = vadd.f32 %v3263, %v3697
        %v3744 = vadd.f32 %v3264, %v3702
        %v3745 = vadd.f32 %v3265, %v3705
        %v3746 = vadd.f32 %v3266, %v3710
        %v3747 = vadd.f32 %v3267, %v3713
        %v3748 = vadd.f32 %v3268, %v3718
        %v3749 = vadd.f32 %v3269, %v3721
        %v3750 = vadd.f32 %v3270, %v3726
        %v3751 = vadd.f32 %v3271, %v3729
        %v3752 = vld [vmem:[%s772] sm:$0xe]
        %v3753 = vld [vmem:[%s772 + $0xc] sm:$0xe]
        %v3754 = vld [vmem:[%s772 + $0x18] sm:$0xe]
        %v3755 = vld [vmem:[%s772 + $0x24] sm:$0xe]
        %v3756 = vld [vmem:[%s772 + $0x30] sm:$0xe]
        %v3757 = vld [vmem:[%s772 + $0x3c] sm:$0xe]
        %v3758 = vld [vmem:[%s772 + $0x48] sm:$0xe]
        %v3759 = vld [vmem:[%s772 + $0x54] sm:$0xe]
        %v3760 = vld [vmem:[%s772 + $0x60] sm:$0xe]
        %v3761 = vld [vmem:[%s772 + $0x6c] sm:$0xe]
        %v3792 = vrot.slane %v3752, 5
        %v3793 = vrot.slane %v3792, 4
        %v3794 = vrot.slane %v3273, 5
        %v3795 = vsel %vm1690, %v3793, %v3794
        %v3796 = vrot.slane %v3794, 4
        %v3797 = vrot.slane %v3274, 5
        %v3798 = vsel %vm1690, %v3796, %v3797
        %v3799 = vrot.slane %v3753, 5
        %v3800 = vrot.slane %v3799, 4
        %v3801 = vrot.slane %v3276, 5
        %v3802 = vsel %vm1690, %v3800, %v3801
        %v3803 = vrot.slane %v3801, 4
        %v3804 = vrot.slane %v3277, 5
        %v3805 = vsel %vm1690, %v3803, %v3804
        %v3806 = vrot.slane %v3754, 5
        %v3807 = vrot.slane %v3806, 4
        %v3808 = vrot.slane %v3279, 5
        %v3809 = vsel %vm1690, %v3807, %v3808
        %v3810 = vrot.slane %v3808, 4
        %v3811 = vrot.slane %v3280, 5
        %v3812 = vsel %vm1690, %v3810, %v3811
        %v3813 = vrot.slane %v3755, 5
        %v3814 = vrot.slane %v3813, 4
        %v3815 = vrot.slane %v3282, 5
        %v3816 = vsel %vm1690, %v3814, %v3815
        %v3817 = vrot.slane %v3815, 4
        %v3818 = vrot.slane %v3283, 5
        %v3819 = vsel %vm1690, %v3817, %v3818
        %v3820 = vrot.slane %v3756, 5
        %v3821 = vrot.slane %v3820, 4
        %v3822 = vrot.slane %v3285, 5
        %v3823 = vsel %vm1690, %v3821, %v3822
        %v3824 = vrot.slane %v3822, 4
        %v3825 = vrot.slane %v3286, 5
        %v3826 = vsel %vm1690, %v3824, %v3825
        %v3827 = vrot.slane %v3757, 5
        %v3828 = vrot.slane %v3827, 4
        %v3829 = vrot.slane %v3288, 5
        %v3830 = vsel %vm1690, %v3828, %v3829
        %v3831 = vrot.slane %v3829, 4
        %v3832 = vrot.slane %v3289, 5
        %v3833 = vsel %vm1690, %v3831, %v3832
        %v3834 = vrot.slane %v3758, 5
        %v3835 = vrot.slane %v3834, 4
        %v3836 = vrot.slane %v3291, 5
        %v3837 = vsel %vm1690, %v3835, %v3836
        %v3838 = vrot.slane %v3836, 4
        %v3839 = vrot.slane %v3292, 5
        %v3840 = vsel %vm1690, %v3838, %v3839
        %v3841 = vrot.slane %v3759, 5
        %v3842 = vrot.slane %v3841, 4
        %v3843 = vrot.slane %v3294, 5
        %v3844 = vsel %vm1690, %v3842, %v3843
        %v3845 = vrot.slane %v3843, 4
        %v3846 = vrot.slane %v3295, 5
        %v3847 = vsel %vm1690, %v3845, %v3846
        %v3848 = vrot.slane %v3760, 5
        %v3849 = vrot.slane %v3848, 4
        %v3850 = vrot.slane %v3297, 5
        %v3851 = vsel %vm1690, %v3849, %v3850
        %v3852 = vrot.slane %v3850, 4
        %v3853 = vrot.slane %v3298, 5
        %v3854 = vsel %vm1690, %v3852, %v3853
        %v3855 = vrot.slane %v3761, 5
        %v3856 = vrot.slane %v3855, 4
        %v3857 = vrot.slane %v3300, 5
        %v3858 = vsel %vm1690, %v3856, %v3857
        %v3859 = vrot.slane %v3857, 4
        %v3860 = vrot.slane %v3301, 5
        %v3861 = vsel %vm1690, %v3859, %v3860
        %s3862 = scalar_lea.vmem [#allocation10], 128
        %v3863 = vld [vmem:[%s3862] sm:$0xf]
        %v3864 = vld [vmem:[%s3862 + $0x4] sm:$0xf]
        %v3865 = vld [vmem:[%s3862 + $0x8] sm:$0xf]
        %v3866 = vld [vmem:[%s3862 + $0xc] sm:$0xf]
        %v3867 = vunpack.c.l.b16 %v3795
        %v3868 = vunpack.c.l.b16 %v3798
        %v3869 = vunpack.c.l.b16 %v3802
        %v3870 = vunpack.c.l.b16 %v3805
        %v3871 = vunpack.c.l.b16 %v3809
        %v3872 = vunpack.c.l.b16 %v3812
        %v3873 = vunpack.c.l.b16 %v3816
        %v3874 = vunpack.c.l.b16 %v3819
        %v3875 = vunpack.c.l.b16 %v3823
        %v3876 = vunpack.c.l.b16 %v3826
        %v3877 = vunpack.c.l.b16 %v3830
        %v3878 = vunpack.c.l.b16 %v3833
        %v3879 = vunpack.c.l.b16 %v3837
        %v3880 = vunpack.c.l.b16 %v3840
        %v3881 = vunpack.c.l.b16 %v3844
        %v3882 = vunpack.c.l.b16 %v3847
        %v3883 = vunpack.c.l.b16 %v3851
        %v3884 = vunpack.c.l.b16 %v3854
        %v3885 = vunpack.c.l.b16 %v3858
        %v3886 = vunpack.c.l.b16 %v3861
        %v3887 = vpack.c.b16 %v3868, %v3867
        %v3888 = vpack.c.b16 %v3870, %v3869
        %v3889 = vpack.c.b16 %v3872, %v3871
        %v3890 = vpack.c.b16 %v3874, %v3873
        %v3891 = vpack.c.b16 %v3876, %v3875
        %v3892 = vpack.c.b16 %v3878, %v3877
        %v3893 = vpack.c.b16 %v3880, %v3879
        %v3894 = vpack.c.b16 %v3882, %v3881
        %v3895 = vpack.c.b16 %v3884, %v3883
        %v3896 = vpack.c.b16 %v3886, %v3885
        %v3901 = vunpack.c.l.b16 %v3863
        %v3902 = vunpack.c.l.b16 %v3864
        %v3903 = vunpack.c.l.b16 %v3865
        %v3904 = vunpack.c.l.b16 %v3866
        %v3905 = vpack.c.b16 %v3902, %v3901
        %v3906 = vpack.c.b16 %v3904, %v3903
        %v3910 = vsel %vm1309, %v3887, 0
        %v3913 = vsel %vm1309, %v3888, 0
        %v3916 = vsel %vm1309, %v3889, 0
        %v3919 = vsel %vm1309, %v3890, 0
        %v3922 = vsel %vm1309, %v3891, 0
        %v3925 = vsel %vm1309, %v3892, 0
        %v3928 = vsel %vm1309, %v3893, 0
        %v3931 = vsel %vm1309, %v3894, 0
        %v3934 = vsel %vm1309, %v3895, 0
        %v3937 = vsel %vm1309, %v3896, 0
        %3939 = vmatprep.subr.bf16.mxu0 0
        %3940 = vmatpush1.bf16.msra.mxu0 %v3905
        %3941 = vmatprep.subr.bf16.mxu0 0
        %3942 = vmatpush1.bf16.msra.mxu0 %v3906
        %3943 = vmatprep.subr.bf16.mxu0 0
        %3944 = vmatpush1.bf16.msra.mxu0 0
        %3945 = vmatprep.subr.bf16.mxu0 0
        %3946 = vmatpush1.bf16.msra.mxu0 0
        %3947 = vmatprep.subr.bf16.mxu0 0
        %3948 = vmatpush1.bf16.msra.mxu0 0
        %3949 = vmatprep.subr.bf16.mxu0 0
        %3950 = vmatpush1.bf16.msra.mxu0 0
        %3951 = vmatprep.subr.bf16.mxu0 0
        %3952 = vmatpush1.bf16.msra.mxu0 0
        %3953 = vmatprep.subr.bf16.mxu0 0
        %3954 = vmatpush1.bf16.msra.mxu0 0
        %3955 = vmatprep.subr.bf16.mxu0 0
        %3956 = vmatpush1.bf16.msra.mxu0 0
        %3957 = vmatprep.subr.bf16.mxu0 0
        %3958 = vmatpush1.bf16.msra.mxu0 0
        %3959 = vmatprep.subr.bf16.mxu0 0
        %3960 = vmatpush1.bf16.msra.mxu0 0
        %3961 = vmatprep.subr.bf16.mxu0 0
        %3962 = vmatpush1.bf16.msra.mxu0 0
        %3963 = vmatprep.subr.bf16.mxu0 0
        %3964 = vmatpush1.bf16.msra.mxu0 0
        %3965 = vmatprep.subr.bf16.mxu0 0
        %3966 = vmatpush1.bf16.msra.mxu0 0
        %3967 = vmatprep.subr.bf16.mxu0 0
        %3968 = vmatpush1.bf16.msra.mxu0 0
        %3969 = vmatprep.subr.bf16.mxu0 0
        %3970 = vmatpush1.bf16.msra.mxu0 0
        %3971 = vmatprep.mubr.bf16.mxu0 0
        %3972 = vmatmul.mubr.bf16.gmra.mrb[0].mxu0 %v3910
        %v3973 = vpop.f32.mrb[0].mxu0
        %v3974 = vadd.f32 0.0, %v3973
        %v3975 = vpop.f32.mrb[0].mxu0
        %v3976 = vpop.f32.mrb[0].mxu0
        %v3977 = vadd.f32 0.0, %v3976
        %v3978 = vpop.f32.mrb[0].mxu0
        %3979 = vmatprep.mubr.bf16.mxu0 0
        %3980 = vmatmul.mubr.bf16.gmra.mrb[0].mxu0 %v3913
        %v3981 = vpop.f32.mrb[0].mxu0
        %v3982 = vadd.f32 0.0, %v3981
        %v3983 = vpop.f32.mrb[0].mxu0
        %v3984 = vpop.f32.mrb[0].mxu0
        %v3985 = vadd.f32 0.0, %v3984
        %v3986 = vpop.f32.mrb[0].mxu0
        %3987 = vmatprep.mubr.bf16.mxu0 0
        %3988 = vmatmul.mubr.bf16.gmra.mrb[0].mxu0 %v3916
        %v3989 = vpop.f32.mrb[0].mxu0
        %v3990 = vadd.f32 0.0, %v3989
        %v3991 = vpop.f32.mrb[0].mxu0
        %v3992 = vpop.f32.mrb[0].mxu0
        %v3993 = vadd.f32 0.0, %v3992
        %v3994 = vpop.f32.mrb[0].mxu0
        %3995 = vmatprep.mubr.bf16.mxu0 0
        %3996 = vmatmul.mubr.bf16.gmra.mrb[0].mxu0 %v3919
        %v3997 = vpop.f32.mrb[0].mxu0
        %v3998 = vadd.f32 0.0, %v3997
        %v3999 = vpop.f32.mrb[0].mxu0
        %v4000 = vpop.f32.mrb[0].mxu0
        %v4001 = vadd.f32 0.0, %v4000
        %v4002 = vpop.f32.mrb[0].mxu0
        %4003 = vmatprep.mubr.bf16.mxu0 0
        %4004 = vmatmul.mubr.bf16.gmra.mrb[0].mxu0 %v3922
        %v4005 = vpop.f32.mrb[0].mxu0
        %v4006 = vadd.f32 0.0, %v4005
        %v4007 = vpop.f32.mrb[0].mxu0
        %v4008 = vpop.f32.mrb[0].mxu0
        %v4009 = vadd.f32 0.0, %v4008
        %v4010 = vpop.f32.mrb[0].mxu0
        %4011 = vmatprep.mubr.bf16.mxu0 0
        %4012 = vmatmul.mubr.bf16.gmra.mrb[0].mxu0 %v3925
        %v4013 = vpop.f32.mrb[0].mxu0
        %v4014 = vadd.f32 0.0, %v4013
        %v4015 = vpop.f32.mrb[0].mxu0
        %v4016 = vpop.f32.mrb[0].mxu0
        %v4017 = vadd.f32 0.0, %v4016
        %v4018 = vpop.f32.mrb[0].mxu0
        %4019 = vmatprep.mubr.bf16.mxu0 0
        %4020 = vmatmul.mubr.bf16.gmra.mrb[0].mxu0 %v3928
        %v4021 = vpop.f32.mrb[0].mxu0
        %v4022 = vadd.f32 0.0, %v4021
        %v4023 = vpop.f32.mrb[0].mxu0
        %v4024 = vpop.f32.mrb[0].mxu0
        %v4025 = vadd.f32 0.0, %v4024
        %v4026 = vpop.f32.mrb[0].mxu0
        %4027 = vmatprep.mubr.bf16.mxu0 0
        %4028 = vmatmul.mubr.bf16.gmra.mrb[0].mxu0 %v3931
        %v4029 = vpop.f32.mrb[0].mxu0
        %v4030 = vadd.f32 0.0, %v4029
        %v4031 = vpop.f32.mrb[0].mxu0
        %v4032 = vpop.f32.mrb[0].mxu0
        %v4033 = vadd.f32 0.0, %v4032
        %v4034 = vpop.f32.mrb[0].mxu0
        %4035 = vmatprep.mubr.bf16.mxu0 0
        %4036 = vmatmul.mubr.bf16.gmra.mrb[0].mxu0 %v3934
        %v4037 = vpop.f32.mrb[0].mxu0
        %v4038 = vadd.f32 0.0, %v4037
        %v4039 = vpop.f32.mrb[0].mxu0
        %v4040 = vpop.f32.mrb[0].mxu0
        %v4041 = vadd.f32 0.0, %v4040
        %v4042 = vpop.f32.mrb[0].mxu0
        %4043 = vmatprep.mubr.bf16.mxu0 0
        %4044 = vmatmul.mubr.bf16.gmra.mrb[0].mxu0 %v3937
        %v4045 = vpop.f32.mrb[0].mxu0
        %v4046 = vadd.f32 0.0, %v4045
        %v4047 = vpop.f32.mrb[0].mxu0
        %v4048 = vpop.f32.mrb[0].mxu0
        %v4049 = vadd.f32 0.0, %v4048
        %v4050 = vpop.f32.mrb[0].mxu0
        %4051 = vdwg.mxu0
        %v4052 = vadd.f32 %v3732, %v3974
        %v4053 = vadd.f32 %v3733, %v3977
        %v4054 = vadd.f32 %v3734, %v3982
        %v4055 = vadd.f32 %v3735, %v3985
        %v4056 = vadd.f32 %v3736, %v3990
        %v4057 = vadd.f32 %v3737, %v3993
        %v4058 = vadd.f32 %v3738, %v3998
        %v4059 = vadd.f32 %v3739, %v4001
        %v4060 = vadd.f32 %v3740, %v4006
        %v4061 = vadd.f32 %v3741, %v4009
        %v4062 = vadd.f32 %v3742, %v4014
        %v4063 = vadd.f32 %v3743, %v4017
        %v4064 = vadd.f32 %v3744, %v4022
        %v4065 = vadd.f32 %v3745, %v4025
        %v4066 = vadd.f32 %v3746, %v4030
        %v4067 = vadd.f32 %v3747, %v4033
        %v4068 = vadd.f32 %v3748, %v4038
        %v4069 = vadd.f32 %v3749, %v4041
        %v4070 = vadd.f32 %v3750, %v4046
        %v4071 = vadd.f32 %v3751, %v4049
        %v4072 = vld [vmem:[%s4] sm:$0x1]
        %v4074 = vlaneseq
        %v4075 = vshrl.u32 %v4074, 7
        %v4076 = vsub.s32 0, %v4075
        %v4077 = vrot.slane %v4072, %v4076
        %v4079 = vadd.f32 %v4052, %v4077
        %v4080 = vadd.f32 %v4053, %v4077
        %v4081 = vadd.f32 %v4054, %v4077
        %v4082 = vadd.f32 %v4055, %v4077
        %v4083 = vadd.f32 %v4056, %v4077
        %v4084 = vadd.f32 %v4057, %v4077
        %v4085 = vadd.f32 %v4058, %v4077
        %v4086 = vadd.f32 %v4059, %v4077
        %v4087 = vadd.f32 %v4060, %v4077
        %v4088 = vadd.f32 %v4061, %v4077
        %v4089 = vadd.f32 %v4062, %v4077
        %v4090 = vadd.f32 %v4063, %v4077
        %v4091 = vadd.f32 %v4064, %v4077
        %v4092 = vadd.f32 %v4065, %v4077
        %v4093 = vadd.f32 %v4066, %v4077
        %v4094 = vadd.f32 %v4067, %v4077
        %v4095 = vadd.f32 %v4068, %v4077
        %v4096 = vadd.f32 %v4069, %v4077
        %v4097 = vadd.f32 %v4070, %v4077
        %v4098 = vadd.f32 %v4071, %v4077
        %v4099 = vmul.f32 %v4079, 0.2
        %v4100 = vmul.f32 %v4080, 0.2
        %v4101 = vmul.f32 %v4081, 0.2
        %v4102 = vmul.f32 %v4082, 0.2
        %v4103 = vmul.f32 %v4083, 0.2
        %v4104 = vmul.f32 %v4084, 0.2
        %v4105 = vmul.f32 %v4085, 0.2
        %v4106 = vmul.f32 %v4086, 0.2
        %v4107 = vmul.f32 %v4087, 0.2
        %v4108 = vmul.f32 %v4088, 0.2
        %v4109 = vmul.f32 %v4089, 0.2
        %v4110 = vmul.f32 %v4090, 0.2
        %v4111 = vmul.f32 %v4091, 0.2
        %v4112 = vmul.f32 %v4092, 0.2
        %v4113 = vmul.f32 %v4093, 0.2
        %v4114 = vmul.f32 %v4094, 0.2
        %v4115 = vmul.f32 %v4095, 0.2
        %v4116 = vmul.f32 %v4096, 0.2
        %v4117 = vmul.f32 %v4097, 0.2
        %v4118 = vmul.f32 %v4098, 0.2
        %v4119 = vmax.f32 %v4079, %v4099
        %v4120 = vmax.f32 %v4080, %v4100
        %v4121 = vmax.f32 %v4081, %v4101
        %v4122 = vmax.f32 %v4082, %v4102
        %v4123 = vmax.f32 %v4083, %v4103
        %v4124 = vmax.f32 %v4084, %v4104
        %v4125 = vmax.f32 %v4085, %v4105
        %v4126 = vmax.f32 %v4086, %v4106
        %v4127 = vmax.f32 %v4087, %v4107
        %v4128 = vmax.f32 %v4088, %v4108
        %v4129 = vmax.f32 %v4089, %v4109
        %v4130 = vmax.f32 %v4090, %v4110
        %v4131 = vmax.f32 %v4091, %v4111
        %v4132 = vmax.f32 %v4092, %v4112
        %v4133 = vmax.f32 %v4093, %v4113
        %v4134 = vmax.f32 %v4094, %v4114
        %v4135 = vmax.f32 %v4095, %v4115
        %v4136 = vmax.f32 %v4096, %v4116
        %v4137 = vmax.f32 %v4097, %v4117
        %v4138 = vmax.f32 %v4098, %v4118
        %s4139 = smul.u32 %s33, 8
        %s4140 = ssub.s32 %s4139, 1
        %v4141 = vstv %s4140
        %v4142 = vadd.s32 %v4141, 1
        %v4143 = vadd.s32 %v4141, 2
        %v4144 = vadd.s32 %v4141, 3
        %v4145 = vadd.s32 %v4141, 4
        %v4146 = vadd.s32 %v4141, 5
        %v4147 = vadd.s32 %v4141, 6
        %v4148 = vadd.s32 %v4141, 7
        %v4149 = vadd.s32 %v4141, 8
        %v4150 = vadd.s32 %v4141, 9
        %vm4151 = vcmp.ge.s32.totalorder %v4141, 0
        %vm4152 = vcmp.ge.s32.totalorder %v4142, 0
        %vm4153 = vcmp.ge.s32.totalorder %v4143, 0
        %vm4154 = vcmp.ge.s32.totalorder %v4144, 0
        %vm4155 = vcmp.ge.s32.totalorder %v4145, 0
        %vm4156 = vcmp.ge.s32.totalorder %v4146, 0
        %vm4157 = vcmp.ge.s32.totalorder %v4147, 0
        %vm4158 = vcmp.ge.s32.totalorder %v4148, 0
        %vm4159 = vcmp.ge.s32.totalorder %v4149, 0
        %vm4160 = vcmp.ge.s32.totalorder %v4150, 0
        %vm4161 = vcmp.lt.s32.totalorder %v4141, 16
        %vm4162 = vcmp.lt.s32.totalorder %v4142, 16
        %vm4163 = vcmp.lt.s32.totalorder %v4143, 16
        %vm4164 = vcmp.lt.s32.totalorder %v4144, 16
        %vm4165 = vcmp.lt.s32.totalorder %v4145, 16
        %vm4166 = vcmp.lt.s32.totalorder %v4146, 16
        %vm4167 = vcmp.lt.s32.totalorder %v4147, 16
        %vm4168 = vcmp.lt.s32.totalorder %v4148, 16
        %vm4169 = vcmp.lt.s32.totalorder %v4149, 16
        %vm4170 = vcmp.lt.s32.totalorder %v4150, 16
        %vm4171 = vmand %vm4151, %vm4161
        %vm4172 = vmand %vm4152, %vm4162
        %vm4173 = vmand %vm4153, %vm4163
        %vm4174 = vmand %vm4154, %vm4164
        %vm4175 = vmand %vm4155, %vm4165
        %vm4176 = vmand %vm4156, %vm4166
        %vm4177 = vmand %vm4157, %vm4167
        %vm4178 = vmand %vm4158, %vm4168
        %vm4179 = vmand %vm4159, %vm4169
        %vm4180 = vmand %vm4160, %vm4170
        %v4181 = vsel %vm4171, 1, 0
        %v4182 = vsel %vm4172, 1, 0
        %v4183 = vsel %vm4173, 1, 0
        %v4184 = vsel %vm4174, 1, 0
        %v4185 = vsel %vm4175, 1, 0
        %v4186 = vsel %vm4176, 1, 0
        %v4187 = vsel %vm4177, 1, 0
        %v4188 = vsel %vm4178, 1, 0
        %v4189 = vsel %vm4179, 1, 0
        %v4190 = vsel %vm4180, 1, 0
        %vm4191 = vcmp.eq.s32.totalorder %v4181, 1
        %vm4192 = vcmp.eq.s32.totalorder %v4182, 1
        %vm4193 = vcmp.eq.s32.totalorder %v4183, 1
        %vm4194 = vcmp.eq.s32.totalorder %v4184, 1
        %vm4195 = vcmp.eq.s32.totalorder %v4185, 1
        %vm4196 = vcmp.eq.s32.totalorder %v4186, 1
        %vm4197 = vcmp.eq.s32.totalorder %v4187, 1
        %vm4198 = vcmp.eq.s32.totalorder %v4188, 1
        %vm4199 = vcmp.eq.s32.totalorder %v4189, 1
        %vm4200 = vcmp.eq.s32.totalorder %v4190, 1
        %v4201 = vsel %vm4191, %v4119, 0.0
        %v4202 = vsel %vm4191, %v4120, 0.0
        %v4203 = vsel %vm4192, %v4121, 0.0
        %v4204 = vsel %vm4192, %v4122, 0.0
        %v4205 = vsel %vm4193, %v4123, 0.0
        %v4206 = vsel %vm4193, %v4124, 0.0
        %v4207 = vsel %vm4194, %v4125, 0.0
        %v4208 = vsel %vm4194, %v4126, 0.0
        %v4209 = vsel %vm4195, %v4127, 0.0
        %v4210 = vsel %vm4195, %v4128, 0.0
        %v4211 = vsel %vm4196, %v4129, 0.0
        %v4212 = vsel %vm4196, %v4130, 0.0
        %v4213 = vsel %vm4197, %v4131, 0.0
        %v4214 = vsel %vm4197, %v4132, 0.0
        %v4215 = vsel %vm4198, %v4133, 0.0
        %v4216 = vsel %vm4198, %v4134, 0.0
        %v4217 = vsel %vm4199, %v4135, 0.0
        %v4218 = vsel %vm4199, %v4136, 0.0
        %v4219 = vsel %vm4200, %v4137, 0.0
        %v4220 = vsel %vm4200, %v4138, 0.0
        %v4221 = vld [vmem:[#allocation3] sm:$0x1]
        %v4222 = vsel %vm471, 0, %v4221
        %4223 = vst [vmem:[#allocation3] sm:$0x1] %v4222
        %v4224 = vld [vmem:[#allocation3 + $0xc] sm:$0x1]
        %v4225 = vsel %vm471, 0, %v4224
        %4226 = vst [vmem:[#allocation3 + $0xc] sm:$0x1] %v4225
        %v4227 = vld [vmem:[#allocation3 + $0x18] sm:$0x1]
        %v4228 = vsel %vm471, 0, %v4227
        %4229 = vst [vmem:[#allocation3 + $0x18] sm:$0x1] %v4228
        %v4230 = vld [vmem:[#allocation3 + $0x24] sm:$0x1]
        %v4231 = vsel %vm471, 0, %v4230
        %4232 = vst [vmem:[#allocation3 + $0x24] sm:$0x1] %v4231
        %v4233 = vld [vmem:[#allocation3 + $0x30] sm:$0x1]
        %v4234 = vsel %vm471, 0, %v4233
        %4235 = vst [vmem:[#allocation3 + $0x30] sm:$0x1] %v4234
        %v4236 = vld [vmem:[#allocation3 + $0x3c] sm:$0x1]
        %v4237 = vsel %vm471, 0, %v4236
        %4238 = vst [vmem:[#allocation3 + $0x3c] sm:$0x1] %v4237
        %v4239 = vld [vmem:[#allocation3 + $0x48] sm:$0x1]
        %v4240 = vsel %vm471, 0, %v4239
        %4241 = vst [vmem:[#allocation3 + $0x48] sm:$0x1] %v4240
        %v4242 = vld [vmem:[#allocation3 + $0x54] sm:$0x1]
        %v4243 = vsel %vm471, 0, %v4242
        %4244 = vst [vmem:[#allocation3 + $0x54] sm:$0x1] %v4243
        %v4245 = vld [vmem:[#allocation3 + $0x60] sm:$0x1]
        %v4246 = vsel %vm471, 0, %v4245
        %4247 = vst [vmem:[#allocation3 + $0x60] sm:$0x1] %v4246
        %v4248 = vld [vmem:[#allocation3 + $0x6c] sm:$0x1]
        %v4249 = vsel %vm471, 0, %v4248
        %4250 = vst [vmem:[#allocation3 + $0x6c] sm:$0x1] %v4249
        %v4251 = vld [vmem:[#allocation3 + $0x8] sm:$0x1]
        %v4252 = vsel %vm509, 0, %v4251
        %4253 = vst [vmem:[#allocation3 + $0x8] sm:$0x1] %v4252
        %v4254 = vld [vmem:[#allocation3 + $0x14] sm:$0x1]
        %v4255 = vsel %vm509, 0, %v4254
        %4256 = vst [vmem:[#allocation3 + $0x14] sm:$0x1] %v4255
        %v4257 = vld [vmem:[#allocation3 + $0x20] sm:$0x1]
        %v4258 = vsel %vm509, 0, %v4257
        %4259 = vst [vmem:[#allocation3 + $0x20] sm:$0x1] %v4258
        %v4260 = vld [vmem:[#allocation3 + $0x2c] sm:$0x1]
        %v4261 = vsel %vm509, 0, %v4260
        %4262 = vst [vmem:[#allocation3 + $0x2c] sm:$0x1] %v4261
        %v4263 = vld [vmem:[#allocation3 + $0x38] sm:$0x1]
        %v4264 = vsel %vm509, 0, %v4263
        %4265 = vst [vmem:[#allocation3 + $0x38] sm:$0x1] %v4264
        %v4266 = vld [vmem:[#allocation3 + $0x44] sm:$0x1]
        %v4267 = vsel %vm509, 0, %v4266
        %4268 = vst [vmem:[#allocation3 + $0x44] sm:$0x1] %v4267
        %v4269 = vld [vmem:[#allocation3 + $0x50] sm:$0x1]
        %v4270 = vsel %vm509, 0, %v4269
        %4271 = vst [vmem:[#allocation3 + $0x50] sm:$0x1] %v4270
        %v4272 = vld [vmem:[#allocation3 + $0x5c] sm:$0x1]
        %v4273 = vsel %vm509, 0, %v4272
        %4274 = vst [vmem:[#allocation3 + $0x5c] sm:$0x1] %v4273
        %v4275 = vld [vmem:[#allocation3 + $0x68] sm:$0x1]
        %v4276 = vsel %vm509, 0, %v4275
        %4277 = vst [vmem:[#allocation3 + $0x68] sm:$0x1] %v4276
        %v4278 = vld [vmem:[#allocation3 + $0x74] sm:$0x1]
        %v4279 = vsel %vm509, 0, %v4278
        %4280 = vst [vmem:[#allocation3 + $0x74] sm:$0x1] %v4279
        %v4281 = vpack.c.bf16 %v4202, %v4201
        %v4282 = vpack.c.bf16 %v4204, %v4203
        %v4283 = vpack.c.bf16 %v4206, %v4205
        %v4284 = vpack.c.bf16 %v4208, %v4207
        %v4285 = vpack.c.bf16 %v4210, %v4209
        %v4286 = vpack.c.bf16 %v4212, %v4211
        %v4287 = vpack.c.bf16 %v4214, %v4213
        %v4288 = vpack.c.bf16 %v4216, %v4215
        %v4289 = vpack.c.bf16 %v4218, %v4217
        %v4290 = vpack.c.bf16 %v4220, %v4219
        %v4301 = vunpack.c.l.b16 %v4281
        %v4302 = vunpack.c.h.b16 %v4281
        %v4303 = vunpack.c.l.b16 %v4282
        %v4304 = vunpack.c.h.b16 %v4282
        %v4305 = vunpack.c.l.b16 %v4283
        %v4306 = vunpack.c.h.b16 %v4283
        %v4307 = vunpack.c.l.b16 %v4284
        %v4308 = vunpack.c.h.b16 %v4284
        %v4309 = vunpack.c.l.b16 %v4285
        %v4310 = vunpack.c.h.b16 %v4285
        %v4311 = vunpack.c.l.b16 %v4286
        %v4312 = vunpack.c.h.b16 %v4286
        %v4313 = vunpack.c.l.b16 %v4287
        %v4314 = vunpack.c.h.b16 %v4287
        %v4315 = vunpack.c.l.b16 %v4288
        %v4316 = vunpack.c.h.b16 %v4288
        %v4317 = vunpack.c.l.b16 %v4289
        %v4318 = vunpack.c.h.b16 %v4289
        %v4319 = vunpack.c.l.b16 %v4290
        %v4320 = vunpack.c.h.b16 %v4290
        %v4321 = vpack.c.b16 %v4301, %v4301
        %v4322 = vpack.c.b16 %v4302, %v4302
        %v4323 = vpack.c.b16 %v4303, %v4303
        %v4324 = vpack.c.b16 %v4304, %v4304
        %v4325 = vpack.c.b16 %v4305, %v4305
        %v4326 = vpack.c.b16 %v4306, %v4306
        %v4327 = vpack.c.b16 %v4307, %v4307
        %v4328 = vpack.c.b16 %v4308, %v4308
        %v4329 = vpack.c.b16 %v4309, %v4309
        %v4330 = vpack.c.b16 %v4310, %v4310
        %v4331 = vpack.c.b16 %v4311, %v4311
        %v4332 = vpack.c.b16 %v4312, %v4312
        %v4333 = vpack.c.b16 %v4313, %v4313
        %v4334 = vpack.c.b16 %v4314, %v4314
        %v4335 = vpack.c.b16 %v4315, %v4315
        %v4336 = vpack.c.b16 %v4316, %v4316
        %v4337 = vpack.c.b16 %v4317, %v4317
        %v4338 = vpack.c.b16 %v4318, %v4318
        %v4339 = vpack.c.b16 %v4319, %v4319
        %v4340 = vpack.c.b16 %v4320, %v4320
        %v4342 = vshrl.u32 %v4321, 16
        %v4344 = vrot.slane %v4342, 7
        %v4345 = vshll.u32 %v4321, 16
        %v4347 = vor.u32 %v4344, %v4345
        %v4348 = vrot.slane %v4344, 4
        %v4350 = vshrl.u32 %v4322, 16
        %v4352 = vrot.slane %v4350, 7
        %v4353 = vshll.u32 %v4322, 16
        %v4355 = vor.u32 %v4352, %v4353
        %v4356 = vsel %vm611, %v4348, %v4355
        %v4357 = vrot.slane %v4352, 4
        %v4359 = vshrl.u32 %v4323, 16
        %v4361 = vrot.slane %v4359, 7
        %v4362 = vshll.u32 %v4323, 16
        %v4364 = vor.u32 %v4361, %v4362
        %v4365 = vrot.slane %v4361, 4
        %v4367 = vshrl.u32 %v4324, 16
        %v4369 = vrot.slane %v4367, 7
        %v4370 = vshll.u32 %v4324, 16
        %v4372 = vor.u32 %v4369, %v4370
        %v4373 = vsel %vm611, %v4365, %v4372
        %v4374 = vrot.slane %v4369, 4
        %v4376 = vshrl.u32 %v4325, 16
        %v4378 = vrot.slane %v4376, 7
        %v4379 = vshll.u32 %v4325, 16
        %v4381 = vor.u32 %v4378, %v4379
        %v4382 = vrot.slane %v4378, 4
        %v4384 = vshrl.u32 %v4326, 16
        %v4386 = vrot.slane %v4384, 7
        %v4387 = vshll.u32 %v4326, 16
        %v4389 = vor.u32 %v4386, %v4387
        %v4390 = vsel %vm611, %v4382, %v4389
        %v4391 = vrot.slane %v4386, 4
        %v4393 = vshrl.u32 %v4327, 16
        %v4395 = vrot.slane %v4393, 7
        %v4396 = vshll.u32 %v4327, 16
        %v4398 = vor.u32 %v4395, %v4396
        %v4399 = vrot.slane %v4395, 4
        %v4401 = vshrl.u32 %v4328, 16
        %v4403 = vrot.slane %v4401, 7
        %v4404 = vshll.u32 %v4328, 16
        %v4406 = vor.u32 %v4403, %v4404
        %v4407 = vsel %vm611, %v4399, %v4406
        %v4408 = vrot.slane %v4403, 4
        %v4410 = vshrl.u32 %v4329, 16
        %v4412 = vrot.slane %v4410, 7
        %v4413 = vshll.u32 %v4329, 16
        %v4415 = vor.u32 %v4412, %v4413
        %v4416 = vrot.slane %v4412, 4
        %v4418 = vshrl.u32 %v4330, 16
        %v4420 = vrot.slane %v4418, 7
        %v4421 = vshll.u32 %v4330, 16
        %v4423 = vor.u32 %v4420, %v4421
        %v4424 = vsel %vm611, %v4416, %v4423
        %v4425 = vrot.slane %v4420, 4
        %v4427 = vshrl.u32 %v4331, 16
        %v4429 = vrot.slane %v4427, 7
        %v4430 = vshll.u32 %v4331, 16
        %v4432 = vor.u32 %v4429, %v4430
        %v4433 = vrot.slane %v4429, 4
        %v4435 = vshrl.u32 %v4332, 16
        %v4437 = vrot.slane %v4435, 7
        %v4438 = vshll.u32 %v4332, 16
        %v4440 = vor.u32 %v4437, %v4438
        %v4441 = vsel %vm611, %v4433, %v4440
        %v4442 = vrot.slane %v4437, 4
        %v4444 = vshrl.u32 %v4333, 16
        %v4446 = vrot.slane %v4444, 7
        %v4447 = vshll.u32 %v4333, 16
        %v4449 = vor.u32 %v4446, %v4447
        %v4450 = vrot.slane %v4446, 4
        %v4452 = vshrl.u32 %v4334, 16
        %v4454 = vrot.slane %v4452, 7
        %v4455 = vshll.u32 %v4334, 16
        %v4457 = vor.u32 %v4454, %v4455
        %v4458 = vsel %vm611, %v4450, %v4457
        %v4459 = vrot.slane %v4454, 4
        %v4461 = vshrl.u32 %v4335, 16
        %v4463 = vrot.slane %v4461, 7
        %v4464 = vshll.u32 %v4335, 16
        %v4466 = vor.u32 %v4463, %v4464
        %v4467 = vrot.slane %v4463, 4
        %v4469 = vshrl.u32 %v4336, 16
        %v4471 = vrot.slane %v4469, 7
        %v4472 = vshll.u32 %v4336, 16
        %v4474 = vor.u32 %v4471, %v4472
        %v4475 = vsel %vm611, %v4467, %v4474
        %v4476 = vrot.slane %v4471, 4
        %v4478 = vshrl.u32 %v4337, 16
        %v4480 = vrot.slane %v4478, 7
        %v4481 = vshll.u32 %v4337, 16
        %v4483 = vor.u32 %v4480, %v4481
        %v4484 = vrot.slane %v4480, 4
        %v4486 = vshrl.u32 %v4338, 16
        %v4488 = vrot.slane %v4486, 7
        %v4489 = vshll.u32 %v4338, 16
        %v4491 = vor.u32 %v4488, %v4489
        %v4492 = vsel %vm611, %v4484, %v4491
        %v4493 = vrot.slane %v4488, 4
        %v4495 = vshrl.u32 %v4339, 16
        %v4497 = vrot.slane %v4495, 7
        %v4498 = vshll.u32 %v4339, 16
        %v4500 = vor.u32 %v4497, %v4498
        %v4501 = vrot.slane %v4497, 4
        %v4503 = vshrl.u32 %v4340, 16
        %v4505 = vrot.slane %v4503, 7
        %v4506 = vshll.u32 %v4340, 16
        %v4508 = vor.u32 %v4505, %v4506
        %v4509 = vsel %vm611, %v4501, %v4508
        %v4510 = vrot.slane %v4505, 4
        %v4541 = vld [vmem:[#allocation3] sm:$0xf]
        %v4542 = vsel %vm774, %v4347, %v4541
        %4543 = vst [vmem:[#allocation3] sm:$0xf] %v4542
        %4544 = vst.msk [vmem:[#allocation3 + $0x4] sm:$0xf] %vm778, %v4356
        %v4545 = vld [vmem:[#allocation3 + $0x8] sm:$0x1]
        %v4546 = vsel %vm471, %v4357, %v4545
        %4547 = vst [vmem:[#allocation3 + $0x8] sm:$0x1] %v4546
        %v4548 = vld [vmem:[#allocation3 + $0xc] sm:$0xf]
        %v4549 = vsel %vm774, %v4364, %v4548
        %4550 = vst [vmem:[#allocation3 + $0xc] sm:$0xf] %v4549
        %4551 = vst.msk [vmem:[#allocation3 + $0x10] sm:$0xf] %vm778, %v4373
        %v4552 = vld [vmem:[#allocation3 + $0x14] sm:$0x1]
        %v4553 = vsel %vm471, %v4374, %v4552
        %4554 = vst [vmem:[#allocation3 + $0x14] sm:$0x1] %v4553
        %v4555 = vld [vmem:[#allocation3 + $0x18] sm:$0xf]
        %v4556 = vsel %vm774, %v4381, %v4555
        %4557 = vst [vmem:[#allocation3 + $0x18] sm:$0xf] %v4556
        %4558 = vst.msk [vmem:[#allocation3 + $0x1c] sm:$0xf] %vm778, %v4390
        %v4559 = vld [vmem:[#allocation3 + $0x20] sm:$0x1]
        %v4560 = vsel %vm471, %v4391, %v4559
        %4561 = vst [vmem:[#allocation3 + $0x20] sm:$0x1] %v4560
        %v4562 = vld [vmem:[#allocation3 + $0x24] sm:$0xf]
        %v4563 = vsel %vm774, %v4398, %v4562
        %4564 = vst [vmem:[#allocation3 + $0x24] sm:$0xf] %v4563
        %4565 = vst.msk [vmem:[#allocation3 + $0x28] sm:$0xf] %vm778, %v4407
        %v4566 = vld [vmem:[#allocation3 + $0x2c] sm:$0x1]
        %v4567 = vsel %vm471, %v4408, %v4566
        %4568 = vst [vmem:[#allocation3 + $0x2c] sm:$0x1] %v4567
        %v4569 = vld [vmem:[#allocation3 + $0x30] sm:$0xf]
        %v4570 = vsel %vm774, %v4415, %v4569
        %4571 = vst [vmem:[#allocation3 + $0x30] sm:$0xf] %v4570
        %4572 = vst.msk [vmem:[#allocation3 + $0x34] sm:$0xf] %vm778, %v4424
        %v4573 = vld [vmem:[#allocation3 + $0x38] sm:$0x1]
        %v4574 = vsel %vm471, %v4425, %v4573
        %4575 = vst [vmem:[#allocation3 + $0x38] sm:$0x1] %v4574
        %v4576 = vld [vmem:[#allocation3 + $0x3c] sm:$0xf]
        %v4577 = vsel %vm774, %v4432, %v4576
        %4578 = vst [vmem:[#allocation3 + $0x3c] sm:$0xf] %v4577
        %4579 = vst.msk [vmem:[#allocation3 + $0x40] sm:$0xf] %vm778, %v4441
        %v4580 = vld [vmem:[#allocation3 + $0x44] sm:$0x1]
        %v4581 = vsel %vm471, %v4442, %v4580
        %4582 = vst [vmem:[#allocation3 + $0x44] sm:$0x1] %v4581
        %v4583 = vld [vmem:[#allocation3 + $0x48] sm:$0xf]
        %v4584 = vsel %vm774, %v4449, %v4583
        %4585 = vst [vmem:[#allocation3 + $0x48] sm:$0xf] %v4584
        %4586 = vst.msk [vmem:[#allocation3 + $0x4c] sm:$0xf] %vm778, %v4458
        %v4587 = vld [vmem:[#allocation3 + $0x50] sm:$0x1]
        %v4588 = vsel %vm471, %v4459, %v4587
        %4589 = vst [vmem:[#allocation3 + $0x50] sm:$0x1] %v4588
        %v4590 = vld [vmem:[#allocation3 + $0x54] sm:$0xf]
        %v4591 = vsel %vm774, %v4466, %v4590
        %4592 = vst [vmem:[#allocation3 + $0x54] sm:$0xf] %v4591
        %4593 = vst.msk [vmem:[#allocation3 + $0x58] sm:$0xf] %vm778, %v4475
        %v4594 = vld [vmem:[#allocation3 + $0x5c] sm:$0x1]
        %v4595 = vsel %vm471, %v4476, %v4594
        %4596 = vst [vmem:[#allocation3 + $0x5c] sm:$0x1] %v4595
        %v4597 = vld [vmem:[#allocation3 + $0x60] sm:$0xf]
        %v4598 = vsel %vm774, %v4483, %v4597
        %4599 = vst [vmem:[#allocation3 + $0x60] sm:$0xf] %v4598
        %4600 = vst.msk [vmem:[#allocation3 + $0x64] sm:$0xf] %vm778, %v4492
        %v4601 = vld [vmem:[#allocation3 + $0x68] sm:$0x1]
        %v4602 = vsel %vm471, %v4493, %v4601
        %4603 = vst [vmem:[#allocation3 + $0x68] sm:$0x1] %v4602
        %v4604 = vld [vmem:[#allocation3 + $0x6c] sm:$0xf]
        %v4605 = vsel %vm774, %v4500, %v4604
        %4606 = vst [vmem:[#allocation3 + $0x6c] sm:$0xf] %v4605
        %4607 = vst.msk [vmem:[#allocation3 + $0x70] sm:$0xf] %vm778, %v4509
        %v4608 = vld [vmem:[#allocation3 + $0x74] sm:$0x1]
        %v4609 = vsel %vm471, %v4510, %v4608
        %4610 = vst [vmem:[#allocation3 + $0x74] sm:$0x1] %v4609
        %v4611 = vld [vmem:[#allocation3] sm:$0xf]
        %v4612 = vld [vmem:[#allocation3 + $0x4] sm:$0xf]
        %v4613 = vld [vmem:[#allocation3 + $0xc] sm:$0xf]
        %v4614 = vld [vmem:[#allocation3 + $0x10] sm:$0xf]
        %v4615 = vld [vmem:[#allocation3 + $0x18] sm:$0xf]
        %v4616 = vld [vmem:[#allocation3 + $0x1c] sm:$0xf]
        %v4617 = vld [vmem:[#allocation3 + $0x24] sm:$0xf]
        %v4618 = vld [vmem:[#allocation3 + $0x28] sm:$0xf]
        %v4619 = vld [vmem:[#allocation3 + $0x30] sm:$0xf]
        %v4620 = vld [vmem:[#allocation3 + $0x34] sm:$0xf]
        %v4621 = vld [vmem:[#allocation3 + $0x3c] sm:$0xf]
        %v4622 = vld [vmem:[#allocation3 + $0x40] sm:$0xf]
        %v4623 = vld [vmem:[#allocation3 + $0x48] sm:$0xf]
        %v4624 = vld [vmem:[#allocation3 + $0x4c] sm:$0xf]
        %v4625 = vld [vmem:[#allocation3 + $0x54] sm:$0xf]
        %v4626 = vld [vmem:[#allocation3 + $0x58] sm:$0xf]
        %v4627 = vld [vmem:[#allocation12] sm:$0xf]
        %v4628 = vld [vmem:[#allocation12 + $0x4] sm:$0xf]
        %v4629 = vld [vmem:[#allocation12 + $0x8] sm:$0xf]
        %v4630 = vld [vmem:[#allocation12 + $0xc] sm:$0xf]
        %v4631 = vld [vmem:[#allocation3 + $0x8] sm:$0x1]
        %v4632 = vld [vmem:[#allocation3 + $0x14] sm:$0x1]
        %v4633 = vld [vmem:[#allocation3 + $0x20] sm:$0x1]
        %v4634 = vld [vmem:[#allocation3 + $0x2c] sm:$0x1]
        %v4635 = vld [vmem:[#allocation3 + $0x38] sm:$0x1]
        %v4636 = vld [vmem:[#allocation3 + $0x44] sm:$0x1]
        %v4637 = vld [vmem:[#allocation3 + $0x50] sm:$0x1]
        %v4638 = vld [vmem:[#allocation3 + $0x5c] sm:$0x1]
        %v4640 = vshrl.u32 %v4611, 16
        %v4642 = vrot.slane %v4640, 4
        %v4643 = vshll.u32 %v4611, 16
        %v4645 = vrot.slane %v4643, 5
        %v4646 = vor.u32 %v4642, %v4645
        %v4647 = vrot.slane %v4646, 4
        %v4649 = vshll.u32 %v4612, 16
        %v4651 = vrot.slane %v4649, 5
        %v4652 = vsel %vm1021, %v4647, %v4651
        %v4653 = vshrl.u32 %v4612, 16
        %v4655 = vrot.slane %v4653, 4
        %v4656 = vor.u32 %v4655, %v4651
        %v4657 = vrot.slane %v4656, 4
        %v4659 = vshll.u32 %v4631, 16
        %v4661 = vrot.slane %v4659, 5
        %v4662 = vsel %vm1021, %v4657, %v4661
        %v4664 = vshrl.u32 %v4613, 16
        %v4666 = vrot.slane %v4664, 4
        %v4667 = vshll.u32 %v4613, 16
        %v4669 = vrot.slane %v4667, 5
        %v4670 = vor.u32 %v4666, %v4669
        %v4671 = vrot.slane %v4670, 4
        %v4673 = vshll.u32 %v4614, 16
        %v4675 = vrot.slane %v4673, 5
        %v4676 = vsel %vm1021, %v4671, %v4675
        %v4677 = vshrl.u32 %v4614, 16
        %v4679 = vrot.slane %v4677, 4
        %v4680 = vor.u32 %v4679, %v4675
        %v4681 = vrot.slane %v4680, 4
        %v4683 = vshll.u32 %v4632, 16
        %v4685 = vrot.slane %v4683, 5
        %v4686 = vsel %vm1021, %v4681, %v4685
        %v4688 = vshrl.u32 %v4615, 16
        %v4690 = vrot.slane %v4688, 4
        %v4691 = vshll.u32 %v4615, 16
        %v4693 = vrot.slane %v4691, 5
        %v4694 = vor.u32 %v4690, %v4693
        %v4695 = vrot.slane %v4694, 4
        %v4697 = vshll.u32 %v4616, 16
        %v4699 = vrot.slane %v4697, 5
        %v4700 = vsel %vm1021, %v4695, %v4699
        %v4701 = vshrl.u32 %v4616, 16
        %v4703 = vrot.slane %v4701, 4
        %v4704 = vor.u32 %v4703, %v4699
        %v4705 = vrot.slane %v4704, 4
        %v4707 = vshll.u32 %v4633, 16
        %v4709 = vrot.slane %v4707, 5
        %v4710 = vsel %vm1021, %v4705, %v4709
        %v4712 = vshrl.u32 %v4617, 16
        %v4714 = vrot.slane %v4712, 4
        %v4715 = vshll.u32 %v4617, 16
        %v4717 = vrot.slane %v4715, 5
        %v4718 = vor.u32 %v4714, %v4717
        %v4719 = vrot.slane %v4718, 4
        %v4721 = vshll.u32 %v4618, 16
        %v4723 = vrot.slane %v4721, 5
        %v4724 = vsel %vm1021, %v4719, %v4723
        %v4725 = vshrl.u32 %v4618, 16
        %v4727 = vrot.slane %v4725, 4
        %v4728 = vor.u32 %v4727, %v4723
        %v4729 = vrot.slane %v4728, 4
        %v4731 = vshll.u32 %v4634, 16
        %v4733 = vrot.slane %v4731, 5
        %v4734 = vsel %vm1021, %v4729, %v4733
        %v4736 = vshrl.u32 %v4619, 16
        %v4738 = vrot.slane %v4736, 4
        %v4739 = vshll.u32 %v4619, 16
        %v4741 = vrot.slane %v4739, 5
        %v4742 = vor.u32 %v4738, %v4741
        %v4743 = vrot.slane %v4742, 4
        %v4745 = vshll.u32 %v4620, 16
        %v4747 = vrot.slane %v4745, 5
        %v4748 = vsel %vm1021, %v4743, %v4747
        %v4749 = vshrl.u32 %v4620, 16
        %v4751 = vrot.slane %v4749, 4
        %v4752 = vor.u32 %v4751, %v4747
        %v4753 = vrot.slane %v4752, 4
        %v4755 = vshll.u32 %v4635, 16
        %v4757 = vrot.slane %v4755, 5
        %v4758 = vsel %vm1021, %v4753, %v4757
        %v4760 = vshrl.u32 %v4621, 16
        %v4762 = vrot.slane %v4760, 4
        %v4763 = vshll.u32 %v4621, 16
        %v4765 = vrot.slane %v4763, 5
        %v4766 = vor.u32 %v4762, %v4765
        %v4767 = vrot.slane %v4766, 4
        %v4769 = vshll.u32 %v4622, 16
        %v4771 = vrot.slane %v4769, 5
        %v4772 = vsel %vm1021, %v4767, %v4771
        %v4773 = vshrl.u32 %v4622, 16
        %v4775 = vrot.slane %v4773, 4
        %v4776 = vor.u32 %v4775, %v4771
        %v4777 = vrot.slane %v4776, 4
        %v4779 = vshll.u32 %v4636, 16
        %v4781 = vrot.slane %v4779, 5
        %v4782 = vsel %vm1021, %v4777, %v4781
        %v4784 = vshrl.u32 %v4623, 16
        %v4786 = vrot.slane %v4784, 4
        %v4787 = vshll.u32 %v4623, 16
        %v4789 = vrot.slane %v4787, 5
        %v4790 = vor.u32 %v4786, %v4789
        %v4791 = vrot.slane %v4790, 4
        %v4793 = vshll.u32 %v4624, 16
        %v4795 = vrot.slane %v4793, 5
        %v4796 = vsel %vm1021, %v4791, %v4795
        %v4797 = vshrl.u32 %v4624, 16
        %v4799 = vrot.slane %v4797, 4
        %v4800 = vor.u32 %v4799, %v4795
        %v4801 = vrot.slane %v4800, 4
        %v4803 = vshll.u32 %v4637, 16
        %v4805 = vrot.slane %v4803, 5
        %v4806 = vsel %vm1021, %v4801, %v4805
        %v4808 = vshrl.u32 %v4625, 16
        %v4810 = vrot.slane %v4808, 4
        %v4811 = vshll.u32 %v4625, 16
        %v4813 = vrot.slane %v4811, 5
        %v4814 = vor.u32 %v4810, %v4813
        %v4815 = vrot.slane %v4814, 4
        %v4817 = vshll.u32 %v4626, 16
        %v4819 = vrot.slane %v4817, 5
        %v4820 = vsel %vm1021, %v4815, %v4819
        %v4821 = vshrl.u32 %v4626, 16
        %v4823 = vrot.slane %v4821, 4
        %v4824 = vor.u32 %v4823, %v4819
        %v4825 = vrot.slane %v4824, 4
        %v4827 = vshll.u32 %v4638, 16
        %v4829 = vrot.slane %v4827, 5
        %v4830 = vsel %vm1021, %v4825, %v4829
        %s4831 = scalar_lea.vmem [#allocation12], 16
        %v4832 = vld [vmem:[%s4831] sm:$0xf]
        %v4833 = vld [vmem:[%s4831 + $0x4] sm:$0xf]
        %v4834 = vld [vmem:[%s4831 + $0x8] sm:$0xf]
        %v4835 = vld [vmem:[%s4831 + $0xc] sm:$0xf]
        %v4836 = vunpack.c.l.b16 %v4652
        %v4837 = vunpack.c.l.b16 %v4662
        %v4838 = vunpack.c.l.b16 %v4676
        %v4839 = vunpack.c.l.b16 %v4686
        %v4840 = vunpack.c.l.b16 %v4700
        %v4841 = vunpack.c.l.b16 %v4710
        %v4842 = vunpack.c.l.b16 %v4724
        %v4843 = vunpack.c.l.b16 %v4734
        %v4844 = vunpack.c.l.b16 %v4748
        %v4845 = vunpack.c.l.b16 %v4758
        %v4846 = vunpack.c.l.b16 %v4772
        %v4847 = vunpack.c.l.b16 %v4782
        %v4848 = vunpack.c.l.b16 %v4796
        %v4849 = vunpack.c.l.b16 %v4806
        %v4850 = vunpack.c.l.b16 %v4820
        %v4851 = vunpack.c.l.b16 %v4830
        %v4852 = vpack.c.b16 %v4837, %v4836
        %v4853 = vpack.c.b16 %v4839, %v4838
        %v4854 = vpack.c.b16 %v4841, %v4840
        %v4855 = vpack.c.b16 %v4843, %v4842
        %v4856 = vpack.c.b16 %v4845, %v4844
        %v4857 = vpack.c.b16 %v4847, %v4846
        %v4858 = vpack.c.b16 %v4849, %v4848
        %v4859 = vpack.c.b16 %v4851, %v4850
        %v4864 = vunpack.c.l.b16 %v4832
        %v4865 = vunpack.c.l.b16 %v4833
        %v4866 = vunpack.c.l.b16 %v4834
        %v4867 = vunpack.c.l.b16 %v4835
        %v4868 = vpack.c.b16 %v4865, %v4864
        %v4869 = vpack.c.b16 %v4867, %v4866
        %v4873 = vsel %vm1309, %v4852, 0
        %v4876 = vsel %vm1309, %v4853, 0
        %v4879 = vsel %vm1309, %v4854, 0
        %v4882 = vsel %vm1309, %v4855, 0
        %v4885 = vsel %vm1309, %v4856, 0
        %v4888 = vsel %vm1309, %v4857, 0
        %v4891 = vsel %vm1309, %v4858, 0
        %v4894 = vsel %vm1309, %v4859, 0
        %4896 = vmatprep.subr.bf16.mxu0 0
        %4897 = vmatpush1.bf16.msra.mxu0 %v4868
        %4898 = vmatprep.subr.bf16.mxu0 0
        %4899 = vmatpush1.bf16.msra.mxu0 %v4869
        %4900 = vmatprep.subr.bf16.mxu0 0
        %4901 = vmatpush1.bf16.msra.mxu0 0
        %4902 = vmatprep.subr.bf16.mxu0 0
        %4903 = vmatpush1.bf16.msra.mxu0 0
        %4904 = vmatprep.subr.bf16.mxu0 0
        %4905 = vmatpush1.bf16.msra.mxu0 0
        %4906 = vmatprep.subr.bf16.mxu0 0
        %4907 = vmatpush1.bf16.msra.mxu0 0
        %4908 = vmatprep.subr.bf16.mxu0 0
        %4909 = vmatpush1.bf16.msra.mxu0 0
        %4910 = vmatprep.subr.bf16.mxu0 0
        %4911 = vmatpush1.bf16.msra.mxu0 0
        %4912 = vmatprep.subr.bf16.mxu0 0
        %4913 = vmatpush1.bf16.msra.mxu0 0
        %4914 = vmatprep.subr.bf16.mxu0 0
        %4915 = vmatpush1.bf16.msra.mxu0 0
        %4916 = vmatprep.subr.bf16.mxu0 0
        %4917 = vmatpush1.bf16.msra.mxu0 0
        %4918 = vmatprep.subr.bf16.mxu0 0
        %4919 = vmatpush1.bf16.msra.mxu0 0
        %4920 = vmatprep.subr.bf16.mxu0 0
        %4921 = vmatpush1.bf16.msra.mxu0 0
        %4922 = vmatprep.subr.bf16.mxu0 0
        %4923 = vmatpush1.bf16.msra.mxu0 0
        %4924 = vmatprep.subr.bf16.mxu0 0
        %4925 = vmatpush1.bf16.msra.mxu0 0
        %4926 = vmatprep.subr.bf16.mxu0 0
        %4927 = vmatpush1.bf16.msra.mxu0 0
        %4928 = vmatprep.mubr.bf16.mxu0 0
        %4929 = vmatmul.mubr.bf16.gmra.mrb[0].mxu0 %v4873
        %v4930 = vpop.f32.mrb[0].mxu0
        %v4931 = vadd.f32 0.0, %v4930
        %v4932 = vpop.f32.mrb[0].mxu0
        %v4933 = vpop.f32.mrb[0].mxu0
        %v4934 = vadd.f32 0.0, %v4933
        %v4935 = vpop.f32.mrb[0].mxu0
        %4936 = vmatprep.mubr.bf16.mxu0 0
        %4937 = vmatmul.mubr.bf16.gmra.mrb[0].mxu0 %v4876
        %v4938 = vpop.f32.mrb[0].mxu0
        %v4939 = vadd.f32 0.0, %v4938
        %v4940 = vpop.f32.mrb[0].mxu0
        %v4941 = vpop.f32.mrb[0].mxu0
        %v4942 = vadd.f32 0.0, %v4941
        %v4943 = vpop.f32.mrb[0].mxu0
        %4944 = vmatprep.mubr.bf16.mxu0 0
        %4945 = vmatmul.mubr.bf16.gmra.mrb[0].mxu0 %v4879
        %v4946 = vpop.f32.mrb[0].mxu0
        %v4947 = vadd.f32 0.0, %v4946
        %v4948 = vpop.f32.mrb[0].mxu0
        %v4949 = vpop.f32.mrb[0].mxu0
        %v4950 = vadd.f32 0.0, %v4949
        %v4951 = vpop.f32.mrb[0].mxu0
        %4952 = vmatprep.mubr.bf16.mxu0 0
        %4953 = vmatmul.mubr.bf16.gmra.mrb[0].mxu0 %v4882
        %v4954 = vpop.f32.mrb[0].mxu0
        %v4955 = vadd.f32 0.0, %v4954
        %v4956 = vpop.f32.mrb[0].mxu0
        %v4957 = vpop.f32.mrb[0].mxu0
        %v4958 = vadd.f32 0.0, %v4957
        %v4959 = vpop.f32.mrb[0].mxu0
        %4960 = vmatprep.mubr.bf16.mxu0 0
        %4961 = vmatmul.mubr.bf16.gmra.mrb[0].mxu0 %v4885
        %v4962 = vpop.f32.mrb[0].mxu0
        %v4963 = vadd.f32 0.0, %v4962
        %v4964 = vpop.f32.mrb[0].mxu0
        %v4965 = vpop.f32.mrb[0].mxu0
        %v4966 = vadd.f32 0.0, %v4965
        %v4967 = vpop.f32.mrb[0].mxu0
        %4968 = vmatprep.mubr.bf16.mxu0 0
        %4969 = vmatmul.mubr.bf16.gmra.mrb[0].mxu0 %v4888
        %v4970 = vpop.f32.mrb[0].mxu0
        %v4971 = vadd.f32 0.0, %v4970
        %v4972 = vpop.f32.mrb[0].mxu0
        %v4973 = vpop.f32.mrb[0].mxu0
        %v4974 = vadd.f32 0.0, %v4973
        %v4975 = vpop.f32.mrb[0].mxu0
        %4976 = vmatprep.mubr.bf16.mxu0 0
        %4977 = vmatmul.mubr.bf16.gmra.mrb[0].mxu0 %v4891
        %v4978 = vpop.f32.mrb[0].mxu0
        %v4979 = vadd.f32 0.0, %v4978
        %v4980 = vpop.f32.mrb[0].mxu0
        %v4981 = vpop.f32.mrb[0].mxu0
        %v4982 = vadd.f32 0.0, %v4981
        %v4983 = vpop.f32.mrb[0].mxu0
        %4984 = vmatprep.mubr.bf16.mxu0 0
        %4985 = vmatmul.mubr.bf16.gmra.mrb[0].mxu0 %v4894
        %v4986 = vpop.f32.mrb[0].mxu0
        %v4987 = vadd.f32 0.0, %v4986
        %v4988 = vpop.f32.mrb[0].mxu0
        %v4989 = vpop.f32.mrb[0].mxu0
        %v4990 = vadd.f32 0.0, %v4989
        %v4991 = vpop.f32.mrb[0].mxu0
        %4992 = vdwg.mxu0
        %v5009 = vunpack.c.l.b16 %v4611
        %v5010 = vunpack.c.l.b16 %v4612
        %v5011 = vunpack.c.l.b16 %v4613
        %v5012 = vunpack.c.l.b16 %v4614
        %v5013 = vunpack.c.l.b16 %v4615
        %v5014 = vunpack.c.l.b16 %v4616
        %v5015 = vunpack.c.l.b16 %v4617
        %v5016 = vunpack.c.l.b16 %v4618
        %v5017 = vunpack.c.l.b16 %v4619
        %v5018 = vunpack.c.l.b16 %v4620
        %v5019 = vunpack.c.l.b16 %v4621
        %v5020 = vunpack.c.l.b16 %v4622
        %v5021 = vunpack.c.l.b16 %v4623
        %v5022 = vunpack.c.l.b16 %v4624
        %v5023 = vunpack.c.l.b16 %v4625
        %v5024 = vunpack.c.l.b16 %v4626
        %v5025 = vpack.c.b16 %v5010, %v5009
        %v5026 = vpack.c.b16 %v5012, %v5011
        %v5027 = vpack.c.b16 %v5014, %v5013
        %v5028 = vpack.c.b16 %v5016, %v5015
        %v5029 = vpack.c.b16 %v5018, %v5017
        %v5030 = vpack.c.b16 %v5020, %v5019
        %v5031 = vpack.c.b16 %v5022, %v5021
        %v5032 = vpack.c.b16 %v5024, %v5023
        %v5037 = vunpack.c.l.b16 %v4627
        %v5038 = vunpack.c.l.b16 %v4628
        %v5039 = vunpack.c.l.b16 %v4629
        %v5040 = vunpack.c.l.b16 %v4630
        %v5041 = vpack.c.b16 %v5038, %v5037
        %v5042 = vpack.c.b16 %v5040, %v5039
        %v5046 = vsel %vm1309, %v5025, 0
        %v5049 = vsel %vm1309, %v5026, 0
        %v5052 = vsel %vm1309, %v5027, 0
        %v5055 = vsel %vm1309, %v5028, 0
        %v5058 = vsel %vm1309, %v5029, 0
        %v5061 = vsel %vm1309, %v5030, 0
        %v5064 = vsel %vm1309, %v5031, 0
        %v5067 = vsel %vm1309, %v5032, 0
        %5069 = vmatprep.subr.bf16.mxu0 0
        %5070 = vmatpush1.bf16.msra.mxu0 %v5041
        %5071 = vmatprep.subr.bf16.mxu0 0
        %5072 = vmatpush1.bf16.msra.mxu0 %v5042
        %5073 = vmatprep.subr.bf16.mxu0 0
        %5074 = vmatpush1.bf16.msra.mxu0 0
        %5075 = vmatprep.subr.bf16.mxu0 0
        %5076 = vmatpush1.bf16.msra.mxu0 0
        %5077 = vmatprep.subr.bf16.mxu0 0
        %5078 = vmatpush1.bf16.msra.mxu0 0
        %5079 = vmatprep.subr.bf16.mxu0 0
        %5080 = vmatpush1.bf16.msra.mxu0 0
        %5081 = vmatprep.subr.bf16.mxu0 0
        %5082 = vmatpush1.bf16.msra.mxu0 0
        %5083 = vmatprep.subr.bf16.mxu0 0
        %5084 = vmatpush1.bf16.msra.mxu0 0
        %5085 = vmatprep.subr.bf16.mxu0 0
        %5086 = vmatpush1.bf16.msra.mxu0 0
        %5087 = vmatprep.subr.bf16.mxu0 0
        %5088 = vmatpush1.bf16.msra.mxu0 0
        %5089 = vmatprep.subr.bf16.mxu0 0
        %5090 = vmatpush1.bf16.msra.mxu0 0
        %5091 = vmatprep.subr.bf16.mxu0 0
        %5092 = vmatpush1.bf16.msra.mxu0 0
        %5093 = vmatprep.subr.bf16.mxu0 0
        %5094 = vmatpush1.bf16.msra.mxu0 0
        %5095 = vmatprep.subr.bf16.mxu0 0
        %5096 = vmatpush1.bf16.msra.mxu0 0
        %5097 = vmatprep.subr.bf16.mxu0 0
        %5098 = vmatpush1.bf16.msra.mxu0 0
        %5099 = vmatprep.subr.bf16.mxu0 0
        %5100 = vmatpush1.bf16.msra.mxu0 0
        %5101 = vmatprep.mubr.bf16.mxu0 0
        %5102 = vmatmul.mubr.bf16.gmra.mrb[0].mxu0 %v5046
        %v5103 = vpop.f32.mrb[0].mxu0
        %v5104 = vadd.f32 %v4931, %v5103
        %v5105 = vpop.f32.mrb[0].mxu0
        %v5106 = vpop.f32.mrb[0].mxu0
        %v5107 = vadd.f32 %v4934, %v5106
        %v5108 = vpop.f32.mrb[0].mxu0
        %5109 = vmatprep.mubr.bf16.mxu0 0
        %5110 = vmatmul.mubr.bf16.gmra.mrb[0].mxu0 %v5049
        %v5111 = vpop.f32.mrb[0].mxu0
        %v5112 = vadd.f32 %v4939, %v5111
        %v5113 = vpop.f32.mrb[0].mxu0
        %v5114 = vpop.f32.mrb[0].mxu0
        %v5115 = vadd.f32 %v4942, %v5114
        %v5116 = vpop.f32.mrb[0].mxu0
        %5117 = vmatprep.mubr.bf16.mxu0 0
        %5118 = vmatmul.mubr.bf16.gmra.mrb[0].mxu0 %v5052
        %v5119 = vpop.f32.mrb[0].mxu0
        %v5120 = vadd.f32 %v4947, %v5119
        %v5121 = vpop.f32.mrb[0].mxu0
        %v5122 = vpop.f32.mrb[0].mxu0
        %v5123 = vadd.f32 %v4950, %v5122
        %v5124 = vpop.f32.mrb[0].mxu0
        %5125 = vmatprep.mubr.bf16.mxu0 0
        %5126 = vmatmul.mubr.bf16.gmra.mrb[0].mxu0 %v5055
        %v5127 = vpop.f32.mrb[0].mxu0
        %v5128 = vadd.f32 %v4955, %v5127
        %v5129 = vpop.f32.mrb[0].mxu0
        %v5130 = vpop.f32.mrb[0].mxu0
        %v5131 = vadd.f32 %v4958, %v5130
        %v5132 = vpop.f32.mrb[0].mxu0
        %5133 = vmatprep.mubr.bf16.mxu0 0
        %5134 = vmatmul.mubr.bf16.gmra.mrb[0].mxu0 %v5058
        %v5135 = vpop.f32.mrb[0].mxu0
        %v5136 = vadd.f32 %v4963, %v5135
        %v5137 = vpop.f32.mrb[0].mxu0
        %v5138 = vpop.f32.mrb[0].mxu0
        %v5139 = vadd.f32 %v4966, %v5138
        %v5140 = vpop.f32.mrb[0].mxu0
        %5141 = vmatprep.mubr.bf16.mxu0 0
        %5142 = vmatmul.mubr.bf16.gmra.mrb[0].mxu0 %v5061
        %v5143 = vpop.f32.mrb[0].mxu0
        %v5144 = vadd.f32 %v4971, %v5143
        %v5145 = vpop.f32.mrb[0].mxu0
        %v5146 = vpop.f32.mrb[0].mxu0
        %v5147 = vadd.f32 %v4974, %v5146
        %v5148 = vpop.f32.mrb[0].mxu0
        %5149 = vmatprep.mubr.bf16.mxu0 0
        %5150 = vmatmul.mubr.bf16.gmra.mrb[0].mxu0 %v5064
        %v5151 = vpop.f32.mrb[0].mxu0
        %v5152 = vadd.f32 %v4979, %v5151
        %v5153 = vpop.f32.mrb[0].mxu0
        %v5154 = vpop.f32.mrb[0].mxu0
        %v5155 = vadd.f32 %v4982, %v5154
        %v5156 = vpop.f32.mrb[0].mxu0
        %5157 = vmatprep.mubr.bf16.mxu0 0
        %5158 = vmatmul.mubr.bf16.gmra.mrb[0].mxu0 %v5067
        %v5159 = vpop.f32.mrb[0].mxu0
        %v5160 = vadd.f32 %v4987, %v5159
        %v5161 = vpop.f32.mrb[0].mxu0
        %v5162 = vpop.f32.mrb[0].mxu0
        %v5163 = vadd.f32 %v4990, %v5162
        %v5164 = vpop.f32.mrb[0].mxu0
        %5165 = vdwg.mxu0
        %v5166 = vld [vmem:[#allocation3] sm:$0xe]
        %v5167 = vld [vmem:[#allocation3 + $0xc] sm:$0xe]
        %v5168 = vld [vmem:[#allocation3 + $0x18] sm:$0xe]
        %v5169 = vld [vmem:[#allocation3 + $0x24] sm:$0xe]
        %v5170 = vld [vmem:[#allocation3 + $0x30] sm:$0xe]
        %v5171 = vld [vmem:[#allocation3 + $0x3c] sm:$0xe]
        %v5172 = vld [vmem:[#allocation3 + $0x48] sm:$0xe]
        %v5173 = vld [vmem:[#allocation3 + $0x54] sm:$0xe]
        %v5190 = vrot.slane %v5166, 5
        %v5191 = vrot.slane %v5190, 4
        %v5192 = vrot.slane %v4612, 5
        %v5193 = vsel %vm1690, %v5191, %v5192
        %v5194 = vrot.slane %v5192, 4
        %v5195 = vrot.slane %v4631, 5
        %v5196 = vsel %vm1690, %v5194, %v5195
        %v5197 = vrot.slane %v5167, 5
        %v5198 = vrot.slane %v5197, 4
        %v5199 = vrot.slane %v4614, 5
        %v5200 = vsel %vm1690, %v5198, %v5199
        %v5201 = vrot.slane %v5199, 4
        %v5202 = vrot.slane %v4632, 5
        %v5203 = vsel %vm1690, %v5201, %v5202
        %v5204 = vrot.slane %v5168, 5
        %v5205 = vrot.slane %v5204, 4
        %v5206 = vrot.slane %v4616, 5
        %v5207 = vsel %vm1690, %v5205, %v5206
        %v5208 = vrot.slane %v5206, 4
        %v5209 = vrot.slane %v4633, 5
        %v5210 = vsel %vm1690, %v5208, %v5209
        %v5211 = vrot.slane %v5169, 5
        %v5212 = vrot.slane %v5211, 4
        %v5213 = vrot.slane %v4618, 5
        %v5214 = vsel %vm1690, %v5212, %v5213
        %v5215 = vrot.slane %v5213, 4
        %v5216 = vrot.slane %v4634, 5
        %v5217 = vsel %vm1690, %v5215, %v5216
        %v5218 = vrot.slane %v5170, 5
        %v5219 = vrot.slane %v5218, 4
        %v5220 = vrot.slane %v4620, 5
        %v5221 = vsel %vm1690, %v5219, %v5220
        %v5222 = vrot.slane %v5220, 4
        %v5223 = vrot.slane %v4635, 5
        %v5224 = vsel %vm1690, %v5222, %v5223
        %v5225 = vrot.slane %v5171, 5
        %v5226 = vrot.slane %v5225, 4
        %v5227 = vrot.slane %v4622, 5
        %v5228 = vsel %vm1690, %v5226, %v5227
        %v5229 = vrot.slane %v5227, 4
        %v5230 = vrot.slane %v4636, 5
        %v5231 = vsel %vm1690, %v5229, %v5230
        %v5232 = vrot.slane %v5172, 5
        %v5233 = vrot.slane %v5232, 4
        %v5234 = vrot.slane %v4624, 5
        %v5235 = vsel %vm1690, %v5233, %v5234
        %v5236 = vrot.slane %v5234, 4
        %v5237 = vrot.slane %v4637, 5
        %v5238 = vsel %vm1690, %v5236, %v5237
        %v5239 = vrot.slane %v5173, 5
        %v5240 = vrot.slane %v5239, 4
        %v5241 = vrot.slane %v4626, 5
        %v5242 = vsel %vm1690, %v5240, %v5241
        %v5243 = vrot.slane %v5241, 4
        %v5244 = vrot.slane %v4638, 5
        %v5245 = vsel %vm1690, %v5243, %v5244
        %s5246 = scalar_lea.vmem [#allocation12], 32
        %v5247 = vld [vmem:[%s5246] sm:$0xf]
        %v5248 = vld [vmem:[%s5246 + $0x4] sm:$0xf]
        %v5249 = vld [vmem:[%s5246 + $0x8] sm:$0xf]
        %v5250 = vld [vmem:[%s5246 + $0xc] sm:$0xf]
        %v5251 = vunpack.c.l.b16 %v5193
        %v5252 = vunpack.c.l.b16 %v5196
        %v5253 = vunpack.c.l.b16 %v5200
        %v5254 = vunpack.c.l.b16 %v5203
        %v5255 = vunpack.c.l.b16 %v5207
        %v5256 = vunpack.c.l.b16 %v5210
        %v5257 = vunpack.c.l.b16 %v5214
        %v5258 = vunpack.c.l.b16 %v5217
        %v5259 = vunpack.c.l.b16 %v5221
        %v5260 = vunpack.c.l.b16 %v5224
        %v5261 = vunpack.c.l.b16 %v5228
        %v5262 = vunpack.c.l.b16 %v5231
        %v5263 = vunpack.c.l.b16 %v5235
        %v5264 = vunpack.c.l.b16 %v5238
        %v5265 = vunpack.c.l.b16 %v5242
        %v5266 = vunpack.c.l.b16 %v5245
        %v5267 = vpack.c.b16 %v5252, %v5251
        %v5268 = vpack.c.b16 %v5254, %v5253
        %v5269 = vpack.c.b16 %v5256, %v5255
        %v5270 = vpack.c.b16 %v5258, %v5257
        %v5271 = vpack.c.b16 %v5260, %v5259
        %v5272 = vpack.c.b16 %v5262, %v5261
        %v5273 = vpack.c.b16 %v5264, %v5263
        %v5274 = vpack.c.b16 %v5266, %v5265
        %v5279 = vunpack.c.l.b16 %v5247
        %v5280 = vunpack.c.l.b16 %v5248
        %v5281 = vunpack.c.l.b16 %v5249
        %v5282 = vunpack.c.l.b16 %v5250
        %v5283 = vpack.c.b16 %v5280, %v5279
        %v5284 = vpack.c.b16 %v5282, %v5281
        %v5288 = vsel %vm1309, %v5267, 0
        %v5291 = vsel %vm1309, %v5268, 0
        %v5294 = vsel %vm1309, %v5269, 0
        %v5297 = vsel %vm1309, %v5270, 0
        %v5300 = vsel %vm1309, %v5271, 0
        %v5303 = vsel %vm1309, %v5272, 0
        %v5306 = vsel %vm1309, %v5273, 0
        %v5309 = vsel %vm1309, %v5274, 0
        %5311 = vmatprep.subr.bf16.mxu0 0
        %5312 = vmatpush1.bf16.msra.mxu0 %v5283
        %5313 = vmatprep.subr.bf16.mxu0 0
        %5314 = vmatpush1.bf16.msra.mxu0 %v5284
        %5315 = vmatprep.subr.bf16.mxu0 0
        %5316 = vmatpush1.bf16.msra.mxu0 0
        %5317 = vmatprep.subr.bf16.mxu0 0
        %5318 = vmatpush1.bf16.msra.mxu0 0
        %5319 = vmatprep.subr.bf16.mxu0 0
        %5320 = vmatpush1.bf16.msra.mxu0 0
        %5321 = vmatprep.subr.bf16.mxu0 0
        %5322 = vmatpush1.bf16.msra.mxu0 0
        %5323 = vmatprep.subr.bf16.mxu0 0
        %5324 = vmatpush1.bf16.msra.mxu0 0
        %5325 = vmatprep.subr.bf16.mxu0 0
        %5326 = vmatpush1.bf16.msra.mxu0 0
        %5327 = vmatprep.subr.bf16.mxu0 0
        %5328 = vmatpush1.bf16.msra.mxu0 0
        %5329 = vmatprep.subr.bf16.mxu0 0
        %5330 = vmatpush1.bf16.msra.mxu0 0
        %5331 = vmatprep.subr.bf16.mxu0 0
        %5332 = vmatpush1.bf16.msra.mxu0 0
        %5333 = vmatprep.subr.bf16.mxu0 0
        %5334 = vmatpush1.bf16.msra.mxu0 0
        %5335 = vmatprep.subr.bf16.mxu0 0
        %5336 = vmatpush1.bf16.msra.mxu0 0
        %5337 = vmatprep.subr.bf16.mxu0 0
        %5338 = vmatpush1.bf16.msra.mxu0 0
        %5339 = vmatprep.subr.bf16.mxu0 0
        %5340 = vmatpush1.bf16.msra.mxu0 0
        %5341 = vmatprep.subr.bf16.mxu0 0
        %5342 = vmatpush1.bf16.msra.mxu0 0
        %5343 = vmatprep.mubr.bf16.mxu0 0
        %5344 = vmatmul.mubr.bf16.gmra.mrb[0].mxu0 %v5288
        %v5345 = vpop.f32.mrb[0].mxu0
        %v5346 = vadd.f32 0.0, %v5345
        %v5347 = vpop.f32.mrb[0].mxu0
        %v5348 = vpop.f32.mrb[0].mxu0
        %v5349 = vadd.f32 0.0, %v5348
        %v5350 = vpop.f32.mrb[0].mxu0
        %5351 = vmatprep.mubr.bf16.mxu0 0
        %5352 = vmatmul.mubr.bf16.gmra.mrb[0].mxu0 %v5291
        %v5353 = vpop.f32.mrb[0].mxu0
        %v5354 = vadd.f32 0.0, %v5353
        %v5355 = vpop.f32.mrb[0].mxu0
        %v5356 = vpop.f32.mrb[0].mxu0
        %v5357 = vadd.f32 0.0, %v5356
        %v5358 = vpop.f32.mrb[0].mxu0
        %5359 = vmatprep.mubr.bf16.mxu0 0
        %5360 = vmatmul.mubr.bf16.gmra.mrb[0].mxu0 %v5294
        %v5361 = vpop.f32.mrb[0].mxu0
        %v5362 = vadd.f32 0.0, %v5361
        %v5363 = vpop.f32.mrb[0].mxu0
        %v5364 = vpop.f32.mrb[0].mxu0
        %v5365 = vadd.f32 0.0, %v5364
        %v5366 = vpop.f32.mrb[0].mxu0
        %5367 = vmatprep.mubr.bf16.mxu0 0
        %5368 = vmatmul.mubr.bf16.gmra.mrb[0].mxu0 %v5297
        %v5369 = vpop.f32.mrb[0].mxu0
        %v5370 = vadd.f32 0.0, %v5369
        %v5371 = vpop.f32.mrb[0].mxu0
        %v5372 = vpop.f32.mrb[0].mxu0
        %v5373 = vadd.f32 0.0, %v5372
        %v5374 = vpop.f32.mrb[0].mxu0
        %5375 = vmatprep.mubr.bf16.mxu0 0
        %5376 = vmatmul.mubr.bf16.gmra.mrb[0].mxu0 %v5300
        %v5377 = vpop.f32.mrb[0].mxu0
        %v5378 = vadd.f32 0.0, %v5377
        %v5379 = vpop.f32.mrb[0].mxu0
        %v5380 = vpop.f32.mrb[0].mxu0
        %v5381 = vadd.f32 0.0, %v5380
        %v5382 = vpop.f32.mrb[0].mxu0
        %5383 = vmatprep.mubr.bf16.mxu0 0
        %5384 = vmatmul.mubr.bf16.gmra.mrb[0].mxu0 %v5303
        %v5385 = vpop.f32.mrb[0].mxu0
        %v5386 = vadd.f32 0.0, %v5385
        %v5387 = vpop.f32.mrb[0].mxu0
        %v5388 = vpop.f32.mrb[0].mxu0
        %v5389 = vadd.f32 0.0, %v5388
        %v5390 = vpop.f32.mrb[0].mxu0
        %5391 = vmatprep.mubr.bf16.mxu0 0
        %5392 = vmatmul.mubr.bf16.gmra.mrb[0].mxu0 %v5306
        %v5393 = vpop.f32.mrb[0].mxu0
        %v5394 = vadd.f32 0.0, %v5393
        %v5395 = vpop.f32.mrb[0].mxu0
        %v5396 = vpop.f32.mrb[0].mxu0
        %v5397 = vadd.f32 0.0, %v5396
        %v5398 = vpop.f32.mrb[0].mxu0
        %5399 = vmatprep.mubr.bf16.mxu0 0
        %5400 = vmatmul.mubr.bf16.gmra.mrb[0].mxu0 %v5309
        %v5401 = vpop.f32.mrb[0].mxu0
        %v5402 = vadd.f32 0.0, %v5401
        %v5403 = vpop.f32.mrb[0].mxu0
        %v5404 = vpop.f32.mrb[0].mxu0
        %v5405 = vadd.f32 0.0, %v5404
        %v5406 = vpop.f32.mrb[0].mxu0
        %5407 = vdwg.mxu0
        %v5408 = vadd.f32 %v5104, %v5346
        %v5409 = vadd.f32 %v5107, %v5349
        %v5410 = vadd.f32 %v5112, %v5354
        %v5411 = vadd.f32 %v5115, %v5357
        %v5412 = vadd.f32 %v5120, %v5362
        %v5413 = vadd.f32 %v5123, %v5365
        %v5414 = vadd.f32 %v5128, %v5370
        %v5415 = vadd.f32 %v5131, %v5373
        %v5416 = vadd.f32 %v5136, %v5378
        %v5417 = vadd.f32 %v5139, %v5381
        %v5418 = vadd.f32 %v5144, %v5386
        %v5419 = vadd.f32 %v5147, %v5389
        %v5420 = vadd.f32 %v5152, %v5394
        %v5421 = vadd.f32 %v5155, %v5397
        %v5422 = vadd.f32 %v5160, %v5402
        %v5423 = vadd.f32 %v5163, %v5405
        %s5424 = scalar_lea.vmem [#allocation3], 12
        %v5425 = vld [vmem:[%s5424] sm:$0xf]
        %v5426 = vld [vmem:[%s5424 + $0x4] sm:$0xf]
        %v5427 = vld [vmem:[%s5424 + $0xc] sm:$0xf]
        %v5428 = vld [vmem:[%s5424 + $0x10] sm:$0xf]
        %v5429 = vld [vmem:[%s5424 + $0x18] sm:$0xf]
        %v5430 = vld [vmem:[%s5424 + $0x1c] sm:$0xf]
        %v5431 = vld [vmem:[%s5424 + $0x24] sm:$0xf]
        %v5432 = vld [vmem:[%s5424 + $0x28] sm:$0xf]
        %v5433 = vld [vmem:[%s5424 + $0x30] sm:$0xf]
        %v5434 = vld [vmem:[%s5424 + $0x34] sm:$0xf]
        %v5435 = vld [vmem:[%s5424 + $0x3c] sm:$0xf]
        %v5436 = vld [vmem:[%s5424 + $0x40] sm:$0xf]
        %v5437 = vld [vmem:[%s5424 + $0x48] sm:$0xf]
        %v5438 = vld [vmem:[%s5424 + $0x4c] sm:$0xf]
        %v5439 = vld [vmem:[%s5424 + $0x54] sm:$0xf]
        %v5440 = vld [vmem:[%s5424 + $0x58] sm:$0xf]
        %s5441 = scalar_lea.vmem [#allocation12], 48
        %v5442 = vld [vmem:[%s5441] sm:$0xf]
        %v5443 = vld [vmem:[%s5441 + $0x4] sm:$0xf]
        %v5444 = vld [vmem:[%s5441 + $0x8] sm:$0xf]
        %v5445 = vld [vmem:[%s5441 + $0xc] sm:$0xf]
        %v5462 = vunpack.c.l.b16 %v5425
        %v5463 = vunpack.c.l.b16 %v5426
        %v5464 = vunpack.c.l.b16 %v5427
        %v5465 = vunpack.c.l.b16 %v5428
        %v5466 = vunpack.c.l.b16 %v5429
        %v5467 = vunpack.c.l.b16 %v5430
        %v5468 = vunpack.c.l.b16 %v5431
        %v5469 = vunpack.c.l.b16 %v5432
        %v5470 = vunpack.c.l.b16 %v5433
        %v5471 = vunpack.c.l.b16 %v5434
        %v5472 = vunpack.c.l.b16 %v5435
        %v5473 = vunpack.c.l.b16 %v5436
        %v5474 = vunpack.c.l.b16 %v5437
        %v5475 = vunpack.c.l.b16 %v5438
        %v5476 = vunpack.c.l.b16 %v5439
        %v5477 = vunpack.c.l.b16 %v5440
        %v5478 = vpack.c.b16 %v5463, %v5462
        %v5479 = vpack.c.b16 %v5465, %v5464
        %v5480 = vpack.c.b16 %v5467, %v5466
        %v5481 = vpack.c.b16 %v5469, %v5468
        %v5482 = vpack.c.b16 %v5471, %v5470
        %v5483 = vpack.c.b16 %v5473, %v5472
        %v5484 = vpack.c.b16 %v5475, %v5474
        %v5485 = vpack.c.b16 %v5477, %v5476
        %v5490 = vunpack.c.l.b16 %v5442
        %v5491 = vunpack.c.l.b16 %v5443
        %v5492 = vunpack.c.l.b16 %v5444
        %v5493 = vunpack.c.l.b16 %v5445
        %v5494 = vpack.c.b16 %v5491, %v5490
        %v5495 = vpack.c.b16 %v5493, %v5492
        %v5499 = vsel %vm1309, %v5478, 0
        %v5502 = vsel %vm1309, %v5479, 0
        %v5505 = vsel %vm1309, %v5480, 0
        %v5508 = vsel %vm1309, %v5481, 0
        %v5511 = vsel %vm1309, %v5482, 0
        %v5514 = vsel %vm1309, %v5483, 0
        %v5517 = vsel %vm1309, %v5484, 0
        %v5520 = vsel %vm1309, %v5485, 0
        %5522 = vmatprep.subr.bf16.mxu0 0
        %5523 = vmatpush1.bf16.msra.mxu0 %v5494
        %5524 = vmatprep.subr.bf16.mxu0 0
        %5525 = vmatpush1.bf16.msra.mxu0 %v5495
        %5526 = vmatprep.subr.bf16.mxu0 0
        %5527 = vmatpush1.bf16.msra.mxu0 0
        %5528 = vmatprep.subr.bf16.mxu0 0
        %5529 = vmatpush1.bf16.msra.mxu0 0
        %5530 = vmatprep.subr.bf16.mxu0 0
        %5531 = vmatpush1.bf16.msra.mxu0 0
        %5532 = vmatprep.subr.bf16.mxu0 0
        %5533 = vmatpush1.bf16.msra.mxu0 0
        %5534 = vmatprep.subr.bf16.mxu0 0
        %5535 = vmatpush1.bf16.msra.mxu0 0
        %5536 = vmatprep.subr.bf16.mxu0 0
        %5537 = vmatpush1.bf16.msra.mxu0 0
        %5538 = vmatprep.subr.bf16.mxu0 0
        %5539 = vmatpush1.bf16.msra.mxu0 0
        %5540 = vmatprep.subr.bf16.mxu0 0
        %5541 = vmatpush1.bf16.msra.mxu0 0
        %5542 = vmatprep.subr.bf16.mxu0 0
        %5543 = vmatpush1.bf16.msra.mxu0 0
        %5544 = vmatprep.subr.bf16.mxu0 0
        %5545 = vmatpush1.bf16.msra.mxu0 0
        %5546 = vmatprep.subr.bf16.mxu0 0
        %5547 = vmatpush1.bf16.msra.mxu0 0
        %5548 = vmatprep.subr.bf16.mxu0 0
        %5549 = vmatpush1.bf16.msra.mxu0 0
        %5550 = vmatprep.subr.bf16.mxu0 0
        %5551 = vmatpush1.bf16.msra.mxu0 0
        %5552 = vmatprep.subr.bf16.mxu0 0
        %5553 = vmatpush1.bf16.msra.mxu0 0
        %5554 = vmatprep.mubr.bf16.mxu0 0
        %5555 = vmatmul.mubr.bf16.gmra.mrb[0].mxu0 %v5499
        %v5556 = vpop.f32.mrb[0].mxu0
        %v5557 = vadd.f32 0.0, %v5556
        %v5558 = vpop.f32.mrb[0].mxu0
        %v5559 = vpop.f32.mrb[0].mxu0
        %v5560 = vadd.f32 0.0, %v5559
        %v5561 = vpop.f32.mrb[0].mxu0
        %5562 = vmatprep.mubr.bf16.mxu0 0
        %5563 = vmatmul.mubr.bf16.gmra.mrb[0].mxu0 %v5502
        %v5564 = vpop.f32.mrb[0].mxu0
        %v5565 = vadd.f32 0.0, %v5564
        %v5566 = vpop.f32.mrb[0].mxu0
        %v5567 = vpop.f32.mrb[0].mxu0
        %v5568 = vadd.f32 0.0, %v5567
        %v5569 = vpop.f32.mrb[0].mxu0
        %5570 = vmatprep.mubr.bf16.mxu0 0
        %5571 = vmatmul.mubr.bf16.gmra.mrb[0].mxu0 %v5505
        %v5572 = vpop.f32.mrb[0].mxu0
        %v5573 = vadd.f32 0.0, %v5572
        %v5574 = vpop.f32.mrb[0].mxu0
        %v5575 = vpop.f32.mrb[0].mxu0
        %v5576 = vadd.f32 0.0, %v5575
        %v5577 = vpop.f32.mrb[0].mxu0
        %5578 = vmatprep.mubr.bf16.mxu0 0
        %5579 = vmatmul.mubr.bf16.gmra.mrb[0].mxu0 %v5508
        %v5580 = vpop.f32.mrb[0].mxu0
        %v5581 = vadd.f32 0.0, %v5580
        %v5582 = vpop.f32.mrb[0].mxu0
        %v5583 = vpop.f32.mrb[0].mxu0
        %v5584 = vadd.f32 0.0, %v5583
        %v5585 = vpop.f32.mrb[0].mxu0
        %5586 = vmatprep.mubr.bf16.mxu0 0
        %5587 = vmatmul.mubr.bf16.gmra.mrb[0].mxu0 %v5511
        %v5588 = vpop.f32.mrb[0].mxu0
        %v5589 = vadd.f32 0.0, %v5588
        %v5590 = vpop.f32.mrb[0].mxu0
        %v5591 = vpop.f32.mrb[0].mxu0
        %v5592 = vadd.f32 0.0, %v5591
        %v5593 = vpop.f32.mrb[0].mxu0
        %5594 = vmatprep.mubr.bf16.mxu0 0
        %5595 = vmatmul.mubr.bf16.gmra.mrb[0].mxu0 %v5514
        %v5596 = vpop.f32.mrb[0].mxu0
        %v5597 = vadd.f32 0.0, %v5596
        %v5598 = vpop.f32.mrb[0].mxu0
        %v5599 = vpop.f32.mrb[0].mxu0
        %v5600 = vadd.f32 0.0, %v5599
        %v5601 = vpop.f32.mrb[0].mxu0
        %5602 = vmatprep.mubr.bf16.mxu0 0
        %5603 = vmatmul.mubr.bf16.gmra.mrb[0].mxu0 %v5517
        %v5604 = vpop.f32.mrb[0].mxu0
        %v5605 = vadd.f32 0.0, %v5604
        %v5606 = vpop.f32.mrb[0].mxu0
        %v5607 = vpop.f32.mrb[0].mxu0
        %v5608 = vadd.f32 0.0, %v5607
        %v5609 = vpop.f32.mrb[0].mxu0
        %5610 = vmatprep.mubr.bf16.mxu0 0
        %5611 = vmatmul.mubr.bf16.gmra.mrb[0].mxu0 %v5520
        %v5612 = vpop.f32.mrb[0].mxu0
        %v5613 = vadd.f32 0.0, %v5612
        %v5614 = vpop.f32.mrb[0].mxu0
        %v5615 = vpop.f32.mrb[0].mxu0
        %v5616 = vadd.f32 0.0, %v5615
        %v5617 = vpop.f32.mrb[0].mxu0
        %5618 = vdwg.mxu0
        %v5619 = vadd.f32 %v5408, %v5557
        %v5620 = vadd.f32 %v5409, %v5560
        %v5621 = vadd.f32 %v5410, %v5565
        %v5622 = vadd.f32 %v5411, %v5568
        %v5623 = vadd.f32 %v5412, %v5573
        %v5624 = vadd.f32 %v5413, %v5576
        %v5625 = vadd.f32 %v5414, %v5581
        %v5626 = vadd.f32 %v5415, %v5584
        %v5627 = vadd.f32 %v5416, %v5589
        %v5628 = vadd.f32 %v5417, %v5592
        %v5629 = vadd.f32 %v5418, %v5597
        %v5630 = vadd.f32 %v5419, %v5600
        %v5631 = vadd.f32 %v5420, %v5605
        %v5632 = vadd.f32 %v5421, %v5608
        %v5633 = vadd.f32 %v5422, %v5613
        %v5634 = vadd.f32 %v5423, %v5616
        %v5635 = vld [vmem:[%s5424] sm:$0xf]
        %v5636 = vld [vmem:[%s5424 + $0x4] sm:$0xf]
        %v5637 = vld [vmem:[%s5424 + $0x8] sm:$0x1]
        %v5638 = vld [vmem:[%s5424 + $0xc] sm:$0xf]
        %v5639 = vld [vmem:[%s5424 + $0x10] sm:$0xf]
        %v5640 = vld [vmem:[%s5424 + $0x14] sm:$0x1]
        %v5641 = vld [vmem:[%s5424 + $0x18] sm:$0xf]
        %v5642 = vld [vmem:[%s5424 + $0x1c] sm:$0xf]
        %v5643 = vld [vmem:[%s5424 + $0x20] sm:$0x1]
        %v5644 = vld [vmem:[%s5424 + $0x24] sm:$0xf]
        %v5645 = vld [vmem:[%s5424 + $0x28] sm:$0xf]
        %v5646 = vld [vmem:[%s5424 + $0x2c] sm:$0x1]
        %v5647 = vld [vmem:[%s5424 + $0x30] sm:$0xf]
        %v5648 = vld [vmem:[%s5424 + $0x34] sm:$0xf]
        %v5649 = vld [vmem:[%s5424 + $0x38] sm:$0x1]
        %v5650 = vld [vmem:[%s5424 + $0x3c] sm:$0xf]
        %v5651 = vld [vmem:[%s5424 + $0x40] sm:$0xf]
        %v5652 = vld [vmem:[%s5424 + $0x44] sm:$0x1]
        %v5653 = vld [vmem:[%s5424 + $0x48] sm:$0xf]
        %v5654 = vld [vmem:[%s5424 + $0x4c] sm:$0xf]
        %v5655 = vld [vmem:[%s5424 + $0x50] sm:$0x1]
        %v5656 = vld [vmem:[%s5424 + $0x54] sm:$0xf]
        %v5657 = vld [vmem:[%s5424 + $0x58] sm:$0xf]
        %v5658 = vld [vmem:[%s5424 + $0x5c] sm:$0x1]
        %v5660 = vshrl.u32 %v5635, 16
        %v5662 = vrot.slane %v5660, 4
        %v5663 = vshll.u32 %v5635, 16
        %v5665 = vrot.slane %v5663, 5
        %v5666 = vor.u32 %v5662, %v5665
        %v5667 = vrot.slane %v5666, 4
        %v5669 = vshll.u32 %v5636, 16
        %v5671 = vrot.slane %v5669, 5
        %v5672 = vsel %vm1021, %v5667, %v5671
        %v5673 = vshrl.u32 %v5636, 16
        %v5675 = vrot.slane %v5673, 4
        %v5676 = vor.u32 %v5675, %v5671
        %v5677 = vrot.slane %v5676, 4
        %v5679 = vshll.u32 %v5637, 16
        %v5681 = vrot.slane %v5679, 5
        %v5682 = vsel %vm1021, %v5677, %v5681
        %v5684 = vshrl.u32 %v5638, 16
        %v5686 = vrot.slane %v5684, 4
        %v5687 = vshll.u32 %v5638, 16
        %v5689 = vrot.slane %v5687, 5
        %v5690 = vor.u32 %v5686, %v5689
        %v5691 = vrot.slane %v5690, 4
        %v5693 = vshll.u32 %v5639, 16
        %v5695 = vrot.slane %v5693, 5
        %v5696 = vsel %vm1021, %v5691, %v5695
        %v5697 = vshrl.u32 %v5639, 16
        %v5699 = vrot.slane %v5697, 4
        %v5700 = vor.u32 %v5699, %v5695
        %v5701 = vrot.slane %v5700, 4
        %v5703 = vshll.u32 %v5640, 16
        %v5705 = vrot.slane %v5703, 5
        %v5706 = vsel %vm1021, %v5701, %v5705
        %v5708 = vshrl.u32 %v5641, 16
        %v5710 = vrot.slane %v5708, 4
        %v5711 = vshll.u32 %v5641, 16
        %v5713 = vrot.slane %v5711, 5
        %v5714 = vor.u32 %v5710, %v5713
        %v5715 = vrot.slane %v5714, 4
        %v5717 = vshll.u32 %v5642, 16
        %v5719 = vrot.slane %v5717, 5
        %v5720 = vsel %vm1021, %v5715, %v5719
        %v5721 = vshrl.u32 %v5642, 16
        %v5723 = vrot.slane %v5721, 4
        %v5724 = vor.u32 %v5723, %v5719
        %v5725 = vrot.slane %v5724, 4
        %v5727 = vshll.u32 %v5643, 16
        %v5729 = vrot.slane %v5727, 5
        %v5730 = vsel %vm1021, %v5725, %v5729
        %v5732 = vshrl.u32 %v5644, 16
        %v5734 = vrot.slane %v5732, 4
        %v5735 = vshll.u32 %v5644, 16
        %v5737 = vrot.slane %v5735, 5
        %v5738 = vor.u32 %v5734, %v5737
        %v5739 = vrot.slane %v5738, 4
        %v5741 = vshll.u32 %v5645, 16
        %v5743 = vrot.slane %v5741, 5
        %v5744 = vsel %vm1021, %v5739, %v5743
        %v5745 = vshrl.u32 %v5645, 16
        %v5747 = vrot.slane %v5745, 4
        %v5748 = vor.u32 %v5747, %v5743
        %v5749 = vrot.slane %v5748, 4
        %v5751 = vshll.u32 %v5646, 16
        %v5753 = vrot.slane %v5751, 5
        %v5754 = vsel %vm1021, %v5749, %v5753
        %v5756 = vshrl.u32 %v5647, 16
        %v5758 = vrot.slane %v5756, 4
        %v5759 = vshll.u32 %v5647, 16
        %v5761 = vrot.slane %v5759, 5
        %v5762 = vor.u32 %v5758, %v5761
        %v5763 = vrot.slane %v5762, 4
        %v5765 = vshll.u32 %v5648, 16
        %v5767 = vrot.slane %v5765, 5
        %v5768 = vsel %vm1021, %v5763, %v5767
        %v5769 = vshrl.u32 %v5648, 16
        %v5771 = vrot.slane %v5769, 4
        %v5772 = vor.u32 %v5771, %v5767
        %v5773 = vrot.slane %v5772, 4
        %v5775 = vshll.u32 %v5649, 16
        %v5777 = vrot.slane %v5775, 5
        %v5778 = vsel %vm1021, %v5773, %v5777
        %v5780 = vshrl.u32 %v5650, 16
        %v5782 = vrot.slane %v5780, 4
        %v5783 = vshll.u32 %v5650, 16
        %v5785 = vrot.slane %v5783, 5
        %v5786 = vor.u32 %v5782, %v5785
        %v5787 = vrot.slane %v5786, 4
        %v5789 = vshll.u32 %v5651, 16
        %v5791 = vrot.slane %v5789, 5
        %v5792 = vsel %vm1021, %v5787, %v5791
        %v5793 = vshrl.u32 %v5651, 16
        %v5795 = vrot.slane %v5793, 4
        %v5796 = vor.u32 %v5795, %v5791
        %v5797 = vrot.slane %v5796, 4
        %v5799 = vshll.u32 %v5652, 16
        %v5801 = vrot.slane %v5799, 5
        %v5802 = vsel %vm1021, %v5797, %v5801
        %v5804 = vshrl.u32 %v5653, 16
        %v5806 = vrot.slane %v5804, 4
        %v5807 = vshll.u32 %v5653, 16
        %v5809 = vrot.slane %v5807, 5
        %v5810 = vor.u32 %v5806, %v5809
        %v5811 = vrot.slane %v5810, 4
        %v5813 = vshll.u32 %v5654, 16
        %v5815 = vrot.slane %v5813, 5
        %v5816 = vsel %vm1021, %v5811, %v5815
        %v5817 = vshrl.u32 %v5654, 16
        %v5819 = vrot.slane %v5817, 4
        %v5820 = vor.u32 %v5819, %v5815
        %v5821 = vrot.slane %v5820, 4
        %v5823 = vshll.u32 %v5655, 16
        %v5825 = vrot.slane %v5823, 5
        %v5826 = vsel %vm1021, %v5821, %v5825
        %v5828 = vshrl.u32 %v5656, 16
        %v5830 = vrot.slane %v5828, 4
        %v5831 = vshll.u32 %v5656, 16
        %v5833 = vrot.slane %v5831, 5
        %v5834 = vor.u32 %v5830, %v5833
        %v5835 = vrot.slane %v5834, 4
        %v5837 = vshll.u32 %v5657, 16
        %v5839 = vrot.slane %v5837, 5
        %v5840 = vsel %vm1021, %v5835, %v5839
        %v5841 = vshrl.u32 %v5657, 16
        %v5843 = vrot.slane %v5841, 4
        %v5844 = vor.u32 %v5843, %v5839
        %v5845 = vrot.slane %v5844, 4
        %v5847 = vshll.u32 %v5658, 16
        %v5849 = vrot.slane %v5847, 5
        %v5850 = vsel %vm1021, %v5845, %v5849
        %s5851 = scalar_lea.vmem [#allocation12], 64
        %v5852 = vld [vmem:[%s5851] sm:$0xf]
        %v5853 = vld [vmem:[%s5851 + $0x4] sm:$0xf]
        %v5854 = vld [vmem:[%s5851 + $0x8] sm:$0xf]
        %v5855 = vld [vmem:[%s5851 + $0xc] sm:$0xf]
        %v5856 = vunpack.c.l.b16 %v5672
        %v5857 = vunpack.c.l.b16 %v5682
        %v5858 = vunpack.c.l.b16 %v5696
        %v5859 = vunpack.c.l.b16 %v5706
        %v5860 = vunpack.c.l.b16 %v5720
        %v5861 = vunpack.c.l.b16 %v5730
        %v5862 = vunpack.c.l.b16 %v5744
        %v5863 = vunpack.c.l.b16 %v5754
        %v5864 = vunpack.c.l.b16 %v5768
        %v5865 = vunpack.c.l.b16 %v5778
        %v5866 = vunpack.c.l.b16 %v5792
        %v5867 = vunpack.c.l.b16 %v5802
        %v5868 = vunpack.c.l.b16 %v5816
        %v5869 = vunpack.c.l.b16 %v5826
        %v5870 = vunpack.c.l.b16 %v5840
        %v5871 = vunpack.c.l.b16 %v5850
        %v5872 = vpack.c.b16 %v5857, %v5856
        %v5873 = vpack.c.b16 %v5859, %v5858
        %v5874 = vpack.c.b16 %v5861, %v5860
        %v5875 = vpack.c.b16 %v5863, %v5862
        %v5876 = vpack.c.b16 %v5865, %v5864
        %v5877 = vpack.c.b16 %v5867, %v5866
        %v5878 = vpack.c.b16 %v5869, %v5868
        %v5879 = vpack.c.b16 %v5871, %v5870
        %v5884 = vunpack.c.l.b16 %v5852
        %v5885 = vunpack.c.l.b16 %v5853
        %v5886 = vunpack.c.l.b16 %v5854
        %v5887 = vunpack.c.l.b16 %v5855
        %v5888 = vpack.c.b16 %v5885, %v5884
        %v5889 = vpack.c.b16 %v5887, %v5886
        %v5893 = vsel %vm1309, %v5872, 0
        %v5896 = vsel %vm1309, %v5873, 0
        %v5899 = vsel %vm1309, %v5874, 0
        %v5902 = vsel %vm1309, %v5875, 0
        %v5905 = vsel %vm1309, %v5876, 0
        %v5908 = vsel %vm1309, %v5877, 0
        %v5911 = vsel %vm1309, %v5878, 0
        %v5914 = vsel %vm1309, %v5879, 0
        %5916 = vmatprep.subr.bf16.mxu0 0
        %5917 = vmatpush1.bf16.msra.mxu0 %v5888
        %5918 = vmatprep.subr.bf16.mxu0 0
        %5919 = vmatpush1.bf16.msra.mxu0 %v5889
        %5920 = vmatprep.subr.bf16.mxu0 0
        %5921 = vmatpush1.bf16.msra.mxu0 0
        %5922 = vmatprep.subr.bf16.mxu0 0
        %5923 = vmatpush1.bf16.msra.mxu0 0
        %5924 = vmatprep.subr.bf16.mxu0 0
        %5925 = vmatpush1.bf16.msra.mxu0 0
        %5926 = vmatprep.subr.bf16.mxu0 0
        %5927 = vmatpush1.bf16.msra.mxu0 0
        %5928 = vmatprep.subr.bf16.mxu0 0
        %5929 = vmatpush1.bf16.msra.mxu0 0
        %5930 = vmatprep.subr.bf16.mxu0 0
        %5931 = vmatpush1.bf16.msra.mxu0 0
        %5932 = vmatprep.subr.bf16.mxu0 0
        %5933 = vmatpush1.bf16.msra.mxu0 0
        %5934 = vmatprep.subr.bf16.mxu0 0
        %5935 = vmatpush1.bf16.msra.mxu0 0
        %5936 = vmatprep.subr.bf16.mxu0 0
        %5937 = vmatpush1.bf16.msra.mxu0 0
        %5938 = vmatprep.subr.bf16.mxu0 0
        %5939 = vmatpush1.bf16.msra.mxu0 0
        %5940 = vmatprep.subr.bf16.mxu0 0
        %5941 = vmatpush1.bf16.msra.mxu0 0
        %5942 = vmatprep.subr.bf16.mxu0 0
        %5943 = vmatpush1.bf16.msra.mxu0 0
        %5944 = vmatprep.subr.bf16.mxu0 0
        %5945 = vmatpush1.bf16.msra.mxu0 0
        %5946 = vmatprep.subr.bf16.mxu0 0
        %5947 = vmatpush1.bf16.msra.mxu0 0
        %5948 = vmatprep.mubr.bf16.mxu0 0
        %5949 = vmatmul.mubr.bf16.gmra.mrb[0].mxu0 %v5893
        %v5950 = vpop.f32.mrb[0].mxu0
        %v5951 = vadd.f32 0.0, %v5950
        %v5952 = vpop.f32.mrb[0].mxu0
        %v5953 = vpop.f32.mrb[0].mxu0
        %v5954 = vadd.f32 0.0, %v5953
        %v5955 = vpop.f32.mrb[0].mxu0
        %5956 = vmatprep.mubr.bf16.mxu0 0
        %5957 = vmatmul.mubr.bf16.gmra.mrb[0].mxu0 %v5896
        %v5958 = vpop.f32.mrb[0].mxu0
        %v5959 = vadd.f32 0.0, %v5958
        %v5960 = vpop.f32.mrb[0].mxu0
        %v5961 = vpop.f32.mrb[0].mxu0
        %v5962 = vadd.f32 0.0, %v5961
        %v5963 = vpop.f32.mrb[0].mxu0
        %5964 = vmatprep.mubr.bf16.mxu0 0
        %5965 = vmatmul.mubr.bf16.gmra.mrb[0].mxu0 %v5899
        %v5966 = vpop.f32.mrb[0].mxu0
        %v5967 = vadd.f32 0.0, %v5966
        %v5968 = vpop.f32.mrb[0].mxu0
        %v5969 = vpop.f32.mrb[0].mxu0
        %v5970 = vadd.f32 0.0, %v5969
        %v5971 = vpop.f32.mrb[0].mxu0
        %5972 = vmatprep.mubr.bf16.mxu0 0
        %5973 = vmatmul.mubr.bf16.gmra.mrb[0].mxu0 %v5902
        %v5974 = vpop.f32.mrb[0].mxu0
        %v5975 = vadd.f32 0.0, %v5974
        %v5976 = vpop.f32.mrb[0].mxu0
        %v5977 = vpop.f32.mrb[0].mxu0
        %v5978 = vadd.f32 0.0, %v5977
        %v5979 = vpop.f32.mrb[0].mxu0
        %5980 = vmatprep.mubr.bf16.mxu0 0
        %5981 = vmatmul.mubr.bf16.gmra.mrb[0].mxu0 %v5905
        %v5982 = vpop.f32.mrb[0].mxu0
        %v5983 = vadd.f32 0.0, %v5982
        %v5984 = vpop.f32.mrb[0].mxu0
        %v5985 = vpop.f32.mrb[0].mxu0
        %v5986 = vadd.f32 0.0, %v5985
        %v5987 = vpop.f32.mrb[0].mxu0
        %5988 = vmatprep.mubr.bf16.mxu0 0
        %5989 = vmatmul.mubr.bf16.gmra.mrb[0].mxu0 %v5908
        %v5990 = vpop.f32.mrb[0].mxu0
        %v5991 = vadd.f32 0.0, %v5990
        %v5992 = vpop.f32.mrb[0].mxu0
        %v5993 = vpop.f32.mrb[0].mxu0
        %v5994 = vadd.f32 0.0, %v5993
        %v5995 = vpop.f32.mrb[0].mxu0
        %5996 = vmatprep.mubr.bf16.mxu0 0
        %5997 = vmatmul.mubr.bf16.gmra.mrb[0].mxu0 %v5911
        %v5998 = vpop.f32.mrb[0].mxu0
        %v5999 = vadd.f32 0.0, %v5998
        %v6000 = vpop.f32.mrb[0].mxu0
        %v6001 = vpop.f32.mrb[0].mxu0
        %v6002 = vadd.f32 0.0, %v6001
        %v6003 = vpop.f32.mrb[0].mxu0
        %6004 = vmatprep.mubr.bf16.mxu0 0
        %6005 = vmatmul.mubr.bf16.gmra.mrb[0].mxu0 %v5914
        %v6006 = vpop.f32.mrb[0].mxu0
        %v6007 = vadd.f32 0.0, %v6006
        %v6008 = vpop.f32.mrb[0].mxu0
        %v6009 = vpop.f32.mrb[0].mxu0
        %v6010 = vadd.f32 0.0, %v6009
        %v6011 = vpop.f32.mrb[0].mxu0
        %6012 = vdwg.mxu0
        %v6013 = vadd.f32 %v5619, %v5951
        %v6014 = vadd.f32 %v5620, %v5954
        %v6015 = vadd.f32 %v5621, %v5959
        %v6016 = vadd.f32 %v5622, %v5962
        %v6017 = vadd.f32 %v5623, %v5967
        %v6018 = vadd.f32 %v5624, %v5970
        %v6019 = vadd.f32 %v5625, %v5975
        %v6020 = vadd.f32 %v5626, %v5978
        %v6021 = vadd.f32 %v5627, %v5983
        %v6022 = vadd.f32 %v5628, %v5986
        %v6023 = vadd.f32 %v5629, %v5991
        %v6024 = vadd.f32 %v5630, %v5994
        %v6025 = vadd.f32 %v5631, %v5999
        %v6026 = vadd.f32 %v5632, %v6002
        %v6027 = vadd.f32 %v5633, %v6007
        %v6028 = vadd.f32 %v5634, %v6010
        %v6029 = vld [vmem:[%s5424] sm:$0xe]
        %v6030 = vld [vmem:[%s5424 + $0xc] sm:$0xe]
        %v6031 = vld [vmem:[%s5424 + $0x18] sm:$0xe]
        %v6032 = vld [vmem:[%s5424 + $0x24] sm:$0xe]
        %v6033 = vld [vmem:[%s5424 + $0x30] sm:$0xe]
        %v6034 = vld [vmem:[%s5424 + $0x3c] sm:$0xe]
        %v6035 = vld [vmem:[%s5424 + $0x48] sm:$0xe]
        %v6036 = vld [vmem:[%s5424 + $0x54] sm:$0xe]
        %v6061 = vrot.slane %v6029, 5
        %v6062 = vrot.slane %v6061, 4
        %v6063 = vrot.slane %v5636, 5
        %v6064 = vsel %vm1690, %v6062, %v6063
        %v6065 = vrot.slane %v6063, 4
        %v6066 = vrot.slane %v5637, 5
        %v6067 = vsel %vm1690, %v6065, %v6066
        %v6068 = vrot.slane %v6030, 5
        %v6069 = vrot.slane %v6068, 4
        %v6070 = vrot.slane %v5639, 5
        %v6071 = vsel %vm1690, %v6069, %v6070
        %v6072 = vrot.slane %v6070, 4
        %v6073 = vrot.slane %v5640, 5
        %v6074 = vsel %vm1690, %v6072, %v6073
        %v6075 = vrot.slane %v6031, 5
        %v6076 = vrot.slane %v6075, 4
        %v6077 = vrot.slane %v5642, 5
        %v6078 = vsel %vm1690, %v6076, %v6077
        %v6079 = vrot.slane %v6077, 4
        %v6080 = vrot.slane %v5643, 5
        %v6081 = vsel %vm1690, %v6079, %v6080
        %v6082 = vrot.slane %v6032, 5
        %v6083 = vrot.slane %v6082, 4
        %v6084 = vrot.slane %v5645, 5
        %v6085 = vsel %vm1690, %v6083, %v6084
        %v6086 = vrot.slane %v6084, 4
        %v6087 = vrot.slane %v5646, 5
        %v6088 = vsel %vm1690, %v6086, %v6087
        %v6089 = vrot.slane %v6033, 5
        %v6090 = vrot.slane %v6089, 4
        %v6091 = vrot.slane %v5648, 5
        %v6092 = vsel %vm1690, %v6090, %v6091
        %v6093 = vrot.slane %v6091, 4
        %v6094 = vrot.slane %v5649, 5
        %v6095 = vsel %vm1690, %v6093, %v6094
        %v6096 = vrot.slane %v6034, 5
        %v6097 = vrot.slane %v6096, 4
        %v6098 = vrot.slane %v5651, 5
        %v6099 = vsel %vm1690, %v6097, %v6098
        %v6100 = vrot.slane %v6098, 4
        %v6101 = vrot.slane %v5652, 5
        %v6102 = vsel %vm1690, %v6100, %v6101
        %v6103 = vrot.slane %v6035, 5
        %v6104 = vrot.slane %v6103, 4
        %v6105 = vrot.slane %v5654, 5
        %v6106 = vsel %vm1690, %v6104, %v6105
        %v6107 = vrot.slane %v6105, 4
        %v6108 = vrot.slane %v5655, 5
        %v6109 = vsel %vm1690, %v6107, %v6108
        %v6110 = vrot.slane %v6036, 5
        %v6111 = vrot.slane %v6110, 4
        %v6112 = vrot.slane %v5657, 5
        %v6113 = vsel %vm1690, %v6111, %v6112
        %v6114 = vrot.slane %v6112, 4
        %v6115 = vrot.slane %v5658, 5
        %v6116 = vsel %vm1690, %v6114, %v6115
        %s6117 = scalar_lea.vmem [#allocation12], 80
        %v6118 = vld [vmem:[%s6117] sm:$0xf]
        %v6119 = vld [vmem:[%s6117 + $0x4] sm:$0xf]
        %v6120 = vld [vmem:[%s6117 + $0x8] sm:$0xf]
        %v6121 = vld [vmem:[%s6117 + $0xc] sm:$0xf]
        %v6122 = vunpack.c.l.b16 %v6064
        %v6123 = vunpack.c.l.b16 %v6067
        %v6124 = vunpack.c.l.b16 %v6071
        %v6125 = vunpack.c.l.b16 %v6074
        %v6126 = vunpack.c.l.b16 %v6078
        %v6127 = vunpack.c.l.b16 %v6081
        %v6128 = vunpack.c.l.b16 %v6085
        %v6129 = vunpack.c.l.b16 %v6088
        %v6130 = vunpack.c.l.b16 %v6092
        %v6131 = vunpack.c.l.b16 %v6095
        %v6132 = vunpack.c.l.b16 %v6099
        %v6133 = vunpack.c.l.b16 %v6102
        %v6134 = vunpack.c.l.b16 %v6106
        %v6135 = vunpack.c.l.b16 %v6109
        %v6136 = vunpack.c.l.b16 %v6113
        %v6137 = vunpack.c.l.b16 %v6116
        %v6138 = vpack.c.b16 %v6123, %v6122
        %v6139 = vpack.c.b16 %v6125, %v6124
        %v6140 = vpack.c.b16 %v6127, %v6126
        %v6141 = vpack.c.b16 %v6129, %v6128
        %v6142 = vpack.c.b16 %v6131, %v6130
        %v6143 = vpack.c.b16 %v6133, %v6132
        %v6144 = vpack.c.b16 %v6135, %v6134
        %v6145 = vpack.c.b16 %v6137, %v6136
        %v6150 = vunpack.c.l.b16 %v6118
        %v6151 = vunpack.c.l.b16 %v6119
        %v6152 = vunpack.c.l.b16 %v6120
        %v6153 = vunpack.c.l.b16 %v6121
        %v6154 = vpack.c.b16 %v6151, %v6150
        %v6155 = vpack.c.b16 %v6153, %v6152
        %v6159 = vsel %vm1309, %v6138, 0
        %v6162 = vsel %vm1309, %v6139, 0
        %v6165 = vsel %vm1309, %v6140, 0
        %v6168 = vsel %vm1309, %v6141, 0
        %v6171 = vsel %vm1309, %v6142, 0
        %v6174 = vsel %vm1309, %v6143, 0
        %v6177 = vsel %vm1309, %v6144, 0
        %v6180 = vsel %vm1309, %v6145, 0
        %6182 = vmatprep.subr.bf16.mxu0 0
        %6183 = vmatpush1.bf16.msra.mxu0 %v6154
        %6184 = vmatprep.subr.bf16.mxu0 0
        %6185 = vmatpush1.bf16.msra.mxu0 %v6155
        %6186 = vmatprep.subr.bf16.mxu0 0
        %6187 = vmatpush1.bf16.msra.mxu0 0
        %6188 = vmatprep.subr.bf16.mxu0 0
        %6189 = vmatpush1.bf16.msra.mxu0 0
        %6190 = vmatprep.subr.bf16.mxu0 0
        %6191 = vmatpush1.bf16.msra.mxu0 0
        %6192 = vmatprep.subr.bf16.mxu0 0
        %6193 = vmatpush1.bf16.msra.mxu0 0
        %6194 = vmatprep.subr.bf16.mxu0 0
        %6195 = vmatpush1.bf16.msra.mxu0 0
        %6196 = vmatprep.subr.bf16.mxu0 0
        %6197 = vmatpush1.bf16.msra.mxu0 0
        %6198 = vmatprep.subr.bf16.mxu0 0
        %6199 = vmatpush1.bf16.msra.mxu0 0
        %6200 = vmatprep.subr.bf16.mxu0 0
        %6201 = vmatpush1.bf16.msra.mxu0 0
        %6202 = vmatprep.subr.bf16.mxu0 0
        %6203 = vmatpush1.bf16.msra.mxu0 0
        %6204 = vmatprep.subr.bf16.mxu0 0
        %6205 = vmatpush1.bf16.msra.mxu0 0
        %6206 = vmatprep.subr.bf16.mxu0 0
        %6207 = vmatpush1.bf16.msra.mxu0 0
        %6208 = vmatprep.subr.bf16.mxu0 0
        %6209 = vmatpush1.bf16.msra.mxu0 0
        %6210 = vmatprep.subr.bf16.mxu0 0
        %6211 = vmatpush1.bf16.msra.mxu0 0
        %6212 = vmatprep.subr.bf16.mxu0 0
        %6213 = vmatpush1.bf16.msra.mxu0 0
        %6214 = vmatprep.mubr.bf16.mxu0 0
        %6215 = vmatmul.mubr.bf16.gmra.mrb[0].mxu0 %v6159
        %v6216 = vpop.f32.mrb[0].mxu0
        %v6217 = vadd.f32 0.0, %v6216
        %v6218 = vpop.f32.mrb[0].mxu0
        %v6219 = vpop.f32.mrb[0].mxu0
        %v6220 = vadd.f32 0.0, %v6219
        %v6221 = vpop.f32.mrb[0].mxu0
        %6222 = vmatprep.mubr.bf16.mxu0 0
        %6223 = vmatmul.mubr.bf16.gmra.mrb[0].mxu0 %v6162
        %v6224 = vpop.f32.mrb[0].mxu0
        %v6225 = vadd.f32 0.0, %v6224
        %v6226 = vpop.f32.mrb[0].mxu0
        %v6227 = vpop.f32.mrb[0].mxu0
        %v6228 = vadd.f32 0.0, %v6227
        %v6229 = vpop.f32.mrb[0].mxu0
        %6230 = vmatprep.mubr.bf16.mxu0 0
        %6231 = vmatmul.mubr.bf16.gmra.mrb[0].mxu0 %v6165
        %v6232 = vpop.f32.mrb[0].mxu0
        %v6233 = vadd.f32 0.0, %v6232
        %v6234 = vpop.f32.mrb[0].mxu0
        %v6235 = vpop.f32.mrb[0].mxu0
        %v6236 = vadd.f32 0.0, %v6235
        %v6237 = vpop.f32.mrb[0].mxu0
        %6238 = vmatprep.mubr.bf16.mxu0 0
        %6239 = vmatmul.mubr.bf16.gmra.mrb[0].mxu0 %v6168
        %v6240 = vpop.f32.mrb[0].mxu0
        %v6241 = vadd.f32 0.0, %v6240
        %v6242 = vpop.f32.mrb[0].mxu0
        %v6243 = vpop.f32.mrb[0].mxu0
        %v6244 = vadd.f32 0.0, %v6243
        %v6245 = vpop.f32.mrb[0].mxu0
        %6246 = vmatprep.mubr.bf16.mxu0 0
        %6247 = vmatmul.mubr.bf16.gmra.mrb[0].mxu0 %v6171
        %v6248 = vpop.f32.mrb[0].mxu0
        %v6249 = vadd.f32 0.0, %v6248
        %v6250 = vpop.f32.mrb[0].mxu0
        %v6251 = vpop.f32.mrb[0].mxu0
        %v6252 = vadd.f32 0.0, %v6251
        %v6253 = vpop.f32.mrb[0].mxu0
        %6254 = vmatprep.mubr.bf16.mxu0 0
        %6255 = vmatmul.mubr.bf16.gmra.mrb[0].mxu0 %v6174
        %v6256 = vpop.f32.mrb[0].mxu0
        %v6257 = vadd.f32 0.0, %v6256
        %v6258 = vpop.f32.mrb[0].mxu0
        %v6259 = vpop.f32.mrb[0].mxu0
        %v6260 = vadd.f32 0.0, %v6259
        %v6261 = vpop.f32.mrb[0].mxu0
        %6262 = vmatprep.mubr.bf16.mxu0 0
        %6263 = vmatmul.mubr.bf16.gmra.mrb[0].mxu0 %v6177
        %v6264 = vpop.f32.mrb[0].mxu0
        %v6265 = vadd.f32 0.0, %v6264
        %v6266 = vpop.f32.mrb[0].mxu0
        %v6267 = vpop.f32.mrb[0].mxu0
        %v6268 = vadd.f32 0.0, %v6267
        %v6269 = vpop.f32.mrb[0].mxu0
        %6270 = vmatprep.mubr.bf16.mxu0 0
        %6271 = vmatmul.mubr.bf16.gmra.mrb[0].mxu0 %v6180
        %v6272 = vpop.f32.mrb[0].mxu0
        %v6273 = vadd.f32 0.0, %v6272
        %v6274 = vpop.f32.mrb[0].mxu0
        %v6275 = vpop.f32.mrb[0].mxu0
        %v6276 = vadd.f32 0.0, %v6275
        %v6277 = vpop.f32.mrb[0].mxu0
        %6278 = vdwg.mxu0
        %v6279 = vadd.f32 %v6013, %v6217
        %v6280 = vadd.f32 %v6014, %v6220
        %v6281 = vadd.f32 %v6015, %v6225
        %v6282 = vadd.f32 %v6016, %v6228
        %v6283 = vadd.f32 %v6017, %v6233
        %v6284 = vadd.f32 %v6018, %v6236
        %v6285 = vadd.f32 %v6019, %v6241
        %v6286 = vadd.f32 %v6020, %v6244
        %v6287 = vadd.f32 %v6021, %v6249
        %v6288 = vadd.f32 %v6022, %v6252
        %v6289 = vadd.f32 %v6023, %v6257
        %v6290 = vadd.f32 %v6024, %v6260
        %v6291 = vadd.f32 %v6025, %v6265
        %v6292 = vadd.f32 %v6026, %v6268
        %v6293 = vadd.f32 %v6027, %v6273
        %v6294 = vadd.f32 %v6028, %v6276
        %s6295 = scalar_lea.vmem [#allocation3], 24
        %v6296 = vld [vmem:[%s6295] sm:$0xf]
        %v6297 = vld [vmem:[%s6295 + $0x4] sm:$0xf]
        %v6298 = vld [vmem:[%s6295 + $0xc] sm:$0xf]
        %v6299 = vld [vmem:[%s6295 + $0x10] sm:$0xf]
        %v6300 = vld [vmem:[%s6295 + $0x18] sm:$0xf]
        %v6301 = vld [vmem:[%s6295 + $0x1c] sm:$0xf]
        %v6302 = vld [vmem:[%s6295 + $0x24] sm:$0xf]
        %v6303 = vld [vmem:[%s6295 + $0x28] sm:$0xf]
        %v6304 = vld [vmem:[%s6295 + $0x30] sm:$0xf]
        %v6305 = vld [vmem:[%s6295 + $0x34] sm:$0xf]
        %v6306 = vld [vmem:[%s6295 + $0x3c] sm:$0xf]
        %v6307 = vld [vmem:[%s6295 + $0x40] sm:$0xf]
        %v6308 = vld [vmem:[%s6295 + $0x48] sm:$0xf]
        %v6309 = vld [vmem:[%s6295 + $0x4c] sm:$0xf]
        %v6310 = vld [vmem:[%s6295 + $0x54] sm:$0xf]
        %v6311 = vld [vmem:[%s6295 + $0x58] sm:$0xf]
        %s6312 = scalar_lea.vmem [#allocation12], 96
        %v6313 = vld [vmem:[%s6312] sm:$0xf]
        %v6314 = vld [vmem:[%s6312 + $0x4] sm:$0xf]
        %v6315 = vld [vmem:[%s6312 + $0x8] sm:$0xf]
        %v6316 = vld [vmem:[%s6312 + $0xc] sm:$0xf]
        %v6333 = vunpack.c.l.b16 %v6296
        %v6334 = vunpack.c.l.b16 %v6297
        %v6335 = vunpack.c.l.b16 %v6298
        %v6336 = vunpack.c.l.b16 %v6299
        %v6337 = vunpack.c.l.b16 %v6300
        %v6338 = vunpack.c.l.b16 %v6301
        %v6339 = vunpack.c.l.b16 %v6302
        %v6340 = vunpack.c.l.b16 %v6303
        %v6341 = vunpack.c.l.b16 %v6304
        %v6342 = vunpack.c.l.b16 %v6305
        %v6343 = vunpack.c.l.b16 %v6306
        %v6344 = vunpack.c.l.b16 %v6307
        %v6345 = vunpack.c.l.b16 %v6308
        %v6346 = vunpack.c.l.b16 %v6309
        %v6347 = vunpack.c.l.b16 %v6310
        %v6348 = vunpack.c.l.b16 %v6311
        %v6349 = vpack.c.b16 %v6334, %v6333
        %v6350 = vpack.c.b16 %v6336, %v6335
        %v6351 = vpack.c.b16 %v6338, %v6337
        %v6352 = vpack.c.b16 %v6340, %v6339
        %v6353 = vpack.c.b16 %v6342, %v6341
        %v6354 = vpack.c.b16 %v6344, %v6343
        %v6355 = vpack.c.b16 %v6346, %v6345
        %v6356 = vpack.c.b16 %v6348, %v6347
        %v6361 = vunpack.c.l.b16 %v6313
        %v6362 = vunpack.c.l.b16 %v6314
        %v6363 = vunpack.c.l.b16 %v6315
        %v6364 = vunpack.c.l.b16 %v6316
        %v6365 = vpack.c.b16 %v6362, %v6361
        %v6366 = vpack.c.b16 %v6364, %v6363
        %v6370 = vsel %vm1309, %v6349, 0
        %v6373 = vsel %vm1309, %v6350, 0
        %v6376 = vsel %vm1309, %v6351, 0
        %v6379 = vsel %vm1309, %v6352, 0
        %v6382 = vsel %vm1309, %v6353, 0
        %v6385 = vsel %vm1309, %v6354, 0
        %v6388 = vsel %vm1309, %v6355, 0
        %v6391 = vsel %vm1309, %v6356, 0
        %6393 = vmatprep.subr.bf16.mxu0 0
        %6394 = vmatpush1.bf16.msra.mxu0 %v6365
        %6395 = vmatprep.subr.bf16.mxu0 0
        %6396 = vmatpush1.bf16.msra.mxu0 %v6366
        %6397 = vmatprep.subr.bf16.mxu0 0
        %6398 = vmatpush1.bf16.msra.mxu0 0
        %6399 = vmatprep.subr.bf16.mxu0 0
        %6400 = vmatpush1.bf16.msra.mxu0 0
        %6401 = vmatprep.subr.bf16.mxu0 0
        %6402 = vmatpush1.bf16.msra.mxu0 0
        %6403 = vmatprep.subr.bf16.mxu0 0
        %6404 = vmatpush1.bf16.msra.mxu0 0
        %6405 = vmatprep.subr.bf16.mxu0 0
        %6406 = vmatpush1.bf16.msra.mxu0 0
        %6407 = vmatprep.subr.bf16.mxu0 0
        %6408 = vmatpush1.bf16.msra.mxu0 0
        %6409 = vmatprep.subr.bf16.mxu0 0
        %6410 = vmatpush1.bf16.msra.mxu0 0
        %6411 = vmatprep.subr.bf16.mxu0 0
        %6412 = vmatpush1.bf16.msra.mxu0 0
        %6413 = vmatprep.subr.bf16.mxu0 0
        %6414 = vmatpush1.bf16.msra.mxu0 0
        %6415 = vmatprep.subr.bf16.mxu0 0
        %6416 = vmatpush1.bf16.msra.mxu0 0
        %6417 = vmatprep.subr.bf16.mxu0 0
        %6418 = vmatpush1.bf16.msra.mxu0 0
        %6419 = vmatprep.subr.bf16.mxu0 0
        %6420 = vmatpush1.bf16.msra.mxu0 0
        %6421 = vmatprep.subr.bf16.mxu0 0
        %6422 = vmatpush1.bf16.msra.mxu0 0
        %6423 = vmatprep.subr.bf16.mxu0 0
        %6424 = vmatpush1.bf16.msra.mxu0 0
        %6425 = vmatprep.mubr.bf16.mxu0 0
        %6426 = vmatmul.mubr.bf16.gmra.mrb[0].mxu0 %v6370
        %v6427 = vpop.f32.mrb[0].mxu0
        %v6428 = vadd.f32 0.0, %v6427
        %v6429 = vpop.f32.mrb[0].mxu0
        %v6430 = vpop.f32.mrb[0].mxu0
        %v6431 = vadd.f32 0.0, %v6430
        %v6432 = vpop.f32.mrb[0].mxu0
        %6433 = vmatprep.mubr.bf16.mxu0 0
        %6434 = vmatmul.mubr.bf16.gmra.mrb[0].mxu0 %v6373
        %v6435 = vpop.f32.mrb[0].mxu0
        %v6436 = vadd.f32 0.0, %v6435
        %v6437 = vpop.f32.mrb[0].mxu0
        %v6438 = vpop.f32.mrb[0].mxu0
        %v6439 = vadd.f32 0.0, %v6438
        %v6440 = vpop.f32.mrb[0].mxu0
        %6441 = vmatprep.mubr.bf16.mxu0 0
        %6442 = vmatmul.mubr.bf16.gmra.mrb[0].mxu0 %v6376
        %v6443 = vpop.f32.mrb[0].mxu0
        %v6444 = vadd.f32 0.0, %v6443
        %v6445 = vpop.f32.mrb[0].mxu0
        %v6446 = vpop.f32.mrb[0].mxu0
        %v6447 = vadd.f32 0.0, %v6446
        %v6448 = vpop.f32.mrb[0].mxu0
        %6449 = vmatprep.mubr.bf16.mxu0 0
        %6450 = vmatmul.mubr.bf16.gmra.mrb[0].mxu0 %v6379
        %v6451 = vpop.f32.mrb[0].mxu0
        %v6452 = vadd.f32 0.0, %v6451
        %v6453 = vpop.f32.mrb[0].mxu0
        %v6454 = vpop.f32.mrb[0].mxu0
        %v6455 = vadd.f32 0.0, %v6454
        %v6456 = vpop.f32.mrb[0].mxu0
        %6457 = vmatprep.mubr.bf16.mxu0 0
        %6458 = vmatmul.mubr.bf16.gmra.mrb[0].mxu0 %v6382
        %v6459 = vpop.f32.mrb[0].mxu0
        %v6460 = vadd.f32 0.0, %v6459
        %v6461 = vpop.f32.mrb[0].mxu0
        %v6462 = vpop.f32.mrb[0].mxu0
        %v6463 = vadd.f32 0.0, %v6462
        %v6464 = vpop.f32.mrb[0].mxu0
        %6465 = vmatprep.mubr.bf16.mxu0 0
        %6466 = vmatmul.mubr.bf16.gmra.mrb[0].mxu0 %v6385
        %v6467 = vpop.f32.mrb[0].mxu0
        %v6468 = vadd.f32 0.0, %v6467
        %v6469 = vpop.f32.mrb[0].mxu0
        %v6470 = vpop.f32.mrb[0].mxu0
        %v6471 = vadd.f32 0.0, %v6470
        %v6472 = vpop.f32.mrb[0].mxu0
        %6473 = vmatprep.mubr.bf16.mxu0 0
        %6474 = vmatmul.mubr.bf16.gmra.mrb[0].mxu0 %v6388
        %v6475 = vpop.f32.mrb[0].mxu0
        %v6476 = vadd.f32 0.0, %v6475
        %v6477 = vpop.f32.mrb[0].mxu0
        %v6478 = vpop.f32.mrb[0].mxu0
        %v6479 = vadd.f32 0.0, %v6478
        %v6480 = vpop.f32.mrb[0].mxu0
        %6481 = vmatprep.mubr.bf16.mxu0 0
        %6482 = vmatmul.mubr.bf16.gmra.mrb[0].mxu0 %v6391
        %v6483 = vpop.f32.mrb[0].mxu0
        %v6484 = vadd.f32 0.0, %v6483
        %v6485 = vpop.f32.mrb[0].mxu0
        %v6486 = vpop.f32.mrb[0].mxu0
        %v6487 = vadd.f32 0.0, %v6486
        %v6488 = vpop.f32.mrb[0].mxu0
        %6489 = vdwg.mxu0
        %v6490 = vadd.f32 %v6279, %v6428
        %v6491 = vadd.f32 %v6280, %v6431
        %v6492 = vadd.f32 %v6281, %v6436
        %v6493 = vadd.f32 %v6282, %v6439
        %v6494 = vadd.f32 %v6283, %v6444
        %v6495 = vadd.f32 %v6284, %v6447
        %v6496 = vadd.f32 %v6285, %v6452
        %v6497 = vadd.f32 %v6286, %v6455
        %v6498 = vadd.f32 %v6287, %v6460
        %v6499 = vadd.f32 %v6288, %v6463
        %v6500 = vadd.f32 %v6289, %v6468
        %v6501 = vadd.f32 %v6290, %v6471
        %v6502 = vadd.f32 %v6291, %v6476
        %v6503 = vadd.f32 %v6292, %v6479
        %v6504 = vadd.f32 %v6293, %v6484
        %v6505 = vadd.f32 %v6294, %v6487
        %v6506 = vld [vmem:[%s6295] sm:$0xf]
        %v6507 = vld [vmem:[%s6295 + $0x4] sm:$0xf]
        %v6508 = vld [vmem:[%s6295 + $0x8] sm:$0x1]
        %v6509 = vld [vmem:[%s6295 + $0xc] sm:$0xf]
        %v6510 = vld [vmem:[%s6295 + $0x10] sm:$0xf]
        %v6511 = vld [vmem:[%s6295 + $0x14] sm:$0x1]
        %v6512 = vld [vmem:[%s6295 + $0x18] sm:$0xf]
        %v6513 = vld [vmem:[%s6295 + $0x1c] sm:$0xf]
        %v6514 = vld [vmem:[%s6295 + $0x20] sm:$0x1]
        %v6515 = vld [vmem:[%s6295 + $0x24] sm:$0xf]
        %v6516 = vld [vmem:[%s6295 + $0x28] sm:$0xf]
        %v6517 = vld [vmem:[%s6295 + $0x2c] sm:$0x1]
        %v6518 = vld [vmem:[%s6295 + $0x30] sm:$0xf]
        %v6519 = vld [vmem:[%s6295 + $0x34] sm:$0xf]
        %v6520 = vld [vmem:[%s6295 + $0x38] sm:$0x1]
        %v6521 = vld [vmem:[%s6295 + $0x3c] sm:$0xf]
        %v6522 = vld [vmem:[%s6295 + $0x40] sm:$0xf]
        %v6523 = vld [vmem:[%s6295 + $0x44] sm:$0x1]
        %v6524 = vld [vmem:[%s6295 + $0x48] sm:$0xf]
        %v6525 = vld [vmem:[%s6295 + $0x4c] sm:$0xf]
        %v6526 = vld [vmem:[%s6295 + $0x50] sm:$0x1]
        %v6527 = vld [vmem:[%s6295 + $0x54] sm:$0xf]
        %v6528 = vld [vmem:[%s6295 + $0x58] sm:$0xf]
        %v6529 = vld [vmem:[%s6295 + $0x5c] sm:$0x1]
        %v6531 = vshrl.u32 %v6506, 16
        %v6533 = vrot.slane %v6531, 4
        %v6534 = vshll.u32 %v6506, 16
        %v6536 = vrot.slane %v6534, 5
        %v6537 = vor.u32 %v6533, %v6536
        %v6538 = vrot.slane %v6537, 4
        %v6540 = vshll.u32 %v6507, 16
        %v6542 = vrot.slane %v6540, 5
        %v6543 = vsel %vm1021, %v6538, %v6542
        %v6544 = vshrl.u32 %v6507, 16
        %v6546 = vrot.slane %v6544, 4
        %v6547 = vor.u32 %v6546, %v6542
        %v6548 = vrot.slane %v6547, 4
        %v6550 = vshll.u32 %v6508, 16
        %v6552 = vrot.slane %v6550, 5
        %v6553 = vsel %vm1021, %v6548, %v6552
        %v6555 = vshrl.u32 %v6509, 16
        %v6557 = vrot.slane %v6555, 4
        %v6558 = vshll.u32 %v6509, 16
        %v6560 = vrot.slane %v6558, 5
        %v6561 = vor.u32 %v6557, %v6560
        %v6562 = vrot.slane %v6561, 4
        %v6564 = vshll.u32 %v6510, 16
        %v6566 = vrot.slane %v6564, 5
        %v6567 = vsel %vm1021, %v6562, %v6566
        %v6568 = vshrl.u32 %v6510, 16
        %v6570 = vrot.slane %v6568, 4
        %v6571 = vor.u32 %v6570, %v6566
        %v6572 = vrot.slane %v6571, 4
        %v6574 = vshll.u32 %v6511, 16
        %v6576 = vrot.slane %v6574, 5
        %v6577 = vsel %vm1021, %v6572, %v6576
        %v6579 = vshrl.u32 %v6512, 16
        %v6581 = vrot.slane %v6579, 4
        %v6582 = vshll.u32 %v6512, 16
        %v6584 = vrot.slane %v6582, 5
        %v6585 = vor.u32 %v6581, %v6584
        %v6586 = vrot.slane %v6585, 4
        %v6588 = vshll.u32 %v6513, 16
        %v6590 = vrot.slane %v6588, 5
        %v6591 = vsel %vm1021, %v6586, %v6590
        %v6592 = vshrl.u32 %v6513, 16
        %v6594 = vrot.slane %v6592, 4
        %v6595 = vor.u32 %v6594, %v6590
        %v6596 = vrot.slane %v6595, 4
        %v6598 = vshll.u32 %v6514, 16
        %v6600 = vrot.slane %v6598, 5
        %v6601 = vsel %vm1021, %v6596, %v6600
        %v6603 = vshrl.u32 %v6515, 16
        %v6605 = vrot.slane %v6603, 4
        %v6606 = vshll.u32 %v6515, 16
        %v6608 = vrot.slane %v6606, 5
        %v6609 = vor.u32 %v6605, %v6608
        %v6610 = vrot.slane %v6609, 4
        %v6612 = vshll.u32 %v6516, 16
        %v6614 = vrot.slane %v6612, 5
        %v6615 = vsel %vm1021, %v6610, %v6614
        %v6616 = vshrl.u32 %v6516, 16
        %v6618 = vrot.slane %v6616, 4
        %v6619 = vor.u32 %v6618, %v6614
        %v6620 = vrot.slane %v6619, 4
        %v6622 = vshll.u32 %v6517, 16
        %v6624 = vrot.slane %v6622, 5
        %v6625 = vsel %vm1021, %v6620, %v6624
        %v6627 = vshrl.u32 %v6518, 16
        %v6629 = vrot.slane %v6627, 4
        %v6630 = vshll.u32 %v6518, 16
        %v6632 = vrot.slane %v6630, 5
        %v6633 = vor.u32 %v6629, %v6632
        %v6634 = vrot.slane %v6633, 4
        %v6636 = vshll.u32 %v6519, 16
        %v6638 = vrot.slane %v6636, 5
        %v6639 = vsel %vm1021, %v6634, %v6638
        %v6640 = vshrl.u32 %v6519, 16
        %v6642 = vrot.slane %v6640, 4
        %v6643 = vor.u32 %v6642, %v6638
        %v6644 = vrot.slane %v6643, 4
        %v6646 = vshll.u32 %v6520, 16
        %v6648 = vrot.slane %v6646, 5
        %v6649 = vsel %vm1021, %v6644, %v6648
        %v6651 = vshrl.u32 %v6521, 16
        %v6653 = vrot.slane %v6651, 4
        %v6654 = vshll.u32 %v6521, 16
        %v6656 = vrot.slane %v6654, 5
        %v6657 = vor.u32 %v6653, %v6656
        %v6658 = vrot.slane %v6657, 4
        %v6660 = vshll.u32 %v6522, 16
        %v6662 = vrot.slane %v6660, 5
        %v6663 = vsel %vm1021, %v6658, %v6662
        %v6664 = vshrl.u32 %v6522, 16
        %v6666 = vrot.slane %v6664, 4
        %v6667 = vor.u32 %v6666, %v6662
        %v6668 = vrot.slane %v6667, 4
        %v6670 = vshll.u32 %v6523, 16
        %v6672 = vrot.slane %v6670, 5
        %v6673 = vsel %vm1021, %v6668, %v6672
        %v6675 = vshrl.u32 %v6524, 16
        %v6677 = vrot.slane %v6675, 4
        %v6678 = vshll.u32 %v6524, 16
        %v6680 = vrot.slane %v6678, 5
        %v6681 = vor.u32 %v6677, %v6680
        %v6682 = vrot.slane %v6681, 4
        %v6684 = vshll.u32 %v6525, 16
        %v6686 = vrot.slane %v6684, 5
        %v6687 = vsel %vm1021, %v6682, %v6686
        %v6688 = vshrl.u32 %v6525, 16
        %v6690 = vrot.slane %v6688, 4
        %v6691 = vor.u32 %v6690, %v6686
        %v6692 = vrot.slane %v6691, 4
        %v6694 = vshll.u32 %v6526, 16
        %v6696 = vrot.slane %v6694, 5
        %v6697 = vsel %vm1021, %v6692, %v6696
        %v6699 = vshrl.u32 %v6527, 16
        %v6701 = vrot.slane %v6699, 4
        %v6702 = vshll.u32 %v6527, 16
        %v6704 = vrot.slane %v6702, 5
        %v6705 = vor.u32 %v6701, %v6704
        %v6706 = vrot.slane %v6705, 4
        %v6708 = vshll.u32 %v6528, 16
        %v6710 = vrot.slane %v6708, 5
        %v6711 = vsel %vm1021, %v6706, %v6710
        %v6712 = vshrl.u32 %v6528, 16
        %v6714 = vrot.slane %v6712, 4
        %v6715 = vor.u32 %v6714, %v6710
        %v6716 = vrot.slane %v6715, 4
        %v6718 = vshll.u32 %v6529, 16
        %v6720 = vrot.slane %v6718, 5
        %v6721 = vsel %vm1021, %v6716, %v6720
        %s6722 = scalar_lea.vmem [#allocation12], 112
        %v6723 = vld [vmem:[%s6722] sm:$0xf]
        %v6724 = vld [vmem:[%s6722 + $0x4] sm:$0xf]
        %v6725 = vld [vmem:[%s6722 + $0x8] sm:$0xf]
        %v6726 = vld [vmem:[%s6722 + $0xc] sm:$0xf]
        %v6727 = vunpack.c.l.b16 %v6543
        %v6728 = vunpack.c.l.b16 %v6553
        %v6729 = vunpack.c.l.b16 %v6567
        %v6730 = vunpack.c.l.b16 %v6577
        %v6731 = vunpack.c.l.b16 %v6591
        %v6732 = vunpack.c.l.b16 %v6601
        %v6733 = vunpack.c.l.b16 %v6615
        %v6734 = vunpack.c.l.b16 %v6625
        %v6735 = vunpack.c.l.b16 %v6639
        %v6736 = vunpack.c.l.b16 %v6649
        %v6737 = vunpack.c.l.b16 %v6663
        %v6738 = vunpack.c.l.b16 %v6673
        %v6739 = vunpack.c.l.b16 %v6687
        %v6740 = vunpack.c.l.b16 %v6697
        %v6741 = vunpack.c.l.b16 %v6711
        %v6742 = vunpack.c.l.b16 %v6721
        %v6743 = vpack.c.b16 %v6728, %v6727
        %v6744 = vpack.c.b16 %v6730, %v6729
        %v6745 = vpack.c.b16 %v6732, %v6731
        %v6746 = vpack.c.b16 %v6734, %v6733
        %v6747 = vpack.c.b16 %v6736, %v6735
        %v6748 = vpack.c.b16 %v6738, %v6737
        %v6749 = vpack.c.b16 %v6740, %v6739
        %v6750 = vpack.c.b16 %v6742, %v6741
        %v6755 = vunpack.c.l.b16 %v6723
        %v6756 = vunpack.c.l.b16 %v6724
        %v6757 = vunpack.c.l.b16 %v6725
        %v6758 = vunpack.c.l.b16 %v6726
        %v6759 = vpack.c.b16 %v6756, %v6755
        %v6760 = vpack.c.b16 %v6758, %v6757
        %v6764 = vsel %vm1309, %v6743, 0
        %v6767 = vsel %vm1309, %v6744, 0
        %v6770 = vsel %vm1309, %v6745, 0
        %v6773 = vsel %vm1309, %v6746, 0
        %v6776 = vsel %vm1309, %v6747, 0
        %v6779 = vsel %vm1309, %v6748, 0
        %v6782 = vsel %vm1309, %v6749, 0
        %v6785 = vsel %vm1309, %v6750, 0
        %6787 = vmatprep.subr.bf16.mxu0 0
        %6788 = vmatpush1.bf16.msra.mxu0 %v6759
        %6789 = vmatprep.subr.bf16.mxu0 0
        %6790 = vmatpush1.bf16.msra.mxu0 %v6760
        %6791 = vmatprep.subr.bf16.mxu0 0
        %6792 = vmatpush1.bf16.msra.mxu0 0
        %6793 = vmatprep.subr.bf16.mxu0 0
        %6794 = vmatpush1.bf16.msra.mxu0 0
        %6795 = vmatprep.subr.bf16.mxu0 0
        %6796 = vmatpush1.bf16.msra.mxu0 0
        %6797 = vmatprep.subr.bf16.mxu0 0
        %6798 = vmatpush1.bf16.msra.mxu0 0
        %6799 = vmatprep.subr.bf16.mxu0 0
        %6800 = vmatpush1.bf16.msra.mxu0 0
        %6801 = vmatprep.subr.bf16.mxu0 0
        %6802 = vmatpush1.bf16.msra.mxu0 0
        %6803 = vmatprep.subr.bf16.mxu0 0
        %6804 = vmatpush1.bf16.msra.mxu0 0
        %6805 = vmatprep.subr.bf16.mxu0 0
        %6806 = vmatpush1.bf16.msra.mxu0 0
        %6807 = vmatprep.subr.bf16.mxu0 0
        %6808 = vmatpush1.bf16.msra.mxu0 0
        %6809 = vmatprep.subr.bf16.mxu0 0
        %6810 = vmatpush1.bf16.msra.mxu0 0
        %6811 = vmatprep.subr.bf16.mxu0 0
        %6812 = vmatpush1.bf16.msra.mxu0 0
        %6813 = vmatprep.subr.bf16.mxu0 0
        %6814 = vmatpush1.bf16.msra.mxu0 0
        %6815 = vmatprep.subr.bf16.mxu0 0
        %6816 = vmatpush1.bf16.msra.mxu0 0
        %6817 = vmatprep.subr.bf16.mxu0 0
        %6818 = vmatpush1.bf16.msra.mxu0 0
        %6819 = vmatprep.mubr.bf16.mxu0 0
        %6820 = vmatmul.mubr.bf16.gmra.mrb[0].mxu0 %v6764
        %v6821 = vpop.f32.mrb[0].mxu0
        %v6822 = vadd.f32 0.0, %v6821
        %v6823 = vpop.f32.mrb[0].mxu0
        %v6824 = vpop.f32.mrb[0].mxu0
        %v6825 = vadd.f32 0.0, %v6824
        %v6826 = vpop.f32.mrb[0].mxu0
        %6827 = vmatprep.mubr.bf16.mxu0 0
        %6828 = vmatmul.mubr.bf16.gmra.mrb[0].mxu0 %v6767
        %v6829 = vpop.f32.mrb[0].mxu0
        %v6830 = vadd.f32 0.0, %v6829
        %v6831 = vpop.f32.mrb[0].mxu0
        %v6832 = vpop.f32.mrb[0].mxu0
        %v6833 = vadd.f32 0.0, %v6832
        %v6834 = vpop.f32.mrb[0].mxu0
        %6835 = vmatprep.mubr.bf16.mxu0 0
        %6836 = vmatmul.mubr.bf16.gmra.mrb[0].mxu0 %v6770
        %v6837 = vpop.f32.mrb[0].mxu0
        %v6838 = vadd.f32 0.0, %v6837
        %v6839 = vpop.f32.mrb[0].mxu0
        %v6840 = vpop.f32.mrb[0].mxu0
        %v6841 = vadd.f32 0.0, %v6840
        %v6842 = vpop.f32.mrb[0].mxu0
        %6843 = vmatprep.mubr.bf16.mxu0 0
        %6844 = vmatmul.mubr.bf16.gmra.mrb[0].mxu0 %v6773
        %v6845 = vpop.f32.mrb[0].mxu0
        %v6846 = vadd.f32 0.0, %v6845
        %v6847 = vpop.f32.mrb[0].mxu0
        %v6848 = vpop.f32.mrb[0].mxu0
        %v6849 = vadd.f32 0.0, %v6848
        %v6850 = vpop.f32.mrb[0].mxu0
        %6851 = vmatprep.mubr.bf16.mxu0 0
        %6852 = vmatmul.mubr.bf16.gmra.mrb[0].mxu0 %v6776
        %v6853 = vpop.f32.mrb[0].mxu0
        %v6854 = vadd.f32 0.0, %v6853
        %v6855 = vpop.f32.mrb[0].mxu0
        %v6856 = vpop.f32.mrb[0].mxu0
        %v6857 = vadd.f32 0.0, %v6856
        %v6858 = vpop.f32.mrb[0].mxu0
        %6859 = vmatprep.mubr.bf16.mxu0 0
        %6860 = vmatmul.mubr.bf16.gmra.mrb[0].mxu0 %v6779
        %v6861 = vpop.f32.mrb[0].mxu0
        %v6862 = vadd.f32 0.0, %v6861
        %v6863 = vpop.f32.mrb[0].mxu0
        %v6864 = vpop.f32.mrb[0].mxu0
        %v6865 = vadd.f32 0.0, %v6864
        %v6866 = vpop.f32.mrb[0].mxu0
        %6867 = vmatprep.mubr.bf16.mxu0 0
        %6868 = vmatmul.mubr.bf16.gmra.mrb[0].mxu0 %v6782
        %v6869 = vpop.f32.mrb[0].mxu0
        %v6870 = vadd.f32 0.0, %v6869
        %v6871 = vpop.f32.mrb[0].mxu0
        %v6872 = vpop.f32.mrb[0].mxu0
        %v6873 = vadd.f32 0.0, %v6872
        %v6874 = vpop.f32.mrb[0].mxu0
        %6875 = vmatprep.mubr.bf16.mxu0 0
        %6876 = vmatmul.mubr.bf16.gmra.mrb[0].mxu0 %v6785
        %v6877 = vpop.f32.mrb[0].mxu0
        %v6878 = vadd.f32 0.0, %v6877
        %v6879 = vpop.f32.mrb[0].mxu0
        %v6880 = vpop.f32.mrb[0].mxu0
        %v6881 = vadd.f32 0.0, %v6880
        %v6882 = vpop.f32.mrb[0].mxu0
        %6883 = vdwg.mxu0
        %v6884 = vadd.f32 %v6490, %v6822
        %v6885 = vadd.f32 %v6491, %v6825
        %v6886 = vadd.f32 %v6492, %v6830
        %v6887 = vadd.f32 %v6493, %v6833
        %v6888 = vadd.f32 %v6494, %v6838
        %v6889 = vadd.f32 %v6495, %v6841
        %v6890 = vadd.f32 %v6496, %v6846
        %v6891 = vadd.f32 %v6497, %v6849
        %v6892 = vadd.f32 %v6498, %v6854
        %v6893 = vadd.f32 %v6499, %v6857
        %v6894 = vadd.f32 %v6500, %v6862
        %v6895 = vadd.f32 %v6501, %v6865
        %v6896 = vadd.f32 %v6502, %v6870
        %v6897 = vadd.f32 %v6503, %v6873
        %v6898 = vadd.f32 %v6504, %v6878
        %v6899 = vadd.f32 %v6505, %v6881
        %v6900 = vld [vmem:[%s6295] sm:$0xe]
        %v6901 = vld [vmem:[%s6295 + $0xc] sm:$0xe]
        %v6902 = vld [vmem:[%s6295 + $0x18] sm:$0xe]
        %v6903 = vld [vmem:[%s6295 + $0x24] sm:$0xe]
        %v6904 = vld [vmem:[%s6295 + $0x30] sm:$0xe]
        %v6905 = vld [vmem:[%s6295 + $0x3c] sm:$0xe]
        %v6906 = vld [vmem:[%s6295 + $0x48] sm:$0xe]
        %v6907 = vld [vmem:[%s6295 + $0x54] sm:$0xe]
        %v6932 = vrot.slane %v6900, 5
        %v6933 = vrot.slane %v6932, 4
        %v6934 = vrot.slane %v6507, 5
        %v6935 = vsel %vm1690, %v6933, %v6934
        %v6936 = vrot.slane %v6934, 4
        %v6937 = vrot.slane %v6508, 5
        %v6938 = vsel %vm1690, %v6936, %v6937
        %v6939 = vrot.slane %v6901, 5
        %v6940 = vrot.slane %v6939, 4
        %v6941 = vrot.slane %v6510, 5
        %v6942 = vsel %vm1690, %v6940, %v6941
        %v6943 = vrot.slane %v6941, 4
        %v6944 = vrot.slane %v6511, 5
        %v6945 = vsel %vm1690, %v6943, %v6944
        %v6946 = vrot.slane %v6902, 5
        %v6947 = vrot.slane %v6946, 4
        %v6948 = vrot.slane %v6513, 5
        %v6949 = vsel %vm1690, %v6947, %v6948
        %v6950 = vrot.slane %v6948, 4
        %v6951 = vrot.slane %v6514, 5
        %v6952 = vsel %vm1690, %v6950, %v6951
        %v6953 = vrot.slane %v6903, 5
        %v6954 = vrot.slane %v6953, 4
        %v6955 = vrot.slane %v6516, 5
        %v6956 = vsel %vm1690, %v6954, %v6955
        %v6957 = vrot.slane %v6955, 4
        %v6958 = vrot.slane %v6517, 5
        %v6959 = vsel %vm1690, %v6957, %v6958
        %v6960 = vrot.slane %v6904, 5
        %v6961 = vrot.slane %v6960, 4
        %v6962 = vrot.slane %v6519, 5
        %v6963 = vsel %vm1690, %v6961, %v6962
        %v6964 = vrot.slane %v6962, 4
        %v6965 = vrot.slane %v6520, 5
        %v6966 = vsel %vm1690, %v6964, %v6965
        %v6967 = vrot.slane %v6905, 5
        %v6968 = vrot.slane %v6967, 4
        %v6969 = vrot.slane %v6522, 5
        %v6970 = vsel %vm1690, %v6968, %v6969
        %v6971 = vrot.slane %v6969, 4
        %v6972 = vrot.slane %v6523, 5
        %v6973 = vsel %vm1690, %v6971, %v6972
        %v6974 = vrot.slane %v6906, 5
        %v6975 = vrot.slane %v6974, 4
        %v6976 = vrot.slane %v6525, 5
        %v6977 = vsel %vm1690, %v6975, %v6976
        %v6978 = vrot.slane %v6976, 4
        %v6979 = vrot.slane %v6526, 5
        %v6980 = vsel %vm1690, %v6978, %v6979
        %v6981 = vrot.slane %v6907, 5
        %v6982 = vrot.slane %v6981, 4
        %v6983 = vrot.slane %v6528, 5
        %v6984 = vsel %vm1690, %v6982, %v6983
        %v6985 = vrot.slane %v6983, 4
        %v6986 = vrot.slane %v6529, 5
        %v6987 = vsel %vm1690, %v6985, %v6986
        %s6988 = scalar_lea.vmem [#allocation12], 128
        %v6989 = vld [vmem:[%s6988] sm:$0xf]
        %v6990 = vld [vmem:[%s6988 + $0x4] sm:$0xf]
        %v6991 = vld [vmem:[%s6988 + $0x8] sm:$0xf]
        %v6992 = vld [vmem:[%s6988 + $0xc] sm:$0xf]
        %v6993 = vunpack.c.l.b16 %v6935
        %v6994 = vunpack.c.l.b16 %v6938
        %v6995 = vunpack.c.l.b16 %v6942
        %v6996 = vunpack.c.l.b16 %v6945
        %v6997 = vunpack.c.l.b16 %v6949
        %v6998 = vunpack.c.l.b16 %v6952
        %v6999 = vunpack.c.l.b16 %v6956
        %v7000 = vunpack.c.l.b16 %v6959
        %v7001 = vunpack.c.l.b16 %v6963
        %v7002 = vunpack.c.l.b16 %v6966
        %v7003 = vunpack.c.l.b16 %v6970
        %v7004 = vunpack.c.l.b16 %v6973
        %v7005 = vunpack.c.l.b16 %v6977
        %v7006 = vunpack.c.l.b16 %v6980
        %v7007 = vunpack.c.l.b16 %v6984
        %v7008 = vunpack.c.l.b16 %v6987
        %v7009 = vpack.c.b16 %v6994, %v6993
        %v7010 = vpack.c.b16 %v6996, %v6995
        %v7011 = vpack.c.b16 %v6998, %v6997
        %v7012 = vpack.c.b16 %v7000, %v6999
        %v7013 = vpack.c.b16 %v7002, %v7001
        %v7014 = vpack.c.b16 %v7004, %v7003
        %v7015 = vpack.c.b16 %v7006, %v7005
        %v7016 = vpack.c.b16 %v7008, %v7007
        %v7021 = vunpack.c.l.b16 %v6989
        %v7022 = vunpack.c.l.b16 %v6990
        %v7023 = vunpack.c.l.b16 %v6991
        %v7024 = vunpack.c.l.b16 %v6992
        %v7025 = vpack.c.b16 %v7022, %v7021
        %v7026 = vpack.c.b16 %v7024, %v7023
        %v7030 = vsel %vm1309, %v7009, 0
        %v7033 = vsel %vm1309, %v7010, 0
        %v7036 = vsel %vm1309, %v7011, 0
        %v7039 = vsel %vm1309, %v7012, 0
        %v7042 = vsel %vm1309, %v7013, 0
        %v7045 = vsel %vm1309, %v7014, 0
        %v7048 = vsel %vm1309, %v7015, 0
        %v7051 = vsel %vm1309, %v7016, 0
        %7053 = vmatprep.subr.bf16.mxu0 0
        %7054 = vmatpush1.bf16.msra.mxu0 %v7025
        %7055 = vmatprep.subr.bf16.mxu0 0
        %7056 = vmatpush1.bf16.msra.mxu0 %v7026
        %7057 = vmatprep.subr.bf16.mxu0 0
        %7058 = vmatpush1.bf16.msra.mxu0 0
        %7059 = vmatprep.subr.bf16.mxu0 0
        %7060 = vmatpush1.bf16.msra.mxu0 0
        %7061 = vmatprep.subr.bf16.mxu0 0
        %7062 = vmatpush1.bf16.msra.mxu0 0
        %7063 = vmatprep.subr.bf16.mxu0 0
        %7064 = vmatpush1.bf16.msra.mxu0 0
        %7065 = vmatprep.subr.bf16.mxu0 0
        %7066 = vmatpush1.bf16.msra.mxu0 0
        %7067 = vmatprep.subr.bf16.mxu0 0
        %7068 = vmatpush1.bf16.msra.mxu0 0
        %7069 = vmatprep.subr.bf16.mxu0 0
        %7070 = vmatpush1.bf16.msra.mxu0 0
        %7071 = vmatprep.subr.bf16.mxu0 0
        %7072 = vmatpush1.bf16.msra.mxu0 0
        %7073 = vmatprep.subr.bf16.mxu0 0
        %7074 = vmatpush1.bf16.msra.mxu0 0
        %7075 = vmatprep.subr.bf16.mxu0 0
        %7076 = vmatpush1.bf16.msra.mxu0 0
        %7077 = vmatprep.subr.bf16.mxu0 0
        %7078 = vmatpush1.bf16.msra.mxu0 0
        %7079 = vmatprep.subr.bf16.mxu0 0
        %7080 = vmatpush1.bf16.msra.mxu0 0
        %7081 = vmatprep.subr.bf16.mxu0 0
        %7082 = vmatpush1.bf16.msra.mxu0 0
        %7083 = vmatprep.subr.bf16.mxu0 0
        %7084 = vmatpush1.bf16.msra.mxu0 0
        %7085 = vmatprep.mubr.bf16.mxu0 0
        %7086 = vmatmul.mubr.bf16.gmra.mrb[0].mxu0 %v7030
        %v7087 = vpop.f32.mrb[0].mxu0
        %v7088 = vadd.f32 0.0, %v7087
        %v7089 = vpop.f32.mrb[0].mxu0
        %v7090 = vpop.f32.mrb[0].mxu0
        %v7091 = vadd.f32 0.0, %v7090
        %v7092 = vpop.f32.mrb[0].mxu0
        %7093 = vmatprep.mubr.bf16.mxu0 0
        %7094 = vmatmul.mubr.bf16.gmra.mrb[0].mxu0 %v7033
        %v7095 = vpop.f32.mrb[0].mxu0
        %v7096 = vadd.f32 0.0, %v7095
        %v7097 = vpop.f32.mrb[0].mxu0
        %v7098 = vpop.f32.mrb[0].mxu0
        %v7099 = vadd.f32 0.0, %v7098
        %v7100 = vpop.f32.mrb[0].mxu0
        %7101 = vmatprep.mubr.bf16.mxu0 0
        %7102 = vmatmul.mubr.bf16.gmra.mrb[0].mxu0 %v7036
        %v7103 = vpop.f32.mrb[0].mxu0
        %v7104 = vadd.f32 0.0, %v7103
        %v7105 = vpop.f32.mrb[0].mxu0
        %v7106 = vpop.f32.mrb[0].mxu0
        %v7107 = vadd.f32 0.0, %v7106
        %v7108 = vpop.f32.mrb[0].mxu0
        %7109 = vmatprep.mubr.bf16.mxu0 0
        %7110 = vmatmul.mubr.bf16.gmra.mrb[0].mxu0 %v7039
        %v7111 = vpop.f32.mrb[0].mxu0
        %v7112 = vadd.f32 0.0, %v7111
        %v7113 = vpop.f32.mrb[0].mxu0
        %v7114 = vpop.f32.mrb[0].mxu0
        %v7115 = vadd.f32 0.0, %v7114
        %v7116 = vpop.f32.mrb[0].mxu0
        %7117 = vmatprep.mubr.bf16.mxu0 0
        %7118 = vmatmul.mubr.bf16.gmra.mrb[0].mxu0 %v7042
        %v7119 = vpop.f32.mrb[0].mxu0
        %v7120 = vadd.f32 0.0, %v7119
        %v7121 = vpop.f32.mrb[0].mxu0
        %v7122 = vpop.f32.mrb[0].mxu0
        %v7123 = vadd.f32 0.0, %v7122
        %v7124 = vpop.f32.mrb[0].mxu0
        %7125 = vmatprep.mubr.bf16.mxu0 0
        %7126 = vmatmul.mubr.bf16.gmra.mrb[0].mxu0 %v7045
        %v7127 = vpop.f32.mrb[0].mxu0
        %v7128 = vadd.f32 0.0, %v7127
        %v7129 = vpop.f32.mrb[0].mxu0
        %v7130 = vpop.f32.mrb[0].mxu0
        %v7131 = vadd.f32 0.0, %v7130
        %v7132 = vpop.f32.mrb[0].mxu0
        %7133 = vmatprep.mubr.bf16.mxu0 0
        %7134 = vmatmul.mubr.bf16.gmra.mrb[0].mxu0 %v7048
        %v7135 = vpop.f32.mrb[0].mxu0
        %v7136 = vadd.f32 0.0, %v7135
        %v7137 = vpop.f32.mrb[0].mxu0
        %v7138 = vpop.f32.mrb[0].mxu0
        %v7139 = vadd.f32 0.0, %v7138
        %v7140 = vpop.f32.mrb[0].mxu0
        %7141 = vmatprep.mubr.bf16.mxu0 0
        %7142 = vmatmul.mubr.bf16.gmra.mrb[0].mxu0 %v7051
        %v7143 = vpop.f32.mrb[0].mxu0
        %v7144 = vadd.f32 0.0, %v7143
        %v7145 = vpop.f32.mrb[0].mxu0
        %v7146 = vpop.f32.mrb[0].mxu0
        %v7147 = vadd.f32 0.0, %v7146
        %v7148 = vpop.f32.mrb[0].mxu0
        %7149 = vdwg.mxu0
        %v7150 = vadd.f32 %v6884, %v7088
        %v7151 = vadd.f32 %v6885, %v7091
        %v7152 = vadd.f32 %v6886, %v7096
        %v7153 = vadd.f32 %v6887, %v7099
        %v7154 = vadd.f32 %v6888, %v7104
        %v7155 = vadd.f32 %v6889, %v7107
        %v7156 = vadd.f32 %v6890, %v7112
        %v7157 = vadd.f32 %v6891, %v7115
        %v7158 = vadd.f32 %v6892, %v7120
        %v7159 = vadd.f32 %v6893, %v7123
        %v7160 = vadd.f32 %v6894, %v7128
        %v7161 = vadd.f32 %v6895, %v7131
        %v7162 = vadd.f32 %v6896, %v7136
        %v7163 = vadd.f32 %v6897, %v7139
        %v7164 = vadd.f32 %v6898, %v7144
        %v7165 = vadd.f32 %v6899, %v7147
        %v7166 = vld [vmem:[%s6] sm:$0x1]
        %v7168 = vlaneseq
        %v7169 = vshrl.u32 %v7168, 7
        %v7170 = vsub.s32 0, %v7169
        %v7171 = vrot.slane %v7166, %v7170
        %v7173 = vadd.f32 %v7150, %v7171
        %v7174 = vadd.f32 %v7151, %v7171
        %v7175 = vadd.f32 %v7152, %v7171
        %v7176 = vadd.f32 %v7153, %v7171
        %v7177 = vadd.f32 %v7154, %v7171
        %v7178 = vadd.f32 %v7155, %v7171
        %v7179 = vadd.f32 %v7156, %v7171
        %v7180 = vadd.f32 %v7157, %v7171
        %v7181 = vadd.f32 %v7158, %v7171
        %v7182 = vadd.f32 %v7159, %v7171
        %v7183 = vadd.f32 %v7160, %v7171
        %v7184 = vadd.f32 %v7161, %v7171
        %v7185 = vadd.f32 %v7162, %v7171
        %v7186 = vadd.f32 %v7163, %v7171
        %v7187 = vadd.f32 %v7164, %v7171
        %v7188 = vadd.f32 %v7165, %v7171
        %v7189 = vld [vmem:[%s389] sm:$0xff]
        %v7190 = vld [vmem:[%s389 + $0x8] sm:$0xff]
        %v7191 = vld [vmem:[%s389 + $0x10] sm:$0xff]
        %v7192 = vld [vmem:[%s389 + $0x18] sm:$0xff]
        %v7193 = vld [vmem:[%s389 + $0x20] sm:$0xff]
        %v7194 = vld [vmem:[%s389 + $0x28] sm:$0xff]
        %v7195 = vld [vmem:[%s389 + $0x30] sm:$0xff]
        %v7196 = vld [vmem:[%s389 + $0x38] sm:$0xff]
        %v7197 = vld [vmem:[%s389 + $0x40] sm:$0xff]
        %v7198 = vld [vmem:[%s389 + $0x48] sm:$0xff]
        %v7199 = vld [vmem:[%s389 + $0x50] sm:$0xff]
        %v7200 = vld [vmem:[%s389 + $0x58] sm:$0xff]
        %v7201 = vld [vmem:[%s389 + $0x60] sm:$0xff]
        %v7202 = vld [vmem:[%s389 + $0x68] sm:$0xff]
        %v7203 = vld [vmem:[%s389 + $0x70] sm:$0xff]
        %v7204 = vld [vmem:[%s389 + $0x78] sm:$0xff]
        %v7205 = vadd.f32 %v7189, %v7173
        %v7206 = vadd.f32 %v7190, %v7174
        %v7207 = vadd.f32 %v7191, %v7175
        %v7208 = vadd.f32 %v7192, %v7176
        %v7209 = vadd.f32 %v7193, %v7177
        %v7210 = vadd.f32 %v7194, %v7178
        %v7211 = vadd.f32 %v7195, %v7179
        %v7212 = vadd.f32 %v7196, %v7180
        %v7213 = vadd.f32 %v7197, %v7181
        %v7214 = vadd.f32 %v7198, %v7182
        %v7215 = vadd.f32 %v7199, %v7183
        %v7216 = vadd.f32 %v7200, %v7184
        %v7217 = vadd.f32 %v7201, %v7185
        %v7218 = vadd.f32 %v7202, %v7186
        %v7219 = vadd.f32 %v7203, %v7187
        %v7220 = vadd.f32 %v7204, %v7188
        %7221 = vst.msk [vmem:[%s455] sm:$0xff] %vm1309, %v7205
        %7222 = vst.msk [vmem:[%s455 + $0x8] sm:$0xff] %vm1309, %v7206
        %7223 = vst.msk [vmem:[%s455 + $0x10] sm:$0xff] %vm1309, %v7207
        %7224 = vst.msk [vmem:[%s455 + $0x18] sm:$0xff] %vm1309, %v7208
        %7225 = vst.msk [vmem:[%s455 + $0x20] sm:$0xff] %vm1309, %v7209
        %7226 = vst.msk [vmem:[%s455 + $0x28] sm:$0xff] %vm1309, %v7210
        %7227 = vst.msk [vmem:[%s455 + $0x30] sm:$0xff] %vm1309, %v7211
        %7228 = vst.msk [vmem:[%s455 + $0x38] sm:$0xff] %vm1309, %v7212
        %7229 = vst.msk [vmem:[%s455 + $0x40] sm:$0xff] %vm1309, %v7213
        %7230 = vst.msk [vmem:[%s455 + $0x48] sm:$0xff] %vm1309, %v7214
        %7231 = vst.msk [vmem:[%s455 + $0x50] sm:$0xff] %vm1309, %v7215
        %7232 = vst.msk [vmem:[%s455 + $0x58] sm:$0xff] %vm1309, %v7216
        %7233 = vst.msk [vmem:[%s455 + $0x60] sm:$0xff] %vm1309, %v7217
        %7234 = vst.msk [vmem:[%s455 + $0x68] sm:$0xff] %vm1309, %v7218
        %7235 = vst.msk [vmem:[%s455 + $0x70] sm:$0xff] %vm1309, %v7219
        %7236 = vst.msk [vmem:[%s455 + $0x78] sm:$0xff] %vm1309, %v7220
        %s7237 = sand.u32 %s234, 1
        %s7238 = scalar_lea.sflag [#allocation6], %s7237
        %s7239 = sand.u32 %s234, 1
        %s7240 = smul.addr %s7239, 128
        %s7241 = scalar_lea.vmem [#allocation13], %s7240
        // Predicated region
        $region69: #{tpu_custom_call.1} parent=47 // pred_check
          %p7242 = pneg %p244
        $region70: #{tpu_custom_call.1} parent=47 // pred_check_branch
          %7244 = sbr.rel (%p7242) target = $region72
        $region71: #{tpu_custom_call.1} parent=47 // pred_region
          %s7245 = smul.u32 8, %s33
          %s7247 = ssub.s32 2048, 2048
          %7248 = vsyncadd %s7238, %s7247
          %s7249 = smul.addr %s7245, 2
          %s7250 = smul.addr %s32, 32
          %s7251 = sadd.s32 %s7249, %s7250
          %s7252 = smul.addr %s7251, 128
          %s7253 = scalar_lea.hbm %s7, %s7252
          %s7254 = sshll.u32 %s7241, 4
          %s7255 = int_to_ptr.vmem [resolvable:$true] %s7254
          %7260 = dma.vmem_to_hbm [thread:$0]  %s7255, 2048, %s7253, %s7238, 128, 128, 8
        $region72: #{tpu_custom_call.1} parent=47 // pred_fallthru
          _
      $region48: #{tpu_custom_call.1} parent=5 // pred_fallthru
        _
      %p7261 = scmp.le.s32.totalorder 2, %s23
      // Predicated region
      $region73: #{tpu_custom_call.1} parent=5 // pred_check
        %p7262 = pneg %p7261
      $region74: #{tpu_custom_call.1} parent=5 // pred_check_branch
        %7264 = sbr.rel (%p7262) target = $region76
      $region75: #{tpu_custom_call.1} parent=5 // pred_region
        %s7265 = ssub.s32 %s23, 2
        // Predicated region
        $region77: #{tpu_custom_call.1} parent=75 // pred_check
          %p7266 = pneg %p250
        $region78: #{tpu_custom_call.1} parent=75 // pred_check_branch
          %7268 = sbr.rel (%p7266) target = $region80
        $region79: #{tpu_custom_call.1} parent=75 // pred_region
          %s7269 = sand.u32 %s235, 1
          %s7270 = scalar_lea.sflag [#allocation6], %s7269
          %s7271 = sand.u32 %s235, 1
          %s7272 = smul.addr %s7271, 128
          %s7273 = scalar_lea.vmem [#allocation13], %s7272
          %7274 = dma.done %s7270, 2048
        $region80: #{tpu_custom_call.1} parent=75 // pred_fallthru
          _
      $region76: #{tpu_custom_call.1} parent=5 // pred_fallthru
        _
    $region6: #{tpu_custom_call.1} parent=1 // loop_footer
      %s27 = sadd.s32 1, %s23
    $region7: #{tpu_custom_call.1} parent=1 // loop_footer_branch
      %22 = sbr.rel target = $region3
    $region8: #{tpu_custom_call.1} parent=1 // loop_exit
      _
    %7275 = vsyncpa [#allocation5], 1
    %s7276 = scalar_lea.sflag [#allocation5], 1
    %7277 = vsyncpa %s7276, 1
    %7278 = vsyncpa [#allocation8], 1
    %s7279 = scalar_lea.sflag [#allocation8], 1
    %7280 = vsyncpa %s7279, 1
    %7281 = vsyncpa [#allocation11], 1
    %7282 = vsyncpa [#allocation6], 1
    %s7283 = scalar_lea.sflag [#allocation6], 1
    %7284 = vsyncpa %s7283, 1

</llo_original>
